<compile_context>
chip_gen: v6e
topology: v6e:2x2x1
jax: 0.10.0
libtpu: 0.0.40
codegen_flags: <defaults>
</compile_context>

<pallas_src>
import math
import functools

import jax
import jax.numpy as jnp
from jax import lax
from jax.experimental import pallas as pl
from jax.experimental.pallas import tpu as pltpu


def _round_up(x, m):
    return ((x + m - 1) // m) * m


def _lsh_simmat_kernel(a_ref, b_ref, rt_ref, qtok_ref, dtok_ref, out_ref, e2_scr,
                       *, padding, num_bits):
    # a_ref:   (bt, A_pad, D)  bf16      b_ref:  (bt, B, D) bf16
    # rt_ref:  (D, NB)         bf16
    # qtok_ref:(bt, A_pad, 1)  i32       dtok_ref:(bt, 1, B_pad) i32
    # out_ref: (bt, A_pad, B_pad) f32    e2_scr: (bt, B_pad, NB) bf16 scratch
    bt, A_pad, D = a_ref.shape
    B = b_ref.shape[1]
    B_pad = out_ref.shape[2]
    NB = rt_ref.shape[1]

    rt = rt_ref[...]                                             # (D, NB) bf16

    # Flatten batch into M so the projections feed bt*A_pad / bt*B rows to MXU.
    a2 = a_ref[...].reshape(bt * A_pad, D)
    b2 = b_ref[...].reshape(bt * B, D)

    h1 = jnp.dot(a2, rt, preferred_element_type=jnp.float32)    # (bt*A_pad, NB)
    h2 = jnp.dot(b2, rt, preferred_element_type=jnp.float32)    # (bt*B, NB)

    # LSH codes: exact {0,1} -> bf16 is lossless for the Hamming matmul.
    e1 = (h1 > 0).astype(jnp.bfloat16).reshape(bt, A_pad, NB)
    e2 = (h2 > 0).astype(jnp.bfloat16).reshape(bt, B, NB)

    # Zero-pad the doc codes to B_pad in VMEM so the output block stays
    # lane-dense without padding doc_embed in HBM.
    if B < B_pad:
        e2_scr[:, :B, :] = e2
        e2_scr[:, B:, :] = jnp.zeros((bt, B_pad - B, NB), jnp.bfloat16)
    else:
        e2_scr[...] = e2
    e2p = e2_scr[...]                                            # (bt, B_pad, NB)

    # Matching-ones count: one batched bf16 matmul (contract NB, batch bt).
    m = lax.dot_general(e1, e2p, (((2,), (2,)), ((0,), (0,))),
                        preferred_element_type=jnp.float32)     # (bt, A_pad, B_pad)

    # Hamming distance = s1 + s2 - 2*m; fold the pi/num_bits scale into the
    # small per-row popcounts so the big tile sees mul/add/sub + cos only.
    scale = jnp.float32(math.pi / num_bits)
    s1 = scale * jnp.sum(e1, axis=-1, dtype=jnp.float32)        # (bt, A_pad)
    s2 = scale * jnp.sum(e2p, axis=-1, dtype=jnp.float32)       # (bt, B_pad)

    ang = s1[:, :, None] + (s2[:, None, :] - (2.0 * scale) * m)
    sim = jnp.cos(ang)

    # Fused padding mask (padded A rows / B columns carry `padding` tokens).
    qmask = qtok_ref[...] == padding                            # (bt, A_pad, 1)
    dmask = dtok_ref[...] == padding                            # (bt, 1, B_pad)
    sim = jnp.where(qmask | dmask, jnp.float32(0.0), sim)

    out_ref[...] = sim


def _select_batch_tile(BAT, A_pad, B, B_pad, D, NB, budget_bytes=20 << 20):
    """Largest divisor of BAT whose per-step VMEM footprint fits the budget."""
    def footprint(bt):
        emb_in = 2 * (bt * A_pad * D * 2 + bt * B * D * 2)      # double-buffered bf16
        rt_in = 2 * D * NB * 2
        out = 2 * bt * A_pad * B_pad * 4                        # double-buffered f32
        scratch = bt * B_pad * NB * 2                           # padded doc codes
        inter = (bt * (A_pad + B) * NB * 4                      # h1/h2 f32
                 + bt * (A_pad + B) * NB * 2                    # e1/e2 bf16
                 + 2 * bt * A_pad * B_pad * 4)                  # m / sim f32
        return emb_in + rt_in + out + scratch + inter

    bt = 1
    for d in range(1, BAT + 1):
        if BAT % d == 0 and footprint(d) <= budget_bytes:
            bt = d
    return bt, footprint(bt)


def lsh_simmat(query_embed, doc_embed, query_tok, doc_tok, r, padding=-1):
    """query_embed: (L, BAT, A, D), doc_embed: (L, BAT, B, D),
    query_tok: (BAT, A), doc_tok: (BAT, B), r: (num_bits, D).
    Returns (BAT, L, A, B) float32."""
    L, BAT, A, D = query_embed.shape
    B = doc_embed.shape[2]
    NB = r.shape[0]

    # A to the bf16 sublane tile (16) so the code reshape is layout-free;
    # B_pad is only used for the lane-dense output / in-VMEM code padding.
    A_pad = _round_up(A, 16)
    B_pad = _round_up(B, 128)

    # Query side is small: pad it (padded rows masked via `padding` tokens).
    q_emb = jnp.pad(query_embed,
                    ((0, 0), (0, 0), (0, A_pad - A), (0, 0))).astype(jnp.bfloat16)
    # Doc side is the big HBM stream: pass it unpadded, in bf16.
    d_emb = doc_embed.astype(jnp.bfloat16)

    q_tok3 = jnp.pad(query_tok.astype(jnp.int32), ((0, 0), (0, A_pad - A)),
                     constant_values=padding)[:, :, None]        # (BAT, A_pad, 1)
    d_tok3 = jnp.pad(doc_tok.astype(jnp.int32), ((0, 0), (0, B_pad - B)),
                     constant_values=padding)[:, None, :]        # (BAT, 1, B_pad)

    r_t = jnp.asarray(r, jnp.float32).T.astype(jnp.bfloat16)     # (D, NB)

    bt, fp = _select_batch_tile(BAT, A_pad, B, B_pad, D, NB)
    n_b = BAT // bt
    vmem_limit = int(min(48 << 20, max(16 << 20, 2 * fp)))

    kernel = functools.partial(_lsh_simmat_kernel, padding=padding, num_bits=NB)

    out = pl.pallas_call(
        kernel,
        out_shape=jax.ShapeDtypeStruct((BAT, L, A_pad, B_pad), jnp.float32),
        grid=(L, n_b),
        in_specs=[
            pl.BlockSpec((None, bt, A_pad, D), lambda l, b: (l, b, 0, 0)),  # q emb
            pl.BlockSpec((None, bt, B, D),     lambda l, b: (l, b, 0, 0)),  # d emb
            pl.BlockSpec((D, NB),              lambda l, b: (0, 0)),        # r^T
            pl.BlockSpec((bt, A_pad, 1),       lambda l, b: (b, 0, 0)),     # q tok
            pl.BlockSpec((bt, 1, B_pad),       lambda l, b: (b, 0, 0)),     # d tok
        ],
        out_specs=pl.BlockSpec((bt, None, A_pad, B_pad), lambda l, b: (b, l, 0, 0)),
        scratch_shapes=[pltpu.VMEM((bt, B_pad, NB), jnp.bfloat16)],
        compiler_params=pltpu.CompilerParams(
            dimension_semantics=("parallel", "parallel"),
            vmem_limit_bytes=vmem_limit),
    )(q_emb, d_emb, r_t, q_tok3, d_tok3)

    return out[:, :, :A, :B]


def _reference(query_embed, doc_embed, query_tok, doc_tok, r, padding, num_bits):
    # Mirrors the kernel's bf16 quantization of the projection operands
    # (bf16 x bf16 products are exact in f32, so this matches the MXU path).
    q = query_embed.astype(jnp.bfloat16).astype(jnp.float32)
    d = doc_embed.astype(jnp.bfloat16).astype(jnp.float32)
    rr = jnp.asarray(r, jnp.float32).astype(jnp.bfloat16).astype(jnp.float32)
    hi = lax.Precision.HIGHEST
    e1 = (jnp.einsum('lbad,nd->lban', q, rr, precision=hi) > 0).astype(jnp.float32)
    e2 = (jnp.einsum('lbkd,nd->lbkn', d, rr, precision=hi) > 0).astype(jnp.float32)
    ham = (jnp.einsum('lban,lbkn->lbak', e1, 1.0 - e2, precision=hi) +
           jnp.einsum('lban,lbkn->lbak', 1.0 - e1, e2, precision=hi))
    sim = jnp.cos(jnp.float32(math.pi) / jnp.float32(num_bits) * ham)
    sim = jnp.where(query_tok[None, :, :, None] == padding, 0.0, sim)
    sim = jnp.where(doc_tok[None, :, None, :] == padding, 0.0, sim)
    return jnp.transpose(sim, (1, 0, 2, 3))


if __name__ == "__main__":
    key = jax.random.PRNGKey(0)
    k_r, k_q, k_d, k_qt, k_dt = jax.random.split(key, 5)

    # Small synthetic shapes consistent with the module
    L, BAT, A, B, D = 2, 2, 8, 16, 128   # D=128 is fixed by r's shape in LshModule
    NUM_BITS = 256
    PADDING = -1

    # Deterministic parameter init: r = randn(num_bits, 128) * sigma + mu
    sigma, mu = 0.1, 0.0
    r = jax.random.normal(k_r, (NUM_BITS, D), dtype=jnp.float32) * sigma + mu

    query_embed = jax.random.normal(k_q, (L, BAT, A, D), dtype=jnp.float32)
    doc_embed = jax.random.normal(k_d, (L, BAT, B, D), dtype=jnp.float32)

    query_tok = jax.random.randint(k_qt, (BAT, A), 0, 100, dtype=jnp.int32)
    doc_tok = jax.random.randint(k_dt, (BAT, B), 0, 100, dtype=jnp.int32)
    # Introduce some padding tokens deterministically
    query_tok = query_tok.at[:, -2:].set(PADDING)
    doc_tok = doc_tok.at[:, -3:].set(PADDING)

    out = lsh_simmat(query_embed, doc_embed, query_tok, doc_tok, r, padding=PADDING)
    out = jax.block_until_ready(out)

    ref = _reference(query_embed, doc_embed, query_tok, doc_tok, r, PADDING, NUM_BITS)
    ref = jax.block_until_ready(ref)

    assert out.shape == (BAT, L, A, B), out.shape
    assert jnp.allclose(out, ref, rtol=1e-5, atol=1e-5), float(jnp.max(jnp.abs(out - ref)))

    print("KERNEL_OK")
</pallas_src>

<mosaic_0001>
module attributes {stable_mosaic.version = 11 : i64} {
  func.func @_lsh_simmat_kernel(%arg0: i32, %arg1: i32, %arg2: memref<1x2x16x128xbf16, #tpu.memory_space<vmem>>, %arg3: memref<1x2x16x128xbf16, #tpu.memory_space<vmem>>, %arg4: memref<128x256xbf16, #tpu.memory_space<vmem>>, %arg5: memref<2x16x1xi32, #tpu.memory_space<vmem>>, %arg6: memref<2x1x128xi32, #tpu.memory_space<vmem>>, %arg7: memref<2x1x16x128xf32, #tpu.memory_space<vmem>>, %arg8: memref<2x128x256xbf16, #tpu.memory_space<vmem>>) attributes {dimension_semantics = [#tpu.dimension_semantics<parallel>, #tpu.dimension_semantics<parallel>], iteration_bounds = array<i64: 2, 1>, scalar_prefetch = 0 : i64, scratch_operands = 1 : i64, tpu.core_type = #tpu.core_type<tc>, window_params = [{transform_indices = @transform_0, window_bounds = array<i64: 1, 2, 16, 128>}, {transform_indices = @transform_1, window_bounds = array<i64: 1, 2, 16, 128>}, {pipeline_mode = #tpu.pipeline_mode<synchronous>, transform_indices = @transform_2, window_bounds = array<i64: 128, 256>}, {transform_indices = @transform_3, window_bounds = array<i64: 2, 16, 1>}, {transform_indices = @transform_4, window_bounds = array<i64: 2, 1, 128>}, {transform_indices = @transform_5, window_bounds = array<i64: 2, 1, 16, 128>}]} {
    %c0 = arith.constant 0 : index
    %c0_0 = arith.constant 0 : index
    %0 = vector.load %arg4[%c0, %c0_0] : memref<128x256xbf16, #tpu.memory_space<vmem>>, vector<128x256xbf16>
    %c0_1 = arith.constant 0 : index
    %c0_2 = arith.constant 0 : index
    %c0_3 = arith.constant 0 : index
    %c0_4 = arith.constant 0 : index
    %1 = vector.load %arg2[%c0_1, %c0_2, %c0_3, %c0_4] : memref<1x2x16x128xbf16, #tpu.memory_space<vmem>>, vector<1x2x16x128xbf16>
    %2 = vector.shape_cast %1 : vector<1x2x16x128xbf16> to vector<2x16x128xbf16>
    %3 = vector.shape_cast %2 : vector<2x16x128xbf16> to vector<32x128xbf16>
    %c0_5 = arith.constant 0 : index
    %c0_6 = arith.constant 0 : index
    %c0_7 = arith.constant 0 : index
    %c0_8 = arith.constant 0 : index
    %4 = vector.load %arg3[%c0_5, %c0_6, %c0_7, %c0_8] : memref<1x2x16x128xbf16, #tpu.memory_space<vmem>>, vector<1x2x16x128xbf16>
    %5 = vector.shape_cast %4 : vector<1x2x16x128xbf16> to vector<2x16x128xbf16>
    %6 = vector.shape_cast %5 : vector<2x16x128xbf16> to vector<32x128xbf16>
    %cst = arith.constant dense<0.000000e+00> : vector<32x256xf32>
    %7 = tpu.matmul %3, %0, %cst {dimension_numbers = #tpu.dot_dimension_numbers<[1], [0], [0], [1], [0, 0, 1, 1], [], []>} : vector<32x128xbf16>, vector<128x256xbf16>, vector<32x256xf32> -> vector<32x256xf32>
    %cst_9 = arith.constant dense<0.000000e+00> : vector<32x256xf32>
    %8 = tpu.matmul %6, %0, %cst_9 {dimension_numbers = #tpu.dot_dimension_numbers<[1], [0], [0], [1], [0, 0, 1, 1], [], []>} : vector<32x128xbf16>, vector<128x256xbf16>, vector<32x256xf32> -> vector<32x256xf32>
    %cst_10 = arith.constant 0.000000e+00 : f32
    %9 = vector.broadcast %cst_10 : f32 to vector<32x256xf32>
    %10 = arith.cmpf ogt, %7, %9 : vector<32x256xf32>
    %11 = arith.extui %10 : vector<32x256xi1> to vector<32x256xi32>
    %12 = arith.sitofp %11 : vector<32x256xi32> to vector<32x256xf32>
    %13 = arith.truncf %12 : vector<32x256xf32> to vector<32x256xbf16>
    %14 = vector.shape_cast %13 : vector<32x256xbf16> to vector<2x16x256xbf16>
    %cst_11 = arith.constant 0.000000e+00 : f32
    %15 = vector.broadcast %cst_11 : f32 to vector<32x256xf32>
    %16 = arith.cmpf ogt, %8, %15 : vector<32x256xf32>
    %17 = arith.extui %16 : vector<32x256xi1> to vector<32x256xi32>
    %18 = arith.sitofp %17 : vector<32x256xi32> to vector<32x256xf32>
    %19 = arith.truncf %18 : vector<32x256xf32> to vector<32x256xbf16>
    %20 = vector.shape_cast %19 : vector<32x256xbf16> to vector<2x16x256xbf16>
    %c0_12 = arith.constant 0 : index
    %c0_13 = arith.constant 0 : index
    %c0_14 = arith.constant 0 : index
    %21 = vector.load %arg8[%c0_12, %c0_13, %c0_14] : memref<2x128x256xbf16, #tpu.memory_space<vmem>>, vector<2x16x256xbf16>
    tpu.vector_store %arg8[%c0_12, %c0_13, %c0_14], %20 {strides = array<i32>} : memref<2x128x256xbf16, #tpu.memory_space<vmem>>, vector<2x16x256xbf16>,
    %cst_15 = arith.constant 0.000000e+00 : bf16
    %22 = vector.broadcast %cst_15 : bf16 to vector<2x112x256xbf16>
    %c0_16 = arith.constant 0 : index
    %c16 = arith.constant 16 : index
    %c0_17 = arith.constant 0 : index
    %23 = vector.load %arg8[%c0_16, %c16, %c0_17] : memref<2x128x256xbf16, #tpu.memory_space<vmem>>, vector<2x112x256xbf16>
    tpu.vector_store %arg8[%c0_16, %c16, %c0_17], %22 {strides = array<i32>} : memref<2x128x256xbf16, #tpu.memory_space<vmem>>, vector<2x112x256xbf16>,
    %c0_18 = arith.constant 0 : index
    %c0_19 = arith.constant 0 : index
    %c0_20 = arith.constant 0 : index
    %24 = vector.load %arg8[%c0_18, %c0_19, %c0_20] : memref<2x128x256xbf16, #tpu.memory_space<vmem>>, vector<2x128x256xbf16>
    %cst_21 = arith.constant dense<0.000000e+00> : vector<2x16x128xf32>
    %25 = tpu.matmul %14, %24, %cst_21 {dimension_numbers = #tpu.dot_dimension_numbers<[2], [2], [1], [1], [0, 0, 0, 1, 1, 1], [0], [0]>} : vector<2x16x256xbf16>, vector<2x128x256xbf16>, vector<2x16x128xf32> -> vector<2x16x128xf32>
    %26 = arith.extf %14 : vector<2x16x256xbf16> to vector<2x16x256xf32>
    %cst_22 = arith.constant dense<0.000000e+00> : vector<2x16xf32>
    %27 = vector.multi_reduction <add>, %26, %cst_22 [2] : vector<2x16x256xf32> to vector<2x16xf32>
    %cst_23 = arith.constant 0.0122718466 : f32
    %28 = vector.broadcast %cst_23 : f32 to vector<2x16xf32>
    %29 = arith.mulf %28, %27 : vector<2x16xf32>
    %30 = arith.extf %24 : vector<2x128x256xbf16> to vector<2x128x256xf32>
    %cst_24 = arith.constant dense<0.000000e+00> : vector<2x128xf32>
    %31 = vector.multi_reduction <add>, %30, %cst_24 [2] : vector<2x128x256xf32> to vector<2x128xf32>
    %cst_25 = arith.constant 0.0122718466 : f32
    %32 = vector.broadcast %cst_25 : f32 to vector<2x128xf32>
    %33 = arith.mulf %32, %31 : vector<2x128xf32>
    %34 = vector.shape_cast %29 : vector<2x16xf32> to vector<2x16x1xf32>
    %35 = vector.shape_cast %33 : vector<2x128xf32> to vector<2x1x128xf32>
    %cst_26 = arith.constant 2.000000e+00 : f32
    %cst_27 = arith.constant 0.0122718466 : f32
    %36 = arith.mulf %cst_26, %cst_27 : f32
    %37 = vector.broadcast %36 : f32 to vector<2x16x128xf32>
    %38 = arith.mulf %37, %25 : vector<2x16x128xf32>
    %39 = vector.broadcast %35 : vector<2x1x128xf32> to vector<2x16x128xf32>
    %40 = arith.subf %39, %38 : vector<2x16x128xf32>
    %41 = vector.broadcast %34 : vector<2x16x1xf32> to vector<2x16x128xf32>
    %42 = arith.addf %41, %40 : vector<2x16x128xf32>
    %43 = math.cos %42 : vector<2x16x128xf32>
    %c0_28 = arith.constant 0 : index
    %c0_29 = arith.constant 0 : index
    %c0_30 = arith.constant 0 : index
    %44 = vector.load %arg5[%c0_28, %c0_29, %c0_30] : memref<2x16x1xi32, #tpu.memory_space<vmem>>, vector<2x16x1xi32>
    %c-1_i32 = arith.constant -1 : i32
    %45 = vector.broadcast %c-1_i32 : i32 to vector<2x16x1xi32>
    %46 = arith.cmpi eq, %44, %45 : vector<2x16x1xi32>
    %c0_31 = arith.constant 0 : index
    %c0_32 = arith.constant 0 : index
    %c0_33 = arith.constant 0 : index
    %47 = vector.load %arg6[%c0_31, %c0_32, %c0_33] : memref<2x1x128xi32, #tpu.memory_space<vmem>>, vector<2x1x128xi32>
    %c-1_i32_34 = arith.constant -1 : i32
    %48 = vector.broadcast %c-1_i32_34 : i32 to vector<2x1x128xi32>
    %49 = arith.cmpi eq, %47, %48 : vector<2x1x128xi32>
    %50 = vector.broadcast %46 : vector<2x16x1xi1> to vector<2x16x128xi1>
    %51 = vector.broadcast %49 : vector<2x1x128xi1> to vector<2x16x128xi1>
    %52 = arith.ori %50, %51 : vector<2x16x128xi1>
    %cst_35 = arith.constant 0.000000e+00 : f32
    %53 = vector.broadcast %cst_35 : f32 to vector<2x16x128xf32>
    %54 = arith.select %52, %53, %43 : vector<2x16x128xi1>, vector<2x16x128xf32>
    %c0_36 = arith.constant 0 : index
    %c0_37 = arith.constant 0 : index
    %c0_38 = arith.constant 0 : index
    %c0_39 = arith.constant 0 : index
    %55 = vector.load %arg7[%c0_36, %c0_37, %c0_38, %c0_39] : memref<2x1x16x128xf32, #tpu.memory_space<vmem>>, vector<2x1x16x128xf32>
    %56 = vector.shape_cast %55 : vector<2x1x16x128xf32> to vector<2x16x128xf32>
    %57 = vector.shape_cast %54 : vector<2x16x128xf32> to vector<2x1x16x128xf32>
    tpu.vector_store %arg7[%c0_36, %c0_37, %c0_38, %c0_39], %57 {strides = array<i32>} : memref<2x1x16x128xf32, #tpu.memory_space<vmem>>, vector<2x1x16x128xf32>,
    return
  }
  func.func @transform_0(%arg0: i32, %arg1: i32) -> (i32, i32, i32, i32) {
    %c0_i32 = arith.constant 0 : i32
    %c0_i32_0 = arith.constant 0 : i32
    %c0_i32_1 = arith.constant 0 : i32
    return %arg0, %arg1, %c0_i32, %c0_i32_0 : i32, i32, i32, i32
  }
  func.func @transform_1(%arg0: i32, %arg1: i32) -> (i32, i32, i32, i32) {
    %c0_i32 = arith.constant 0 : i32
    %c0_i32_0 = arith.constant 0 : i32
    %c0_i32_1 = arith.constant 0 : i32
    return %arg0, %arg1, %c0_i32, %c0_i32_0 : i32, i32, i32, i32
  }
  func.func @transform_2(%arg0: i32, %arg1: i32) -> (i32, i32) {
    %c0_i32 = arith.constant 0 : i32
    %c0_i32_0 = arith.constant 0 : i32
    %c0_i32_1 = arith.constant 0 : i32
    return %c0_i32, %c0_i32_0 : i32, i32
  }
  func.func @transform_3(%arg0: i32, %arg1: i32) -> (i32, i32, i32) {
    %c0_i32 = arith.constant 0 : i32
    %c0_i32_0 = arith.constant 0 : i32
    %c0_i32_1 = arith.constant 0 : i32
    return %arg1, %c0_i32, %c0_i32_0 : i32, i32, i32
  }
  func.func @transform_4(%arg0: i32, %arg1: i32) -> (i32, i32, i32) {
    %c0_i32 = arith.constant 0 : i32
    %c0_i32_0 = arith.constant 0 : i32
    %c0_i32_1 = arith.constant 0 : i32
    return %arg1, %c0_i32, %c0_i32_0 : i32, i32, i32
  }
  func.func @transform_5(%arg0: i32, %arg1: i32) -> (i32, i32, i32, i32) {
    %c0_i32 = arith.constant 0 : i32
    %c0_i32_0 = arith.constant 0 : i32
    %c0_i32_1 = arith.constant 0 : i32
    return %arg1, %arg0, %c0_i32, %c0_i32_0 : i32, i32, i32, i32
  }
}

</mosaic_0001>

<llo_original>
// kernel: tpu_custom_call.1
$region0: #{tpu_custom_call.1}
  #allocation0 [shape = 'u32[]', space=smem, size = 0x4, offset = 0x4, fixed_abs, tag = 'smem constant byte address 0x4 - core index']
  #allocation1 [shape = 'u32[144,128]{1,0:T(1,128)}', space=vmem, size = 0x12000, scoped, tag = 'internal scratch']
  #allocation2 [shape = 'bf16[2,128,256]{2,1,0:T(8,128)(2,1)}', space=vmem, size = 0x20000, scoped, tag = 'scratch operand']
  #allocation9 [shape = 's32[]', space=sflag, size = 0x4, offset = 0, fixed_abs, tag = 'sflag constant byte address 0x0 - dummy sync flag']
  %s0 = inlined_call_operand.vmem [shape: bf16[2,2,16,128], index: 0, kind: input, shape index: {}]
  %s1 = inlined_call_operand.hbm [shape: bf16[2,2,16,128], index: 1, kind: input, shape index: {}]
  %s2 = inlined_call_operand.hbm [shape: bf16[128,256], index: 2, kind: input, shape index: {}]
  %s3 = inlined_call_operand.vmem [shape: s32[2,16,1], index: 3, kind: input, shape index: {}]
  %s4 = inlined_call_operand.vmem [shape: s32[2,1,128], index: 4, kind: input, shape index: {}]
  %s5 = inlined_call_operand.hbm [shape: f32[2,2,16,128], index: 5, kind: output, shape index: {}]
  %s6 = sld [smem:[#allocation0]]
  $region61: #{tpu_custom_call.1} parent=0
    _
  %s8 = ssub.s32 1, %s6
  %s9 = scalar_select 0, %s8, %s6
  $region1: #{tpu_custom_call.1} parent=0
    #allocation3 [shape = 'u8[16384]{0}', space=vmem, size = 0x4000, scoped, tag = 'input window, operand 1']
    #allocation4 [shape = 's32[2]{0}', space=sflag, size = 0x8, scoped, tag = 'scoped memory for tpu_custom_call.1']
    #allocation5 [shape = 's32[2]{0}', space=sflag, size = 0x8, scoped, tag = 'scoped memory for tpu_custom_call.1']
    #allocation6 [shape = 'u8[65536]{0}', space=vmem, size = 0x10000, scoped, tag = 'input window, operand 2, single buffered']
    #allocation7 [shape = 's32[1]{0}', space=sflag, size = 0x4, scoped, tag = 'scoped memory for tpu_custom_call.1']
    #allocation8 [shape = 'u8[32768]{0}', space=vmem, size = 0x8000, scoped, tag = 'output window, operand 0']
    %10 = vsyncpa [#allocation4], 0
    %s11 = scalar_lea.sflag [#allocation4], 1
    %12 = vsyncpa %s11, 0
    %13 = vsyncpa [#allocation7], 0
    %14 = vsyncpa [#allocation5], 0
    %s15 = scalar_lea.sflag [#allocation5], 1
    %16 = vsyncpa %s15, 0
    loop: start=0, step=1, limit=4
    $region2: #{tpu_custom_call.1} parent=1 // loop_pre_header
      _
    $region3: #{tpu_custom_call.1} parent=1 // loop_header
      %s18 = sphi 0, %s22
      %p19 = scmp.ge.s32.totalorder %s18, 4
      %s25 = sphi 0, %s37
      %s26 = sphi 0, %s33
      %s27 = sphi 0, %s25
      %s28 = sphi 0, %s26
      %s29 = sphi 0, %s27
      %s30 = sphi 0, %s28
      %s42 = sphi 0, %s44
      %s45 = sphi 0, %s42
      %s46 = sphi 0, %s45
      %s62 = sphi 0, %s46
      %s70 = sphi 0, %s72
      %s73 = sphi 0, %s70
      %s74 = sphi 0, %s73
      %s90 = sphi 0, %s74
      %s94 = sphi 0, %s94
      %s96 = sphi 0, %s94
      %s97 = sphi 0, %s96
      %s111 = sphi 0, %s97
      %s117 = sphi 0, %s119
      %s120 = sphi 0, %s117
      %s121 = sphi 0, %s120
      %s137 = sphi 0, %s121
      %s143 = sphi 0, %s145
      %s146 = sphi 0, %s143
      %s147 = sphi 0, %s146
      %s163 = sphi 0, %s147
      %s171 = sphi 0, %s173
      %s174 = sphi 0, %s171
      %s175 = sphi 0, %s174
      %s191 = sphi 0, %s175
    $region4: #{tpu_custom_call.1} parent=1 // loop_header_branch
      %21 = sbr.rel (%p19) target = $region8
    $region5: #{tpu_custom_call.1} parent=1 // loop_body
      %s23 = ssub.s32 %s18, 1
      %s24 = ssub.s32 %s18, 2
      %s31 = sadd.s32 1, %s26
      %p32 = scmp.ge.s32.totalorder %s31, 1
      %s33 = scalar_select %p32, 0, %s31
      %s34 = sadd.s32 1, %s25
      %s35 = scalar_select %p32, %s34, %s25
      %p36 = scmp.ge.s32.totalorder %s35, 2
      %s37 = scalar_select %p36, 0, %s35
      %s38 = ssub.s32 %s25, %s37
      %s39 = ssub.s32 %s26, %s33
      %s40 = sor.u32 %s38, %s39
      %p41 = scmp.eq.s32.totalorder %s40, 0
      %s43 = sadd.s32 %s42, 1
      %s44 = scalar_select %p41, %s42, %s43
      %p47 = pneg %p41
      %p48 = scmp.eq.s32.totalorder %s18, 1
      %p49 = por %p47, %p48
      %p50 = scmp.ne.s32.totalorder %s42, %s45
      %p51 = scmp.eq.s32.totalorder %s18, 0
      %p52 = por %p50, %p51
      %p53 = scmp.ne.s32.totalorder %s42, %s45
      %p54 = scmp.eq.s32.totalorder %s23, 1
      %p55 = por %p53, %p54
      %p56 = scmp.ne.s32.totalorder %s45, %s46
      %p57 = scmp.eq.s32.totalorder %s23, 0
      %p58 = por %p56, %p57
      %p59 = scmp.ne.s32.totalorder %s45, %s46
      %p60 = scmp.eq.s32.totalorder %s24, 1
      %p61 = por %p59, %p60
      %p63 = scmp.ne.s32.totalorder %s46, %s62
      %p64 = scmp.eq.s32.totalorder %s24, 0
      %p65 = por %p63, %p64
      %s66 = ssub.s32 %s25, %s37
      %s67 = ssub.s32 %s26, %s33
      %s68 = sor.u32 %s66, %s67
      %p69 = scmp.eq.s32.totalorder %s68, 0
      %s71 = sadd.s32 %s70, 1
      %s72 = scalar_select %p69, %s70, %s71
      %p75 = pneg %p69
      %p76 = scmp.eq.s32.totalorder %s18, 1
      %p77 = por %p75, %p76
      %p78 = scmp.ne.s32.totalorder %s70, %s73
      %p79 = scmp.eq.s32.totalorder %s18, 0
      %p80 = por %p78, %p79
      %p81 = scmp.ne.s32.totalorder %s70, %s73
      %p82 = scmp.eq.s32.totalorder %s23, 1
      %p83 = por %p81, %p82
      %p84 = scmp.ne.s32.totalorder %s73, %s74
      %p85 = scmp.eq.s32.totalorder %s23, 0
      %p86 = por %p84, %p85
      %p87 = scmp.ne.s32.totalorder %s73, %s74
      %p88 = scmp.eq.s32.totalorder %s24, 1
      %p89 = por %p87, %p88
      %p91 = scmp.ne.s32.totalorder %s74, %s90
      %p92 = scmp.eq.s32.totalorder %s24, 0
      %p93 = por %p91, %p92
      %s95 = sadd.s32 %s94, 1
      %p98 = scmp.eq.s32.totalorder %s18, 1
      %p99 = scmp.ne.s32.totalorder %s94, %s96
      %p100 = scmp.eq.s32.totalorder %s18, 0
      %p101 = por %p99, %p100
      %p102 = scmp.ne.s32.totalorder %s94, %s96
      %p103 = scmp.eq.s32.totalorder %s23, 1
      %p104 = por %p102, %p103
      %p105 = scmp.ne.s32.totalorder %s96, %s97
      %p106 = scmp.eq.s32.totalorder %s23, 0
      %p107 = por %p105, %p106
      %p108 = scmp.ne.s32.totalorder %s96, %s97
      %p109 = scmp.eq.s32.totalorder %s24, 1
      %p110 = por %p108, %p109
      %p112 = scmp.ne.s32.totalorder %s97, %s111
      %p113 = scmp.eq.s32.totalorder %s24, 0
      %p114 = por %p112, %p113
      %s115 = ssub.s32 %s26, %s33
      %p116 = scmp.eq.s32.totalorder %s115, 0
      %s118 = sadd.s32 %s117, 1
      %s119 = scalar_select %p116, %s117, %s118
      %p122 = pneg %p116
      %p123 = scmp.eq.s32.totalorder %s18, 1
      %p124 = por %p122, %p123
      %p125 = scmp.ne.s32.totalorder %s117, %s120
      %p126 = scmp.eq.s32.totalorder %s18, 0
      %p127 = por %p125, %p126
      %p128 = scmp.ne.s32.totalorder %s117, %s120
      %p129 = scmp.eq.s32.totalorder %s23, 1
      %p130 = por %p128, %p129
      %p131 = scmp.ne.s32.totalorder %s120, %s121
      %p132 = scmp.eq.s32.totalorder %s23, 0
      %p133 = por %p131, %p132
      %p134 = scmp.ne.s32.totalorder %s120, %s121
      %p135 = scmp.eq.s32.totalorder %s24, 1
      %p136 = por %p134, %p135
      %p138 = scmp.ne.s32.totalorder %s121, %s137
      %p139 = scmp.eq.s32.totalorder %s24, 0
      %p140 = por %p138, %p139
      %s141 = ssub.s32 %s26, %s33
      %p142 = scmp.eq.s32.totalorder %s141, 0
      %s144 = sadd.s32 %s143, 1
      %s145 = scalar_select %p142, %s143, %s144
      %p148 = pneg %p142
      %p149 = scmp.eq.s32.totalorder %s18, 1
      %p150 = por %p148, %p149
      %p151 = scmp.ne.s32.totalorder %s143, %s146
      %p152 = scmp.eq.s32.totalorder %s18, 0
      %p153 = por %p151, %p152
      %p154 = scmp.ne.s32.totalorder %s143, %s146
      %p155 = scmp.eq.s32.totalorder %s23, 1
      %p156 = por %p154, %p155
      %p157 = scmp.ne.s32.totalorder %s146, %s147
      %p158 = scmp.eq.s32.totalorder %s23, 0
      %p159 = por %p157, %p158
      %p160 = scmp.ne.s32.totalorder %s146, %s147
      %p161 = scmp.eq.s32.totalorder %s24, 1
      %p162 = por %p160, %p161
      %p164 = scmp.ne.s32.totalorder %s147, %s163
      %p165 = scmp.eq.s32.totalorder %s24, 0
      %p166 = por %p164, %p165
      %s167 = ssub.s32 %s26, %s33
      %s168 = ssub.s32 %s25, %s37
      %s169 = sor.u32 %s167, %s168
      %p170 = scmp.eq.s32.totalorder %s169, 0
      %s172 = sadd.s32 %s171, 1
      %s173 = scalar_select %p170, %s171, %s172
      %p176 = pneg %p170
      %p177 = scmp.eq.s32.totalorder %s18, 1
      %p178 = por %p176, %p177
      %p179 = scmp.ne.s32.totalorder %s171, %s174
      %p180 = scmp.eq.s32.totalorder %s18, 0
      %p181 = por %p179, %p180
      %p182 = scmp.ne.s32.totalorder %s171, %s174
      %p183 = scmp.eq.s32.totalorder %s23, 1
      %p184 = por %p182, %p183
      %p185 = scmp.ne.s32.totalorder %s174, %s175
      %p186 = scmp.eq.s32.totalorder %s23, 0
      %p187 = por %p185, %p186
      %p188 = scmp.ne.s32.totalorder %s174, %s175
      %p189 = scmp.eq.s32.totalorder %s24, 1
      %p190 = por %p188, %p189
      %p192 = scmp.ne.s32.totalorder %s175, %s191
      %p193 = scmp.eq.s32.totalorder %s24, 0
      %p194 = por %p192, %p193
      %p195 = scmp.le.s32.totalorder 1, %s18
      %p196 = scmp.lt.s32.totalorder %s18, 3
      %p197 = pnand %p195, %p196
      %p198 = pneg %p197
      // Predicated region
      $region9: #{tpu_custom_call.1} parent=5 // pred_check
        _
      $region10: #{tpu_custom_call.1} parent=5 // pred_check_branch
        %200 = sbr.rel (%p197) target = $region12
      $region11: #{tpu_custom_call.1} parent=5 // pred_region
        %s201 = ssub.s32 %s18, 1
        // Predicated region
        $region13: #{tpu_custom_call.1} parent=11 // pred_check
          %p202 = pneg %p107
        $region14: #{tpu_custom_call.1} parent=11 // pred_check_branch
          %204 = sbr.rel (%p202) target = $region16
        $region15: #{tpu_custom_call.1} parent=11 // pred_region
          %s206 = ssub.s32 2048, 2048
          %207 = vsyncadd [#allocation7], %s206
          %s208 = sshll.u32 [#allocation6], 4
          %s209 = int_to_ptr.vmem [resolvable:$true] %s208
          %214 = dma.hbm_to_vmem [thread:$0]  %s2, 2048, %s209, [#allocation7], 128, 128, 8
        $region16: #{tpu_custom_call.1} parent=11 // pred_fallthru
          _
        // Predicated region
        $region17: #{tpu_custom_call.1} parent=11 // pred_check
          %p215 = pneg %p133
        $region18: #{tpu_custom_call.1} parent=11 // pred_check_branch
          %217 = sbr.rel (%p215) target = $region20
        $region19: #{tpu_custom_call.1} parent=11 // pred_region
          %s218 = smul.u32 2, %s28
          %p219 = scmp.lt.s32.totalorder %s218, 1
          %s220 = scalar_select %p219, %s218, 1
          %s221 = smul.addr %s220, 2
          %s222 = smul.addr %s221, 8
          %s223 = scalar_lea.vmem %s3, %s222
          %s224 = smul.u32 2, %s28
        $region20: #{tpu_custom_call.1} parent=11 // pred_fallthru
          _
        // Predicated region
        $region21: #{tpu_custom_call.1} parent=11 // pred_check
          %p225 = pneg %p159
        $region22: #{tpu_custom_call.1} parent=11 // pred_check_branch
          %227 = sbr.rel (%p225) target = $region24
        $region23: #{tpu_custom_call.1} parent=11 // pred_region
          %s228 = smul.u32 2, %s28
          %p229 = scmp.lt.s32.totalorder %s228, 1
          %s230 = scalar_select %p229, %s228, 1
          %s231 = scalar_lea.vmem %s4, %s230
          %s232 = smul.u32 2, %s28
        $region24: #{tpu_custom_call.1} parent=11 // pred_fallthru
          _
      $region12: #{tpu_custom_call.1} parent=5 // pred_fallthru
        _
      %p233 = scmp.lt.s32.totalorder %s18, 2
      // Predicated region
      $region25: #{tpu_custom_call.1} parent=5 // pred_check
        %p234 = pneg %p233
      $region26: #{tpu_custom_call.1} parent=5 // pred_check_branch
        %236 = sbr.rel (%p234) target = $region28
      $region27: #{tpu_custom_call.1} parent=5 // pred_region
        // Predicated region
        $region29: #{tpu_custom_call.1} parent=27 // pred_check
          %p237 = pneg %p52
        $region30: #{tpu_custom_call.1} parent=27 // pred_check_branch
          %239 = sbr.rel (%p237) target = $region32
        $region31: #{tpu_custom_call.1} parent=27 // pred_region
          %s240 = smul.u32 2, %s26
          %p241 = scmp.lt.s32.totalorder %s25, 1
          %s242 = scalar_select %p241, %s25, 1
          %p243 = scmp.lt.s32.totalorder %s240, 1
          %s244 = scalar_select %p243, %s240, 1
          %s245 = smul.addr %s244, 2
          %s246 = smul.addr %s242, 4
          %s247 = sadd.s32 %s245, %s246
          %s248 = smul.addr %s247, 4
          %s249 = scalar_lea.vmem %s0, %s248
          %s250 = smul.u32 2, %s26
        $region32: #{tpu_custom_call.1} parent=27 // pred_fallthru
          _
        // Predicated region
        $region33: #{tpu_custom_call.1} parent=27 // pred_check
          %p251 = pneg %p80
        $region34: #{tpu_custom_call.1} parent=27 // pred_check_branch
          %253 = sbr.rel (%p251) target = $region36
        $region35: #{tpu_custom_call.1} parent=27 // pred_region
          %s254 = sand.u32 %s70, 1
          %s255 = scalar_lea.sflag [#allocation4], %s254
          %s256 = sand.u32 %s70, 1
          %s257 = smul.addr %s256, 16
          %s258 = scalar_lea.vmem [#allocation3], %s257
          %s259 = smul.u32 2, %s26
          %s261 = ssub.s32 256, 256
          %262 = vsyncadd %s255, %s261
          %s263 = smul.addr %s259, 2
          %s264 = smul.addr %s25, 4
          %s265 = sadd.s32 %s263, %s264
          %s266 = smul.addr %s265, 64
          %s267 = scalar_lea.hbm %s1, %s266
          %s268 = sshll.u32 %s258, 4
          %s269 = int_to_ptr.vmem [resolvable:$true] %s268
          %274 = dma.hbm_to_vmem [thread:$0]  %s267, 256, %s269, %s255, 64, 64, 4
        $region36: #{tpu_custom_call.1} parent=27 // pred_fallthru
          _
      $region28: #{tpu_custom_call.1} parent=5 // pred_fallthru
        _
      %p275 = scmp.le.s32.totalorder 1, %s18
      %p276 = scmp.lt.s32.totalorder %s18, 3
      %p277 = pnand %p275, %p276
      %p278 = pneg %p277
      // Predicated region
      $region37: #{tpu_custom_call.1} parent=5 // pred_check
        _
      $region38: #{tpu_custom_call.1} parent=5 // pred_check_branch
        %280 = sbr.rel (%p277) target = $region40
      $region39: #{tpu_custom_call.1} parent=5 // pred_region
        %s281 = ssub.s32 %s18, 1
        %s282 = sand.u32 %s73, 1
        %s283 = scalar_lea.sflag [#allocation4], %s282
        %s284 = sand.u32 %s73, 1
        %s285 = smul.addr %s284, 16
        %s286 = scalar_lea.vmem [#allocation3], %s285
        // Predicated region
        $region41: #{tpu_custom_call.1} parent=39 // pred_check
          %p287 = pneg %p86
        $region42: #{tpu_custom_call.1} parent=39 // pred_check_branch
          %289 = sbr.rel (%p287) target = $region44
        $region43: #{tpu_custom_call.1} parent=39 // pred_region
          %290 = dma.done %s283, 256
        $region44: #{tpu_custom_call.1} parent=39 // pred_fallthru
          _
        // Predicated region
        $region45: #{tpu_custom_call.1} parent=39 // pred_check
          %p291 = pneg %p107
        $region46: #{tpu_custom_call.1} parent=39 // pred_check_branch
          %293 = sbr.rel (%p291) target = $region48
        $region47: #{tpu_custom_call.1} parent=39 // pred_region
          %294 = dma.done [#allocation7], 2048
        $region48: #{tpu_custom_call.1} parent=39 // pred_fallthru
          _
        %s295 = smul.u32 2, %s28
        %p296 = scmp.lt.s32.totalorder %s27, 1
        %s297 = scalar_select %p296, %s27, 1
        %p298 = scmp.lt.s32.totalorder %s295, 1
        %s299 = scalar_select %p298, %s295, 1
        %s300 = smul.addr %s299, 2
        %s301 = smul.addr %s297, 4
        %s302 = sadd.s32 %s300, %s301
        %s303 = smul.addr %s302, 4
        %s304 = scalar_lea.vmem %s0, %s303
        %p305 = pneg %p58
        %p306 = pneg %p55
        %s307 = sand.u32 %s73, 1
        %s308 = scalar_lea.sflag [#allocation4], %s307
        %s309 = sand.u32 %s73, 1
        %s310 = smul.addr %s309, 16
        %s311 = scalar_lea.vmem [#allocation3], %s310
        %p312 = pneg %p86
        %p313 = pneg %p83
        %p314 = pneg %p107
        %p315 = pneg %p104
        %s316 = smul.u32 2, %s28
        %p317 = scmp.lt.s32.totalorder %s316, 1
        %s318 = scalar_select %p317, %s316, 1
        %s319 = smul.addr %s318, 2
        %s320 = smul.addr %s319, 8
        %s321 = scalar_lea.vmem %s3, %s320
        %p322 = pneg %p133
        %p323 = pneg %p130
        %s324 = smul.u32 2, %s28
        %p325 = scmp.lt.s32.totalorder %s324, 1
        %s326 = scalar_select %p325, %s324, 1
        %s327 = scalar_lea.vmem %s4, %s326
        %p328 = pneg %p159
        %p329 = pneg %p156
        %p330 = pneg %p187
        %p331 = pneg %p184
        %s332 = sand.u32 %s174, 1
        %s333 = scalar_lea.sflag [#allocation5], %s332
        %s334 = sand.u32 %s174, 1
        %s335 = smul.addr %s334, 32
        %s336 = scalar_lea.vmem [#allocation8], %s335
        %s337 = smul.u32 2, %s28
        %p338 = scmp.lt.s32.totalorder %s27, 1
        %s339 = scalar_select %p338, %s27, 1
        %p340 = scmp.lt.s32.totalorder %s337, 1
        %s341 = scalar_select %p340, %s337, 1
        %s342 = smul.addr %s341, 2
        %s343 = smul.addr %s339, 4
        %s344 = sadd.s32 %s342, %s343
        %s345 = smul.addr %s344, 4
        %s346 = scalar_lea.vmem %s0, %s345
        %s347 = smul.u32 2, %s28
        %s348 = smul.u32 2, %s28
        %s349 = smul.u32 2, %s28
        %p350 = scmp.lt.s32.totalorder %s349, 1
        %s351 = scalar_select %p350, %s349, 1
        %s352 = smul.addr %s351, 2
        %s353 = smul.addr %s352, 8
        %s354 = scalar_lea.vmem %s3, %s353
        %s355 = smul.u32 2, %s28
        %s356 = smul.u32 2, %s28
        %p357 = scmp.lt.s32.totalorder %s356, 1
        %s358 = scalar_select %p357, %s356, 1
        %s359 = scalar_lea.vmem %s4, %s358
        %s360 = smul.u32 2, %s28
        %s361 = smul.u32 2, %s28
        %v363 = vld [vmem:[#allocation6] sm:$0xff]
        %v364 = vld [vmem:[#allocation6 + $0x8] sm:$0xff]
        %v365 = vld [vmem:[#allocation6 + $0x10] sm:$0xff]
        %v366 = vld [vmem:[#allocation6 + $0x18] sm:$0xff]
        %v367 = vld [vmem:[#allocation6 + $0x20] sm:$0xff]
        %v368 = vld [vmem:[#allocation6 + $0x28] sm:$0xff]
        %v369 = vld [vmem:[#allocation6 + $0x30] sm:$0xff]
        %v370 = vld [vmem:[#allocation6 + $0x38] sm:$0xff]
        %v371 = vld [vmem:[#allocation6 + $0x40] sm:$0xff]
        %v372 = vld [vmem:[#allocation6 + $0x48] sm:$0xff]
        %v373 = vld [vmem:[#allocation6 + $0x50] sm:$0xff]
        %v374 = vld [vmem:[#allocation6 + $0x58] sm:$0xff]
        %v375 = vld [vmem:[#allocation6 + $0x60] sm:$0xff]
        %v376 = vld [vmem:[#allocation6 + $0x68] sm:$0xff]
        %v377 = vld [vmem:[#allocation6 + $0x70] sm:$0xff]
        %v378 = vld [vmem:[#allocation6 + $0x78] sm:$0xff]
        %v379 = vld [vmem:[%s346] sm:$0xf]
        %v380 = vld [vmem:[%s346 + $0x4] sm:$0xf]
        %v381 = vld [vmem:[%s346 + $0x8] sm:$0xf]
        %v382 = vld [vmem:[%s346 + $0xc] sm:$0xf]
        %v383 = vld [vmem:[%s286] sm:$0xf]
        %v384 = vld [vmem:[%s286 + $0x4] sm:$0xf]
        %v385 = vld [vmem:[%s286 + $0x8] sm:$0xf]
        %v386 = vld [vmem:[%s286 + $0xc] sm:$0xf]
        %v391 = vunpack.c.l.b16 %v379
        %v392 = vunpack.c.l.b16 %v380
        %v393 = vunpack.c.l.b16 %v381
        %v394 = vunpack.c.l.b16 %v382
        %v395 = vpack.c.b16 %v392, %v391
        %v396 = vpack.c.b16 %v394, %v393
        %v415 = vunpack.c.l.b16 %v363
        %v416 = vunpack.c.h.b16 %v363
        %v417 = vunpack.c.l.b16 %v364
        %v418 = vunpack.c.h.b16 %v364
        %v419 = vunpack.c.l.b16 %v365
        %v420 = vunpack.c.h.b16 %v365
        %v421 = vunpack.c.l.b16 %v366
        %v422 = vunpack.c.h.b16 %v366
        %v423 = vunpack.c.l.b16 %v367
        %v424 = vunpack.c.h.b16 %v367
        %v425 = vunpack.c.l.b16 %v368
        %v426 = vunpack.c.h.b16 %v368
        %v427 = vunpack.c.l.b16 %v369
        %v428 = vunpack.c.h.b16 %v369
        %v429 = vunpack.c.l.b16 %v370
        %v430 = vunpack.c.h.b16 %v370
        %v431 = vunpack.c.l.b16 %v371
        %v432 = vunpack.c.h.b16 %v371
        %v433 = vunpack.c.l.b16 %v372
        %v434 = vunpack.c.h.b16 %v372
        %v435 = vunpack.c.l.b16 %v373
        %v436 = vunpack.c.h.b16 %v373
        %v437 = vunpack.c.l.b16 %v374
        %v438 = vunpack.c.h.b16 %v374
        %v439 = vunpack.c.l.b16 %v375
        %v440 = vunpack.c.h.b16 %v375
        %v441 = vunpack.c.l.b16 %v376
        %v442 = vunpack.c.h.b16 %v376
        %v443 = vunpack.c.l.b16 %v377
        %v444 = vunpack.c.h.b16 %v377
        %v445 = vunpack.c.l.b16 %v378
        %v446 = vunpack.c.h.b16 %v378
        %v447 = vpack.c.b16 %v417, %v415
        %v448 = vpack.c.b16 %v418, %v416
        %v449 = vpack.c.b16 %v421, %v419
        %v450 = vpack.c.b16 %v422, %v420
        %v451 = vpack.c.b16 %v425, %v423
        %v452 = vpack.c.b16 %v426, %v424
        %v453 = vpack.c.b16 %v429, %v427
        %v454 = vpack.c.b16 %v430, %v428
        %v455 = vpack.c.b16 %v433, %v431
        %v456 = vpack.c.b16 %v434, %v432
        %v457 = vpack.c.b16 %v437, %v435
        %v458 = vpack.c.b16 %v438, %v436
        %v459 = vpack.c.b16 %v441, %v439
        %v460 = vpack.c.b16 %v442, %v440
        %v461 = vpack.c.b16 %v445, %v443
        %v462 = vpack.c.b16 %v446, %v444
        %479 = vmatprep.subr.bf16.mxu0 %v462
        %480 = vmatpush1.bf16.msra.mxu0 %v461
        %481 = vmatprep.subr.bf16.mxu0 %v460
        %482 = vmatpush1.bf16.msra.mxu0 %v459
        %483 = vmatprep.subr.bf16.mxu0 %v458
        %484 = vmatpush1.bf16.msra.mxu0 %v457
        %485 = vmatprep.subr.bf16.mxu0 %v456
        %486 = vmatpush1.bf16.msra.mxu0 %v455
        %487 = vmatprep.subr.bf16.mxu0 %v454
        %488 = vmatpush1.bf16.msra.mxu0 %v453
        %489 = vmatprep.subr.bf16.mxu0 %v452
        %490 = vmatpush1.bf16.msra.mxu0 %v451
        %491 = vmatprep.subr.bf16.mxu0 %v450
        %492 = vmatpush1.bf16.msra.mxu0 %v449
        %493 = vmatprep.subr.bf16.mxu0 %v448
        %494 = vmatpush1.bf16.msra.mxu0 %v447
        %495 = vmatprep.subr.bf16.mxu0 0
        %496 = vmatpush2.bf16.msra.mxu0 0
        %497 = vmatprep.subr.bf16.mxu0 0
        %498 = vmatpush2.bf16.msra.mxu0 0
        %499 = vmatprep.subr.bf16.mxu0 0
        %500 = vmatpush2.bf16.msra.mxu0 0
        %501 = vmatprep.subr.bf16.mxu0 0
        %502 = vmatpush2.bf16.msra.mxu0 0
        %503 = vmatprep.subr.bf16.mxu0 0
        %504 = vmatpush2.bf16.msra.mxu0 0
        %505 = vmatprep.subr.bf16.mxu0 0
        %506 = vmatpush2.bf16.msra.mxu0 0
        %507 = vmatprep.subr.bf16.mxu0 0
        %508 = vmatpush2.bf16.msra.mxu0 0
        %509 = vmatprep.subr.bf16.mxu0 0
        %510 = vmatpush2.bf16.msra.mxu0 0
        %511 = vmatprep.mubr.bf16.mxu0 0
        %512 = vmatmul.mubr.bf16.gmra.mxu0 %v395
        %v513 = vpop.f32.mrf.mxu0
        %v514 = vadd.f32 0.0, %v513
        %v515 = vpop.f32.mrf.mxu0
        %v516 = vadd.f32 0.0, %v515
        %v517 = vpop.f32.mrf.mxu0
        %v518 = vadd.f32 0.0, %v517
        %v519 = vpop.f32.mrf.mxu0
        %v520 = vadd.f32 0.0, %v519
        %521 = vmatprep.mubr.bf16.mxu0 0
        %522 = vmatmul.mubr.bf16.gmra.mxu0 %v396
        %v523 = vpop.f32.mrf.mxu0
        %v524 = vadd.f32 0.0, %v523
        %v525 = vpop.f32.mrf.mxu0
        %v526 = vadd.f32 0.0, %v525
        %v527 = vpop.f32.mrf.mxu0
        %v528 = vadd.f32 0.0, %v527
        %v529 = vpop.f32.mrf.mxu0
        %v530 = vadd.f32 0.0, %v529
        %531 = vdwg.mxu0
        %v536 = vunpack.c.l.b16 %v383
        %v537 = vunpack.c.l.b16 %v384
        %v538 = vunpack.c.l.b16 %v385
        %v539 = vunpack.c.l.b16 %v386
        %v540 = vpack.c.b16 %v537, %v536
        %v541 = vpack.c.b16 %v539, %v538
        %544 = vmatprep.subr.bf16.mxu0 %v462
        %545 = vmatpush1.bf16.msra.mxu0 %v461
        %546 = vmatprep.subr.bf16.mxu0 %v460
        %547 = vmatpush1.bf16.msra.mxu0 %v459
        %548 = vmatprep.subr.bf16.mxu0 %v458
        %549 = vmatpush1.bf16.msra.mxu0 %v457
        %550 = vmatprep.subr.bf16.mxu0 %v456
        %551 = vmatpush1.bf16.msra.mxu0 %v455
        %552 = vmatprep.subr.bf16.mxu0 %v454
        %553 = vmatpush1.bf16.msra.mxu0 %v453
        %554 = vmatprep.subr.bf16.mxu0 %v452
        %555 = vmatpush1.bf16.msra.mxu0 %v451
        %556 = vmatprep.subr.bf16.mxu0 %v450
        %557 = vmatpush1.bf16.msra.mxu0 %v449
        %558 = vmatprep.subr.bf16.mxu0 %v448
        %559 = vmatpush1.bf16.msra.mxu0 %v447
        %560 = vmatprep.subr.bf16.mxu0 0
        %561 = vmatpush2.bf16.msra.mxu0 0
        %562 = vmatprep.subr.bf16.mxu0 0
        %563 = vmatpush2.bf16.msra.mxu0 0
        %564 = vmatprep.subr.bf16.mxu0 0
        %565 = vmatpush2.bf16.msra.mxu0 0
        %566 = vmatprep.subr.bf16.mxu0 0
        %567 = vmatpush2.bf16.msra.mxu0 0
        %568 = vmatprep.subr.bf16.mxu0 0
        %569 = vmatpush2.bf16.msra.mxu0 0
        %570 = vmatprep.subr.bf16.mxu0 0
        %571 = vmatpush2.bf16.msra.mxu0 0
        %572 = vmatprep.subr.bf16.mxu0 0
        %573 = vmatpush2.bf16.msra.mxu0 0
        %574 = vmatprep.subr.bf16.mxu0 0
        %575 = vmatpush2.bf16.msra.mxu0 0
        %576 = vmatprep.mubr.bf16.mxu0 0
        %577 = vmatmul.mubr.bf16.gmra.mxu0 %v540
        %v578 = vpop.f32.mrf.mxu0
        %v579 = vadd.f32 0.0, %v578
        %v580 = vpop.f32.mrf.mxu0
        %v581 = vadd.f32 0.0, %v580
        %v582 = vpop.f32.mrf.mxu0
        %v583 = vadd.f32 0.0, %v582
        %v584 = vpop.f32.mrf.mxu0
        %v585 = vadd.f32 0.0, %v584
        %586 = vmatprep.mubr.bf16.mxu0 0
        %587 = vmatmul.mubr.bf16.gmra.mxu0 %v541
        %v588 = vpop.f32.mrf.mxu0
        %v589 = vadd.f32 0.0, %v588
        %v590 = vpop.f32.mrf.mxu0
        %v591 = vadd.f32 0.0, %v590
        %v592 = vpop.f32.mrf.mxu0
        %v593 = vadd.f32 0.0, %v592
        %v594 = vpop.f32.mrf.mxu0
        %v595 = vadd.f32 0.0, %v594
        %596 = vdwg.mxu0
        %vm597 = vcmp.gt.f32.partialorder %v514, 0.0
        %vm598 = vcmp.gt.f32.partialorder %v516, 0.0
        %vm599 = vcmp.gt.f32.partialorder %v518, 0.0
        %vm600 = vcmp.gt.f32.partialorder %v520, 0.0
        %vm601 = vcmp.gt.f32.partialorder %v524, 0.0
        %vm602 = vcmp.gt.f32.partialorder %v526, 0.0
        %vm603 = vcmp.gt.f32.partialorder %v528, 0.0
        %vm604 = vcmp.gt.f32.partialorder %v530, 0.0
        %v605 = vsel %vm597, 1, 0
        %v606 = vsel %vm598, 1, 0
        %v607 = vsel %vm599, 1, 0
        %v608 = vsel %vm600, 1, 0
        %v609 = vsel %vm601, 1, 0
        %v610 = vsel %vm602, 1, 0
        %v611 = vsel %vm603, 1, 0
        %v612 = vsel %vm604, 1, 0
        %v613 = vcvt.s32.f32 %v605
        %v614 = vcvt.s32.f32 %v606
        %v615 = vcvt.s32.f32 %v607
        %v616 = vcvt.s32.f32 %v608
        %v617 = vcvt.s32.f32 %v609
        %v618 = vcvt.s32.f32 %v610
        %v619 = vcvt.s32.f32 %v611
        %v620 = vcvt.s32.f32 %v612
        %v621 = vpack.c.bf16 %v615, %v613
        %v622 = vpack.c.bf16 %v616, %v614
        %v623 = vpack.c.bf16 %v619, %v617
        %v624 = vpack.c.bf16 %v620, %v618
        %vm625 = vcmp.gt.f32.partialorder %v579, 0.0
        %vm626 = vcmp.gt.f32.partialorder %v581, 0.0
        %vm627 = vcmp.gt.f32.partialorder %v583, 0.0
        %vm628 = vcmp.gt.f32.partialorder %v585, 0.0
        %vm629 = vcmp.gt.f32.partialorder %v589, 0.0
        %vm630 = vcmp.gt.f32.partialorder %v591, 0.0
        %vm631 = vcmp.gt.f32.partialorder %v593, 0.0
        %vm632 = vcmp.gt.f32.partialorder %v595, 0.0
        %v633 = vsel %vm625, 1, 0
        %v634 = vsel %vm626, 1, 0
        %v635 = vsel %vm627, 1, 0
        %v636 = vsel %vm628, 1, 0
        %v637 = vsel %vm629, 1, 0
        %v638 = vsel %vm630, 1, 0
        %v639 = vsel %vm631, 1, 0
        %v640 = vsel %vm632, 1, 0
        %v641 = vcvt.s32.f32 %v633
        %v642 = vcvt.s32.f32 %v634
        %v643 = vcvt.s32.f32 %v635
        %v644 = vcvt.s32.f32 %v636
        %v645 = vcvt.s32.f32 %v637
        %v646 = vcvt.s32.f32 %v638
        %v647 = vcvt.s32.f32 %v639
        %v648 = vcvt.s32.f32 %v640
        %v649 = vpack.c.bf16 %v643, %v641
        %v650 = vpack.c.bf16 %v644, %v642
        %v651 = vpack.c.bf16 %v647, %v645
        %v652 = vpack.c.bf16 %v648, %v646
        %v657 = vunpack.c.l.b16 %v649
        %v658 = vunpack.c.l.b16 %v650
        %v659 = vunpack.c.h.b16 %v649
        %v660 = vunpack.c.h.b16 %v650
        %v661 = vunpack.c.l.b16 %v651
        %v662 = vunpack.c.l.b16 %v652
        %v663 = vunpack.c.h.b16 %v651
        %v664 = vunpack.c.h.b16 %v652
        %v665 = vpack.c.b16 %v658, %v657
        %v666 = vpack.c.b16 %v660, %v659
        %v667 = vpack.c.b16 %v662, %v661
        %v668 = vpack.c.b16 %v664, %v663
        %673 = vst [vmem:[#allocation2] sm:$0xff] %v665
        %674 = vst [vmem:[#allocation2 + $0x8] sm:$0xff] %v666
        %675 = vst [vmem:[#allocation2 + $0x80] sm:$0xff] %v667
        %676 = vst [vmem:[#allocation2 + $0x88] sm:$0xff] %v668
        %677 = vst [vmem:[#allocation2 + $0x10] sm:$0xff] 0
        %678 = vst [vmem:[#allocation2 + $0x18] sm:$0xff] 0
        %679 = vst [vmem:[#allocation2 + $0x20] sm:$0xff] 0
        %680 = vst [vmem:[#allocation2 + $0x28] sm:$0xff] 0
        %681 = vst [vmem:[#allocation2 + $0x30] sm:$0xff] 0
        %682 = vst [vmem:[#allocation2 + $0x38] sm:$0xff] 0
        %683 = vst [vmem:[#allocation2 + $0x40] sm:$0xff] 0
        %684 = vst [vmem:[#allocation2 + $0x48] sm:$0xff] 0
        %685 = vst [vmem:[#allocation2 + $0x50] sm:$0xff] 0
        %686 = vst [vmem:[#allocation2 + $0x58] sm:$0xff] 0
        %687 = vst [vmem:[#allocation2 + $0x60] sm:$0xff] 0
        %688 = vst [vmem:[#allocation2 + $0x68] sm:$0xff] 0
        %689 = vst [vmem:[#allocation2 + $0x70] sm:$0xff] 0
        %690 = vst [vmem:[#allocation2 + $0x78] sm:$0xff] 0
        %691 = vst [vmem:[#allocation2 + $0x90] sm:$0xff] 0
        %692 = vst [vmem:[#allocation2 + $0x98] sm:$0xff] 0
        %693 = vst [vmem:[#allocation2 + $0xa0] sm:$0xff] 0
        %694 = vst [vmem:[#allocation2 + $0xa8] sm:$0xff] 0
        %695 = vst [vmem:[#allocation2 + $0xb0] sm:$0xff] 0
        %696 = vst [vmem:[#allocation2 + $0xb8] sm:$0xff] 0
        %697 = vst [vmem:[#allocation2 + $0xc0] sm:$0xff] 0
        %698 = vst [vmem:[#allocation2 + $0xc8] sm:$0xff] 0
        %699 = vst [vmem:[#allocation2 + $0xd0] sm:$0xff] 0
        %700 = vst [vmem:[#allocation2 + $0xd8] sm:$0xff] 0
        %701 = vst [vmem:[#allocation2 + $0xe0] sm:$0xff] 0
        %702 = vst [vmem:[#allocation2 + $0xe8] sm:$0xff] 0
        %703 = vst [vmem:[#allocation2 + $0xf0] sm:$0xff] 0
        %704 = vst [vmem:[#allocation2 + $0xf8] sm:$0xff] 0
        %v705 = vld [vmem:[#allocation2] sm:$0xff]
        %v706 = vld [vmem:[#allocation2 + $0x8] sm:$0xff]
        %v707 = vld [vmem:[#allocation2 + $0x10] sm:$0xff]
        %v708 = vld [vmem:[#allocation2 + $0x18] sm:$0xff]
        %v709 = vld [vmem:[#allocation2 + $0x20] sm:$0xff]
        %v710 = vld [vmem:[#allocation2 + $0x28] sm:$0xff]
        %v711 = vld [vmem:[#allocation2 + $0x30] sm:$0xff]
        %v712 = vld [vmem:[#allocation2 + $0x38] sm:$0xff]
        %v713 = vld [vmem:[#allocation2 + $0x40] sm:$0xff]
        %v714 = vld [vmem:[#allocation2 + $0x48] sm:$0xff]
        %v715 = vld [vmem:[#allocation2 + $0x50] sm:$0xff]
        %v716 = vld [vmem:[#allocation2 + $0x58] sm:$0xff]
        %v717 = vld [vmem:[#allocation2 + $0x60] sm:$0xff]
        %v718 = vld [vmem:[#allocation2 + $0x68] sm:$0xff]
        %v719 = vld [vmem:[#allocation2 + $0x70] sm:$0xff]
        %v720 = vld [vmem:[#allocation2 + $0x78] sm:$0xff]
        %v721 = vld [vmem:[#allocation2 + $0x80] sm:$0xff]
        %v722 = vld [vmem:[#allocation2 + $0x88] sm:$0xff]
        %v723 = vld [vmem:[#allocation2 + $0x90] sm:$0xff]
        %v724 = vld [vmem:[#allocation2 + $0x98] sm:$0xff]
        %v725 = vld [vmem:[#allocation2 + $0xa0] sm:$0xff]
        %v726 = vld [vmem:[#allocation2 + $0xa8] sm:$0xff]
        %v727 = vld [vmem:[#allocation2 + $0xb0] sm:$0xff]
        %v728 = vld [vmem:[#allocation2 + $0xb8] sm:$0xff]
        %v729 = vld [vmem:[#allocation2 + $0xc0] sm:$0xff]
        %v730 = vld [vmem:[#allocation2 + $0xc8] sm:$0xff]
        %v731 = vld [vmem:[#allocation2 + $0xd0] sm:$0xff]
        %v732 = vld [vmem:[#allocation2 + $0xd8] sm:$0xff]
        %v733 = vld [vmem:[#allocation2 + $0xe0] sm:$0xff]
        %v734 = vld [vmem:[#allocation2 + $0xe8] sm:$0xff]
        %v735 = vld [vmem:[#allocation2 + $0xf0] sm:$0xff]
        %v736 = vld [vmem:[#allocation2 + $0xf8] sm:$0xff]
        %v753 = vunpack.c.l.b16 %v705
        %v754 = vunpack.c.h.b16 %v705
        %v755 = vunpack.c.l.b16 %v706
        %v756 = vunpack.c.h.b16 %v706
        %v757 = vunpack.c.l.b16 %v707
        %v758 = vunpack.c.h.b16 %v707
        %v759 = vunpack.c.l.b16 %v708
        %v760 = vunpack.c.h.b16 %v708
        %v761 = vunpack.c.l.b16 %v709
        %v762 = vunpack.c.h.b16 %v709
        %v763 = vunpack.c.l.b16 %v710
        %v764 = vunpack.c.h.b16 %v710
        %v765 = vunpack.c.l.b16 %v711
        %v766 = vunpack.c.h.b16 %v711
        %v767 = vunpack.c.l.b16 %v712
        %v768 = vunpack.c.h.b16 %v712
        %v769 = vunpack.c.l.b16 %v713
        %v770 = vunpack.c.h.b16 %v713
        %v771 = vunpack.c.l.b16 %v714
        %v772 = vunpack.c.h.b16 %v714
        %v773 = vunpack.c.l.b16 %v715
        %v774 = vunpack.c.h.b16 %v715
        %v775 = vunpack.c.l.b16 %v716
        %v776 = vunpack.c.h.b16 %v716
        %v777 = vunpack.c.l.b16 %v717
        %v778 = vunpack.c.h.b16 %v717
        %v779 = vunpack.c.l.b16 %v718
        %v780 = vunpack.c.h.b16 %v718
        %v781 = vunpack.c.l.b16 %v719
        %v782 = vunpack.c.h.b16 %v719
        %v783 = vunpack.c.l.b16 %v720
        %v784 = vunpack.c.h.b16 %v720
        %v785 = vpack.c.b16 %v755, %v753
        %v786 = vpack.c.b16 %v756, %v754
        %v787 = vpack.c.b16 %v759, %v757
        %v788 = vpack.c.b16 %v760, %v758
        %v789 = vpack.c.b16 %v763, %v761
        %v790 = vpack.c.b16 %v764, %v762
        %v791 = vpack.c.b16 %v767, %v765
        %v792 = vpack.c.b16 %v768, %v766
        %v793 = vpack.c.b16 %v771, %v769
        %v794 = vpack.c.b16 %v772, %v770
        %v795 = vpack.c.b16 %v775, %v773
        %v796 = vpack.c.b16 %v776, %v774
        %v797 = vpack.c.b16 %v779, %v777
        %v798 = vpack.c.b16 %v780, %v778
        %v799 = vpack.c.b16 %v783, %v781
        %v800 = vpack.c.b16 %v784, %v782
        %817 = vmatprep.subr.bf16.mxu0 %v800
        %818 = vmatpush1.bf16.xpose.msra.mxu0 %v799
        %819 = vmatprep.subr.bf16.mxu0 %v798
        %820 = vmatpush1.bf16.xpose.msra.mxu0 %v797
        %821 = vmatprep.subr.bf16.mxu0 %v796
        %822 = vmatpush1.bf16.xpose.msra.mxu0 %v795
        %823 = vmatprep.subr.bf16.mxu0 %v794
        %824 = vmatpush1.bf16.xpose.msra.mxu0 %v793
        %825 = vmatprep.subr.bf16.mxu0 %v792
        %826 = vmatpush1.bf16.xpose.msra.mxu0 %v791
        %827 = vmatprep.subr.bf16.mxu0 %v790
        %828 = vmatpush1.bf16.xpose.msra.mxu0 %v789
        %829 = vmatprep.subr.bf16.mxu0 %v788
        %830 = vmatpush1.bf16.xpose.msra.mxu0 %v787
        %831 = vmatprep.subr.bf16.mxu0 %v786
        %832 = vmatpush1.bf16.xpose.msra.mxu0 %v785
        %833 = vmatprep.subr.bf16.mxu0 0
        %834 = vmatpush2.bf16.xpose.msra.mxu0 0
        %835 = vmatprep.subr.bf16.mxu0 0
        %836 = vmatpush2.bf16.xpose.msra.mxu0 0
        %837 = vmatprep.subr.bf16.mxu0 0
        %838 = vmatpush2.bf16.xpose.msra.mxu0 0
        %839 = vmatprep.subr.bf16.mxu0 0
        %840 = vmatpush2.bf16.xpose.msra.mxu0 0
        %841 = vmatprep.subr.bf16.mxu0 0
        %842 = vmatpush2.bf16.xpose.msra.mxu0 0
        %843 = vmatprep.subr.bf16.mxu0 0
        %844 = vmatpush2.bf16.xpose.msra.mxu0 0
        %845 = vmatprep.subr.bf16.mxu0 0
        %846 = vmatpush2.bf16.xpose.msra.mxu0 0
        %847 = vmatprep.subr.bf16.mxu0 0
        %848 = vmatpush2.bf16.xpose.msra.mxu0 0
        %849 = vmatprep.mubr.bf16.mxu0 %v622
        %850 = vmatmul.mubr.bf16.gmra.mxu0 %v621
        %v851 = vpop.f32.mrf.mxu0
        %v852 = vadd.f32 0.0, %v851
        %v853 = vpop.f32.mrf.mxu0
        %v854 = vpop.f32.mrf.mxu0
        %v855 = vadd.f32 0.0, %v854
        %v856 = vpop.f32.mrf.mxu0
        %857 = vdwg.mxu0
        %v874 = vunpack.c.l.b16 %v721
        %v875 = vunpack.c.h.b16 %v721
        %v876 = vunpack.c.l.b16 %v722
        %v877 = vunpack.c.h.b16 %v722
        %v878 = vunpack.c.l.b16 %v723
        %v879 = vunpack.c.h.b16 %v723
        %v880 = vunpack.c.l.b16 %v724
        %v881 = vunpack.c.h.b16 %v724
        %v882 = vunpack.c.l.b16 %v725
        %v883 = vunpack.c.h.b16 %v725
        %v884 = vunpack.c.l.b16 %v726
        %v885 = vunpack.c.h.b16 %v726
        %v886 = vunpack.c.l.b16 %v727
        %v887 = vunpack.c.h.b16 %v727
        %v888 = vunpack.c.l.b16 %v728
        %v889 = vunpack.c.h.b16 %v728
        %v890 = vunpack.c.l.b16 %v729
        %v891 = vunpack.c.h.b16 %v729
        %v892 = vunpack.c.l.b16 %v730
        %v893 = vunpack.c.h.b16 %v730
        %v894 = vunpack.c.l.b16 %v731
        %v895 = vunpack.c.h.b16 %v731
        %v896 = vunpack.c.l.b16 %v732
        %v897 = vunpack.c.h.b16 %v732
        %v898 = vunpack.c.l.b16 %v733
        %v899 = vunpack.c.h.b16 %v733
        %v900 = vunpack.c.l.b16 %v734
        %v901 = vunpack.c.h.b16 %v734
        %v902 = vunpack.c.l.b16 %v735
        %v903 = vunpack.c.h.b16 %v735
        %v904 = vunpack.c.l.b16 %v736
        %v905 = vunpack.c.h.b16 %v736
        %v906 = vpack.c.b16 %v876, %v874
        %v907 = vpack.c.b16 %v877, %v875
        %v908 = vpack.c.b16 %v880, %v878
        %v909 = vpack.c.b16 %v881, %v879
        %v910 = vpack.c.b16 %v884, %v882
        %v911 = vpack.c.b16 %v885, %v883
        %v912 = vpack.c.b16 %v888, %v886
        %v913 = vpack.c.b16 %v889, %v887
        %v914 = vpack.c.b16 %v892, %v890
        %v915 = vpack.c.b16 %v893, %v891
        %v916 = vpack.c.b16 %v896, %v894
        %v917 = vpack.c.b16 %v897, %v895
        %v918 = vpack.c.b16 %v900, %v898
        %v919 = vpack.c.b16 %v901, %v899
        %v920 = vpack.c.b16 %v904, %v902
        %v921 = vpack.c.b16 %v905, %v903
        %938 = vmatprep.subr.bf16.mxu0 %v921
        %939 = vmatpush1.bf16.xpose.msra.mxu0 %v920
        %940 = vmatprep.subr.bf16.mxu0 %v919
        %941 = vmatpush1.bf16.xpose.msra.mxu0 %v918
        %942 = vmatprep.subr.bf16.mxu0 %v917
        %943 = vmatpush1.bf16.xpose.msra.mxu0 %v916
        %944 = vmatprep.subr.bf16.mxu0 %v915
        %945 = vmatpush1.bf16.xpose.msra.mxu0 %v914
        %946 = vmatprep.subr.bf16.mxu0 %v913
        %947 = vmatpush1.bf16.xpose.msra.mxu0 %v912
        %948 = vmatprep.subr.bf16.mxu0 %v911
        %949 = vmatpush1.bf16.xpose.msra.mxu0 %v910
        %950 = vmatprep.subr.bf16.mxu0 %v909
        %951 = vmatpush1.bf16.xpose.msra.mxu0 %v908
        %952 = vmatprep.subr.bf16.mxu0 %v907
        %953 = vmatpush1.bf16.xpose.msra.mxu0 %v906
        %954 = vmatprep.subr.bf16.mxu0 0
        %955 = vmatpush2.bf16.xpose.msra.mxu0 0
        %956 = vmatprep.subr.bf16.mxu0 0
        %957 = vmatpush2.bf16.xpose.msra.mxu0 0
        %958 = vmatprep.subr.bf16.mxu0 0
        %959 = vmatpush2.bf16.xpose.msra.mxu0 0
        %960 = vmatprep.subr.bf16.mxu0 0
        %961 = vmatpush2.bf16.xpose.msra.mxu0 0
        %962 = vmatprep.subr.bf16.mxu0 0
        %963 = vmatpush2.bf16.xpose.msra.mxu0 0
        %964 = vmatprep.subr.bf16.mxu0 0
        %965 = vmatpush2.bf16.xpose.msra.mxu0 0
        %966 = vmatprep.subr.bf16.mxu0 0
        %967 = vmatpush2.bf16.xpose.msra.mxu0 0
        %968 = vmatprep.subr.bf16.mxu0 0
        %969 = vmatpush2.bf16.xpose.msra.mxu0 0
        %970 = vmatprep.mubr.bf16.mxu0 %v624
        %971 = vmatmul.mubr.bf16.gmra.mxu0 %v623
        %v972 = vpop.f32.mrf.mxu0
        %v973 = vadd.f32 0.0, %v972
        %v974 = vpop.f32.mrf.mxu0
        %v975 = vpop.f32.mrf.mxu0
        %v976 = vadd.f32 0.0, %v975
        %v977 = vpop.f32.mrf.mxu0
        %978 = vdwg.mxu0
        %v979 = vunpack.c.l.bf16 %v621
        %v980 = vunpack.c.l.bf16 %v622
        %v981 = vunpack.c.h.bf16 %v621
        %v982 = vunpack.c.h.bf16 %v622
        %v983 = vunpack.c.l.bf16 %v623
        %v984 = vunpack.c.l.bf16 %v624
        %v985 = vunpack.c.h.bf16 %v623
        %v986 = vunpack.c.h.bf16 %v624
        %v987 = vadd.f32 %v979, %v980
        %988 = vadd.xlane.f32.xlu0 %v987
        %v989 = vpop.xlane.xlu0 %988
        %v990 = vadd.f32 %v981, %v982
        %991 = vadd.xlane.f32.xlu0 %v990
        %v992 = vpop.xlane.xlu0 %991
        %v993 = vadd.f32 %v983, %v984
        %994 = vadd.xlane.f32.xlu0 %v993
        %v995 = vpop.xlane.xlu0 %994
        %v996 = vadd.f32 %v985, %v986
        %997 = vadd.xlane.f32.xlu0 %v996
        %v998 = vpop.xlane.xlu0 %997
        %v999 = vmul.f32 %v989, 0.012271847
        %v1000 = vmul.f32 %v992, 0.012271847
        %v1001 = vmul.f32 %v995, 0.012271847
        %v1002 = vmul.f32 %v998, 0.012271847
        %v1003 = vunpack.c.l.bf16 %v705
        %v1004 = vunpack.c.h.bf16 %v705
        %v1005 = vunpack.c.l.bf16 %v706
        %v1006 = vunpack.c.h.bf16 %v706
        %v1007 = vunpack.c.l.bf16 %v707
        %v1008 = vunpack.c.h.bf16 %v707
        %v1009 = vunpack.c.l.bf16 %v708
        %v1010 = vunpack.c.h.bf16 %v708
        %v1011 = vunpack.c.l.bf16 %v709
        %v1012 = vunpack.c.h.bf16 %v709
        %v1013 = vunpack.c.l.bf16 %v710
        %v1014 = vunpack.c.h.bf16 %v710
        %v1015 = vunpack.c.l.bf16 %v711
        %v1016 = vunpack.c.h.bf16 %v711
        %v1017 = vunpack.c.l.bf16 %v712
        %v1018 = vunpack.c.h.bf16 %v712
        %v1019 = vunpack.c.l.bf16 %v713
        %v1020 = vunpack.c.h.bf16 %v713
        %v1021 = vunpack.c.l.bf16 %v714
        %v1022 = vunpack.c.h.bf16 %v714
        %v1023 = vunpack.c.l.bf16 %v715
        %v1024 = vunpack.c.h.bf16 %v715
        %v1025 = vunpack.c.l.bf16 %v716
        %v1026 = vunpack.c.h.bf16 %v716
        %v1027 = vunpack.c.l.bf16 %v717
        %v1028 = vunpack.c.h.bf16 %v717
        %v1029 = vunpack.c.l.bf16 %v718
        %v1030 = vunpack.c.h.bf16 %v718
        %v1031 = vunpack.c.l.bf16 %v719
        %v1032 = vunpack.c.h.bf16 %v719
        %v1033 = vunpack.c.l.bf16 %v720
        %v1034 = vunpack.c.h.bf16 %v720
        %v1035 = vunpack.c.l.bf16 %v721
        %v1036 = vunpack.c.h.bf16 %v721
        %v1037 = vunpack.c.l.bf16 %v722
        %v1038 = vunpack.c.h.bf16 %v722
        %v1039 = vunpack.c.l.bf16 %v723
        %v1040 = vunpack.c.h.bf16 %v723
        %v1041 = vunpack.c.l.bf16 %v724
        %v1042 = vunpack.c.h.bf16 %v724
        %v1043 = vunpack.c.l.bf16 %v725
        %v1044 = vunpack.c.h.bf16 %v725
        %v1045 = vunpack.c.l.bf16 %v726
        %v1046 = vunpack.c.h.bf16 %v726
        %v1047 = vunpack.c.l.bf16 %v727
        %v1048 = vunpack.c.h.bf16 %v727
        %v1049 = vunpack.c.l.bf16 %v728
        %v1050 = vunpack.c.h.bf16 %v728
        %v1051 = vunpack.c.l.bf16 %v729
        %v1052 = vunpack.c.h.bf16 %v729
        %v1053 = vunpack.c.l.bf16 %v730
        %v1054 = vunpack.c.h.bf16 %v730
        %v1055 = vunpack.c.l.bf16 %v731
        %v1056 = vunpack.c.h.bf16 %v731
        %v1057 = vunpack.c.l.bf16 %v732
        %v1058 = vunpack.c.h.bf16 %v732
        %v1059 = vunpack.c.l.bf16 %v733
        %v1060 = vunpack.c.h.bf16 %v733
        %v1061 = vunpack.c.l.bf16 %v734
        %v1062 = vunpack.c.h.bf16 %v734
        %v1063 = vunpack.c.l.bf16 %v735
        %v1064 = vunpack.c.h.bf16 %v735
        %v1065 = vunpack.c.l.bf16 %v736
        %v1066 = vunpack.c.h.bf16 %v736
        %v1067 = vadd.f32 %v1003, %v1004
        %1068 = vadd.xlane.f32.xlu0 %v1067
        %v1069 = vpop.xlane.xlu0 %1068
        %v1070 = vadd.f32 %v1005, %v1006
        %1071 = vadd.xlane.f32.xlu0 %v1070
        %v1072 = vpop.xlane.xlu0 %1071
        %v1073 = vadd.f32 %v1007, %v1008
        %1074 = vadd.xlane.f32.xlu0 %v1073
        %v1075 = vpop.xlane.xlu0 %1074
        %v1076 = vadd.f32 %v1009, %v1010
        %1077 = vadd.xlane.f32.xlu0 %v1076
        %v1078 = vpop.xlane.xlu0 %1077
        %v1079 = vadd.f32 %v1011, %v1012
        %1080 = vadd.xlane.f32.xlu0 %v1079
        %v1081 = vpop.xlane.xlu0 %1080
        %v1082 = vadd.f32 %v1013, %v1014
        %1083 = vadd.xlane.f32.xlu0 %v1082
        %v1084 = vpop.xlane.xlu0 %1083
        %v1085 = vadd.f32 %v1015, %v1016
        %1086 = vadd.xlane.f32.xlu0 %v1085
        %v1087 = vpop.xlane.xlu0 %1086
        %v1088 = vadd.f32 %v1017, %v1018
        %1089 = vadd.xlane.f32.xlu0 %v1088
        %v1090 = vpop.xlane.xlu0 %1089
        %v1091 = vadd.f32 %v1019, %v1020
        %1092 = vadd.xlane.f32.xlu0 %v1091
        %v1093 = vpop.xlane.xlu0 %1092
        %v1094 = vadd.f32 %v1021, %v1022
        %1095 = vadd.xlane.f32.xlu0 %v1094
        %v1096 = vpop.xlane.xlu0 %1095
        %v1097 = vadd.f32 %v1023, %v1024
        %1098 = vadd.xlane.f32.xlu0 %v1097
        %v1099 = vpop.xlane.xlu0 %1098
        %v1100 = vadd.f32 %v1025, %v1026
        %1101 = vadd.xlane.f32.xlu0 %v1100
        %v1102 = vpop.xlane.xlu0 %1101
        %v1103 = vadd.f32 %v1027, %v1028
        %1104 = vadd.xlane.f32.xlu0 %v1103
        %v1105 = vpop.xlane.xlu0 %1104
        %v1106 = vadd.f32 %v1029, %v1030
        %1107 = vadd.xlane.f32.xlu0 %v1106
        %v1108 = vpop.xlane.xlu0 %1107
        %v1109 = vadd.f32 %v1031, %v1032
        %1110 = vadd.xlane.f32.xlu0 %v1109
        %v1111 = vpop.xlane.xlu0 %1110
        %v1112 = vadd.f32 %v1033, %v1034
        %1113 = vadd.xlane.f32.xlu0 %v1112
        %v1114 = vpop.xlane.xlu0 %1113
        %v1115 = vadd.f32 %v1035, %v1036
        %1116 = vadd.xlane.f32.xlu0 %v1115
        %v1117 = vpop.xlane.xlu0 %1116
        %v1118 = vadd.f32 %v1037, %v1038
        %1119 = vadd.xlane.f32.xlu0 %v1118
        %v1120 = vpop.xlane.xlu0 %1119
        %v1121 = vadd.f32 %v1039, %v1040
        %1122 = vadd.xlane.f32.xlu0 %v1121
        %v1123 = vpop.xlane.xlu0 %1122
        %v1124 = vadd.f32 %v1041, %v1042
        %1125 = vadd.xlane.f32.xlu0 %v1124
        %v1126 = vpop.xlane.xlu0 %1125
        %v1127 = vadd.f32 %v1043, %v1044
        %1128 = vadd.xlane.f32.xlu0 %v1127
        %v1129 = vpop.xlane.xlu0 %1128
        %v1130 = vadd.f32 %v1045, %v1046
        %1131 = vadd.xlane.f32.xlu0 %v1130
        %v1132 = vpop.xlane.xlu0 %1131
        %v1133 = vadd.f32 %v1047, %v1048
        %1134 = vadd.xlane.f32.xlu0 %v1133
        %v1135 = vpop.xlane.xlu0 %1134
        %v1136 = vadd.f32 %v1049, %v1050
        %1137 = vadd.xlane.f32.xlu0 %v1136
        %v1138 = vpop.xlane.xlu0 %1137
        %v1139 = vadd.f32 %v1051, %v1052
        %1140 = vadd.xlane.f32.xlu0 %v1139
        %v1141 = vpop.xlane.xlu0 %1140
        %v1142 = vadd.f32 %v1053, %v1054
        %1143 = vadd.xlane.f32.xlu0 %v1142
        %v1144 = vpop.xlane.xlu0 %1143
        %v1145 = vadd.f32 %v1055, %v1056
        %1146 = vadd.xlane.f32.xlu0 %v1145
        %v1147 = vpop.xlane.xlu0 %1146
        %v1148 = vadd.f32 %v1057, %v1058
        %1149 = vadd.xlane.f32.xlu0 %v1148
        %v1150 = vpop.xlane.xlu0 %1149
        %v1151 = vadd.f32 %v1059, %v1060
        %1152 = vadd.xlane.f32.xlu0 %v1151
        %v1153 = vpop.xlane.xlu0 %1152
        %v1154 = vadd.f32 %v1061, %v1062
        %1155 = vadd.xlane.f32.xlu0 %v1154
        %v1156 = vpop.xlane.xlu0 %1155
        %v1157 = vadd.f32 %v1063, %v1064
        %1158 = vadd.xlane.f32.xlu0 %v1157
        %v1159 = vpop.xlane.xlu0 %1158
        %v1160 = vadd.f32 %v1065, %v1066
        %1161 = vadd.xlane.f32.xlu0 %v1160
        %v1162 = vpop.xlane.xlu0 %1161
        %v1163 = vmul.f32 %v1069, 0.012271847
        %v1164 = vmul.f32 %v1072, 0.012271847
        %v1165 = vmul.f32 %v1075, 0.012271847
        %v1166 = vmul.f32 %v1078, 0.012271847
        %v1167 = vmul.f32 %v1081, 0.012271847
        %v1168 = vmul.f32 %v1084, 0.012271847
        %v1169 = vmul.f32 %v1087, 0.012271847
        %v1170 = vmul.f32 %v1090, 0.012271847
        %v1171 = vmul.f32 %v1093, 0.012271847
        %v1172 = vmul.f32 %v1096, 0.012271847
        %v1173 = vmul.f32 %v1099, 0.012271847
        %v1174 = vmul.f32 %v1102, 0.012271847
        %v1175 = vmul.f32 %v1105, 0.012271847
        %v1176 = vmul.f32 %v1108, 0.012271847
        %v1177 = vmul.f32 %v1111, 0.012271847
        %v1178 = vmul.f32 %v1114, 0.012271847
        %v1179 = vmul.f32 %v1117, 0.012271847
        %v1180 = vmul.f32 %v1120, 0.012271847
        %v1181 = vmul.f32 %v1123, 0.012271847
        %v1182 = vmul.f32 %v1126, 0.012271847
        %v1183 = vmul.f32 %v1129, 0.012271847
        %v1184 = vmul.f32 %v1132, 0.012271847
        %v1185 = vmul.f32 %v1135, 0.012271847
        %v1186 = vmul.f32 %v1138, 0.012271847
        %v1187 = vmul.f32 %v1141, 0.012271847
        %v1188 = vmul.f32 %v1144, 0.012271847
        %v1189 = vmul.f32 %v1147, 0.012271847
        %v1190 = vmul.f32 %v1150, 0.012271847
        %v1191 = vmul.f32 %v1153, 0.012271847
        %v1192 = vmul.f32 %v1156, 0.012271847
        %v1193 = vmul.f32 %v1159, 0.012271847
        %v1194 = vmul.f32 %v1162, 0.012271847
        %v1195 = vmul.f32 %v852, 0.024543693
        %v1196 = vmul.f32 %v855, 0.024543693
        %v1197 = vmul.f32 %v973, 0.024543693
        %v1198 = vmul.f32 %v976, 0.024543693
        %v1203 = vlaneseq
        %v1204 = vshrl.u32 %v1203, 7
        %v1205 = vsub.s32 0, %v1204
        %v1206 = vrot.slane %v1195, %v1205
        %1208 = vbcast.lane.b32.xlu0 %v1206, 256
        %v1209 = vpop.permute.xlu0 %1208
        %s1211 = sor.u32 256, 8
        %1212 = vbcast.lane.b32.xlu0 %v1206, %s1211
        %v1213 = vpop.permute.xlu0 %1212
        %s1215 = sor.u32 256, 16
        %1216 = vbcast.lane.b32.xlu0 %v1206, %s1215
        %v1217 = vpop.permute.xlu0 %1216
        %s1219 = sor.u32 256, 24
        %1220 = vbcast.lane.b32.xlu0 %v1206, %s1219
        %v1221 = vpop.permute.xlu0 %1220
        %s1223 = sor.u32 256, 32
        %1224 = vbcast.lane.b32.xlu0 %v1206, %s1223
        %v1225 = vpop.permute.xlu0 %1224
        %s1227 = sor.u32 256, 40
        %1228 = vbcast.lane.b32.xlu0 %v1206, %s1227
        %v1229 = vpop.permute.xlu0 %1228
        %s1231 = sor.u32 256, 48
        %1232 = vbcast.lane.b32.xlu0 %v1206, %s1231
        %v1233 = vpop.permute.xlu0 %1232
        %s1235 = sor.u32 256, 56
        %1236 = vbcast.lane.b32.xlu0 %v1206, %s1235
        %v1237 = vpop.permute.xlu0 %1236
        %s1239 = sor.u32 256, 64
        %1240 = vbcast.lane.b32.xlu0 %v1206, %s1239
        %v1241 = vpop.permute.xlu0 %1240
        %s1243 = sor.u32 256, 72
        %1244 = vbcast.lane.b32.xlu0 %v1206, %s1243
        %v1245 = vpop.permute.xlu0 %1244
        %s1247 = sor.u32 256, 80
        %1248 = vbcast.lane.b32.xlu0 %v1206, %s1247
        %v1249 = vpop.permute.xlu0 %1248
        %s1251 = sor.u32 256, 88
        %1252 = vbcast.lane.b32.xlu0 %v1206, %s1251
        %v1253 = vpop.permute.xlu0 %1252
        %s1255 = sor.u32 256, 96
        %1256 = vbcast.lane.b32.xlu0 %v1206, %s1255
        %v1257 = vpop.permute.xlu0 %1256
        %s1259 = sor.u32 256, 104
        %1260 = vbcast.lane.b32.xlu0 %v1206, %s1259
        %v1261 = vpop.permute.xlu0 %1260
        %s1263 = sor.u32 256, 112
        %1264 = vbcast.lane.b32.xlu0 %v1206, %s1263
        %v1265 = vpop.permute.xlu0 %1264
        %s1267 = sor.u32 256, 120
        %1268 = vbcast.lane.b32.xlu0 %v1206, %s1267
        %v1269 = vpop.permute.xlu0 %1268
        %v1270 = vlaneseq
        %v1271 = vshrl.u32 %v1270, 7
        %v1272 = vsub.s32 1, %v1271
        %v1273 = vrot.slane %v1195, %v1272
        %1275 = vbcast.lane.b32.xlu0 %v1273, 256
        %v1276 = vpop.permute.xlu0 %1275
        %s1278 = sor.u32 256, 8
        %1279 = vbcast.lane.b32.xlu0 %v1273, %s1278
        %v1280 = vpop.permute.xlu0 %1279
        %s1282 = sor.u32 256, 16
        %1283 = vbcast.lane.b32.xlu0 %v1273, %s1282
        %v1284 = vpop.permute.xlu0 %1283
        %s1286 = sor.u32 256, 24
        %1287 = vbcast.lane.b32.xlu0 %v1273, %s1286
        %v1288 = vpop.permute.xlu0 %1287
        %s1290 = sor.u32 256, 32
        %1291 = vbcast.lane.b32.xlu0 %v1273, %s1290
        %v1292 = vpop.permute.xlu0 %1291
        %s1294 = sor.u32 256, 40
        %1295 = vbcast.lane.b32.xlu0 %v1273, %s1294
        %v1296 = vpop.permute.xlu0 %1295
        %s1298 = sor.u32 256, 48
        %1299 = vbcast.lane.b32.xlu0 %v1273, %s1298
        %v1300 = vpop.permute.xlu0 %1299
        %s1302 = sor.u32 256, 56
        %1303 = vbcast.lane.b32.xlu0 %v1273, %s1302
        %v1304 = vpop.permute.xlu0 %1303
        %s1306 = sor.u32 256, 64
        %1307 = vbcast.lane.b32.xlu0 %v1273, %s1306
        %v1308 = vpop.permute.xlu0 %1307
        %s1310 = sor.u32 256, 72
        %1311 = vbcast.lane.b32.xlu0 %v1273, %s1310
        %v1312 = vpop.permute.xlu0 %1311
        %s1314 = sor.u32 256, 80
        %1315 = vbcast.lane.b32.xlu0 %v1273, %s1314
        %v1316 = vpop.permute.xlu0 %1315
        %s1318 = sor.u32 256, 88
        %1319 = vbcast.lane.b32.xlu0 %v1273, %s1318
        %v1320 = vpop.permute.xlu0 %1319
        %s1322 = sor.u32 256, 96
        %1323 = vbcast.lane.b32.xlu0 %v1273, %s1322
        %v1324 = vpop.permute.xlu0 %1323
        %s1326 = sor.u32 256, 104
        %1327 = vbcast.lane.b32.xlu0 %v1273, %s1326
        %v1328 = vpop.permute.xlu0 %1327
        %s1330 = sor.u32 256, 112
        %1331 = vbcast.lane.b32.xlu0 %v1273, %s1330
        %v1332 = vpop.permute.xlu0 %1331
        %s1334 = sor.u32 256, 120
        %1335 = vbcast.lane.b32.xlu0 %v1273, %s1334
        %v1336 = vpop.permute.xlu0 %1335
        %v1337 = vlaneseq
        %v1338 = vshrl.u32 %v1337, 7
        %v1339 = vsub.s32 2, %v1338
        %v1340 = vrot.slane %v1195, %v1339
        %1342 = vbcast.lane.b32.xlu0 %v1340, 256
        %v1343 = vpop.permute.xlu0 %1342
        %s1345 = sor.u32 256, 8
        %1346 = vbcast.lane.b32.xlu0 %v1340, %s1345
        %v1347 = vpop.permute.xlu0 %1346
        %s1349 = sor.u32 256, 16
        %1350 = vbcast.lane.b32.xlu0 %v1340, %s1349
        %v1351 = vpop.permute.xlu0 %1350
        %s1353 = sor.u32 256, 24
        %1354 = vbcast.lane.b32.xlu0 %v1340, %s1353
        %v1355 = vpop.permute.xlu0 %1354
        %s1357 = sor.u32 256, 32
        %1358 = vbcast.lane.b32.xlu0 %v1340, %s1357
        %v1359 = vpop.permute.xlu0 %1358
        %s1361 = sor.u32 256, 40
        %1362 = vbcast.lane.b32.xlu0 %v1340, %s1361
        %v1363 = vpop.permute.xlu0 %1362
        %s1365 = sor.u32 256, 48
        %1366 = vbcast.lane.b32.xlu0 %v1340, %s1365
        %v1367 = vpop.permute.xlu0 %1366
        %s1369 = sor.u32 256, 56
        %1370 = vbcast.lane.b32.xlu0 %v1340, %s1369
        %v1371 = vpop.permute.xlu0 %1370
        %s1373 = sor.u32 256, 64
        %1374 = vbcast.lane.b32.xlu0 %v1340, %s1373
        %v1375 = vpop.permute.xlu0 %1374
        %s1377 = sor.u32 256, 72
        %1378 = vbcast.lane.b32.xlu0 %v1340, %s1377
        %v1379 = vpop.permute.xlu0 %1378
        %s1381 = sor.u32 256, 80
        %1382 = vbcast.lane.b32.xlu0 %v1340, %s1381
        %v1383 = vpop.permute.xlu0 %1382
        %s1385 = sor.u32 256, 88
        %1386 = vbcast.lane.b32.xlu0 %v1340, %s1385
        %v1387 = vpop.permute.xlu0 %1386
        %s1389 = sor.u32 256, 96
        %1390 = vbcast.lane.b32.xlu0 %v1340, %s1389
        %v1391 = vpop.permute.xlu0 %1390
        %s1393 = sor.u32 256, 104
        %1394 = vbcast.lane.b32.xlu0 %v1340, %s1393
        %v1395 = vpop.permute.xlu0 %1394
        %s1397 = sor.u32 256, 112
        %1398 = vbcast.lane.b32.xlu0 %v1340, %s1397
        %v1399 = vpop.permute.xlu0 %1398
        %s1401 = sor.u32 256, 120
        %1402 = vbcast.lane.b32.xlu0 %v1340, %s1401
        %v1403 = vpop.permute.xlu0 %1402
        %v1404 = vlaneseq
        %v1405 = vshrl.u32 %v1404, 7
        %v1406 = vsub.s32 3, %v1405
        %v1407 = vrot.slane %v1195, %v1406
        %1409 = vbcast.lane.b32.xlu0 %v1407, 256
        %v1410 = vpop.permute.xlu0 %1409
        %s1412 = sor.u32 256, 8
        %1413 = vbcast.lane.b32.xlu0 %v1407, %s1412
        %v1414 = vpop.permute.xlu0 %1413
        %s1416 = sor.u32 256, 16
        %1417 = vbcast.lane.b32.xlu0 %v1407, %s1416
        %v1418 = vpop.permute.xlu0 %1417
        %s1420 = sor.u32 256, 24
        %1421 = vbcast.lane.b32.xlu0 %v1407, %s1420
        %v1422 = vpop.permute.xlu0 %1421
        %s1424 = sor.u32 256, 32
        %1425 = vbcast.lane.b32.xlu0 %v1407, %s1424
        %v1426 = vpop.permute.xlu0 %1425
        %s1428 = sor.u32 256, 40
        %1429 = vbcast.lane.b32.xlu0 %v1407, %s1428
        %v1430 = vpop.permute.xlu0 %1429
        %s1432 = sor.u32 256, 48
        %1433 = vbcast.lane.b32.xlu0 %v1407, %s1432
        %v1434 = vpop.permute.xlu0 %1433
        %s1436 = sor.u32 256, 56
        %1437 = vbcast.lane.b32.xlu0 %v1407, %s1436
        %v1438 = vpop.permute.xlu0 %1437
        %s1440 = sor.u32 256, 64
        %1441 = vbcast.lane.b32.xlu0 %v1407, %s1440
        %v1442 = vpop.permute.xlu0 %1441
        %s1444 = sor.u32 256, 72
        %1445 = vbcast.lane.b32.xlu0 %v1407, %s1444
        %v1446 = vpop.permute.xlu0 %1445
        %s1448 = sor.u32 256, 80
        %1449 = vbcast.lane.b32.xlu0 %v1407, %s1448
        %v1450 = vpop.permute.xlu0 %1449
        %s1452 = sor.u32 256, 88
        %1453 = vbcast.lane.b32.xlu0 %v1407, %s1452
        %v1454 = vpop.permute.xlu0 %1453
        %s1456 = sor.u32 256, 96
        %1457 = vbcast.lane.b32.xlu0 %v1407, %s1456
        %v1458 = vpop.permute.xlu0 %1457
        %s1460 = sor.u32 256, 104
        %1461 = vbcast.lane.b32.xlu0 %v1407, %s1460
        %v1462 = vpop.permute.xlu0 %1461
        %s1464 = sor.u32 256, 112
        %1465 = vbcast.lane.b32.xlu0 %v1407, %s1464
        %v1466 = vpop.permute.xlu0 %1465
        %s1468 = sor.u32 256, 120
        %1469 = vbcast.lane.b32.xlu0 %v1407, %s1468
        %v1470 = vpop.permute.xlu0 %1469
        %v1471 = vlaneseq
        %v1472 = vshrl.u32 %v1471, 7
        %v1473 = vsub.s32 4, %v1472
        %v1474 = vrot.slane %v1195, %v1473
        %1476 = vbcast.lane.b32.xlu0 %v1474, 256
        %v1477 = vpop.permute.xlu0 %1476
        %s1479 = sor.u32 256, 8
        %1480 = vbcast.lane.b32.xlu0 %v1474, %s1479
        %v1481 = vpop.permute.xlu0 %1480
        %s1483 = sor.u32 256, 16
        %1484 = vbcast.lane.b32.xlu0 %v1474, %s1483
        %v1485 = vpop.permute.xlu0 %1484
        %s1487 = sor.u32 256, 24
        %1488 = vbcast.lane.b32.xlu0 %v1474, %s1487
        %v1489 = vpop.permute.xlu0 %1488
        %s1491 = sor.u32 256, 32
        %1492 = vbcast.lane.b32.xlu0 %v1474, %s1491
        %v1493 = vpop.permute.xlu0 %1492
        %s1495 = sor.u32 256, 40
        %1496 = vbcast.lane.b32.xlu0 %v1474, %s1495
        %v1497 = vpop.permute.xlu0 %1496
        %s1499 = sor.u32 256, 48
        %1500 = vbcast.lane.b32.xlu0 %v1474, %s1499
        %v1501 = vpop.permute.xlu0 %1500
        %s1503 = sor.u32 256, 56
        %1504 = vbcast.lane.b32.xlu0 %v1474, %s1503
        %v1505 = vpop.permute.xlu0 %1504
        %s1507 = sor.u32 256, 64
        %1508 = vbcast.lane.b32.xlu0 %v1474, %s1507
        %v1509 = vpop.permute.xlu0 %1508
        %s1511 = sor.u32 256, 72
        %1512 = vbcast.lane.b32.xlu0 %v1474, %s1511
        %v1513 = vpop.permute.xlu0 %1512
        %s1515 = sor.u32 256, 80
        %1516 = vbcast.lane.b32.xlu0 %v1474, %s1515
        %v1517 = vpop.permute.xlu0 %1516
        %s1519 = sor.u32 256, 88
        %1520 = vbcast.lane.b32.xlu0 %v1474, %s1519
        %v1521 = vpop.permute.xlu0 %1520
        %s1523 = sor.u32 256, 96
        %1524 = vbcast.lane.b32.xlu0 %v1474, %s1523
        %v1525 = vpop.permute.xlu0 %1524
        %s1527 = sor.u32 256, 104
        %1528 = vbcast.lane.b32.xlu0 %v1474, %s1527
        %v1529 = vpop.permute.xlu0 %1528
        %s1531 = sor.u32 256, 112
        %1532 = vbcast.lane.b32.xlu0 %v1474, %s1531
        %v1533 = vpop.permute.xlu0 %1532
        %s1535 = sor.u32 256, 120
        %1536 = vbcast.lane.b32.xlu0 %v1474, %s1535
        %v1537 = vpop.permute.xlu0 %1536
        %v1538 = vlaneseq
        %v1539 = vshrl.u32 %v1538, 7
        %v1540 = vsub.s32 5, %v1539
        %v1541 = vrot.slane %v1195, %v1540
        %1543 = vbcast.lane.b32.xlu0 %v1541, 256
        %v1544 = vpop.permute.xlu0 %1543
        %s1546 = sor.u32 256, 8
        %1547 = vbcast.lane.b32.xlu0 %v1541, %s1546
        %v1548 = vpop.permute.xlu0 %1547
        %s1550 = sor.u32 256, 16
        %1551 = vbcast.lane.b32.xlu0 %v1541, %s1550
        %v1552 = vpop.permute.xlu0 %1551
        %s1554 = sor.u32 256, 24
        %1555 = vbcast.lane.b32.xlu0 %v1541, %s1554
        %v1556 = vpop.permute.xlu0 %1555
        %s1558 = sor.u32 256, 32
        %1559 = vbcast.lane.b32.xlu0 %v1541, %s1558
        %v1560 = vpop.permute.xlu0 %1559
        %s1562 = sor.u32 256, 40
        %1563 = vbcast.lane.b32.xlu0 %v1541, %s1562
        %v1564 = vpop.permute.xlu0 %1563
        %s1566 = sor.u32 256, 48
        %1567 = vbcast.lane.b32.xlu0 %v1541, %s1566
        %v1568 = vpop.permute.xlu0 %1567
        %s1570 = sor.u32 256, 56
        %1571 = vbcast.lane.b32.xlu0 %v1541, %s1570
        %v1572 = vpop.permute.xlu0 %1571
        %s1574 = sor.u32 256, 64
        %1575 = vbcast.lane.b32.xlu0 %v1541, %s1574
        %v1576 = vpop.permute.xlu0 %1575
        %s1578 = sor.u32 256, 72
        %1579 = vbcast.lane.b32.xlu0 %v1541, %s1578
        %v1580 = vpop.permute.xlu0 %1579
        %s1582 = sor.u32 256, 80
        %1583 = vbcast.lane.b32.xlu0 %v1541, %s1582
        %v1584 = vpop.permute.xlu0 %1583
        %s1586 = sor.u32 256, 88
        %1587 = vbcast.lane.b32.xlu0 %v1541, %s1586
        %v1588 = vpop.permute.xlu0 %1587
        %s1590 = sor.u32 256, 96
        %1591 = vbcast.lane.b32.xlu0 %v1541, %s1590
        %v1592 = vpop.permute.xlu0 %1591
        %s1594 = sor.u32 256, 104
        %1595 = vbcast.lane.b32.xlu0 %v1541, %s1594
        %v1596 = vpop.permute.xlu0 %1595
        %s1598 = sor.u32 256, 112
        %1599 = vbcast.lane.b32.xlu0 %v1541, %s1598
        %v1600 = vpop.permute.xlu0 %1599
        %s1602 = sor.u32 256, 120
        %1603 = vbcast.lane.b32.xlu0 %v1541, %s1602
        %v1604 = vpop.permute.xlu0 %1603
        %v1605 = vlaneseq
        %v1606 = vshrl.u32 %v1605, 7
        %v1607 = vsub.s32 6, %v1606
        %v1608 = vrot.slane %v1195, %v1607
        %1610 = vbcast.lane.b32.xlu0 %v1608, 256
        %v1611 = vpop.permute.xlu0 %1610
        %s1613 = sor.u32 256, 8
        %1614 = vbcast.lane.b32.xlu0 %v1608, %s1613
        %v1615 = vpop.permute.xlu0 %1614
        %s1617 = sor.u32 256, 16
        %1618 = vbcast.lane.b32.xlu0 %v1608, %s1617
        %v1619 = vpop.permute.xlu0 %1618
        %s1621 = sor.u32 256, 24
        %1622 = vbcast.lane.b32.xlu0 %v1608, %s1621
        %v1623 = vpop.permute.xlu0 %1622
        %s1625 = sor.u32 256, 32
        %1626 = vbcast.lane.b32.xlu0 %v1608, %s1625
        %v1627 = vpop.permute.xlu0 %1626
        %s1629 = sor.u32 256, 40
        %1630 = vbcast.lane.b32.xlu0 %v1608, %s1629
        %v1631 = vpop.permute.xlu0 %1630
        %s1633 = sor.u32 256, 48
        %1634 = vbcast.lane.b32.xlu0 %v1608, %s1633
        %v1635 = vpop.permute.xlu0 %1634
        %s1637 = sor.u32 256, 56
        %1638 = vbcast.lane.b32.xlu0 %v1608, %s1637
        %v1639 = vpop.permute.xlu0 %1638
        %s1641 = sor.u32 256, 64
        %1642 = vbcast.lane.b32.xlu0 %v1608, %s1641
        %v1643 = vpop.permute.xlu0 %1642
        %s1645 = sor.u32 256, 72
        %1646 = vbcast.lane.b32.xlu0 %v1608, %s1645
        %v1647 = vpop.permute.xlu0 %1646
        %s1649 = sor.u32 256, 80
        %1650 = vbcast.lane.b32.xlu0 %v1608, %s1649
        %v1651 = vpop.permute.xlu0 %1650
        %s1653 = sor.u32 256, 88
        %1654 = vbcast.lane.b32.xlu0 %v1608, %s1653
        %v1655 = vpop.permute.xlu0 %1654
        %s1657 = sor.u32 256, 96
        %1658 = vbcast.lane.b32.xlu0 %v1608, %s1657
        %v1659 = vpop.permute.xlu0 %1658
        %s1661 = sor.u32 256, 104
        %1662 = vbcast.lane.b32.xlu0 %v1608, %s1661
        %v1663 = vpop.permute.xlu0 %1662
        %s1665 = sor.u32 256, 112
        %1666 = vbcast.lane.b32.xlu0 %v1608, %s1665
        %v1667 = vpop.permute.xlu0 %1666
        %s1669 = sor.u32 256, 120
        %1670 = vbcast.lane.b32.xlu0 %v1608, %s1669
        %v1671 = vpop.permute.xlu0 %1670
        %v1672 = vlaneseq
        %v1673 = vshrl.u32 %v1672, 7
        %v1674 = vsub.s32 7, %v1673
        %v1675 = vrot.slane %v1195, %v1674
        %1677 = vbcast.lane.b32.xlu0 %v1675, 256
        %v1678 = vpop.permute.xlu0 %1677
        %s1680 = sor.u32 256, 8
        %1681 = vbcast.lane.b32.xlu0 %v1675, %s1680
        %v1682 = vpop.permute.xlu0 %1681
        %s1684 = sor.u32 256, 16
        %1685 = vbcast.lane.b32.xlu0 %v1675, %s1684
        %v1686 = vpop.permute.xlu0 %1685
        %s1688 = sor.u32 256, 24
        %1689 = vbcast.lane.b32.xlu0 %v1675, %s1688
        %v1690 = vpop.permute.xlu0 %1689
        %s1692 = sor.u32 256, 32
        %1693 = vbcast.lane.b32.xlu0 %v1675, %s1692
        %v1694 = vpop.permute.xlu0 %1693
        %s1696 = sor.u32 256, 40
        %1697 = vbcast.lane.b32.xlu0 %v1675, %s1696
        %v1698 = vpop.permute.xlu0 %1697
        %s1700 = sor.u32 256, 48
        %1701 = vbcast.lane.b32.xlu0 %v1675, %s1700
        %v1702 = vpop.permute.xlu0 %1701
        %s1704 = sor.u32 256, 56
        %1705 = vbcast.lane.b32.xlu0 %v1675, %s1704
        %v1706 = vpop.permute.xlu0 %1705
        %s1708 = sor.u32 256, 64
        %1709 = vbcast.lane.b32.xlu0 %v1675, %s1708
        %v1710 = vpop.permute.xlu0 %1709
        %s1712 = sor.u32 256, 72
        %1713 = vbcast.lane.b32.xlu0 %v1675, %s1712
        %v1714 = vpop.permute.xlu0 %1713
        %s1716 = sor.u32 256, 80
        %1717 = vbcast.lane.b32.xlu0 %v1675, %s1716
        %v1718 = vpop.permute.xlu0 %1717
        %s1720 = sor.u32 256, 88
        %1721 = vbcast.lane.b32.xlu0 %v1675, %s1720
        %v1722 = vpop.permute.xlu0 %1721
        %s1724 = sor.u32 256, 96
        %1725 = vbcast.lane.b32.xlu0 %v1675, %s1724
        %v1726 = vpop.permute.xlu0 %1725
        %s1728 = sor.u32 256, 104
        %1729 = vbcast.lane.b32.xlu0 %v1675, %s1728
        %v1730 = vpop.permute.xlu0 %1729
        %s1732 = sor.u32 256, 112
        %1733 = vbcast.lane.b32.xlu0 %v1675, %s1732
        %v1734 = vpop.permute.xlu0 %1733
        %s1736 = sor.u32 256, 120
        %1737 = vbcast.lane.b32.xlu0 %v1675, %s1736
        %v1738 = vpop.permute.xlu0 %1737
        %v1739 = vlaneseq
        %v1740 = vshrl.u32 %v1739, 7
        %v1741 = vsub.s32 0, %v1740
        %v1742 = vrot.slane %v1196, %v1741
        %1744 = vbcast.lane.b32.xlu0 %v1742, 256
        %v1745 = vpop.permute.xlu0 %1744
        %s1747 = sor.u32 256, 8
        %1748 = vbcast.lane.b32.xlu0 %v1742, %s1747
        %v1749 = vpop.permute.xlu0 %1748
        %s1751 = sor.u32 256, 16
        %1752 = vbcast.lane.b32.xlu0 %v1742, %s1751
        %v1753 = vpop.permute.xlu0 %1752
        %s1755 = sor.u32 256, 24
        %1756 = vbcast.lane.b32.xlu0 %v1742, %s1755
        %v1757 = vpop.permute.xlu0 %1756
        %s1759 = sor.u32 256, 32
        %1760 = vbcast.lane.b32.xlu0 %v1742, %s1759
        %v1761 = vpop.permute.xlu0 %1760
        %s1763 = sor.u32 256, 40
        %1764 = vbcast.lane.b32.xlu0 %v1742, %s1763
        %v1765 = vpop.permute.xlu0 %1764
        %s1767 = sor.u32 256, 48
        %1768 = vbcast.lane.b32.xlu0 %v1742, %s1767
        %v1769 = vpop.permute.xlu0 %1768
        %s1771 = sor.u32 256, 56
        %1772 = vbcast.lane.b32.xlu0 %v1742, %s1771
        %v1773 = vpop.permute.xlu0 %1772
        %s1775 = sor.u32 256, 64
        %1776 = vbcast.lane.b32.xlu0 %v1742, %s1775
        %v1777 = vpop.permute.xlu0 %1776
        %s1779 = sor.u32 256, 72
        %1780 = vbcast.lane.b32.xlu0 %v1742, %s1779
        %v1781 = vpop.permute.xlu0 %1780
        %s1783 = sor.u32 256, 80
        %1784 = vbcast.lane.b32.xlu0 %v1742, %s1783
        %v1785 = vpop.permute.xlu0 %1784
        %s1787 = sor.u32 256, 88
        %1788 = vbcast.lane.b32.xlu0 %v1742, %s1787
        %v1789 = vpop.permute.xlu0 %1788
        %s1791 = sor.u32 256, 96
        %1792 = vbcast.lane.b32.xlu0 %v1742, %s1791
        %v1793 = vpop.permute.xlu0 %1792
        %s1795 = sor.u32 256, 104
        %1796 = vbcast.lane.b32.xlu0 %v1742, %s1795
        %v1797 = vpop.permute.xlu0 %1796
        %s1799 = sor.u32 256, 112
        %1800 = vbcast.lane.b32.xlu0 %v1742, %s1799
        %v1801 = vpop.permute.xlu0 %1800
        %s1803 = sor.u32 256, 120
        %1804 = vbcast.lane.b32.xlu0 %v1742, %s1803
        %v1805 = vpop.permute.xlu0 %1804
        %v1806 = vlaneseq
        %v1807 = vshrl.u32 %v1806, 7
        %v1808 = vsub.s32 1, %v1807
        %v1809 = vrot.slane %v1196, %v1808
        %1811 = vbcast.lane.b32.xlu0 %v1809, 256
        %v1812 = vpop.permute.xlu0 %1811
        %s1814 = sor.u32 256, 8
        %1815 = vbcast.lane.b32.xlu0 %v1809, %s1814
        %v1816 = vpop.permute.xlu0 %1815
        %s1818 = sor.u32 256, 16
        %1819 = vbcast.lane.b32.xlu0 %v1809, %s1818
        %v1820 = vpop.permute.xlu0 %1819
        %s1822 = sor.u32 256, 24
        %1823 = vbcast.lane.b32.xlu0 %v1809, %s1822
        %v1824 = vpop.permute.xlu0 %1823
        %s1826 = sor.u32 256, 32
        %1827 = vbcast.lane.b32.xlu0 %v1809, %s1826
        %v1828 = vpop.permute.xlu0 %1827
        %s1830 = sor.u32 256, 40
        %1831 = vbcast.lane.b32.xlu0 %v1809, %s1830
        %v1832 = vpop.permute.xlu0 %1831
        %s1834 = sor.u32 256, 48
        %1835 = vbcast.lane.b32.xlu0 %v1809, %s1834
        %v1836 = vpop.permute.xlu0 %1835
        %s1838 = sor.u32 256, 56
        %1839 = vbcast.lane.b32.xlu0 %v1809, %s1838
        %v1840 = vpop.permute.xlu0 %1839
        %s1842 = sor.u32 256, 64
        %1843 = vbcast.lane.b32.xlu0 %v1809, %s1842
        %v1844 = vpop.permute.xlu0 %1843
        %s1846 = sor.u32 256, 72
        %1847 = vbcast.lane.b32.xlu0 %v1809, %s1846
        %v1848 = vpop.permute.xlu0 %1847
        %s1850 = sor.u32 256, 80
        %1851 = vbcast.lane.b32.xlu0 %v1809, %s1850
        %v1852 = vpop.permute.xlu0 %1851
        %s1854 = sor.u32 256, 88
        %1855 = vbcast.lane.b32.xlu0 %v1809, %s1854
        %v1856 = vpop.permute.xlu0 %1855
        %s1858 = sor.u32 256, 96
        %1859 = vbcast.lane.b32.xlu0 %v1809, %s1858
        %v1860 = vpop.permute.xlu0 %1859
        %s1862 = sor.u32 256, 104
        %1863 = vbcast.lane.b32.xlu0 %v1809, %s1862
        %v1864 = vpop.permute.xlu0 %1863
        %s1866 = sor.u32 256, 112
        %1867 = vbcast.lane.b32.xlu0 %v1809, %s1866
        %v1868 = vpop.permute.xlu0 %1867
        %s1870 = sor.u32 256, 120
        %1871 = vbcast.lane.b32.xlu0 %v1809, %s1870
        %v1872 = vpop.permute.xlu0 %1871
        %v1873 = vlaneseq
        %v1874 = vshrl.u32 %v1873, 7
        %v1875 = vsub.s32 2, %v1874
        %v1876 = vrot.slane %v1196, %v1875
        %1878 = vbcast.lane.b32.xlu0 %v1876, 256
        %v1879 = vpop.permute.xlu0 %1878
        %s1881 = sor.u32 256, 8
        %1882 = vbcast.lane.b32.xlu0 %v1876, %s1881
        %v1883 = vpop.permute.xlu0 %1882
        %s1885 = sor.u32 256, 16
        %1886 = vbcast.lane.b32.xlu0 %v1876, %s1885
        %v1887 = vpop.permute.xlu0 %1886
        %s1889 = sor.u32 256, 24
        %1890 = vbcast.lane.b32.xlu0 %v1876, %s1889
        %v1891 = vpop.permute.xlu0 %1890
        %s1893 = sor.u32 256, 32
        %1894 = vbcast.lane.b32.xlu0 %v1876, %s1893
        %v1895 = vpop.permute.xlu0 %1894
        %s1897 = sor.u32 256, 40
        %1898 = vbcast.lane.b32.xlu0 %v1876, %s1897
        %v1899 = vpop.permute.xlu0 %1898
        %s1901 = sor.u32 256, 48
        %1902 = vbcast.lane.b32.xlu0 %v1876, %s1901
        %v1903 = vpop.permute.xlu0 %1902
        %s1905 = sor.u32 256, 56
        %1906 = vbcast.lane.b32.xlu0 %v1876, %s1905
        %v1907 = vpop.permute.xlu0 %1906
        %s1909 = sor.u32 256, 64
        %1910 = vbcast.lane.b32.xlu0 %v1876, %s1909
        %v1911 = vpop.permute.xlu0 %1910
        %s1913 = sor.u32 256, 72
        %1914 = vbcast.lane.b32.xlu0 %v1876, %s1913
        %v1915 = vpop.permute.xlu0 %1914
        %s1917 = sor.u32 256, 80
        %1918 = vbcast.lane.b32.xlu0 %v1876, %s1917
        %v1919 = vpop.permute.xlu0 %1918
        %s1921 = sor.u32 256, 88
        %1922 = vbcast.lane.b32.xlu0 %v1876, %s1921
        %v1923 = vpop.permute.xlu0 %1922
        %s1925 = sor.u32 256, 96
        %1926 = vbcast.lane.b32.xlu0 %v1876, %s1925
        %v1927 = vpop.permute.xlu0 %1926
        %s1929 = sor.u32 256, 104
        %1930 = vbcast.lane.b32.xlu0 %v1876, %s1929
        %v1931 = vpop.permute.xlu0 %1930
        %s1933 = sor.u32 256, 112
        %1934 = vbcast.lane.b32.xlu0 %v1876, %s1933
        %v1935 = vpop.permute.xlu0 %1934
        %s1937 = sor.u32 256, 120
        %1938 = vbcast.lane.b32.xlu0 %v1876, %s1937
        %v1939 = vpop.permute.xlu0 %1938
        %v1940 = vlaneseq
        %v1941 = vshrl.u32 %v1940, 7
        %v1942 = vsub.s32 3, %v1941
        %v1943 = vrot.slane %v1196, %v1942
        %1945 = vbcast.lane.b32.xlu0 %v1943, 256
        %v1946 = vpop.permute.xlu0 %1945
        %s1948 = sor.u32 256, 8
        %1949 = vbcast.lane.b32.xlu0 %v1943, %s1948
        %v1950 = vpop.permute.xlu0 %1949
        %s1952 = sor.u32 256, 16
        %1953 = vbcast.lane.b32.xlu0 %v1943, %s1952
        %v1954 = vpop.permute.xlu0 %1953
        %s1956 = sor.u32 256, 24
        %1957 = vbcast.lane.b32.xlu0 %v1943, %s1956
        %v1958 = vpop.permute.xlu0 %1957
        %s1960 = sor.u32 256, 32
        %1961 = vbcast.lane.b32.xlu0 %v1943, %s1960
        %v1962 = vpop.permute.xlu0 %1961
        %s1964 = sor.u32 256, 40
        %1965 = vbcast.lane.b32.xlu0 %v1943, %s1964
        %v1966 = vpop.permute.xlu0 %1965
        %s1968 = sor.u32 256, 48
        %1969 = vbcast.lane.b32.xlu0 %v1943, %s1968
        %v1970 = vpop.permute.xlu0 %1969
        %s1972 = sor.u32 256, 56
        %1973 = vbcast.lane.b32.xlu0 %v1943, %s1972
        %v1974 = vpop.permute.xlu0 %1973
        %s1976 = sor.u32 256, 64
        %1977 = vbcast.lane.b32.xlu0 %v1943, %s1976
        %v1978 = vpop.permute.xlu0 %1977
        %s1980 = sor.u32 256, 72
        %1981 = vbcast.lane.b32.xlu0 %v1943, %s1980
        %v1982 = vpop.permute.xlu0 %1981
        %s1984 = sor.u32 256, 80
        %1985 = vbcast.lane.b32.xlu0 %v1943, %s1984
        %v1986 = vpop.permute.xlu0 %1985
        %s1988 = sor.u32 256, 88
        %1989 = vbcast.lane.b32.xlu0 %v1943, %s1988
        %v1990 = vpop.permute.xlu0 %1989
        %s1992 = sor.u32 256, 96
        %1993 = vbcast.lane.b32.xlu0 %v1943, %s1992
        %v1994 = vpop.permute.xlu0 %1993
        %s1996 = sor.u32 256, 104
        %1997 = vbcast.lane.b32.xlu0 %v1943, %s1996
        %v1998 = vpop.permute.xlu0 %1997
        %s2000 = sor.u32 256, 112
        %2001 = vbcast.lane.b32.xlu0 %v1943, %s2000
        %v2002 = vpop.permute.xlu0 %2001
        %s2004 = sor.u32 256, 120
        %2005 = vbcast.lane.b32.xlu0 %v1943, %s2004
        %v2006 = vpop.permute.xlu0 %2005
        %v2007 = vlaneseq
        %v2008 = vshrl.u32 %v2007, 7
        %v2009 = vsub.s32 4, %v2008
        %v2010 = vrot.slane %v1196, %v2009
        %2012 = vbcast.lane.b32.xlu0 %v2010, 256
        %v2013 = vpop.permute.xlu0 %2012
        %s2015 = sor.u32 256, 8
        %2016 = vbcast.lane.b32.xlu0 %v2010, %s2015
        %v2017 = vpop.permute.xlu0 %2016
        %s2019 = sor.u32 256, 16
        %2020 = vbcast.lane.b32.xlu0 %v2010, %s2019
        %v2021 = vpop.permute.xlu0 %2020
        %s2023 = sor.u32 256, 24
        %2024 = vbcast.lane.b32.xlu0 %v2010, %s2023
        %v2025 = vpop.permute.xlu0 %2024
        %s2027 = sor.u32 256, 32
        %2028 = vbcast.lane.b32.xlu0 %v2010, %s2027
        %v2029 = vpop.permute.xlu0 %2028
        %s2031 = sor.u32 256, 40
        %2032 = vbcast.lane.b32.xlu0 %v2010, %s2031
        %v2033 = vpop.permute.xlu0 %2032
        %s2035 = sor.u32 256, 48
        %2036 = vbcast.lane.b32.xlu0 %v2010, %s2035
        %v2037 = vpop.permute.xlu0 %2036
        %s2039 = sor.u32 256, 56
        %2040 = vbcast.lane.b32.xlu0 %v2010, %s2039
        %v2041 = vpop.permute.xlu0 %2040
        %s2043 = sor.u32 256, 64
        %2044 = vbcast.lane.b32.xlu0 %v2010, %s2043
        %v2045 = vpop.permute.xlu0 %2044
        %s2047 = sor.u32 256, 72
        %2048 = vbcast.lane.b32.xlu0 %v2010, %s2047
        %v2049 = vpop.permute.xlu0 %2048
        %s2051 = sor.u32 256, 80
        %2052 = vbcast.lane.b32.xlu0 %v2010, %s2051
        %v2053 = vpop.permute.xlu0 %2052
        %s2055 = sor.u32 256, 88
        %2056 = vbcast.lane.b32.xlu0 %v2010, %s2055
        %v2057 = vpop.permute.xlu0 %2056
        %s2059 = sor.u32 256, 96
        %2060 = vbcast.lane.b32.xlu0 %v2010, %s2059
        %v2061 = vpop.permute.xlu0 %2060
        %s2063 = sor.u32 256, 104
        %2064 = vbcast.lane.b32.xlu0 %v2010, %s2063
        %v2065 = vpop.permute.xlu0 %2064
        %s2067 = sor.u32 256, 112
        %2068 = vbcast.lane.b32.xlu0 %v2010, %s2067
        %v2069 = vpop.permute.xlu0 %2068
        %s2071 = sor.u32 256, 120
        %2072 = vbcast.lane.b32.xlu0 %v2010, %s2071
        %v2073 = vpop.permute.xlu0 %2072
        %v2074 = vlaneseq
        %v2075 = vshrl.u32 %v2074, 7
        %v2076 = vsub.s32 5, %v2075
        %v2077 = vrot.slane %v1196, %v2076
        %2079 = vbcast.lane.b32.xlu0 %v2077, 256
        %v2080 = vpop.permute.xlu0 %2079
        %s2082 = sor.u32 256, 8
        %2083 = vbcast.lane.b32.xlu0 %v2077, %s2082
        %v2084 = vpop.permute.xlu0 %2083
        %s2086 = sor.u32 256, 16
        %2087 = vbcast.lane.b32.xlu0 %v2077, %s2086
        %v2088 = vpop.permute.xlu0 %2087
        %s2090 = sor.u32 256, 24
        %2091 = vbcast.lane.b32.xlu0 %v2077, %s2090
        %v2092 = vpop.permute.xlu0 %2091
        %s2094 = sor.u32 256, 32
        %2095 = vbcast.lane.b32.xlu0 %v2077, %s2094
        %v2096 = vpop.permute.xlu0 %2095
        %s2098 = sor.u32 256, 40
        %2099 = vbcast.lane.b32.xlu0 %v2077, %s2098
        %v2100 = vpop.permute.xlu0 %2099
        %s2102 = sor.u32 256, 48
        %2103 = vbcast.lane.b32.xlu0 %v2077, %s2102
        %v2104 = vpop.permute.xlu0 %2103
        %s2106 = sor.u32 256, 56
        %2107 = vbcast.lane.b32.xlu0 %v2077, %s2106
        %v2108 = vpop.permute.xlu0 %2107
        %s2110 = sor.u32 256, 64
        %2111 = vbcast.lane.b32.xlu0 %v2077, %s2110
        %v2112 = vpop.permute.xlu0 %2111
        %s2114 = sor.u32 256, 72
        %2115 = vbcast.lane.b32.xlu0 %v2077, %s2114
        %v2116 = vpop.permute.xlu0 %2115
        %s2118 = sor.u32 256, 80
        %2119 = vbcast.lane.b32.xlu0 %v2077, %s2118
        %v2120 = vpop.permute.xlu0 %2119
        %s2122 = sor.u32 256, 88
        %2123 = vbcast.lane.b32.xlu0 %v2077, %s2122
        %v2124 = vpop.permute.xlu0 %2123
        %s2126 = sor.u32 256, 96
        %2127 = vbcast.lane.b32.xlu0 %v2077, %s2126
        %v2128 = vpop.permute.xlu0 %2127
        %s2130 = sor.u32 256, 104
        %2131 = vbcast.lane.b32.xlu0 %v2077, %s2130
        %v2132 = vpop.permute.xlu0 %2131
        %s2134 = sor.u32 256, 112
        %2135 = vbcast.lane.b32.xlu0 %v2077, %s2134
        %v2136 = vpop.permute.xlu0 %2135
        %s2138 = sor.u32 256, 120
        %2139 = vbcast.lane.b32.xlu0 %v2077, %s2138
        %v2140 = vpop.permute.xlu0 %2139
        %v2141 = vlaneseq
        %v2142 = vshrl.u32 %v2141, 7
        %v2143 = vsub.s32 6, %v2142
        %v2144 = vrot.slane %v1196, %v2143
        %2146 = vbcast.lane.b32.xlu0 %v2144, 256
        %v2147 = vpop.permute.xlu0 %2146
        %s2149 = sor.u32 256, 8
        %2150 = vbcast.lane.b32.xlu0 %v2144, %s2149
        %v2151 = vpop.permute.xlu0 %2150
        %s2153 = sor.u32 256, 16
        %2154 = vbcast.lane.b32.xlu0 %v2144, %s2153
        %v2155 = vpop.permute.xlu0 %2154
        %s2157 = sor.u32 256, 24
        %2158 = vbcast.lane.b32.xlu0 %v2144, %s2157
        %v2159 = vpop.permute.xlu0 %2158
        %s2161 = sor.u32 256, 32
        %2162 = vbcast.lane.b32.xlu0 %v2144, %s2161
        %v2163 = vpop.permute.xlu0 %2162
        %s2165 = sor.u32 256, 40
        %2166 = vbcast.lane.b32.xlu0 %v2144, %s2165
        %v2167 = vpop.permute.xlu0 %2166
        %s2169 = sor.u32 256, 48
        %2170 = vbcast.lane.b32.xlu0 %v2144, %s2169
        %v2171 = vpop.permute.xlu0 %2170
        %s2173 = sor.u32 256, 56
        %2174 = vbcast.lane.b32.xlu0 %v2144, %s2173
        %v2175 = vpop.permute.xlu0 %2174
        %s2177 = sor.u32 256, 64
        %2178 = vbcast.lane.b32.xlu0 %v2144, %s2177
        %v2179 = vpop.permute.xlu0 %2178
        %s2181 = sor.u32 256, 72
        %2182 = vbcast.lane.b32.xlu0 %v2144, %s2181
        %v2183 = vpop.permute.xlu0 %2182
        %s2185 = sor.u32 256, 80
        %2186 = vbcast.lane.b32.xlu0 %v2144, %s2185
        %v2187 = vpop.permute.xlu0 %2186
        %s2189 = sor.u32 256, 88
        %2190 = vbcast.lane.b32.xlu0 %v2144, %s2189
        %v2191 = vpop.permute.xlu0 %2190
        %s2193 = sor.u32 256, 96
        %2194 = vbcast.lane.b32.xlu0 %v2144, %s2193
        %v2195 = vpop.permute.xlu0 %2194
        %s2197 = sor.u32 256, 104
        %2198 = vbcast.lane.b32.xlu0 %v2144, %s2197
        %v2199 = vpop.permute.xlu0 %2198
        %s2201 = sor.u32 256, 112
        %2202 = vbcast.lane.b32.xlu0 %v2144, %s2201
        %v2203 = vpop.permute.xlu0 %2202
        %s2205 = sor.u32 256, 120
        %2206 = vbcast.lane.b32.xlu0 %v2144, %s2205
        %v2207 = vpop.permute.xlu0 %2206
        %v2208 = vlaneseq
        %v2209 = vshrl.u32 %v2208, 7
        %v2210 = vsub.s32 7, %v2209
        %v2211 = vrot.slane %v1196, %v2210
        %2213 = vbcast.lane.b32.xlu0 %v2211, 256
        %v2214 = vpop.permute.xlu0 %2213
        %s2216 = sor.u32 256, 8
        %2217 = vbcast.lane.b32.xlu0 %v2211, %s2216
        %v2218 = vpop.permute.xlu0 %2217
        %s2220 = sor.u32 256, 16
        %2221 = vbcast.lane.b32.xlu0 %v2211, %s2220
        %v2222 = vpop.permute.xlu0 %2221
        %s2224 = sor.u32 256, 24
        %2225 = vbcast.lane.b32.xlu0 %v2211, %s2224
        %v2226 = vpop.permute.xlu0 %2225
        %s2228 = sor.u32 256, 32
        %2229 = vbcast.lane.b32.xlu0 %v2211, %s2228
        %v2230 = vpop.permute.xlu0 %2229
        %s2232 = sor.u32 256, 40
        %2233 = vbcast.lane.b32.xlu0 %v2211, %s2232
        %v2234 = vpop.permute.xlu0 %2233
        %s2236 = sor.u32 256, 48
        %2237 = vbcast.lane.b32.xlu0 %v2211, %s2236
        %v2238 = vpop.permute.xlu0 %2237
        %s2240 = sor.u32 256, 56
        %2241 = vbcast.lane.b32.xlu0 %v2211, %s2240
        %v2242 = vpop.permute.xlu0 %2241
        %s2244 = sor.u32 256, 64
        %2245 = vbcast.lane.b32.xlu0 %v2211, %s2244
        %v2246 = vpop.permute.xlu0 %2245
        %s2248 = sor.u32 256, 72
        %2249 = vbcast.lane.b32.xlu0 %v2211, %s2248
        %v2250 = vpop.permute.xlu0 %2249
        %s2252 = sor.u32 256, 80
        %2253 = vbcast.lane.b32.xlu0 %v2211, %s2252
        %v2254 = vpop.permute.xlu0 %2253
        %s2256 = sor.u32 256, 88
        %2257 = vbcast.lane.b32.xlu0 %v2211, %s2256
        %v2258 = vpop.permute.xlu0 %2257
        %s2260 = sor.u32 256, 96
        %2261 = vbcast.lane.b32.xlu0 %v2211, %s2260
        %v2262 = vpop.permute.xlu0 %2261
        %s2264 = sor.u32 256, 104
        %2265 = vbcast.lane.b32.xlu0 %v2211, %s2264
        %v2266 = vpop.permute.xlu0 %2265
        %s2268 = sor.u32 256, 112
        %2269 = vbcast.lane.b32.xlu0 %v2211, %s2268
        %v2270 = vpop.permute.xlu0 %2269
        %s2272 = sor.u32 256, 120
        %2273 = vbcast.lane.b32.xlu0 %v2211, %s2272
        %v2274 = vpop.permute.xlu0 %2273
        %v2275 = vlaneseq
        %v2276 = vshrl.u32 %v2275, 7
        %v2277 = vsub.s32 0, %v2276
        %v2278 = vrot.slane %v1197, %v2277
        %2280 = vbcast.lane.b32.xlu0 %v2278, 256
        %v2281 = vpop.permute.xlu0 %2280
        %s2283 = sor.u32 256, 8
        %2284 = vbcast.lane.b32.xlu0 %v2278, %s2283
        %v2285 = vpop.permute.xlu0 %2284
        %s2287 = sor.u32 256, 16
        %2288 = vbcast.lane.b32.xlu0 %v2278, %s2287
        %v2289 = vpop.permute.xlu0 %2288
        %s2291 = sor.u32 256, 24
        %2292 = vbcast.lane.b32.xlu0 %v2278, %s2291
        %v2293 = vpop.permute.xlu0 %2292
        %s2295 = sor.u32 256, 32
        %2296 = vbcast.lane.b32.xlu0 %v2278, %s2295
        %v2297 = vpop.permute.xlu0 %2296
        %s2299 = sor.u32 256, 40
        %2300 = vbcast.lane.b32.xlu0 %v2278, %s2299
        %v2301 = vpop.permute.xlu0 %2300
        %s2303 = sor.u32 256, 48
        %2304 = vbcast.lane.b32.xlu0 %v2278, %s2303
        %v2305 = vpop.permute.xlu0 %2304
        %s2307 = sor.u32 256, 56
        %2308 = vbcast.lane.b32.xlu0 %v2278, %s2307
        %v2309 = vpop.permute.xlu0 %2308
        %s2311 = sor.u32 256, 64
        %2312 = vbcast.lane.b32.xlu0 %v2278, %s2311
        %v2313 = vpop.permute.xlu0 %2312
        %s2315 = sor.u32 256, 72
        %2316 = vbcast.lane.b32.xlu0 %v2278, %s2315
        %v2317 = vpop.permute.xlu0 %2316
        %s2319 = sor.u32 256, 80
        %2320 = vbcast.lane.b32.xlu0 %v2278, %s2319
        %v2321 = vpop.permute.xlu0 %2320
        %s2323 = sor.u32 256, 88
        %2324 = vbcast.lane.b32.xlu0 %v2278, %s2323
        %v2325 = vpop.permute.xlu0 %2324
        %s2327 = sor.u32 256, 96
        %2328 = vbcast.lane.b32.xlu0 %v2278, %s2327
        %v2329 = vpop.permute.xlu0 %2328
        %s2331 = sor.u32 256, 104
        %2332 = vbcast.lane.b32.xlu0 %v2278, %s2331
        %v2333 = vpop.permute.xlu0 %2332
        %s2335 = sor.u32 256, 112
        %2336 = vbcast.lane.b32.xlu0 %v2278, %s2335
        %v2337 = vpop.permute.xlu0 %2336
        %s2339 = sor.u32 256, 120
        %2340 = vbcast.lane.b32.xlu0 %v2278, %s2339
        %v2341 = vpop.permute.xlu0 %2340
        %v2342 = vlaneseq
        %v2343 = vshrl.u32 %v2342, 7
        %v2344 = vsub.s32 1, %v2343
        %v2345 = vrot.slane %v1197, %v2344
        %2347 = vbcast.lane.b32.xlu0 %v2345, 256
        %v2348 = vpop.permute.xlu0 %2347
        %s2350 = sor.u32 256, 8
        %2351 = vbcast.lane.b32.xlu0 %v2345, %s2350
        %v2352 = vpop.permute.xlu0 %2351
        %s2354 = sor.u32 256, 16
        %2355 = vbcast.lane.b32.xlu0 %v2345, %s2354
        %v2356 = vpop.permute.xlu0 %2355
        %s2358 = sor.u32 256, 24
        %2359 = vbcast.lane.b32.xlu0 %v2345, %s2358
        %v2360 = vpop.permute.xlu0 %2359
        %s2362 = sor.u32 256, 32
        %2363 = vbcast.lane.b32.xlu0 %v2345, %s2362
        %v2364 = vpop.permute.xlu0 %2363
        %s2366 = sor.u32 256, 40
        %2367 = vbcast.lane.b32.xlu0 %v2345, %s2366
        %v2368 = vpop.permute.xlu0 %2367
        %s2370 = sor.u32 256, 48
        %2371 = vbcast.lane.b32.xlu0 %v2345, %s2370
        %v2372 = vpop.permute.xlu0 %2371
        %s2374 = sor.u32 256, 56
        %2375 = vbcast.lane.b32.xlu0 %v2345, %s2374
        %v2376 = vpop.permute.xlu0 %2375
        %s2378 = sor.u32 256, 64
        %2379 = vbcast.lane.b32.xlu0 %v2345, %s2378
        %v2380 = vpop.permute.xlu0 %2379
        %s2382 = sor.u32 256, 72
        %2383 = vbcast.lane.b32.xlu0 %v2345, %s2382
        %v2384 = vpop.permute.xlu0 %2383
        %s2386 = sor.u32 256, 80
        %2387 = vbcast.lane.b32.xlu0 %v2345, %s2386
        %v2388 = vpop.permute.xlu0 %2387
        %s2390 = sor.u32 256, 88
        %2391 = vbcast.lane.b32.xlu0 %v2345, %s2390
        %v2392 = vpop.permute.xlu0 %2391
        %s2394 = sor.u32 256, 96
        %2395 = vbcast.lane.b32.xlu0 %v2345, %s2394
        %v2396 = vpop.permute.xlu0 %2395
        %s2398 = sor.u32 256, 104
        %2399 = vbcast.lane.b32.xlu0 %v2345, %s2398
        %v2400 = vpop.permute.xlu0 %2399
        %s2402 = sor.u32 256, 112
        %2403 = vbcast.lane.b32.xlu0 %v2345, %s2402
        %v2404 = vpop.permute.xlu0 %2403
        %s2406 = sor.u32 256, 120
        %2407 = vbcast.lane.b32.xlu0 %v2345, %s2406
        %v2408 = vpop.permute.xlu0 %2407
        %v2409 = vlaneseq
        %v2410 = vshrl.u32 %v2409, 7
        %v2411 = vsub.s32 2, %v2410
        %v2412 = vrot.slane %v1197, %v2411
        %2414 = vbcast.lane.b32.xlu0 %v2412, 256
        %v2415 = vpop.permute.xlu0 %2414
        %s2417 = sor.u32 256, 8
        %2418 = vbcast.lane.b32.xlu0 %v2412, %s2417
        %v2419 = vpop.permute.xlu0 %2418
        %s2421 = sor.u32 256, 16
        %2422 = vbcast.lane.b32.xlu0 %v2412, %s2421
        %v2423 = vpop.permute.xlu0 %2422
        %s2425 = sor.u32 256, 24
        %2426 = vbcast.lane.b32.xlu0 %v2412, %s2425
        %v2427 = vpop.permute.xlu0 %2426
        %s2429 = sor.u32 256, 32
        %2430 = vbcast.lane.b32.xlu0 %v2412, %s2429
        %v2431 = vpop.permute.xlu0 %2430
        %s2433 = sor.u32 256, 40
        %2434 = vbcast.lane.b32.xlu0 %v2412, %s2433
        %v2435 = vpop.permute.xlu0 %2434
        %s2437 = sor.u32 256, 48
        %2438 = vbcast.lane.b32.xlu0 %v2412, %s2437
        %v2439 = vpop.permute.xlu0 %2438
        %s2441 = sor.u32 256, 56
        %2442 = vbcast.lane.b32.xlu0 %v2412, %s2441
        %v2443 = vpop.permute.xlu0 %2442
        %s2445 = sor.u32 256, 64
        %2446 = vbcast.lane.b32.xlu0 %v2412, %s2445
        %v2447 = vpop.permute.xlu0 %2446
        %s2449 = sor.u32 256, 72
        %2450 = vbcast.lane.b32.xlu0 %v2412, %s2449
        %v2451 = vpop.permute.xlu0 %2450
        %s2453 = sor.u32 256, 80
        %2454 = vbcast.lane.b32.xlu0 %v2412, %s2453
        %v2455 = vpop.permute.xlu0 %2454
        %s2457 = sor.u32 256, 88
        %2458 = vbcast.lane.b32.xlu0 %v2412, %s2457
        %v2459 = vpop.permute.xlu0 %2458
        %s2461 = sor.u32 256, 96
        %2462 = vbcast.lane.b32.xlu0 %v2412, %s2461
        %v2463 = vpop.permute.xlu0 %2462
        %s2465 = sor.u32 256, 104
        %2466 = vbcast.lane.b32.xlu0 %v2412, %s2465
        %v2467 = vpop.permute.xlu0 %2466
        %s2469 = sor.u32 256, 112
        %2470 = vbcast.lane.b32.xlu0 %v2412, %s2469
        %v2471 = vpop.permute.xlu0 %2470
        %s2473 = sor.u32 256, 120
        %2474 = vbcast.lane.b32.xlu0 %v2412, %s2473
        %v2475 = vpop.permute.xlu0 %2474
        %v2476 = vlaneseq
        %v2477 = vshrl.u32 %v2476, 7
        %v2478 = vsub.s32 3, %v2477
        %v2479 = vrot.slane %v1197, %v2478
        %2481 = vbcast.lane.b32.xlu0 %v2479, 256
        %v2482 = vpop.permute.xlu0 %2481
        %s2484 = sor.u32 256, 8
        %2485 = vbcast.lane.b32.xlu0 %v2479, %s2484
        %v2486 = vpop.permute.xlu0 %2485
        %s2488 = sor.u32 256, 16
        %2489 = vbcast.lane.b32.xlu0 %v2479, %s2488
        %v2490 = vpop.permute.xlu0 %2489
        %s2492 = sor.u32 256, 24
        %2493 = vbcast.lane.b32.xlu0 %v2479, %s2492
        %v2494 = vpop.permute.xlu0 %2493
        %s2496 = sor.u32 256, 32
        %2497 = vbcast.lane.b32.xlu0 %v2479, %s2496
        %v2498 = vpop.permute.xlu0 %2497
        %s2500 = sor.u32 256, 40
        %2501 = vbcast.lane.b32.xlu0 %v2479, %s2500
        %v2502 = vpop.permute.xlu0 %2501
        %s2504 = sor.u32 256, 48
        %2505 = vbcast.lane.b32.xlu0 %v2479, %s2504
        %v2506 = vpop.permute.xlu0 %2505
        %s2508 = sor.u32 256, 56
        %2509 = vbcast.lane.b32.xlu0 %v2479, %s2508
        %v2510 = vpop.permute.xlu0 %2509
        %s2512 = sor.u32 256, 64
        %2513 = vbcast.lane.b32.xlu0 %v2479, %s2512
        %v2514 = vpop.permute.xlu0 %2513
        %s2516 = sor.u32 256, 72
        %2517 = vbcast.lane.b32.xlu0 %v2479, %s2516
        %v2518 = vpop.permute.xlu0 %2517
        %s2520 = sor.u32 256, 80
        %2521 = vbcast.lane.b32.xlu0 %v2479, %s2520
        %v2522 = vpop.permute.xlu0 %2521
        %s2524 = sor.u32 256, 88
        %2525 = vbcast.lane.b32.xlu0 %v2479, %s2524
        %v2526 = vpop.permute.xlu0 %2525
        %s2528 = sor.u32 256, 96
        %2529 = vbcast.lane.b32.xlu0 %v2479, %s2528
        %v2530 = vpop.permute.xlu0 %2529
        %s2532 = sor.u32 256, 104
        %2533 = vbcast.lane.b32.xlu0 %v2479, %s2532
        %v2534 = vpop.permute.xlu0 %2533
        %s2536 = sor.u32 256, 112
        %2537 = vbcast.lane.b32.xlu0 %v2479, %s2536
        %v2538 = vpop.permute.xlu0 %2537
        %s2540 = sor.u32 256, 120
        %2541 = vbcast.lane.b32.xlu0 %v2479, %s2540
        %v2542 = vpop.permute.xlu0 %2541
        %v2543 = vlaneseq
        %v2544 = vshrl.u32 %v2543, 7
        %v2545 = vsub.s32 4, %v2544
        %v2546 = vrot.slane %v1197, %v2545
        %2548 = vbcast.lane.b32.xlu0 %v2546, 256
        %v2549 = vpop.permute.xlu0 %2548
        %s2551 = sor.u32 256, 8
        %2552 = vbcast.lane.b32.xlu0 %v2546, %s2551
        %v2553 = vpop.permute.xlu0 %2552
        %s2555 = sor.u32 256, 16
        %2556 = vbcast.lane.b32.xlu0 %v2546, %s2555
        %v2557 = vpop.permute.xlu0 %2556
        %s2559 = sor.u32 256, 24
        %2560 = vbcast.lane.b32.xlu0 %v2546, %s2559
        %v2561 = vpop.permute.xlu0 %2560
        %s2563 = sor.u32 256, 32
        %2564 = vbcast.lane.b32.xlu0 %v2546, %s2563
        %v2565 = vpop.permute.xlu0 %2564
        %s2567 = sor.u32 256, 40
        %2568 = vbcast.lane.b32.xlu0 %v2546, %s2567
        %v2569 = vpop.permute.xlu0 %2568
        %s2571 = sor.u32 256, 48
        %2572 = vbcast.lane.b32.xlu0 %v2546, %s2571
        %v2573 = vpop.permute.xlu0 %2572
        %s2575 = sor.u32 256, 56
        %2576 = vbcast.lane.b32.xlu0 %v2546, %s2575
        %v2577 = vpop.permute.xlu0 %2576
        %s2579 = sor.u32 256, 64
        %2580 = vbcast.lane.b32.xlu0 %v2546, %s2579
        %v2581 = vpop.permute.xlu0 %2580
        %s2583 = sor.u32 256, 72
        %2584 = vbcast.lane.b32.xlu0 %v2546, %s2583
        %v2585 = vpop.permute.xlu0 %2584
        %s2587 = sor.u32 256, 80
        %2588 = vbcast.lane.b32.xlu0 %v2546, %s2587
        %v2589 = vpop.permute.xlu0 %2588
        %s2591 = sor.u32 256, 88
        %2592 = vbcast.lane.b32.xlu0 %v2546, %s2591
        %v2593 = vpop.permute.xlu0 %2592
        %s2595 = sor.u32 256, 96
        %2596 = vbcast.lane.b32.xlu0 %v2546, %s2595
        %v2597 = vpop.permute.xlu0 %2596
        %s2599 = sor.u32 256, 104
        %2600 = vbcast.lane.b32.xlu0 %v2546, %s2599
        %v2601 = vpop.permute.xlu0 %2600
        %s2603 = sor.u32 256, 112
        %2604 = vbcast.lane.b32.xlu0 %v2546, %s2603
        %v2605 = vpop.permute.xlu0 %2604
        %s2607 = sor.u32 256, 120
        %2608 = vbcast.lane.b32.xlu0 %v2546, %s2607
        %v2609 = vpop.permute.xlu0 %2608
        %v2610 = vlaneseq
        %v2611 = vshrl.u32 %v2610, 7
        %v2612 = vsub.s32 5, %v2611
        %v2613 = vrot.slane %v1197, %v2612
        %2615 = vbcast.lane.b32.xlu0 %v2613, 256
        %v2616 = vpop.permute.xlu0 %2615
        %s2618 = sor.u32 256, 8
        %2619 = vbcast.lane.b32.xlu0 %v2613, %s2618
        %v2620 = vpop.permute.xlu0 %2619
        %s2622 = sor.u32 256, 16
        %2623 = vbcast.lane.b32.xlu0 %v2613, %s2622
        %v2624 = vpop.permute.xlu0 %2623
        %s2626 = sor.u32 256, 24
        %2627 = vbcast.lane.b32.xlu0 %v2613, %s2626
        %v2628 = vpop.permute.xlu0 %2627
        %s2630 = sor.u32 256, 32
        %2631 = vbcast.lane.b32.xlu0 %v2613, %s2630
        %v2632 = vpop.permute.xlu0 %2631
        %s2634 = sor.u32 256, 40
        %2635 = vbcast.lane.b32.xlu0 %v2613, %s2634
        %v2636 = vpop.permute.xlu0 %2635
        %s2638 = sor.u32 256, 48
        %2639 = vbcast.lane.b32.xlu0 %v2613, %s2638
        %v2640 = vpop.permute.xlu0 %2639
        %s2642 = sor.u32 256, 56
        %2643 = vbcast.lane.b32.xlu0 %v2613, %s2642
        %v2644 = vpop.permute.xlu0 %2643
        %s2646 = sor.u32 256, 64
        %2647 = vbcast.lane.b32.xlu0 %v2613, %s2646
        %v2648 = vpop.permute.xlu0 %2647
        %s2650 = sor.u32 256, 72
        %2651 = vbcast.lane.b32.xlu0 %v2613, %s2650
        %v2652 = vpop.permute.xlu0 %2651
        %s2654 = sor.u32 256, 80
        %2655 = vbcast.lane.b32.xlu0 %v2613, %s2654
        %v2656 = vpop.permute.xlu0 %2655
        %s2658 = sor.u32 256, 88
        %2659 = vbcast.lane.b32.xlu0 %v2613, %s2658
        %v2660 = vpop.permute.xlu0 %2659
        %s2662 = sor.u32 256, 96
        %2663 = vbcast.lane.b32.xlu0 %v2613, %s2662
        %v2664 = vpop.permute.xlu0 %2663
        %s2666 = sor.u32 256, 104
        %2667 = vbcast.lane.b32.xlu0 %v2613, %s2666
        %v2668 = vpop.permute.xlu0 %2667
        %s2670 = sor.u32 256, 112
        %2671 = vbcast.lane.b32.xlu0 %v2613, %s2670
        %v2672 = vpop.permute.xlu0 %2671
        %s2674 = sor.u32 256, 120
        %2675 = vbcast.lane.b32.xlu0 %v2613, %s2674
        %v2676 = vpop.permute.xlu0 %2675
        %v2677 = vlaneseq
        %v2678 = vshrl.u32 %v2677, 7
        %v2679 = vsub.s32 6, %v2678
        %v2680 = vrot.slane %v1197, %v2679
        %2682 = vbcast.lane.b32.xlu0 %v2680, 256
        %v2683 = vpop.permute.xlu0 %2682
        %s2685 = sor.u32 256, 8
        %2686 = vbcast.lane.b32.xlu0 %v2680, %s2685
        %v2687 = vpop.permute.xlu0 %2686
        %s2689 = sor.u32 256, 16
        %2690 = vbcast.lane.b32.xlu0 %v2680, %s2689
        %v2691 = vpop.permute.xlu0 %2690
        %s2693 = sor.u32 256, 24
        %2694 = vbcast.lane.b32.xlu0 %v2680, %s2693
        %v2695 = vpop.permute.xlu0 %2694
        %s2697 = sor.u32 256, 32
        %2698 = vbcast.lane.b32.xlu0 %v2680, %s2697
        %v2699 = vpop.permute.xlu0 %2698
        %s2701 = sor.u32 256, 40
        %2702 = vbcast.lane.b32.xlu0 %v2680, %s2701
        %v2703 = vpop.permute.xlu0 %2702
        %s2705 = sor.u32 256, 48
        %2706 = vbcast.lane.b32.xlu0 %v2680, %s2705
        %v2707 = vpop.permute.xlu0 %2706
        %s2709 = sor.u32 256, 56
        %2710 = vbcast.lane.b32.xlu0 %v2680, %s2709
        %v2711 = vpop.permute.xlu0 %2710
        %s2713 = sor.u32 256, 64
        %2714 = vbcast.lane.b32.xlu0 %v2680, %s2713
        %v2715 = vpop.permute.xlu0 %2714
        %s2717 = sor.u32 256, 72
        %2718 = vbcast.lane.b32.xlu0 %v2680, %s2717
        %v2719 = vpop.permute.xlu0 %2718
        %s2721 = sor.u32 256, 80
        %2722 = vbcast.lane.b32.xlu0 %v2680, %s2721
        %v2723 = vpop.permute.xlu0 %2722
        %s2725 = sor.u32 256, 88
        %2726 = vbcast.lane.b32.xlu0 %v2680, %s2725
        %v2727 = vpop.permute.xlu0 %2726
        %s2729 = sor.u32 256, 96
        %2730 = vbcast.lane.b32.xlu0 %v2680, %s2729
        %v2731 = vpop.permute.xlu0 %2730
        %s2733 = sor.u32 256, 104
        %2734 = vbcast.lane.b32.xlu0 %v2680, %s2733
        %v2735 = vpop.permute.xlu0 %2734
        %s2737 = sor.u32 256, 112
        %2738 = vbcast.lane.b32.xlu0 %v2680, %s2737
        %v2739 = vpop.permute.xlu0 %2738
        %s2741 = sor.u32 256, 120
        %2742 = vbcast.lane.b32.xlu0 %v2680, %s2741
        %v2743 = vpop.permute.xlu0 %2742
        %v2744 = vlaneseq
        %v2745 = vshrl.u32 %v2744, 7
        %v2746 = vsub.s32 7, %v2745
        %v2747 = vrot.slane %v1197, %v2746
        %2749 = vbcast.lane.b32.xlu0 %v2747, 256
        %v2750 = vpop.permute.xlu0 %2749
        %s2752 = sor.u32 256, 8
        %2753 = vbcast.lane.b32.xlu0 %v2747, %s2752
        %v2754 = vpop.permute.xlu0 %2753
        %s2756 = sor.u32 256, 16
        %2757 = vbcast.lane.b32.xlu0 %v2747, %s2756
        %v2758 = vpop.permute.xlu0 %2757
        %s2760 = sor.u32 256, 24
        %2761 = vbcast.lane.b32.xlu0 %v2747, %s2760
        %v2762 = vpop.permute.xlu0 %2761
        %s2764 = sor.u32 256, 32
        %2765 = vbcast.lane.b32.xlu0 %v2747, %s2764
        %v2766 = vpop.permute.xlu0 %2765
        %s2768 = sor.u32 256, 40
        %2769 = vbcast.lane.b32.xlu0 %v2747, %s2768
        %v2770 = vpop.permute.xlu0 %2769
        %s2772 = sor.u32 256, 48
        %2773 = vbcast.lane.b32.xlu0 %v2747, %s2772
        %v2774 = vpop.permute.xlu0 %2773
        %s2776 = sor.u32 256, 56
        %2777 = vbcast.lane.b32.xlu0 %v2747, %s2776
        %v2778 = vpop.permute.xlu0 %2777
        %s2780 = sor.u32 256, 64
        %2781 = vbcast.lane.b32.xlu0 %v2747, %s2780
        %v2782 = vpop.permute.xlu0 %2781
        %s2784 = sor.u32 256, 72
        %2785 = vbcast.lane.b32.xlu0 %v2747, %s2784
        %v2786 = vpop.permute.xlu0 %2785
        %s2788 = sor.u32 256, 80
        %2789 = vbcast.lane.b32.xlu0 %v2747, %s2788
        %v2790 = vpop.permute.xlu0 %2789
        %s2792 = sor.u32 256, 88
        %2793 = vbcast.lane.b32.xlu0 %v2747, %s2792
        %v2794 = vpop.permute.xlu0 %2793
        %s2796 = sor.u32 256, 96
        %2797 = vbcast.lane.b32.xlu0 %v2747, %s2796
        %v2798 = vpop.permute.xlu0 %2797
        %s2800 = sor.u32 256, 104
        %2801 = vbcast.lane.b32.xlu0 %v2747, %s2800
        %v2802 = vpop.permute.xlu0 %2801
        %s2804 = sor.u32 256, 112
        %2805 = vbcast.lane.b32.xlu0 %v2747, %s2804
        %v2806 = vpop.permute.xlu0 %2805
        %s2808 = sor.u32 256, 120
        %2809 = vbcast.lane.b32.xlu0 %v2747, %s2808
        %v2810 = vpop.permute.xlu0 %2809
        %v2811 = vlaneseq
        %v2812 = vshrl.u32 %v2811, 7
        %v2813 = vsub.s32 0, %v2812
        %v2814 = vrot.slane %v1198, %v2813
        %2816 = vbcast.lane.b32.xlu0 %v2814, 256
        %v2817 = vpop.permute.xlu0 %2816
        %s2819 = sor.u32 256, 8
        %2820 = vbcast.lane.b32.xlu0 %v2814, %s2819
        %v2821 = vpop.permute.xlu0 %2820
        %s2823 = sor.u32 256, 16
        %2824 = vbcast.lane.b32.xlu0 %v2814, %s2823
        %v2825 = vpop.permute.xlu0 %2824
        %s2827 = sor.u32 256, 24
        %2828 = vbcast.lane.b32.xlu0 %v2814, %s2827
        %v2829 = vpop.permute.xlu0 %2828
        %s2831 = sor.u32 256, 32
        %2832 = vbcast.lane.b32.xlu0 %v2814, %s2831
        %v2833 = vpop.permute.xlu0 %2832
        %s2835 = sor.u32 256, 40
        %2836 = vbcast.lane.b32.xlu0 %v2814, %s2835
        %v2837 = vpop.permute.xlu0 %2836
        %s2839 = sor.u32 256, 48
        %2840 = vbcast.lane.b32.xlu0 %v2814, %s2839
        %v2841 = vpop.permute.xlu0 %2840
        %s2843 = sor.u32 256, 56
        %2844 = vbcast.lane.b32.xlu0 %v2814, %s2843
        %v2845 = vpop.permute.xlu0 %2844
        %s2847 = sor.u32 256, 64
        %2848 = vbcast.lane.b32.xlu0 %v2814, %s2847
        %v2849 = vpop.permute.xlu0 %2848
        %s2851 = sor.u32 256, 72
        %2852 = vbcast.lane.b32.xlu0 %v2814, %s2851
        %v2853 = vpop.permute.xlu0 %2852
        %s2855 = sor.u32 256, 80
        %2856 = vbcast.lane.b32.xlu0 %v2814, %s2855
        %v2857 = vpop.permute.xlu0 %2856
        %s2859 = sor.u32 256, 88
        %2860 = vbcast.lane.b32.xlu0 %v2814, %s2859
        %v2861 = vpop.permute.xlu0 %2860
        %s2863 = sor.u32 256, 96
        %2864 = vbcast.lane.b32.xlu0 %v2814, %s2863
        %v2865 = vpop.permute.xlu0 %2864
        %s2867 = sor.u32 256, 104
        %2868 = vbcast.lane.b32.xlu0 %v2814, %s2867
        %v2869 = vpop.permute.xlu0 %2868
        %s2871 = sor.u32 256, 112
        %2872 = vbcast.lane.b32.xlu0 %v2814, %s2871
        %v2873 = vpop.permute.xlu0 %2872
        %s2875 = sor.u32 256, 120
        %2876 = vbcast.lane.b32.xlu0 %v2814, %s2875
        %v2877 = vpop.permute.xlu0 %2876
        %v2878 = vlaneseq
        %v2879 = vshrl.u32 %v2878, 7
        %v2880 = vsub.s32 1, %v2879
        %v2881 = vrot.slane %v1198, %v2880
        %2883 = vbcast.lane.b32.xlu0 %v2881, 256
        %v2884 = vpop.permute.xlu0 %2883
        %s2886 = sor.u32 256, 8
        %2887 = vbcast.lane.b32.xlu0 %v2881, %s2886
        %v2888 = vpop.permute.xlu0 %2887
        %s2890 = sor.u32 256, 16
        %2891 = vbcast.lane.b32.xlu0 %v2881, %s2890
        %v2892 = vpop.permute.xlu0 %2891
        %s2894 = sor.u32 256, 24
        %2895 = vbcast.lane.b32.xlu0 %v2881, %s2894
        %v2896 = vpop.permute.xlu0 %2895
        %s2898 = sor.u32 256, 32
        %2899 = vbcast.lane.b32.xlu0 %v2881, %s2898
        %v2900 = vpop.permute.xlu0 %2899
        %s2902 = sor.u32 256, 40
        %2903 = vbcast.lane.b32.xlu0 %v2881, %s2902
        %v2904 = vpop.permute.xlu0 %2903
        %s2906 = sor.u32 256, 48
        %2907 = vbcast.lane.b32.xlu0 %v2881, %s2906
        %v2908 = vpop.permute.xlu0 %2907
        %s2910 = sor.u32 256, 56
        %2911 = vbcast.lane.b32.xlu0 %v2881, %s2910
        %v2912 = vpop.permute.xlu0 %2911
        %s2914 = sor.u32 256, 64
        %2915 = vbcast.lane.b32.xlu0 %v2881, %s2914
        %v2916 = vpop.permute.xlu0 %2915
        %s2918 = sor.u32 256, 72
        %2919 = vbcast.lane.b32.xlu0 %v2881, %s2918
        %v2920 = vpop.permute.xlu0 %2919
        %s2922 = sor.u32 256, 80
        %2923 = vbcast.lane.b32.xlu0 %v2881, %s2922
        %v2924 = vpop.permute.xlu0 %2923
        %s2926 = sor.u32 256, 88
        %2927 = vbcast.lane.b32.xlu0 %v2881, %s2926
        %v2928 = vpop.permute.xlu0 %2927
        %s2930 = sor.u32 256, 96
        %2931 = vbcast.lane.b32.xlu0 %v2881, %s2930
        %v2932 = vpop.permute.xlu0 %2931
        %s2934 = sor.u32 256, 104
        %2935 = vbcast.lane.b32.xlu0 %v2881, %s2934
        %v2936 = vpop.permute.xlu0 %2935
        %s2938 = sor.u32 256, 112
        %2939 = vbcast.lane.b32.xlu0 %v2881, %s2938
        %v2940 = vpop.permute.xlu0 %2939
        %s2942 = sor.u32 256, 120
        %2943 = vbcast.lane.b32.xlu0 %v2881, %s2942
        %v2944 = vpop.permute.xlu0 %2943
        %v2945 = vlaneseq
        %v2946 = vshrl.u32 %v2945, 7
        %v2947 = vsub.s32 2, %v2946
        %v2948 = vrot.slane %v1198, %v2947
        %2950 = vbcast.lane.b32.xlu0 %v2948, 256
        %v2951 = vpop.permute.xlu0 %2950
        %s2953 = sor.u32 256, 8
        %2954 = vbcast.lane.b32.xlu0 %v2948, %s2953
        %v2955 = vpop.permute.xlu0 %2954
        %s2957 = sor.u32 256, 16
        %2958 = vbcast.lane.b32.xlu0 %v2948, %s2957
        %v2959 = vpop.permute.xlu0 %2958
        %s2961 = sor.u32 256, 24
        %2962 = vbcast.lane.b32.xlu0 %v2948, %s2961
        %v2963 = vpop.permute.xlu0 %2962
        %s2965 = sor.u32 256, 32
        %2966 = vbcast.lane.b32.xlu0 %v2948, %s2965
        %v2967 = vpop.permute.xlu0 %2966
        %s2969 = sor.u32 256, 40
        %2970 = vbcast.lane.b32.xlu0 %v2948, %s2969
        %v2971 = vpop.permute.xlu0 %2970
        %s2973 = sor.u32 256, 48
        %2974 = vbcast.lane.b32.xlu0 %v2948, %s2973
        %v2975 = vpop.permute.xlu0 %2974
        %s2977 = sor.u32 256, 56
        %2978 = vbcast.lane.b32.xlu0 %v2948, %s2977
        %v2979 = vpop.permute.xlu0 %2978
        %s2981 = sor.u32 256, 64
        %2982 = vbcast.lane.b32.xlu0 %v2948, %s2981
        %v2983 = vpop.permute.xlu0 %2982
        %s2985 = sor.u32 256, 72
        %2986 = vbcast.lane.b32.xlu0 %v2948, %s2985
        %v2987 = vpop.permute.xlu0 %2986
        %s2989 = sor.u32 256, 80
        %2990 = vbcast.lane.b32.xlu0 %v2948, %s2989
        %v2991 = vpop.permute.xlu0 %2990
        %s2993 = sor.u32 256, 88
        %2994 = vbcast.lane.b32.xlu0 %v2948, %s2993
        %v2995 = vpop.permute.xlu0 %2994
        %s2997 = sor.u32 256, 96
        %2998 = vbcast.lane.b32.xlu0 %v2948, %s2997
        %v2999 = vpop.permute.xlu0 %2998
        %s3001 = sor.u32 256, 104
        %3002 = vbcast.lane.b32.xlu0 %v2948, %s3001
        %v3003 = vpop.permute.xlu0 %3002
        %s3005 = sor.u32 256, 112
        %3006 = vbcast.lane.b32.xlu0 %v2948, %s3005
        %v3007 = vpop.permute.xlu0 %3006
        %s3009 = sor.u32 256, 120
        %3010 = vbcast.lane.b32.xlu0 %v2948, %s3009
        %v3011 = vpop.permute.xlu0 %3010
        %v3012 = vlaneseq
        %v3013 = vshrl.u32 %v3012, 7
        %v3014 = vsub.s32 3, %v3013
        %v3015 = vrot.slane %v1198, %v3014
        %3017 = vbcast.lane.b32.xlu0 %v3015, 256
        %v3018 = vpop.permute.xlu0 %3017
        %s3020 = sor.u32 256, 8
        %3021 = vbcast.lane.b32.xlu0 %v3015, %s3020
        %v3022 = vpop.permute.xlu0 %3021
        %s3024 = sor.u32 256, 16
        %3025 = vbcast.lane.b32.xlu0 %v3015, %s3024
        %v3026 = vpop.permute.xlu0 %3025
        %s3028 = sor.u32 256, 24
        %3029 = vbcast.lane.b32.xlu0 %v3015, %s3028
        %v3030 = vpop.permute.xlu0 %3029
        %s3032 = sor.u32 256, 32
        %3033 = vbcast.lane.b32.xlu0 %v3015, %s3032
        %v3034 = vpop.permute.xlu0 %3033
        %s3036 = sor.u32 256, 40
        %3037 = vbcast.lane.b32.xlu0 %v3015, %s3036
        %v3038 = vpop.permute.xlu0 %3037
        %s3040 = sor.u32 256, 48
        %3041 = vbcast.lane.b32.xlu0 %v3015, %s3040
        %v3042 = vpop.permute.xlu0 %3041
        %s3044 = sor.u32 256, 56
        %3045 = vbcast.lane.b32.xlu0 %v3015, %s3044
        %v3046 = vpop.permute.xlu0 %3045
        %s3048 = sor.u32 256, 64
        %3049 = vbcast.lane.b32.xlu0 %v3015, %s3048
        %v3050 = vpop.permute.xlu0 %3049
        %s3052 = sor.u32 256, 72
        %3053 = vbcast.lane.b32.xlu0 %v3015, %s3052
        %v3054 = vpop.permute.xlu0 %3053
        %s3056 = sor.u32 256, 80
        %3057 = vbcast.lane.b32.xlu0 %v3015, %s3056
        %v3058 = vpop.permute.xlu0 %3057
        %s3060 = sor.u32 256, 88
        %3061 = vbcast.lane.b32.xlu0 %v3015, %s3060
        %v3062 = vpop.permute.xlu0 %3061
        %s3064 = sor.u32 256, 96
        %3065 = vbcast.lane.b32.xlu0 %v3015, %s3064
        %v3066 = vpop.permute.xlu0 %3065
        %s3068 = sor.u32 256, 104
        %3069 = vbcast.lane.b32.xlu0 %v3015, %s3068
        %v3070 = vpop.permute.xlu0 %3069
        %s3072 = sor.u32 256, 112
        %3073 = vbcast.lane.b32.xlu0 %v3015, %s3072
        %v3074 = vpop.permute.xlu0 %3073
        %s3076 = sor.u32 256, 120
        %3077 = vbcast.lane.b32.xlu0 %v3015, %s3076
        %v3078 = vpop.permute.xlu0 %3077
        %v3079 = vlaneseq
        %v3080 = vshrl.u32 %v3079, 7
        %v3081 = vsub.s32 4, %v3080
        %v3082 = vrot.slane %v1198, %v3081
        %3084 = vbcast.lane.b32.xlu0 %v3082, 256
        %v3085 = vpop.permute.xlu0 %3084
        %s3087 = sor.u32 256, 8
        %3088 = vbcast.lane.b32.xlu0 %v3082, %s3087
        %v3089 = vpop.permute.xlu0 %3088
        %s3091 = sor.u32 256, 16
        %3092 = vbcast.lane.b32.xlu0 %v3082, %s3091
        %v3093 = vpop.permute.xlu0 %3092
        %s3095 = sor.u32 256, 24
        %3096 = vbcast.lane.b32.xlu0 %v3082, %s3095
        %v3097 = vpop.permute.xlu0 %3096
        %s3099 = sor.u32 256, 32
        %3100 = vbcast.lane.b32.xlu0 %v3082, %s3099
        %v3101 = vpop.permute.xlu0 %3100
        %s3103 = sor.u32 256, 40
        %3104 = vbcast.lane.b32.xlu0 %v3082, %s3103
        %v3105 = vpop.permute.xlu0 %3104
        %s3107 = sor.u32 256, 48
        %3108 = vbcast.lane.b32.xlu0 %v3082, %s3107
        %v3109 = vpop.permute.xlu0 %3108
        %s3111 = sor.u32 256, 56
        %3112 = vbcast.lane.b32.xlu0 %v3082, %s3111
        %v3113 = vpop.permute.xlu0 %3112
        %s3115 = sor.u32 256, 64
        %3116 = vbcast.lane.b32.xlu0 %v3082, %s3115
        %v3117 = vpop.permute.xlu0 %3116
        %s3119 = sor.u32 256, 72
        %3120 = vbcast.lane.b32.xlu0 %v3082, %s3119
        %v3121 = vpop.permute.xlu0 %3120
        %s3123 = sor.u32 256, 80
        %3124 = vbcast.lane.b32.xlu0 %v3082, %s3123
        %v3125 = vpop.permute.xlu0 %3124
        %s3127 = sor.u32 256, 88
        %3128 = vbcast.lane.b32.xlu0 %v3082, %s3127
        %v3129 = vpop.permute.xlu0 %3128
        %s3131 = sor.u32 256, 96
        %3132 = vbcast.lane.b32.xlu0 %v3082, %s3131
        %v3133 = vpop.permute.xlu0 %3132
        %s3135 = sor.u32 256, 104
        %3136 = vbcast.lane.b32.xlu0 %v3082, %s3135
        %v3137 = vpop.permute.xlu0 %3136
        %s3139 = sor.u32 256, 112
        %3140 = vbcast.lane.b32.xlu0 %v3082, %s3139
        %v3141 = vpop.permute.xlu0 %3140
        %s3143 = sor.u32 256, 120
        %3144 = vbcast.lane.b32.xlu0 %v3082, %s3143
        %v3145 = vpop.permute.xlu0 %3144
        %v3146 = vlaneseq
        %v3147 = vshrl.u32 %v3146, 7
        %v3148 = vsub.s32 5, %v3147
        %v3149 = vrot.slane %v1198, %v3148
        %3151 = vbcast.lane.b32.xlu0 %v3149, 256
        %v3152 = vpop.permute.xlu0 %3151
        %s3154 = sor.u32 256, 8
        %3155 = vbcast.lane.b32.xlu0 %v3149, %s3154
        %v3156 = vpop.permute.xlu0 %3155
        %s3158 = sor.u32 256, 16
        %3159 = vbcast.lane.b32.xlu0 %v3149, %s3158
        %v3160 = vpop.permute.xlu0 %3159
        %s3162 = sor.u32 256, 24
        %3163 = vbcast.lane.b32.xlu0 %v3149, %s3162
        %v3164 = vpop.permute.xlu0 %3163
        %s3166 = sor.u32 256, 32
        %3167 = vbcast.lane.b32.xlu0 %v3149, %s3166
        %v3168 = vpop.permute.xlu0 %3167
        %s3170 = sor.u32 256, 40
        %3171 = vbcast.lane.b32.xlu0 %v3149, %s3170
        %v3172 = vpop.permute.xlu0 %3171
        %s3174 = sor.u32 256, 48
        %3175 = vbcast.lane.b32.xlu0 %v3149, %s3174
        %v3176 = vpop.permute.xlu0 %3175
        %s3178 = sor.u32 256, 56
        %3179 = vbcast.lane.b32.xlu0 %v3149, %s3178
        %v3180 = vpop.permute.xlu0 %3179
        %s3182 = sor.u32 256, 64
        %3183 = vbcast.lane.b32.xlu0 %v3149, %s3182
        %v3184 = vpop.permute.xlu0 %3183
        %s3186 = sor.u32 256, 72
        %3187 = vbcast.lane.b32.xlu0 %v3149, %s3186
        %v3188 = vpop.permute.xlu0 %3187
        %s3190 = sor.u32 256, 80
        %3191 = vbcast.lane.b32.xlu0 %v3149, %s3190
        %v3192 = vpop.permute.xlu0 %3191
        %s3194 = sor.u32 256, 88
        %3195 = vbcast.lane.b32.xlu0 %v3149, %s3194
        %v3196 = vpop.permute.xlu0 %3195
        %s3198 = sor.u32 256, 96
        %3199 = vbcast.lane.b32.xlu0 %v3149, %s3198
        %v3200 = vpop.permute.xlu0 %3199
        %s3202 = sor.u32 256, 104
        %3203 = vbcast.lane.b32.xlu0 %v3149, %s3202
        %v3204 = vpop.permute.xlu0 %3203
        %s3206 = sor.u32 256, 112
        %3207 = vbcast.lane.b32.xlu0 %v3149, %s3206
        %v3208 = vpop.permute.xlu0 %3207
        %s3210 = sor.u32 256, 120
        %3211 = vbcast.lane.b32.xlu0 %v3149, %s3210
        %v3212 = vpop.permute.xlu0 %3211
        %v3213 = vlaneseq
        %v3214 = vshrl.u32 %v3213, 7
        %v3215 = vsub.s32 6, %v3214
        %v3216 = vrot.slane %v1198, %v3215
        %3218 = vbcast.lane.b32.xlu0 %v3216, 256
        %v3219 = vpop.permute.xlu0 %3218
        %s3221 = sor.u32 256, 8
        %3222 = vbcast.lane.b32.xlu0 %v3216, %s3221
        %v3223 = vpop.permute.xlu0 %3222
        %s3225 = sor.u32 256, 16
        %3226 = vbcast.lane.b32.xlu0 %v3216, %s3225
        %v3227 = vpop.permute.xlu0 %3226
        %s3229 = sor.u32 256, 24
        %3230 = vbcast.lane.b32.xlu0 %v3216, %s3229
        %v3231 = vpop.permute.xlu0 %3230
        %s3233 = sor.u32 256, 32
        %3234 = vbcast.lane.b32.xlu0 %v3216, %s3233
        %v3235 = vpop.permute.xlu0 %3234
        %s3237 = sor.u32 256, 40
        %3238 = vbcast.lane.b32.xlu0 %v3216, %s3237
        %v3239 = vpop.permute.xlu0 %3238
        %s3241 = sor.u32 256, 48
        %3242 = vbcast.lane.b32.xlu0 %v3216, %s3241
        %v3243 = vpop.permute.xlu0 %3242
        %s3245 = sor.u32 256, 56
        %3246 = vbcast.lane.b32.xlu0 %v3216, %s3245
        %v3247 = vpop.permute.xlu0 %3246
        %s3249 = sor.u32 256, 64
        %3250 = vbcast.lane.b32.xlu0 %v3216, %s3249
        %v3251 = vpop.permute.xlu0 %3250
        %s3253 = sor.u32 256, 72
        %3254 = vbcast.lane.b32.xlu0 %v3216, %s3253
        %v3255 = vpop.permute.xlu0 %3254
        %s3257 = sor.u32 256, 80
        %3258 = vbcast.lane.b32.xlu0 %v3216, %s3257
        %v3259 = vpop.permute.xlu0 %3258
        %s3261 = sor.u32 256, 88
        %3262 = vbcast.lane.b32.xlu0 %v3216, %s3261
        %v3263 = vpop.permute.xlu0 %3262
        %s3265 = sor.u32 256, 96
        %3266 = vbcast.lane.b32.xlu0 %v3216, %s3265
        %v3267 = vpop.permute.xlu0 %3266
        %s3269 = sor.u32 256, 104
        %3270 = vbcast.lane.b32.xlu0 %v3216, %s3269
        %v3271 = vpop.permute.xlu0 %3270
        %s3273 = sor.u32 256, 112
        %3274 = vbcast.lane.b32.xlu0 %v3216, %s3273
        %v3275 = vpop.permute.xlu0 %3274
        %s3277 = sor.u32 256, 120
        %3278 = vbcast.lane.b32.xlu0 %v3216, %s3277
        %v3279 = vpop.permute.xlu0 %3278
        %v3280 = vlaneseq
        %v3281 = vshrl.u32 %v3280, 7
        %v3282 = vsub.s32 7, %v3281
        %v3283 = vrot.slane %v1198, %v3282
        %3285 = vbcast.lane.b32.xlu0 %v3283, 256
        %v3286 = vpop.permute.xlu0 %3285
        %s3288 = sor.u32 256, 8
        %3289 = vbcast.lane.b32.xlu0 %v3283, %s3288
        %v3290 = vpop.permute.xlu0 %3289
        %s3292 = sor.u32 256, 16
        %3293 = vbcast.lane.b32.xlu0 %v3283, %s3292
        %v3294 = vpop.permute.xlu0 %3293
        %s3296 = sor.u32 256, 24
        %3297 = vbcast.lane.b32.xlu0 %v3283, %s3296
        %v3298 = vpop.permute.xlu0 %3297
        %s3300 = sor.u32 256, 32
        %3301 = vbcast.lane.b32.xlu0 %v3283, %s3300
        %v3302 = vpop.permute.xlu0 %3301
        %s3304 = sor.u32 256, 40
        %3305 = vbcast.lane.b32.xlu0 %v3283, %s3304
        %v3306 = vpop.permute.xlu0 %3305
        %s3308 = sor.u32 256, 48
        %3309 = vbcast.lane.b32.xlu0 %v3283, %s3308
        %v3310 = vpop.permute.xlu0 %3309
        %s3312 = sor.u32 256, 56
        %3313 = vbcast.lane.b32.xlu0 %v3283, %s3312
        %v3314 = vpop.permute.xlu0 %3313
        %s3316 = sor.u32 256, 64
        %3317 = vbcast.lane.b32.xlu0 %v3283, %s3316
        %v3318 = vpop.permute.xlu0 %3317
        %s3320 = sor.u32 256, 72
        %3321 = vbcast.lane.b32.xlu0 %v3283, %s3320
        %v3322 = vpop.permute.xlu0 %3321
        %s3324 = sor.u32 256, 80
        %3325 = vbcast.lane.b32.xlu0 %v3283, %s3324
        %v3326 = vpop.permute.xlu0 %3325
        %s3328 = sor.u32 256, 88
        %3329 = vbcast.lane.b32.xlu0 %v3283, %s3328
        %v3330 = vpop.permute.xlu0 %3329
        %s3332 = sor.u32 256, 96
        %3333 = vbcast.lane.b32.xlu0 %v3283, %s3332
        %v3334 = vpop.permute.xlu0 %3333
        %s3336 = sor.u32 256, 104
        %3337 = vbcast.lane.b32.xlu0 %v3283, %s3336
        %v3338 = vpop.permute.xlu0 %3337
        %s3340 = sor.u32 256, 112
        %3341 = vbcast.lane.b32.xlu0 %v3283, %s3340
        %v3342 = vpop.permute.xlu0 %3341
        %s3344 = sor.u32 256, 120
        %3345 = vbcast.lane.b32.xlu0 %v3283, %s3344
        %v3346 = vpop.permute.xlu0 %3345
        %v3859 = vsub.f32 %v1163, %v1209
        %v3860 = vsub.f32 %v1164, %v1213
        %v3861 = vsub.f32 %v1165, %v1217
        %v3862 = vsub.f32 %v1166, %v1221
        %v3863 = vsub.f32 %v1167, %v1225
        %v3864 = vsub.f32 %v1168, %v1229
        %v3865 = vsub.f32 %v1169, %v1233
        %v3866 = vsub.f32 %v1170, %v1237
        %v3867 = vsub.f32 %v1171, %v1241
        %v3868 = vsub.f32 %v1172, %v1245
        %v3869 = vsub.f32 %v1173, %v1249
        %v3870 = vsub.f32 %v1174, %v1253
        %v3871 = vsub.f32 %v1175, %v1257
        %v3872 = vsub.f32 %v1176, %v1261
        %v3873 = vsub.f32 %v1177, %v1265
        %v3874 = vsub.f32 %v1178, %v1269
        %v3875 = vsub.f32 %v1163, %v1276
        %v3876 = vsub.f32 %v1164, %v1280
        %v3877 = vsub.f32 %v1165, %v1284
        %v3878 = vsub.f32 %v1166, %v1288
        %v3879 = vsub.f32 %v1167, %v1292
        %v3880 = vsub.f32 %v1168, %v1296
        %v3881 = vsub.f32 %v1169, %v1300
        %v3882 = vsub.f32 %v1170, %v1304
        %v3883 = vsub.f32 %v1171, %v1308
        %v3884 = vsub.f32 %v1172, %v1312
        %v3885 = vsub.f32 %v1173, %v1316
        %v3886 = vsub.f32 %v1174, %v1320
        %v3887 = vsub.f32 %v1175, %v1324
        %v3888 = vsub.f32 %v1176, %v1328
        %v3889 = vsub.f32 %v1177, %v1332
        %v3890 = vsub.f32 %v1178, %v1336
        %v3891 = vsub.f32 %v1163, %v1343
        %v3892 = vsub.f32 %v1164, %v1347
        %v3893 = vsub.f32 %v1165, %v1351
        %v3894 = vsub.f32 %v1166, %v1355
        %v3895 = vsub.f32 %v1167, %v1359
        %v3896 = vsub.f32 %v1168, %v1363
        %v3897 = vsub.f32 %v1169, %v1367
        %v3898 = vsub.f32 %v1170, %v1371
        %v3899 = vsub.f32 %v1171, %v1375
        %v3900 = vsub.f32 %v1172, %v1379
        %v3901 = vsub.f32 %v1173, %v1383
        %v3902 = vsub.f32 %v1174, %v1387
        %v3903 = vsub.f32 %v1175, %v1391
        %v3904 = vsub.f32 %v1176, %v1395
        %v3905 = vsub.f32 %v1177, %v1399
        %v3906 = vsub.f32 %v1178, %v1403
        %v3907 = vsub.f32 %v1163, %v1410
        %v3908 = vsub.f32 %v1164, %v1414
        %v3909 = vsub.f32 %v1165, %v1418
        %v3910 = vsub.f32 %v1166, %v1422
        %v3911 = vsub.f32 %v1167, %v1426
        %v3912 = vsub.f32 %v1168, %v1430
        %v3913 = vsub.f32 %v1169, %v1434
        %v3914 = vsub.f32 %v1170, %v1438
        %v3915 = vsub.f32 %v1171, %v1442
        %v3916 = vsub.f32 %v1172, %v1446
        %v3917 = vsub.f32 %v1173, %v1450
        %v3918 = vsub.f32 %v1174, %v1454
        %v3919 = vsub.f32 %v1175, %v1458
        %v3920 = vsub.f32 %v1176, %v1462
        %v3921 = vsub.f32 %v1177, %v1466
        %v3922 = vsub.f32 %v1178, %v1470
        %v3923 = vsub.f32 %v1163, %v1477
        %v3924 = vsub.f32 %v1164, %v1481
        %v3925 = vsub.f32 %v1165, %v1485
        %v3926 = vsub.f32 %v1166, %v1489
        %v3927 = vsub.f32 %v1167, %v1493
        %v3928 = vsub.f32 %v1168, %v1497
        %v3929 = vsub.f32 %v1169, %v1501
        %v3930 = vsub.f32 %v1170, %v1505
        %v3931 = vsub.f32 %v1171, %v1509
        %v3932 = vsub.f32 %v1172, %v1513
        %v3933 = vsub.f32 %v1173, %v1517
        %v3934 = vsub.f32 %v1174, %v1521
        %v3935 = vsub.f32 %v1175, %v1525
        %v3936 = vsub.f32 %v1176, %v1529
        %v3937 = vsub.f32 %v1177, %v1533
        %v3938 = vsub.f32 %v1178, %v1537
        %v3939 = vsub.f32 %v1163, %v1544
        %v3940 = vsub.f32 %v1164, %v1548
        %v3941 = vsub.f32 %v1165, %v1552
        %v3942 = vsub.f32 %v1166, %v1556
        %v3943 = vsub.f32 %v1167, %v1560
        %v3944 = vsub.f32 %v1168, %v1564
        %v3945 = vsub.f32 %v1169, %v1568
        %v3946 = vsub.f32 %v1170, %v1572
        %v3947 = vsub.f32 %v1171, %v1576
        %v3948 = vsub.f32 %v1172, %v1580
        %v3949 = vsub.f32 %v1173, %v1584
        %v3950 = vsub.f32 %v1174, %v1588
        %v3951 = vsub.f32 %v1175, %v1592
        %v3952 = vsub.f32 %v1176, %v1596
        %v3953 = vsub.f32 %v1177, %v1600
        %v3954 = vsub.f32 %v1178, %v1604
        %v3955 = vsub.f32 %v1163, %v1611
        %v3956 = vsub.f32 %v1164, %v1615
        %v3957 = vsub.f32 %v1165, %v1619
        %v3958 = vsub.f32 %v1166, %v1623
        %v3959 = vsub.f32 %v1167, %v1627
        %v3960 = vsub.f32 %v1168, %v1631
        %v3961 = vsub.f32 %v1169, %v1635
        %v3962 = vsub.f32 %v1170, %v1639
        %v3963 = vsub.f32 %v1171, %v1643
        %v3964 = vsub.f32 %v1172, %v1647
        %v3965 = vsub.f32 %v1173, %v1651
        %v3966 = vsub.f32 %v1174, %v1655
        %v3967 = vsub.f32 %v1175, %v1659
        %v3968 = vsub.f32 %v1176, %v1663
        %v3969 = vsub.f32 %v1177, %v1667
        %v3970 = vsub.f32 %v1178, %v1671
        %v3971 = vsub.f32 %v1163, %v1678
        %v3972 = vsub.f32 %v1164, %v1682
        %v3973 = vsub.f32 %v1165, %v1686
        %v3974 = vsub.f32 %v1166, %v1690
        %v3975 = vsub.f32 %v1167, %v1694
        %v3976 = vsub.f32 %v1168, %v1698
        %v3977 = vsub.f32 %v1169, %v1702
        %v3978 = vsub.f32 %v1170, %v1706
        %v3979 = vsub.f32 %v1171, %v1710
        %v3980 = vsub.f32 %v1172, %v1714
        %v3981 = vsub.f32 %v1173, %v1718
        %v3982 = vsub.f32 %v1174, %v1722
        %v3983 = vsub.f32 %v1175, %v1726
        %v3984 = vsub.f32 %v1176, %v1730
        %v3985 = vsub.f32 %v1177, %v1734
        %v3986 = vsub.f32 %v1178, %v1738
        %v3987 = vsub.f32 %v1163, %v1745
        %v3988 = vsub.f32 %v1164, %v1749
        %v3989 = vsub.f32 %v1165, %v1753
        %v3990 = vsub.f32 %v1166, %v1757
        %v3991 = vsub.f32 %v1167, %v1761
        %v3992 = vsub.f32 %v1168, %v1765
        %v3993 = vsub.f32 %v1169, %v1769
        %v3994 = vsub.f32 %v1170, %v1773
        %v3995 = vsub.f32 %v1171, %v1777
        %v3996 = vsub.f32 %v1172, %v1781
        %v3997 = vsub.f32 %v1173, %v1785
        %v3998 = vsub.f32 %v1174, %v1789
        %v3999 = vsub.f32 %v1175, %v1793
        %v4000 = vsub.f32 %v1176, %v1797
        %v4001 = vsub.f32 %v1177, %v1801
        %v4002 = vsub.f32 %v1178, %v1805
        %v4003 = vsub.f32 %v1163, %v1812
        %v4004 = vsub.f32 %v1164, %v1816
        %v4005 = vsub.f32 %v1165, %v1820
        %v4006 = vsub.f32 %v1166, %v1824
        %v4007 = vsub.f32 %v1167, %v1828
        %v4008 = vsub.f32 %v1168, %v1832
        %v4009 = vsub.f32 %v1169, %v1836
        %v4010 = vsub.f32 %v1170, %v1840
        %v4011 = vsub.f32 %v1171, %v1844
        %v4012 = vsub.f32 %v1172, %v1848
        %v4013 = vsub.f32 %v1173, %v1852
        %v4014 = vsub.f32 %v1174, %v1856
        %v4015 = vsub.f32 %v1175, %v1860
        %v4016 = vsub.f32 %v1176, %v1864
        %v4017 = vsub.f32 %v1177, %v1868
        %v4018 = vsub.f32 %v1178, %v1872
        %v4019 = vsub.f32 %v1163, %v1879
        %v4020 = vsub.f32 %v1164, %v1883
        %v4021 = vsub.f32 %v1165, %v1887
        %v4022 = vsub.f32 %v1166, %v1891
        %v4023 = vsub.f32 %v1167, %v1895
        %v4024 = vsub.f32 %v1168, %v1899
        %v4025 = vsub.f32 %v1169, %v1903
        %v4026 = vsub.f32 %v1170, %v1907
        %v4027 = vsub.f32 %v1171, %v1911
        %v4028 = vsub.f32 %v1172, %v1915
        %v4029 = vsub.f32 %v1173, %v1919
        %v4030 = vsub.f32 %v1174, %v1923
        %v4031 = vsub.f32 %v1175, %v1927
        %v4032 = vsub.f32 %v1176, %v1931
        %v4033 = vsub.f32 %v1177, %v1935
        %v4034 = vsub.f32 %v1178, %v1939
        %v4035 = vsub.f32 %v1163, %v1946
        %v4036 = vsub.f32 %v1164, %v1950
        %v4037 = vsub.f32 %v1165, %v1954
        %v4038 = vsub.f32 %v1166, %v1958
        %v4039 = vsub.f32 %v1167, %v1962
        %v4040 = vsub.f32 %v1168, %v1966
        %v4041 = vsub.f32 %v1169, %v1970
        %v4042 = vsub.f32 %v1170, %v1974
        %v4043 = vsub.f32 %v1171, %v1978
        %v4044 = vsub.f32 %v1172, %v1982
        %v4045 = vsub.f32 %v1173, %v1986
        %v4046 = vsub.f32 %v1174, %v1990
        %v4047 = vsub.f32 %v1175, %v1994
        %v4048 = vsub.f32 %v1176, %v1998
        %v4049 = vsub.f32 %v1177, %v2002
        %v4050 = vsub.f32 %v1178, %v2006
        %v4051 = vsub.f32 %v1163, %v2013
        %v4052 = vsub.f32 %v1164, %v2017
        %v4053 = vsub.f32 %v1165, %v2021
        %v4054 = vsub.f32 %v1166, %v2025
        %v4055 = vsub.f32 %v1167, %v2029
        %v4056 = vsub.f32 %v1168, %v2033
        %v4057 = vsub.f32 %v1169, %v2037
        %v4058 = vsub.f32 %v1170, %v2041
        %v4059 = vsub.f32 %v1171, %v2045
        %v4060 = vsub.f32 %v1172, %v2049
        %v4061 = vsub.f32 %v1173, %v2053
        %v4062 = vsub.f32 %v1174, %v2057
        %v4063 = vsub.f32 %v1175, %v2061
        %v4064 = vsub.f32 %v1176, %v2065
        %v4065 = vsub.f32 %v1177, %v2069
        %v4066 = vsub.f32 %v1178, %v2073
        %v4067 = vsub.f32 %v1163, %v2080
        %v4068 = vsub.f32 %v1164, %v2084
        %v4069 = vsub.f32 %v1165, %v2088
        %v4070 = vsub.f32 %v1166, %v2092
        %v4071 = vsub.f32 %v1167, %v2096
        %v4072 = vsub.f32 %v1168, %v2100
        %v4073 = vsub.f32 %v1169, %v2104
        %v4074 = vsub.f32 %v1170, %v2108
        %v4075 = vsub.f32 %v1171, %v2112
        %v4076 = vsub.f32 %v1172, %v2116
        %v4077 = vsub.f32 %v1173, %v2120
        %v4078 = vsub.f32 %v1174, %v2124
        %v4079 = vsub.f32 %v1175, %v2128
        %v4080 = vsub.f32 %v1176, %v2132
        %v4081 = vsub.f32 %v1177, %v2136
        %v4082 = vsub.f32 %v1178, %v2140
        %v4083 = vsub.f32 %v1163, %v2147
        %v4084 = vsub.f32 %v1164, %v2151
        %v4085 = vsub.f32 %v1165, %v2155
        %v4086 = vsub.f32 %v1166, %v2159
        %v4087 = vsub.f32 %v1167, %v2163
        %v4088 = vsub.f32 %v1168, %v2167
        %v4089 = vsub.f32 %v1169, %v2171
        %v4090 = vsub.f32 %v1170, %v2175
        %v4091 = vsub.f32 %v1171, %v2179
        %v4092 = vsub.f32 %v1172, %v2183
        %v4093 = vsub.f32 %v1173, %v2187
        %v4094 = vsub.f32 %v1174, %v2191
        %v4095 = vsub.f32 %v1175, %v2195
        %v4096 = vsub.f32 %v1176, %v2199
        %v4097 = vsub.f32 %v1177, %v2203
        %v4098 = vsub.f32 %v1178, %v2207
        %v4099 = vsub.f32 %v1163, %v2214
        %v4100 = vsub.f32 %v1164, %v2218
        %v4101 = vsub.f32 %v1165, %v2222
        %v4102 = vsub.f32 %v1166, %v2226
        %v4103 = vsub.f32 %v1167, %v2230
        %v4104 = vsub.f32 %v1168, %v2234
        %v4105 = vsub.f32 %v1169, %v2238
        %v4106 = vsub.f32 %v1170, %v2242
        %v4107 = vsub.f32 %v1171, %v2246
        %v4108 = vsub.f32 %v1172, %v2250
        %v4109 = vsub.f32 %v1173, %v2254
        %v4110 = vsub.f32 %v1174, %v2258
        %v4111 = vsub.f32 %v1175, %v2262
        %v4112 = vsub.f32 %v1176, %v2266
        %v4113 = vsub.f32 %v1177, %v2270
        %v4114 = vsub.f32 %v1178, %v2274
        %v4115 = vsub.f32 %v1179, %v2281
        %v4116 = vsub.f32 %v1180, %v2285
        %v4117 = vsub.f32 %v1181, %v2289
        %v4118 = vsub.f32 %v1182, %v2293
        %v4119 = vsub.f32 %v1183, %v2297
        %v4120 = vsub.f32 %v1184, %v2301
        %v4121 = vsub.f32 %v1185, %v2305
        %v4122 = vsub.f32 %v1186, %v2309
        %v4123 = vsub.f32 %v1187, %v2313
        %v4124 = vsub.f32 %v1188, %v2317
        %v4125 = vsub.f32 %v1189, %v2321
        %v4126 = vsub.f32 %v1190, %v2325
        %v4127 = vsub.f32 %v1191, %v2329
        %v4128 = vsub.f32 %v1192, %v2333
        %v4129 = vsub.f32 %v1193, %v2337
        %v4130 = vsub.f32 %v1194, %v2341
        %v4131 = vsub.f32 %v1179, %v2348
        %v4132 = vsub.f32 %v1180, %v2352
        %v4133 = vsub.f32 %v1181, %v2356
        %v4134 = vsub.f32 %v1182, %v2360
        %v4135 = vsub.f32 %v1183, %v2364
        %v4136 = vsub.f32 %v1184, %v2368
        %v4137 = vsub.f32 %v1185, %v2372
        %v4138 = vsub.f32 %v1186, %v2376
        %v4139 = vsub.f32 %v1187, %v2380
        %v4140 = vsub.f32 %v1188, %v2384
        %v4141 = vsub.f32 %v1189, %v2388
        %v4142 = vsub.f32 %v1190, %v2392
        %v4143 = vsub.f32 %v1191, %v2396
        %v4144 = vsub.f32 %v1192, %v2400
        %v4145 = vsub.f32 %v1193, %v2404
        %v4146 = vsub.f32 %v1194, %v2408
        %v4147 = vsub.f32 %v1179, %v2415
        %v4148 = vsub.f32 %v1180, %v2419
        %v4149 = vsub.f32 %v1181, %v2423
        %v4150 = vsub.f32 %v1182, %v2427
        %v4151 = vsub.f32 %v1183, %v2431
        %v4152 = vsub.f32 %v1184, %v2435
        %v4153 = vsub.f32 %v1185, %v2439
        %v4154 = vsub.f32 %v1186, %v2443
        %v4155 = vsub.f32 %v1187, %v2447
        %v4156 = vsub.f32 %v1188, %v2451
        %v4157 = vsub.f32 %v1189, %v2455
        %v4158 = vsub.f32 %v1190, %v2459
        %v4159 = vsub.f32 %v1191, %v2463
        %v4160 = vsub.f32 %v1192, %v2467
        %v4161 = vsub.f32 %v1193, %v2471
        %v4162 = vsub.f32 %v1194, %v2475
        %v4163 = vsub.f32 %v1179, %v2482
        %v4164 = vsub.f32 %v1180, %v2486
        %v4165 = vsub.f32 %v1181, %v2490
        %v4166 = vsub.f32 %v1182, %v2494
        %v4167 = vsub.f32 %v1183, %v2498
        %v4168 = vsub.f32 %v1184, %v2502
        %v4169 = vsub.f32 %v1185, %v2506
        %v4170 = vsub.f32 %v1186, %v2510
        %v4171 = vsub.f32 %v1187, %v2514
        %v4172 = vsub.f32 %v1188, %v2518
        %v4173 = vsub.f32 %v1189, %v2522
        %v4174 = vsub.f32 %v1190, %v2526
        %v4175 = vsub.f32 %v1191, %v2530
        %v4176 = vsub.f32 %v1192, %v2534
        %v4177 = vsub.f32 %v1193, %v2538
        %v4178 = vsub.f32 %v1194, %v2542
        %v4179 = vsub.f32 %v1179, %v2549
        %v4180 = vsub.f32 %v1180, %v2553
        %v4181 = vsub.f32 %v1181, %v2557
        %v4182 = vsub.f32 %v1182, %v2561
        %v4183 = vsub.f32 %v1183, %v2565
        %v4184 = vsub.f32 %v1184, %v2569
        %v4185 = vsub.f32 %v1185, %v2573
        %v4186 = vsub.f32 %v1186, %v2577
        %v4187 = vsub.f32 %v1187, %v2581
        %v4188 = vsub.f32 %v1188, %v2585
        %v4189 = vsub.f32 %v1189, %v2589
        %v4190 = vsub.f32 %v1190, %v2593
        %v4191 = vsub.f32 %v1191, %v2597
        %v4192 = vsub.f32 %v1192, %v2601
        %v4193 = vsub.f32 %v1193, %v2605
        %v4194 = vsub.f32 %v1194, %v2609
        %v4195 = vsub.f32 %v1179, %v2616
        %v4196 = vsub.f32 %v1180, %v2620
        %v4197 = vsub.f32 %v1181, %v2624
        %v4198 = vsub.f32 %v1182, %v2628
        %v4199 = vsub.f32 %v1183, %v2632
        %v4200 = vsub.f32 %v1184, %v2636
        %v4201 = vsub.f32 %v1185, %v2640
        %v4202 = vsub.f32 %v1186, %v2644
        %v4203 = vsub.f32 %v1187, %v2648
        %v4204 = vsub.f32 %v1188, %v2652
        %v4205 = vsub.f32 %v1189, %v2656
        %v4206 = vsub.f32 %v1190, %v2660
        %v4207 = vsub.f32 %v1191, %v2664
        %v4208 = vsub.f32 %v1192, %v2668
        %v4209 = vsub.f32 %v1193, %v2672
        %v4210 = vsub.f32 %v1194, %v2676
        %v4211 = vsub.f32 %v1179, %v2683
        %v4212 = vsub.f32 %v1180, %v2687
        %v4213 = vsub.f32 %v1181, %v2691
        %v4214 = vsub.f32 %v1182, %v2695
        %v4215 = vsub.f32 %v1183, %v2699
        %v4216 = vsub.f32 %v1184, %v2703
        %v4217 = vsub.f32 %v1185, %v2707
        %v4218 = vsub.f32 %v1186, %v2711
        %v4219 = vsub.f32 %v1187, %v2715
        %v4220 = vsub.f32 %v1188, %v2719
        %v4221 = vsub.f32 %v1189, %v2723
        %v4222 = vsub.f32 %v1190, %v2727
        %v4223 = vsub.f32 %v1191, %v2731
        %v4224 = vsub.f32 %v1192, %v2735
        %v4225 = vsub.f32 %v1193, %v2739
        %v4226 = vsub.f32 %v1194, %v2743
        %v4227 = vsub.f32 %v1179, %v2750
        %v4228 = vsub.f32 %v1180, %v2754
        %v4229 = vsub.f32 %v1181, %v2758
        %v4230 = vsub.f32 %v1182, %v2762
        %v4231 = vsub.f32 %v1183, %v2766
        %v4232 = vsub.f32 %v1184, %v2770
        %v4233 = vsub.f32 %v1185, %v2774
        %v4234 = vsub.f32 %v1186, %v2778
        %v4235 = vsub.f32 %v1187, %v2782
        %v4236 = vsub.f32 %v1188, %v2786
        %v4237 = vsub.f32 %v1189, %v2790
        %v4238 = vsub.f32 %v1190, %v2794
        %v4239 = vsub.f32 %v1191, %v2798
        %v4240 = vsub.f32 %v1192, %v2802
        %v4241 = vsub.f32 %v1193, %v2806
        %v4242 = vsub.f32 %v1194, %v2810
        %v4243 = vsub.f32 %v1179, %v2817
        %v4244 = vsub.f32 %v1180, %v2821
        %v4245 = vsub.f32 %v1181, %v2825
        %v4246 = vsub.f32 %v1182, %v2829
        %v4247 = vsub.f32 %v1183, %v2833
        %v4248 = vsub.f32 %v1184, %v2837
        %v4249 = vsub.f32 %v1185, %v2841
        %v4250 = vsub.f32 %v1186, %v2845
        %v4251 = vsub.f32 %v1187, %v2849
        %v4252 = vsub.f32 %v1188, %v2853
        %v4253 = vsub.f32 %v1189, %v2857
        %v4254 = vsub.f32 %v1190, %v2861
        %v4255 = vsub.f32 %v1191, %v2865
        %v4256 = vsub.f32 %v1192, %v2869
        %v4257 = vsub.f32 %v1193, %v2873
        %v4258 = vsub.f32 %v1194, %v2877
        %v4259 = vsub.f32 %v1179, %v2884
        %v4260 = vsub.f32 %v1180, %v2888
        %v4261 = vsub.f32 %v1181, %v2892
        %v4262 = vsub.f32 %v1182, %v2896
        %v4263 = vsub.f32 %v1183, %v2900
        %v4264 = vsub.f32 %v1184, %v2904
        %v4265 = vsub.f32 %v1185, %v2908
        %v4266 = vsub.f32 %v1186, %v2912
        %v4267 = vsub.f32 %v1187, %v2916
        %v4268 = vsub.f32 %v1188, %v2920
        %v4269 = vsub.f32 %v1189, %v2924
        %v4270 = vsub.f32 %v1190, %v2928
        %v4271 = vsub.f32 %v1191, %v2932
        %v4272 = vsub.f32 %v1192, %v2936
        %v4273 = vsub.f32 %v1193, %v2940
        %v4274 = vsub.f32 %v1194, %v2944
        %v4275 = vsub.f32 %v1179, %v2951
        %v4276 = vsub.f32 %v1180, %v2955
        %v4277 = vsub.f32 %v1181, %v2959
        %v4278 = vsub.f32 %v1182, %v2963
        %v4279 = vsub.f32 %v1183, %v2967
        %v4280 = vsub.f32 %v1184, %v2971
        %v4281 = vsub.f32 %v1185, %v2975
        %v4282 = vsub.f32 %v1186, %v2979
        %v4283 = vsub.f32 %v1187, %v2983
        %v4284 = vsub.f32 %v1188, %v2987
        %v4285 = vsub.f32 %v1189, %v2991
        %v4286 = vsub.f32 %v1190, %v2995
        %v4287 = vsub.f32 %v1191, %v2999
        %v4288 = vsub.f32 %v1192, %v3003
        %v4289 = vsub.f32 %v1193, %v3007
        %v4290 = vsub.f32 %v1194, %v3011
        %v4291 = vsub.f32 %v1179, %v3018
        %v4292 = vsub.f32 %v1180, %v3022
        %v4293 = vsub.f32 %v1181, %v3026
        %v4294 = vsub.f32 %v1182, %v3030
        %v4295 = vsub.f32 %v1183, %v3034
        %v4296 = vsub.f32 %v1184, %v3038
        %v4297 = vsub.f32 %v1185, %v3042
        %v4298 = vsub.f32 %v1186, %v3046
        %v4299 = vsub.f32 %v1187, %v3050
        %v4300 = vsub.f32 %v1188, %v3054
        %v4301 = vsub.f32 %v1189, %v3058
        %v4302 = vsub.f32 %v1190, %v3062
        %v4303 = vsub.f32 %v1191, %v3066
        %v4304 = vsub.f32 %v1192, %v3070
        %v4305 = vsub.f32 %v1193, %v3074
        %v4306 = vsub.f32 %v1194, %v3078
        %v4307 = vsub.f32 %v1179, %v3085
        %v4308 = vsub.f32 %v1180, %v3089
        %v4309 = vsub.f32 %v1181, %v3093
        %v4310 = vsub.f32 %v1182, %v3097
        %v4311 = vsub.f32 %v1183, %v3101
        %v4312 = vsub.f32 %v1184, %v3105
        %v4313 = vsub.f32 %v1185, %v3109
        %v4314 = vsub.f32 %v1186, %v3113
        %v4315 = vsub.f32 %v1187, %v3117
        %v4316 = vsub.f32 %v1188, %v3121
        %v4317 = vsub.f32 %v1189, %v3125
        %v4318 = vsub.f32 %v1190, %v3129
        %v4319 = vsub.f32 %v1191, %v3133
        %v4320 = vsub.f32 %v1192, %v3137
        %v4321 = vsub.f32 %v1193, %v3141
        %v4322 = vsub.f32 %v1194, %v3145
        %v4323 = vsub.f32 %v1179, %v3152
        %v4324 = vsub.f32 %v1180, %v3156
        %v4325 = vsub.f32 %v1181, %v3160
        %v4326 = vsub.f32 %v1182, %v3164
        %v4327 = vsub.f32 %v1183, %v3168
        %v4328 = vsub.f32 %v1184, %v3172
        %v4329 = vsub.f32 %v1185, %v3176
        %v4330 = vsub.f32 %v1186, %v3180
        %v4331 = vsub.f32 %v1187, %v3184
        %v4332 = vsub.f32 %v1188, %v3188
        %v4333 = vsub.f32 %v1189, %v3192
        %v4334 = vsub.f32 %v1190, %v3196
        %v4335 = vsub.f32 %v1191, %v3200
        %v4336 = vsub.f32 %v1192, %v3204
        %v4337 = vsub.f32 %v1193, %v3208
        %v4338 = vsub.f32 %v1194, %v3212
        %v4339 = vsub.f32 %v1179, %v3219
        %v4340 = vsub.f32 %v1180, %v3223
        %v4341 = vsub.f32 %v1181, %v3227
        %v4342 = vsub.f32 %v1182, %v3231
        %v4343 = vsub.f32 %v1183, %v3235
        %v4344 = vsub.f32 %v1184, %v3239
        %v4345 = vsub.f32 %v1185, %v3243
        %v4346 = vsub.f32 %v1186, %v3247
        %v4347 = vsub.f32 %v1187, %v3251
        %v4348 = vsub.f32 %v1188, %v3255
        %v4349 = vsub.f32 %v1189, %v3259
        %v4350 = vsub.f32 %v1190, %v3263
        %v4351 = vsub.f32 %v1191, %v3267
        %v4352 = vsub.f32 %v1192, %v3271
        %v4353 = vsub.f32 %v1193, %v3275
        %v4354 = vsub.f32 %v1194, %v3279
        %v4355 = vsub.f32 %v1179, %v3286
        %v4356 = vsub.f32 %v1180, %v3290
        %v4357 = vsub.f32 %v1181, %v3294
        %v4358 = vsub.f32 %v1182, %v3298
        %v4359 = vsub.f32 %v1183, %v3302
        %v4360 = vsub.f32 %v1184, %v3306
        %v4361 = vsub.f32 %v1185, %v3310
        %v4362 = vsub.f32 %v1186, %v3314
        %v4363 = vsub.f32 %v1187, %v3318
        %v4364 = vsub.f32 %v1188, %v3322
        %v4365 = vsub.f32 %v1189, %v3326
        %v4366 = vsub.f32 %v1190, %v3330
        %v4367 = vsub.f32 %v1191, %v3334
        %v4368 = vsub.f32 %v1192, %v3338
        %v4369 = vsub.f32 %v1193, %v3342
        %v4370 = vsub.f32 %v1194, %v3346
        %4883 = vset.pattern.permute.xlu0 0
        %4884 = vperm.xlu0 %4883, %v3859
        %v4885 = vpop.permute.xlu0 %4884
        %4886 = vset.pattern.permute.xlu0 0
        %4887 = vperm.xlu0 %4886, %v3860
        %v4888 = vpop.permute.xlu0 %4887
        %4889 = vset.pattern.permute.xlu0 0
        %4890 = vperm.xlu0 %4889, %v3861
        %v4891 = vpop.permute.xlu0 %4890
        %4892 = vset.pattern.permute.xlu0 0
        %4893 = vperm.xlu0 %4892, %v3862
        %v4894 = vpop.permute.xlu0 %4893
        %4895 = vset.pattern.permute.xlu0 0
        %4896 = vperm.xlu0 %4895, %v3863
        %v4897 = vpop.permute.xlu0 %4896
        %4898 = vset.pattern.permute.xlu0 0
        %4899 = vperm.xlu0 %4898, %v3864
        %v4900 = vpop.permute.xlu0 %4899
        %4901 = vset.pattern.permute.xlu0 0
        %4902 = vperm.xlu0 %4901, %v3865
        %v4903 = vpop.permute.xlu0 %4902
        %4904 = vset.pattern.permute.xlu0 0
        %4905 = vperm.xlu0 %4904, %v3866
        %v4906 = vpop.permute.xlu0 %4905
        %4907 = vset.pattern.permute.xlu0 0
        %4908 = vperm.xlu0 %4907, %v3867
        %v4909 = vpop.permute.xlu0 %4908
        %4910 = vset.pattern.permute.xlu0 0
        %4911 = vperm.xlu0 %4910, %v3868
        %v4912 = vpop.permute.xlu0 %4911
        %4913 = vset.pattern.permute.xlu0 0
        %4914 = vperm.xlu0 %4913, %v3869
        %v4915 = vpop.permute.xlu0 %4914
        %4916 = vset.pattern.permute.xlu0 0
        %4917 = vperm.xlu0 %4916, %v3870
        %v4918 = vpop.permute.xlu0 %4917
        %4919 = vset.pattern.permute.xlu0 0
        %4920 = vperm.xlu0 %4919, %v3871
        %v4921 = vpop.permute.xlu0 %4920
        %4922 = vset.pattern.permute.xlu0 0
        %4923 = vperm.xlu0 %4922, %v3872
        %v4924 = vpop.permute.xlu0 %4923
        %4925 = vset.pattern.permute.xlu0 0
        %4926 = vperm.xlu0 %4925, %v3873
        %v4927 = vpop.permute.xlu0 %4926
        %4928 = vset.pattern.permute.xlu0 0
        %4929 = vperm.xlu0 %4928, %v3874
        %v4930 = vpop.permute.xlu0 %4929
        %4931 = vset.pattern.permute.xlu0 0
        %4932 = vperm.xlu0 %4931, %v3875
        %v4933 = vpop.permute.xlu0 %4932
        %4934 = vset.pattern.permute.xlu0 0
        %4935 = vperm.xlu0 %4934, %v3876
        %v4936 = vpop.permute.xlu0 %4935
        %4937 = vset.pattern.permute.xlu0 0
        %4938 = vperm.xlu0 %4937, %v3877
        %v4939 = vpop.permute.xlu0 %4938
        %4940 = vset.pattern.permute.xlu0 0
        %4941 = vperm.xlu0 %4940, %v3878
        %v4942 = vpop.permute.xlu0 %4941
        %4943 = vset.pattern.permute.xlu0 0
        %4944 = vperm.xlu0 %4943, %v3879
        %v4945 = vpop.permute.xlu0 %4944
        %4946 = vset.pattern.permute.xlu0 0
        %4947 = vperm.xlu0 %4946, %v3880
        %v4948 = vpop.permute.xlu0 %4947
        %4949 = vset.pattern.permute.xlu0 0
        %4950 = vperm.xlu0 %4949, %v3881
        %v4951 = vpop.permute.xlu0 %4950
        %4952 = vset.pattern.permute.xlu0 0
        %4953 = vperm.xlu0 %4952, %v3882
        %v4954 = vpop.permute.xlu0 %4953
        %4955 = vset.pattern.permute.xlu0 0
        %4956 = vperm.xlu0 %4955, %v3883
        %v4957 = vpop.permute.xlu0 %4956
        %4958 = vset.pattern.permute.xlu0 0
        %4959 = vperm.xlu0 %4958, %v3884
        %v4960 = vpop.permute.xlu0 %4959
        %4961 = vset.pattern.permute.xlu0 0
        %4962 = vperm.xlu0 %4961, %v3885
        %v4963 = vpop.permute.xlu0 %4962
        %4964 = vset.pattern.permute.xlu0 0
        %4965 = vperm.xlu0 %4964, %v3886
        %v4966 = vpop.permute.xlu0 %4965
        %4967 = vset.pattern.permute.xlu0 0
        %4968 = vperm.xlu0 %4967, %v3887
        %v4969 = vpop.permute.xlu0 %4968
        %4970 = vset.pattern.permute.xlu0 0
        %4971 = vperm.xlu0 %4970, %v3888
        %v4972 = vpop.permute.xlu0 %4971
        %4973 = vset.pattern.permute.xlu0 0
        %4974 = vperm.xlu0 %4973, %v3889
        %v4975 = vpop.permute.xlu0 %4974
        %4976 = vset.pattern.permute.xlu0 0
        %4977 = vperm.xlu0 %4976, %v3890
        %v4978 = vpop.permute.xlu0 %4977
        %4979 = vset.pattern.permute.xlu0 0
        %4980 = vperm.xlu0 %4979, %v3891
        %v4981 = vpop.permute.xlu0 %4980
        %4982 = vset.pattern.permute.xlu0 0
        %4983 = vperm.xlu0 %4982, %v3892
        %v4984 = vpop.permute.xlu0 %4983
        %4985 = vset.pattern.permute.xlu0 0
        %4986 = vperm.xlu0 %4985, %v3893
        %v4987 = vpop.permute.xlu0 %4986
        %4988 = vset.pattern.permute.xlu0 0
        %4989 = vperm.xlu0 %4988, %v3894
        %v4990 = vpop.permute.xlu0 %4989
        %4991 = vset.pattern.permute.xlu0 0
        %4992 = vperm.xlu0 %4991, %v3895
        %v4993 = vpop.permute.xlu0 %4992
        %4994 = vset.pattern.permute.xlu0 0
        %4995 = vperm.xlu0 %4994, %v3896
        %v4996 = vpop.permute.xlu0 %4995
        %4997 = vset.pattern.permute.xlu0 0
        %4998 = vperm.xlu0 %4997, %v3897
        %v4999 = vpop.permute.xlu0 %4998
        %5000 = vset.pattern.permute.xlu0 0
        %5001 = vperm.xlu0 %5000, %v3898
        %v5002 = vpop.permute.xlu0 %5001
        %5003 = vset.pattern.permute.xlu0 0
        %5004 = vperm.xlu0 %5003, %v3899
        %v5005 = vpop.permute.xlu0 %5004
        %5006 = vset.pattern.permute.xlu0 0
        %5007 = vperm.xlu0 %5006, %v3900
        %v5008 = vpop.permute.xlu0 %5007
        %5009 = vset.pattern.permute.xlu0 0
        %5010 = vperm.xlu0 %5009, %v3901
        %v5011 = vpop.permute.xlu0 %5010
        %5012 = vset.pattern.permute.xlu0 0
        %5013 = vperm.xlu0 %5012, %v3902
        %v5014 = vpop.permute.xlu0 %5013
        %5015 = vset.pattern.permute.xlu0 0
        %5016 = vperm.xlu0 %5015, %v3903
        %v5017 = vpop.permute.xlu0 %5016
        %5018 = vset.pattern.permute.xlu0 0
        %5019 = vperm.xlu0 %5018, %v3904
        %v5020 = vpop.permute.xlu0 %5019
        %5021 = vset.pattern.permute.xlu0 0
        %5022 = vperm.xlu0 %5021, %v3905
        %v5023 = vpop.permute.xlu0 %5022
        %5024 = vset.pattern.permute.xlu0 0
        %5025 = vperm.xlu0 %5024, %v3906
        %v5026 = vpop.permute.xlu0 %5025
        %5027 = vset.pattern.permute.xlu0 0
        %5028 = vperm.xlu0 %5027, %v3907
        %v5029 = vpop.permute.xlu0 %5028
        %5030 = vset.pattern.permute.xlu0 0
        %5031 = vperm.xlu0 %5030, %v3908
        %v5032 = vpop.permute.xlu0 %5031
        %5033 = vset.pattern.permute.xlu0 0
        %5034 = vperm.xlu0 %5033, %v3909
        %v5035 = vpop.permute.xlu0 %5034
        %5036 = vset.pattern.permute.xlu0 0
        %5037 = vperm.xlu0 %5036, %v3910
        %v5038 = vpop.permute.xlu0 %5037
        %5039 = vset.pattern.permute.xlu0 0
        %5040 = vperm.xlu0 %5039, %v3911
        %v5041 = vpop.permute.xlu0 %5040
        %5042 = vset.pattern.permute.xlu0 0
        %5043 = vperm.xlu0 %5042, %v3912
        %v5044 = vpop.permute.xlu0 %5043
        %5045 = vset.pattern.permute.xlu0 0
        %5046 = vperm.xlu0 %5045, %v3913
        %v5047 = vpop.permute.xlu0 %5046
        %5048 = vset.pattern.permute.xlu0 0
        %5049 = vperm.xlu0 %5048, %v3914
        %v5050 = vpop.permute.xlu0 %5049
        %5051 = vset.pattern.permute.xlu0 0
        %5052 = vperm.xlu0 %5051, %v3915
        %v5053 = vpop.permute.xlu0 %5052
        %5054 = vset.pattern.permute.xlu0 0
        %5055 = vperm.xlu0 %5054, %v3916
        %v5056 = vpop.permute.xlu0 %5055
        %5057 = vset.pattern.permute.xlu0 0
        %5058 = vperm.xlu0 %5057, %v3917
        %v5059 = vpop.permute.xlu0 %5058
        %5060 = vset.pattern.permute.xlu0 0
        %5061 = vperm.xlu0 %5060, %v3918
        %v5062 = vpop.permute.xlu0 %5061
        %5063 = vset.pattern.permute.xlu0 0
        %5064 = vperm.xlu0 %5063, %v3919
        %v5065 = vpop.permute.xlu0 %5064
        %5066 = vset.pattern.permute.xlu0 0
        %5067 = vperm.xlu0 %5066, %v3920
        %v5068 = vpop.permute.xlu0 %5067
        %5069 = vset.pattern.permute.xlu0 0
        %5070 = vperm.xlu0 %5069, %v3921
        %v5071 = vpop.permute.xlu0 %5070
        %5072 = vset.pattern.permute.xlu0 0
        %5073 = vperm.xlu0 %5072, %v3922
        %v5074 = vpop.permute.xlu0 %5073
        %5075 = vset.pattern.permute.xlu0 0
        %5076 = vperm.xlu0 %5075, %v3923
        %v5077 = vpop.permute.xlu0 %5076
        %5078 = vset.pattern.permute.xlu0 0
        %5079 = vperm.xlu0 %5078, %v3924
        %v5080 = vpop.permute.xlu0 %5079
        %5081 = vset.pattern.permute.xlu0 0
        %5082 = vperm.xlu0 %5081, %v3925
        %v5083 = vpop.permute.xlu0 %5082
        %5084 = vset.pattern.permute.xlu0 0
        %5085 = vperm.xlu0 %5084, %v3926
        %v5086 = vpop.permute.xlu0 %5085
        %5087 = vset.pattern.permute.xlu0 0
        %5088 = vperm.xlu0 %5087, %v3927
        %v5089 = vpop.permute.xlu0 %5088
        %5090 = vset.pattern.permute.xlu0 0
        %5091 = vperm.xlu0 %5090, %v3928
        %v5092 = vpop.permute.xlu0 %5091
        %5093 = vset.pattern.permute.xlu0 0
        %5094 = vperm.xlu0 %5093, %v3929
        %v5095 = vpop.permute.xlu0 %5094
        %5096 = vset.pattern.permute.xlu0 0
        %5097 = vperm.xlu0 %5096, %v3930
        %v5098 = vpop.permute.xlu0 %5097
        %5099 = vset.pattern.permute.xlu0 0
        %5100 = vperm.xlu0 %5099, %v3931
        %v5101 = vpop.permute.xlu0 %5100
        %5102 = vset.pattern.permute.xlu0 0
        %5103 = vperm.xlu0 %5102, %v3932
        %v5104 = vpop.permute.xlu0 %5103
        %5105 = vset.pattern.permute.xlu0 0
        %5106 = vperm.xlu0 %5105, %v3933
        %v5107 = vpop.permute.xlu0 %5106
        %5108 = vset.pattern.permute.xlu0 0
        %5109 = vperm.xlu0 %5108, %v3934
        %v5110 = vpop.permute.xlu0 %5109
        %5111 = vset.pattern.permute.xlu0 0
        %5112 = vperm.xlu0 %5111, %v3935
        %v5113 = vpop.permute.xlu0 %5112
        %5114 = vset.pattern.permute.xlu0 0
        %5115 = vperm.xlu0 %5114, %v3936
        %v5116 = vpop.permute.xlu0 %5115
        %5117 = vset.pattern.permute.xlu0 0
        %5118 = vperm.xlu0 %5117, %v3937
        %v5119 = vpop.permute.xlu0 %5118
        %5120 = vset.pattern.permute.xlu0 0
        %5121 = vperm.xlu0 %5120, %v3938
        %v5122 = vpop.permute.xlu0 %5121
        %5123 = vset.pattern.permute.xlu0 0
        %5124 = vperm.xlu0 %5123, %v3939
        %v5125 = vpop.permute.xlu0 %5124
        %5126 = vset.pattern.permute.xlu0 0
        %5127 = vperm.xlu0 %5126, %v3940
        %v5128 = vpop.permute.xlu0 %5127
        %5129 = vset.pattern.permute.xlu0 0
        %5130 = vperm.xlu0 %5129, %v3941
        %v5131 = vpop.permute.xlu0 %5130
        %5132 = vset.pattern.permute.xlu0 0
        %5133 = vperm.xlu0 %5132, %v3942
        %v5134 = vpop.permute.xlu0 %5133
        %5135 = vset.pattern.permute.xlu0 0
        %5136 = vperm.xlu0 %5135, %v3943
        %v5137 = vpop.permute.xlu0 %5136
        %5138 = vset.pattern.permute.xlu0 0
        %5139 = vperm.xlu0 %5138, %v3944
        %v5140 = vpop.permute.xlu0 %5139
        %5141 = vset.pattern.permute.xlu0 0
        %5142 = vperm.xlu0 %5141, %v3945
        %v5143 = vpop.permute.xlu0 %5142
        %5144 = vset.pattern.permute.xlu0 0
        %5145 = vperm.xlu0 %5144, %v3946
        %v5146 = vpop.permute.xlu0 %5145
        %5147 = vset.pattern.permute.xlu0 0
        %5148 = vperm.xlu0 %5147, %v3947
        %v5149 = vpop.permute.xlu0 %5148
        %5150 = vset.pattern.permute.xlu0 0
        %5151 = vperm.xlu0 %5150, %v3948
        %v5152 = vpop.permute.xlu0 %5151
        %5153 = vset.pattern.permute.xlu0 0
        %5154 = vperm.xlu0 %5153, %v3949
        %v5155 = vpop.permute.xlu0 %5154
        %5156 = vset.pattern.permute.xlu0 0
        %5157 = vperm.xlu0 %5156, %v3950
        %v5158 = vpop.permute.xlu0 %5157
        %5159 = vset.pattern.permute.xlu0 0
        %5160 = vperm.xlu0 %5159, %v3951
        %v5161 = vpop.permute.xlu0 %5160
        %5162 = vset.pattern.permute.xlu0 0
        %5163 = vperm.xlu0 %5162, %v3952
        %v5164 = vpop.permute.xlu0 %5163
        %5165 = vset.pattern.permute.xlu0 0
        %5166 = vperm.xlu0 %5165, %v3953
        %v5167 = vpop.permute.xlu0 %5166
        %5168 = vset.pattern.permute.xlu0 0
        %5169 = vperm.xlu0 %5168, %v3954
        %v5170 = vpop.permute.xlu0 %5169
        %5171 = vset.pattern.permute.xlu0 0
        %5172 = vperm.xlu0 %5171, %v3955
        %v5173 = vpop.permute.xlu0 %5172
        %5174 = vset.pattern.permute.xlu0 0
        %5175 = vperm.xlu0 %5174, %v3956
        %v5176 = vpop.permute.xlu0 %5175
        %5177 = vset.pattern.permute.xlu0 0
        %5178 = vperm.xlu0 %5177, %v3957
        %v5179 = vpop.permute.xlu0 %5178
        %5180 = vset.pattern.permute.xlu0 0
        %5181 = vperm.xlu0 %5180, %v3958
        %v5182 = vpop.permute.xlu0 %5181
        %5183 = vset.pattern.permute.xlu0 0
        %5184 = vperm.xlu0 %5183, %v3959
        %v5185 = vpop.permute.xlu0 %5184
        %5186 = vset.pattern.permute.xlu0 0
        %5187 = vperm.xlu0 %5186, %v3960
        %v5188 = vpop.permute.xlu0 %5187
        %5189 = vset.pattern.permute.xlu0 0
        %5190 = vperm.xlu0 %5189, %v3961
        %v5191 = vpop.permute.xlu0 %5190
        %5192 = vset.pattern.permute.xlu0 0
        %5193 = vperm.xlu0 %5192, %v3962
        %v5194 = vpop.permute.xlu0 %5193
        %5195 = vset.pattern.permute.xlu0 0
        %5196 = vperm.xlu0 %5195, %v3963
        %v5197 = vpop.permute.xlu0 %5196
        %5198 = vset.pattern.permute.xlu0 0
        %5199 = vperm.xlu0 %5198, %v3964
        %v5200 = vpop.permute.xlu0 %5199
        %5201 = vset.pattern.permute.xlu0 0
        %5202 = vperm.xlu0 %5201, %v3965
        %v5203 = vpop.permute.xlu0 %5202
        %5204 = vset.pattern.permute.xlu0 0
        %5205 = vperm.xlu0 %5204, %v3966
        %v5206 = vpop.permute.xlu0 %5205
        %5207 = vset.pattern.permute.xlu0 0
        %5208 = vperm.xlu0 %5207, %v3967
        %v5209 = vpop.permute.xlu0 %5208
        %5210 = vset.pattern.permute.xlu0 0
        %5211 = vperm.xlu0 %5210, %v3968
        %v5212 = vpop.permute.xlu0 %5211
        %5213 = vset.pattern.permute.xlu0 0
        %5214 = vperm.xlu0 %5213, %v3969
        %v5215 = vpop.permute.xlu0 %5214
        %5216 = vset.pattern.permute.xlu0 0
        %5217 = vperm.xlu0 %5216, %v3970
        %v5218 = vpop.permute.xlu0 %5217
        %5219 = vset.pattern.permute.xlu0 0
        %5220 = vperm.xlu0 %5219, %v3971
        %v5221 = vpop.permute.xlu0 %5220
        %5222 = vset.pattern.permute.xlu0 0
        %5223 = vperm.xlu0 %5222, %v3972
        %v5224 = vpop.permute.xlu0 %5223
        %5225 = vset.pattern.permute.xlu0 0
        %5226 = vperm.xlu0 %5225, %v3973
        %v5227 = vpop.permute.xlu0 %5226
        %5228 = vset.pattern.permute.xlu0 0
        %5229 = vperm.xlu0 %5228, %v3974
        %v5230 = vpop.permute.xlu0 %5229
        %5231 = vset.pattern.permute.xlu0 0
        %5232 = vperm.xlu0 %5231, %v3975
        %v5233 = vpop.permute.xlu0 %5232
        %5234 = vset.pattern.permute.xlu0 0
        %5235 = vperm.xlu0 %5234, %v3976
        %v5236 = vpop.permute.xlu0 %5235
        %5237 = vset.pattern.permute.xlu0 0
        %5238 = vperm.xlu0 %5237, %v3977
        %v5239 = vpop.permute.xlu0 %5238
        %5240 = vset.pattern.permute.xlu0 0
        %5241 = vperm.xlu0 %5240, %v3978
        %v5242 = vpop.permute.xlu0 %5241
        %5243 = vset.pattern.permute.xlu0 0
        %5244 = vperm.xlu0 %5243, %v3979
        %v5245 = vpop.permute.xlu0 %5244
        %5246 = vset.pattern.permute.xlu0 0
        %5247 = vperm.xlu0 %5246, %v3980
        %v5248 = vpop.permute.xlu0 %5247
        %5249 = vset.pattern.permute.xlu0 0
        %5250 = vperm.xlu0 %5249, %v3981
        %v5251 = vpop.permute.xlu0 %5250
        %5252 = vset.pattern.permute.xlu0 0
        %5253 = vperm.xlu0 %5252, %v3982
        %v5254 = vpop.permute.xlu0 %5253
        %5255 = vset.pattern.permute.xlu0 0
        %5256 = vperm.xlu0 %5255, %v3983
        %v5257 = vpop.permute.xlu0 %5256
        %5258 = vset.pattern.permute.xlu0 0
        %5259 = vperm.xlu0 %5258, %v3984
        %v5260 = vpop.permute.xlu0 %5259
        %5261 = vset.pattern.permute.xlu0 0
        %5262 = vperm.xlu0 %5261, %v3985
        %v5263 = vpop.permute.xlu0 %5262
        %5264 = vset.pattern.permute.xlu0 0
        %5265 = vperm.xlu0 %5264, %v3986
        %v5266 = vpop.permute.xlu0 %5265
        %5267 = vset.pattern.permute.xlu0 0
        %5268 = vperm.xlu0 %5267, %v3987
        %v5269 = vpop.permute.xlu0 %5268
        %5270 = vset.pattern.permute.xlu0 0
        %5271 = vperm.xlu0 %5270, %v3988
        %v5272 = vpop.permute.xlu0 %5271
        %5273 = vset.pattern.permute.xlu0 0
        %5274 = vperm.xlu0 %5273, %v3989
        %v5275 = vpop.permute.xlu0 %5274
        %5276 = vset.pattern.permute.xlu0 0
        %5277 = vperm.xlu0 %5276, %v3990
        %v5278 = vpop.permute.xlu0 %5277
        %5279 = vset.pattern.permute.xlu0 0
        %5280 = vperm.xlu0 %5279, %v3991
        %v5281 = vpop.permute.xlu0 %5280
        %5282 = vset.pattern.permute.xlu0 0
        %5283 = vperm.xlu0 %5282, %v3992
        %v5284 = vpop.permute.xlu0 %5283
        %5285 = vset.pattern.permute.xlu0 0
        %5286 = vperm.xlu0 %5285, %v3993
        %v5287 = vpop.permute.xlu0 %5286
        %5288 = vset.pattern.permute.xlu0 0
        %5289 = vperm.xlu0 %5288, %v3994
        %v5290 = vpop.permute.xlu0 %5289
        %5291 = vset.pattern.permute.xlu0 0
        %5292 = vperm.xlu0 %5291, %v3995
        %v5293 = vpop.permute.xlu0 %5292
        %5294 = vset.pattern.permute.xlu0 0
        %5295 = vperm.xlu0 %5294, %v3996
        %v5296 = vpop.permute.xlu0 %5295
        %5297 = vset.pattern.permute.xlu0 0
        %5298 = vperm.xlu0 %5297, %v3997
        %v5299 = vpop.permute.xlu0 %5298
        %5300 = vset.pattern.permute.xlu0 0
        %5301 = vperm.xlu0 %5300, %v3998
        %v5302 = vpop.permute.xlu0 %5301
        %5303 = vset.pattern.permute.xlu0 0
        %5304 = vperm.xlu0 %5303, %v3999
        %v5305 = vpop.permute.xlu0 %5304
        %5306 = vset.pattern.permute.xlu0 0
        %5307 = vperm.xlu0 %5306, %v4000
        %v5308 = vpop.permute.xlu0 %5307
        %5309 = vset.pattern.permute.xlu0 0
        %5310 = vperm.xlu0 %5309, %v4001
        %v5311 = vpop.permute.xlu0 %5310
        %5312 = vset.pattern.permute.xlu0 0
        %5313 = vperm.xlu0 %5312, %v4002
        %v5314 = vpop.permute.xlu0 %5313
        %5315 = vset.pattern.permute.xlu0 0
        %5316 = vperm.xlu0 %5315, %v4003
        %v5317 = vpop.permute.xlu0 %5316
        %5318 = vset.pattern.permute.xlu0 0
        %5319 = vperm.xlu0 %5318, %v4004
        %v5320 = vpop.permute.xlu0 %5319
        %5321 = vset.pattern.permute.xlu0 0
        %5322 = vperm.xlu0 %5321, %v4005
        %v5323 = vpop.permute.xlu0 %5322
        %5324 = vset.pattern.permute.xlu0 0
        %5325 = vperm.xlu0 %5324, %v4006
        %v5326 = vpop.permute.xlu0 %5325
        %5327 = vset.pattern.permute.xlu0 0
        %5328 = vperm.xlu0 %5327, %v4007
        %v5329 = vpop.permute.xlu0 %5328
        %5330 = vset.pattern.permute.xlu0 0
        %5331 = vperm.xlu0 %5330, %v4008
        %v5332 = vpop.permute.xlu0 %5331
        %5333 = vset.pattern.permute.xlu0 0
        %5334 = vperm.xlu0 %5333, %v4009
        %v5335 = vpop.permute.xlu0 %5334
        %5336 = vset.pattern.permute.xlu0 0
        %5337 = vperm.xlu0 %5336, %v4010
        %v5338 = vpop.permute.xlu0 %5337
        %5339 = vset.pattern.permute.xlu0 0
        %5340 = vperm.xlu0 %5339, %v4011
        %v5341 = vpop.permute.xlu0 %5340
        %5342 = vset.pattern.permute.xlu0 0
        %5343 = vperm.xlu0 %5342, %v4012
        %v5344 = vpop.permute.xlu0 %5343
        %5345 = vset.pattern.permute.xlu0 0
        %5346 = vperm.xlu0 %5345, %v4013
        %v5347 = vpop.permute.xlu0 %5346
        %5348 = vset.pattern.permute.xlu0 0
        %5349 = vperm.xlu0 %5348, %v4014
        %v5350 = vpop.permute.xlu0 %5349
        %5351 = vset.pattern.permute.xlu0 0
        %5352 = vperm.xlu0 %5351, %v4015
        %v5353 = vpop.permute.xlu0 %5352
        %5354 = vset.pattern.permute.xlu0 0
        %5355 = vperm.xlu0 %5354, %v4016
        %v5356 = vpop.permute.xlu0 %5355
        %5357 = vset.pattern.permute.xlu0 0
        %5358 = vperm.xlu0 %5357, %v4017
        %v5359 = vpop.permute.xlu0 %5358
        %5360 = vset.pattern.permute.xlu0 0
        %5361 = vperm.xlu0 %5360, %v4018
        %v5362 = vpop.permute.xlu0 %5361
        %5363 = vset.pattern.permute.xlu0 0
        %5364 = vperm.xlu0 %5363, %v4019
        %v5365 = vpop.permute.xlu0 %5364
        %5366 = vset.pattern.permute.xlu0 0
        %5367 = vperm.xlu0 %5366, %v4020
        %v5368 = vpop.permute.xlu0 %5367
        %5369 = vset.pattern.permute.xlu0 0
        %5370 = vperm.xlu0 %5369, %v4021
        %v5371 = vpop.permute.xlu0 %5370
        %5372 = vset.pattern.permute.xlu0 0
        %5373 = vperm.xlu0 %5372, %v4022
        %v5374 = vpop.permute.xlu0 %5373
        %5375 = vset.pattern.permute.xlu0 0
        %5376 = vperm.xlu0 %5375, %v4023
        %v5377 = vpop.permute.xlu0 %5376
        %5378 = vset.pattern.permute.xlu0 0
        %5379 = vperm.xlu0 %5378, %v4024
        %v5380 = vpop.permute.xlu0 %5379
        %5381 = vset.pattern.permute.xlu0 0
        %5382 = vperm.xlu0 %5381, %v4025
        %v5383 = vpop.permute.xlu0 %5382
        %5384 = vset.pattern.permute.xlu0 0
        %5385 = vperm.xlu0 %5384, %v4026
        %v5386 = vpop.permute.xlu0 %5385
        %5387 = vset.pattern.permute.xlu0 0
        %5388 = vperm.xlu0 %5387, %v4027
        %v5389 = vpop.permute.xlu0 %5388
        %5390 = vset.pattern.permute.xlu0 0
        %5391 = vperm.xlu0 %5390, %v4028
        %v5392 = vpop.permute.xlu0 %5391
        %5393 = vset.pattern.permute.xlu0 0
        %5394 = vperm.xlu0 %5393, %v4029
        %v5395 = vpop.permute.xlu0 %5394
        %5396 = vset.pattern.permute.xlu0 0
        %5397 = vperm.xlu0 %5396, %v4030
        %v5398 = vpop.permute.xlu0 %5397
        %5399 = vset.pattern.permute.xlu0 0
        %5400 = vperm.xlu0 %5399, %v4031
        %v5401 = vpop.permute.xlu0 %5400
        %5402 = vset.pattern.permute.xlu0 0
        %5403 = vperm.xlu0 %5402, %v4032
        %v5404 = vpop.permute.xlu0 %5403
        %5405 = vset.pattern.permute.xlu0 0
        %5406 = vperm.xlu0 %5405, %v4033
        %v5407 = vpop.permute.xlu0 %5406
        %5408 = vset.pattern.permute.xlu0 0
        %5409 = vperm.xlu0 %5408, %v4034
        %v5410 = vpop.permute.xlu0 %5409
        %5411 = vset.pattern.permute.xlu0 0
        %5412 = vperm.xlu0 %5411, %v4035
        %v5413 = vpop.permute.xlu0 %5412
        %5414 = vset.pattern.permute.xlu0 0
        %5415 = vperm.xlu0 %5414, %v4036
        %v5416 = vpop.permute.xlu0 %5415
        %5417 = vset.pattern.permute.xlu0 0
        %5418 = vperm.xlu0 %5417, %v4037
        %v5419 = vpop.permute.xlu0 %5418
        %5420 = vset.pattern.permute.xlu0 0
        %5421 = vperm.xlu0 %5420, %v4038
        %v5422 = vpop.permute.xlu0 %5421
        %5423 = vset.pattern.permute.xlu0 0
        %5424 = vperm.xlu0 %5423, %v4039
        %v5425 = vpop.permute.xlu0 %5424
        %5426 = vset.pattern.permute.xlu0 0
        %5427 = vperm.xlu0 %5426, %v4040
        %v5428 = vpop.permute.xlu0 %5427
        %5429 = vset.pattern.permute.xlu0 0
        %5430 = vperm.xlu0 %5429, %v4041
        %v5431 = vpop.permute.xlu0 %5430
        %5432 = vset.pattern.permute.xlu0 0
        %5433 = vperm.xlu0 %5432, %v4042
        %v5434 = vpop.permute.xlu0 %5433
        %5435 = vset.pattern.permute.xlu0 0
        %5436 = vperm.xlu0 %5435, %v4043
        %v5437 = vpop.permute.xlu0 %5436
        %5438 = vset.pattern.permute.xlu0 0
        %5439 = vperm.xlu0 %5438, %v4044
        %v5440 = vpop.permute.xlu0 %5439
        %5441 = vset.pattern.permute.xlu0 0
        %5442 = vperm.xlu0 %5441, %v4045
        %v5443 = vpop.permute.xlu0 %5442
        %5444 = vset.pattern.permute.xlu0 0
        %5445 = vperm.xlu0 %5444, %v4046
        %v5446 = vpop.permute.xlu0 %5445
        %5447 = vset.pattern.permute.xlu0 0
        %5448 = vperm.xlu0 %5447, %v4047
        %v5449 = vpop.permute.xlu0 %5448
        %5450 = vset.pattern.permute.xlu0 0
        %5451 = vperm.xlu0 %5450, %v4048
        %v5452 = vpop.permute.xlu0 %5451
        %5453 = vset.pattern.permute.xlu0 0
        %5454 = vperm.xlu0 %5453, %v4049
        %v5455 = vpop.permute.xlu0 %5454
        %5456 = vset.pattern.permute.xlu0 0
        %5457 = vperm.xlu0 %5456, %v4050
        %v5458 = vpop.permute.xlu0 %5457
        %5459 = vset.pattern.permute.xlu0 0
        %5460 = vperm.xlu0 %5459, %v4051
        %v5461 = vpop.permute.xlu0 %5460
        %5462 = vset.pattern.permute.xlu0 0
        %5463 = vperm.xlu0 %5462, %v4052
        %v5464 = vpop.permute.xlu0 %5463
        %5465 = vset.pattern.permute.xlu0 0
        %5466 = vperm.xlu0 %5465, %v4053
        %v5467 = vpop.permute.xlu0 %5466
        %5468 = vset.pattern.permute.xlu0 0
        %5469 = vperm.xlu0 %5468, %v4054
        %v5470 = vpop.permute.xlu0 %5469
        %5471 = vset.pattern.permute.xlu0 0
        %5472 = vperm.xlu0 %5471, %v4055
        %v5473 = vpop.permute.xlu0 %5472
        %5474 = vset.pattern.permute.xlu0 0
        %5475 = vperm.xlu0 %5474, %v4056
        %v5476 = vpop.permute.xlu0 %5475
        %5477 = vset.pattern.permute.xlu0 0
        %5478 = vperm.xlu0 %5477, %v4057
        %v5479 = vpop.permute.xlu0 %5478
        %5480 = vset.pattern.permute.xlu0 0
        %5481 = vperm.xlu0 %5480, %v4058
        %v5482 = vpop.permute.xlu0 %5481
        %5483 = vset.pattern.permute.xlu0 0
        %5484 = vperm.xlu0 %5483, %v4059
        %v5485 = vpop.permute.xlu0 %5484
        %5486 = vset.pattern.permute.xlu0 0
        %5487 = vperm.xlu0 %5486, %v4060
        %v5488 = vpop.permute.xlu0 %5487
        %5489 = vset.pattern.permute.xlu0 0
        %5490 = vperm.xlu0 %5489, %v4061
        %v5491 = vpop.permute.xlu0 %5490
        %5492 = vset.pattern.permute.xlu0 0
        %5493 = vperm.xlu0 %5492, %v4062
        %v5494 = vpop.permute.xlu0 %5493
        %5495 = vset.pattern.permute.xlu0 0
        %5496 = vperm.xlu0 %5495, %v4063
        %v5497 = vpop.permute.xlu0 %5496
        %5498 = vset.pattern.permute.xlu0 0
        %5499 = vperm.xlu0 %5498, %v4064
        %v5500 = vpop.permute.xlu0 %5499
        %5501 = vset.pattern.permute.xlu0 0
        %5502 = vperm.xlu0 %5501, %v4065
        %v5503 = vpop.permute.xlu0 %5502
        %5504 = vset.pattern.permute.xlu0 0
        %5505 = vperm.xlu0 %5504, %v4066
        %v5506 = vpop.permute.xlu0 %5505
        %5507 = vset.pattern.permute.xlu0 0
        %5508 = vperm.xlu0 %5507, %v4067
        %v5509 = vpop.permute.xlu0 %5508
        %5510 = vset.pattern.permute.xlu0 0
        %5511 = vperm.xlu0 %5510, %v4068
        %v5512 = vpop.permute.xlu0 %5511
        %5513 = vset.pattern.permute.xlu0 0
        %5514 = vperm.xlu0 %5513, %v4069
        %v5515 = vpop.permute.xlu0 %5514
        %5516 = vset.pattern.permute.xlu0 0
        %5517 = vperm.xlu0 %5516, %v4070
        %v5518 = vpop.permute.xlu0 %5517
        %5519 = vset.pattern.permute.xlu0 0
        %5520 = vperm.xlu0 %5519, %v4071
        %v5521 = vpop.permute.xlu0 %5520
        %5522 = vset.pattern.permute.xlu0 0
        %5523 = vperm.xlu0 %5522, %v4072
        %v5524 = vpop.permute.xlu0 %5523
        %5525 = vset.pattern.permute.xlu0 0
        %5526 = vperm.xlu0 %5525, %v4073
        %v5527 = vpop.permute.xlu0 %5526
        %5528 = vset.pattern.permute.xlu0 0
        %5529 = vperm.xlu0 %5528, %v4074
        %v5530 = vpop.permute.xlu0 %5529
        %5531 = vset.pattern.permute.xlu0 0
        %5532 = vperm.xlu0 %5531, %v4075
        %v5533 = vpop.permute.xlu0 %5532
        %5534 = vset.pattern.permute.xlu0 0
        %5535 = vperm.xlu0 %5534, %v4076
        %v5536 = vpop.permute.xlu0 %5535
        %5537 = vset.pattern.permute.xlu0 0
        %5538 = vperm.xlu0 %5537, %v4077
        %v5539 = vpop.permute.xlu0 %5538
        %5540 = vset.pattern.permute.xlu0 0
        %5541 = vperm.xlu0 %5540, %v4078
        %v5542 = vpop.permute.xlu0 %5541
        %5543 = vset.pattern.permute.xlu0 0
        %5544 = vperm.xlu0 %5543, %v4079
        %v5545 = vpop.permute.xlu0 %5544
        %5546 = vset.pattern.permute.xlu0 0
        %5547 = vperm.xlu0 %5546, %v4080
        %v5548 = vpop.permute.xlu0 %5547
        %5549 = vset.pattern.permute.xlu0 0
        %5550 = vperm.xlu0 %5549, %v4081
        %v5551 = vpop.permute.xlu0 %5550
        %5552 = vset.pattern.permute.xlu0 0
        %5553 = vperm.xlu0 %5552, %v4082
        %v5554 = vpop.permute.xlu0 %5553
        %5555 = vset.pattern.permute.xlu0 0
        %5556 = vperm.xlu0 %5555, %v4083
        %v5557 = vpop.permute.xlu0 %5556
        %5558 = vset.pattern.permute.xlu0 0
        %5559 = vperm.xlu0 %5558, %v4084
        %v5560 = vpop.permute.xlu0 %5559
        %5561 = vset.pattern.permute.xlu0 0
        %5562 = vperm.xlu0 %5561, %v4085
        %v5563 = vpop.permute.xlu0 %5562
        %5564 = vset.pattern.permute.xlu0 0
        %5565 = vperm.xlu0 %5564, %v4086
        %v5566 = vpop.permute.xlu0 %5565
        %5567 = vset.pattern.permute.xlu0 0
        %5568 = vperm.xlu0 %5567, %v4087
        %v5569 = vpop.permute.xlu0 %5568
        %5570 = vset.pattern.permute.xlu0 0
        %5571 = vperm.xlu0 %5570, %v4088
        %v5572 = vpop.permute.xlu0 %5571
        %5573 = vset.pattern.permute.xlu0 0
        %5574 = vperm.xlu0 %5573, %v4089
        %v5575 = vpop.permute.xlu0 %5574
        %5576 = vset.pattern.permute.xlu0 0
        %5577 = vperm.xlu0 %5576, %v4090
        %v5578 = vpop.permute.xlu0 %5577
        %5579 = vset.pattern.permute.xlu0 0
        %5580 = vperm.xlu0 %5579, %v4091
        %v5581 = vpop.permute.xlu0 %5580
        %5582 = vset.pattern.permute.xlu0 0
        %5583 = vperm.xlu0 %5582, %v4092
        %v5584 = vpop.permute.xlu0 %5583
        %5585 = vset.pattern.permute.xlu0 0
        %5586 = vperm.xlu0 %5585, %v4093
        %v5587 = vpop.permute.xlu0 %5586
        %5588 = vset.pattern.permute.xlu0 0
        %5589 = vperm.xlu0 %5588, %v4094
        %v5590 = vpop.permute.xlu0 %5589
        %5591 = vset.pattern.permute.xlu0 0
        %5592 = vperm.xlu0 %5591, %v4095
        %v5593 = vpop.permute.xlu0 %5592
        %5594 = vset.pattern.permute.xlu0 0
        %5595 = vperm.xlu0 %5594, %v4096
        %v5596 = vpop.permute.xlu0 %5595
        %5597 = vset.pattern.permute.xlu0 0
        %5598 = vperm.xlu0 %5597, %v4097
        %v5599 = vpop.permute.xlu0 %5598
        %5600 = vset.pattern.permute.xlu0 0
        %5601 = vperm.xlu0 %5600, %v4098
        %v5602 = vpop.permute.xlu0 %5601
        %5603 = vset.pattern.permute.xlu0 0
        %5604 = vperm.xlu0 %5603, %v4099
        %v5605 = vpop.permute.xlu0 %5604
        %5606 = vset.pattern.permute.xlu0 0
        %5607 = vperm.xlu0 %5606, %v4100
        %v5608 = vpop.permute.xlu0 %5607
        %5609 = vset.pattern.permute.xlu0 0
        %5610 = vperm.xlu0 %5609, %v4101
        %v5611 = vpop.permute.xlu0 %5610
        %5612 = vset.pattern.permute.xlu0 0
        %5613 = vperm.xlu0 %5612, %v4102
        %v5614 = vpop.permute.xlu0 %5613
        %5615 = vset.pattern.permute.xlu0 0
        %5616 = vperm.xlu0 %5615, %v4103
        %v5617 = vpop.permute.xlu0 %5616
        %5618 = vset.pattern.permute.xlu0 0
        %5619 = vperm.xlu0 %5618, %v4104
        %v5620 = vpop.permute.xlu0 %5619
        %5621 = vset.pattern.permute.xlu0 0
        %5622 = vperm.xlu0 %5621, %v4105
        %v5623 = vpop.permute.xlu0 %5622
        %5624 = vset.pattern.permute.xlu0 0
        %5625 = vperm.xlu0 %5624, %v4106
        %v5626 = vpop.permute.xlu0 %5625
        %5627 = vset.pattern.permute.xlu0 0
        %5628 = vperm.xlu0 %5627, %v4107
        %v5629 = vpop.permute.xlu0 %5628
        %5630 = vset.pattern.permute.xlu0 0
        %5631 = vperm.xlu0 %5630, %v4108
        %v5632 = vpop.permute.xlu0 %5631
        %5633 = vset.pattern.permute.xlu0 0
        %5634 = vperm.xlu0 %5633, %v4109
        %v5635 = vpop.permute.xlu0 %5634
        %5636 = vset.pattern.permute.xlu0 0
        %5637 = vperm.xlu0 %5636, %v4110
        %v5638 = vpop.permute.xlu0 %5637
        %5639 = vset.pattern.permute.xlu0 0
        %5640 = vperm.xlu0 %5639, %v4111
        %v5641 = vpop.permute.xlu0 %5640
        %5642 = vset.pattern.permute.xlu0 0
        %5643 = vperm.xlu0 %5642, %v4112
        %v5644 = vpop.permute.xlu0 %5643
        %5645 = vset.pattern.permute.xlu0 0
        %5646 = vperm.xlu0 %5645, %v4113
        %v5647 = vpop.permute.xlu0 %5646
        %5648 = vset.pattern.permute.xlu0 0
        %5649 = vperm.xlu0 %5648, %v4114
        %v5650 = vpop.permute.xlu0 %5649
        %5651 = vset.pattern.permute.xlu0 0
        %5652 = vperm.xlu0 %5651, %v4115
        %v5653 = vpop.permute.xlu0 %5652
        %5654 = vset.pattern.permute.xlu0 0
        %5655 = vperm.xlu0 %5654, %v4116
        %v5656 = vpop.permute.xlu0 %5655
        %5657 = vset.pattern.permute.xlu0 0
        %5658 = vperm.xlu0 %5657, %v4117
        %v5659 = vpop.permute.xlu0 %5658
        %5660 = vset.pattern.permute.xlu0 0
        %5661 = vperm.xlu0 %5660, %v4118
        %v5662 = vpop.permute.xlu0 %5661
        %5663 = vset.pattern.permute.xlu0 0
        %5664 = vperm.xlu0 %5663, %v4119
        %v5665 = vpop.permute.xlu0 %5664
        %5666 = vset.pattern.permute.xlu0 0
        %5667 = vperm.xlu0 %5666, %v4120
        %v5668 = vpop.permute.xlu0 %5667
        %5669 = vset.pattern.permute.xlu0 0
        %5670 = vperm.xlu0 %5669, %v4121
        %v5671 = vpop.permute.xlu0 %5670
        %5672 = vset.pattern.permute.xlu0 0
        %5673 = vperm.xlu0 %5672, %v4122
        %v5674 = vpop.permute.xlu0 %5673
        %5675 = vset.pattern.permute.xlu0 0
        %5676 = vperm.xlu0 %5675, %v4123
        %v5677 = vpop.permute.xlu0 %5676
        %5678 = vset.pattern.permute.xlu0 0
        %5679 = vperm.xlu0 %5678, %v4124
        %v5680 = vpop.permute.xlu0 %5679
        %5681 = vset.pattern.permute.xlu0 0
        %5682 = vperm.xlu0 %5681, %v4125
        %v5683 = vpop.permute.xlu0 %5682
        %5684 = vset.pattern.permute.xlu0 0
        %5685 = vperm.xlu0 %5684, %v4126
        %v5686 = vpop.permute.xlu0 %5685
        %5687 = vset.pattern.permute.xlu0 0
        %5688 = vperm.xlu0 %5687, %v4127
        %v5689 = vpop.permute.xlu0 %5688
        %5690 = vset.pattern.permute.xlu0 0
        %5691 = vperm.xlu0 %5690, %v4128
        %v5692 = vpop.permute.xlu0 %5691
        %5693 = vset.pattern.permute.xlu0 0
        %5694 = vperm.xlu0 %5693, %v4129
        %v5695 = vpop.permute.xlu0 %5694
        %5696 = vset.pattern.permute.xlu0 0
        %5697 = vperm.xlu0 %5696, %v4130
        %v5698 = vpop.permute.xlu0 %5697
        %5699 = vset.pattern.permute.xlu0 0
        %5700 = vperm.xlu0 %5699, %v4131
        %v5701 = vpop.permute.xlu0 %5700
        %5702 = vset.pattern.permute.xlu0 0
        %5703 = vperm.xlu0 %5702, %v4132
        %v5704 = vpop.permute.xlu0 %5703
        %5705 = vset.pattern.permute.xlu0 0
        %5706 = vperm.xlu0 %5705, %v4133
        %v5707 = vpop.permute.xlu0 %5706
        %5708 = vset.pattern.permute.xlu0 0
        %5709 = vperm.xlu0 %5708, %v4134
        %v5710 = vpop.permute.xlu0 %5709
        %5711 = vset.pattern.permute.xlu0 0
        %5712 = vperm.xlu0 %5711, %v4135
        %v5713 = vpop.permute.xlu0 %5712
        %5714 = vset.pattern.permute.xlu0 0
        %5715 = vperm.xlu0 %5714, %v4136
        %v5716 = vpop.permute.xlu0 %5715
        %5717 = vset.pattern.permute.xlu0 0
        %5718 = vperm.xlu0 %5717, %v4137
        %v5719 = vpop.permute.xlu0 %5718
        %5720 = vset.pattern.permute.xlu0 0
        %5721 = vperm.xlu0 %5720, %v4138
        %v5722 = vpop.permute.xlu0 %5721
        %5723 = vset.pattern.permute.xlu0 0
        %5724 = vperm.xlu0 %5723, %v4139
        %v5725 = vpop.permute.xlu0 %5724
        %5726 = vset.pattern.permute.xlu0 0
        %5727 = vperm.xlu0 %5726, %v4140
        %v5728 = vpop.permute.xlu0 %5727
        %5729 = vset.pattern.permute.xlu0 0
        %5730 = vperm.xlu0 %5729, %v4141
        %v5731 = vpop.permute.xlu0 %5730
        %5732 = vset.pattern.permute.xlu0 0
        %5733 = vperm.xlu0 %5732, %v4142
        %v5734 = vpop.permute.xlu0 %5733
        %5735 = vset.pattern.permute.xlu0 0
        %5736 = vperm.xlu0 %5735, %v4143
        %v5737 = vpop.permute.xlu0 %5736
        %5738 = vset.pattern.permute.xlu0 0
        %5739 = vperm.xlu0 %5738, %v4144
        %v5740 = vpop.permute.xlu0 %5739
        %5741 = vset.pattern.permute.xlu0 0
        %5742 = vperm.xlu0 %5741, %v4145
        %v5743 = vpop.permute.xlu0 %5742
        %5744 = vset.pattern.permute.xlu0 0
        %5745 = vperm.xlu0 %5744, %v4146
        %v5746 = vpop.permute.xlu0 %5745
        %5747 = vset.pattern.permute.xlu0 0
        %5748 = vperm.xlu0 %5747, %v4147
        %v5749 = vpop.permute.xlu0 %5748
        %5750 = vset.pattern.permute.xlu0 0
        %5751 = vperm.xlu0 %5750, %v4148
        %v5752 = vpop.permute.xlu0 %5751
        %5753 = vset.pattern.permute.xlu0 0
        %5754 = vperm.xlu0 %5753, %v4149
        %v5755 = vpop.permute.xlu0 %5754
        %5756 = vset.pattern.permute.xlu0 0
        %5757 = vperm.xlu0 %5756, %v4150
        %v5758 = vpop.permute.xlu0 %5757
        %5759 = vset.pattern.permute.xlu0 0
        %5760 = vperm.xlu0 %5759, %v4151
        %v5761 = vpop.permute.xlu0 %5760
        %5762 = vset.pattern.permute.xlu0 0
        %5763 = vperm.xlu0 %5762, %v4152
        %v5764 = vpop.permute.xlu0 %5763
        %5765 = vset.pattern.permute.xlu0 0
        %5766 = vperm.xlu0 %5765, %v4153
        %v5767 = vpop.permute.xlu0 %5766
        %5768 = vset.pattern.permute.xlu0 0
        %5769 = vperm.xlu0 %5768, %v4154
        %v5770 = vpop.permute.xlu0 %5769
        %5771 = vset.pattern.permute.xlu0 0
        %5772 = vperm.xlu0 %5771, %v4155
        %v5773 = vpop.permute.xlu0 %5772
        %5774 = vset.pattern.permute.xlu0 0
        %5775 = vperm.xlu0 %5774, %v4156
        %v5776 = vpop.permute.xlu0 %5775
        %5777 = vset.pattern.permute.xlu0 0
        %5778 = vperm.xlu0 %5777, %v4157
        %v5779 = vpop.permute.xlu0 %5778
        %5780 = vset.pattern.permute.xlu0 0
        %5781 = vperm.xlu0 %5780, %v4158
        %v5782 = vpop.permute.xlu0 %5781
        %5783 = vset.pattern.permute.xlu0 0
        %5784 = vperm.xlu0 %5783, %v4159
        %v5785 = vpop.permute.xlu0 %5784
        %5786 = vset.pattern.permute.xlu0 0
        %5787 = vperm.xlu0 %5786, %v4160
        %v5788 = vpop.permute.xlu0 %5787
        %5789 = vset.pattern.permute.xlu0 0
        %5790 = vperm.xlu0 %5789, %v4161
        %v5791 = vpop.permute.xlu0 %5790
        %5792 = vset.pattern.permute.xlu0 0
        %5793 = vperm.xlu0 %5792, %v4162
        %v5794 = vpop.permute.xlu0 %5793
        %5795 = vset.pattern.permute.xlu0 0
        %5796 = vperm.xlu0 %5795, %v4163
        %v5797 = vpop.permute.xlu0 %5796
        %5798 = vset.pattern.permute.xlu0 0
        %5799 = vperm.xlu0 %5798, %v4164
        %v5800 = vpop.permute.xlu0 %5799
        %5801 = vset.pattern.permute.xlu0 0
        %5802 = vperm.xlu0 %5801, %v4165
        %v5803 = vpop.permute.xlu0 %5802
        %5804 = vset.pattern.permute.xlu0 0
        %5805 = vperm.xlu0 %5804, %v4166
        %v5806 = vpop.permute.xlu0 %5805
        %5807 = vset.pattern.permute.xlu0 0
        %5808 = vperm.xlu0 %5807, %v4167
        %v5809 = vpop.permute.xlu0 %5808
        %5810 = vset.pattern.permute.xlu0 0
        %5811 = vperm.xlu0 %5810, %v4168
        %v5812 = vpop.permute.xlu0 %5811
        %5813 = vset.pattern.permute.xlu0 0
        %5814 = vperm.xlu0 %5813, %v4169
        %v5815 = vpop.permute.xlu0 %5814
        %5816 = vset.pattern.permute.xlu0 0
        %5817 = vperm.xlu0 %5816, %v4170
        %v5818 = vpop.permute.xlu0 %5817
        %5819 = vset.pattern.permute.xlu0 0
        %5820 = vperm.xlu0 %5819, %v4171
        %v5821 = vpop.permute.xlu0 %5820
        %5822 = vset.pattern.permute.xlu0 0
        %5823 = vperm.xlu0 %5822, %v4172
        %v5824 = vpop.permute.xlu0 %5823
        %5825 = vset.pattern.permute.xlu0 0
        %5826 = vperm.xlu0 %5825, %v4173
        %v5827 = vpop.permute.xlu0 %5826
        %5828 = vset.pattern.permute.xlu0 0
        %5829 = vperm.xlu0 %5828, %v4174
        %v5830 = vpop.permute.xlu0 %5829
        %5831 = vset.pattern.permute.xlu0 0
        %5832 = vperm.xlu0 %5831, %v4175
        %v5833 = vpop.permute.xlu0 %5832
        %5834 = vset.pattern.permute.xlu0 0
        %5835 = vperm.xlu0 %5834, %v4176
        %v5836 = vpop.permute.xlu0 %5835
        %5837 = vset.pattern.permute.xlu0 0
        %5838 = vperm.xlu0 %5837, %v4177
        %v5839 = vpop.permute.xlu0 %5838
        %5840 = vset.pattern.permute.xlu0 0
        %5841 = vperm.xlu0 %5840, %v4178
        %v5842 = vpop.permute.xlu0 %5841
        %5843 = vset.pattern.permute.xlu0 0
        %5844 = vperm.xlu0 %5843, %v4179
        %v5845 = vpop.permute.xlu0 %5844
        %5846 = vset.pattern.permute.xlu0 0
        %5847 = vperm.xlu0 %5846, %v4180
        %v5848 = vpop.permute.xlu0 %5847
        %5849 = vset.pattern.permute.xlu0 0
        %5850 = vperm.xlu0 %5849, %v4181
        %v5851 = vpop.permute.xlu0 %5850
        %5852 = vset.pattern.permute.xlu0 0
        %5853 = vperm.xlu0 %5852, %v4182
        %v5854 = vpop.permute.xlu0 %5853
        %5855 = vset.pattern.permute.xlu0 0
        %5856 = vperm.xlu0 %5855, %v4183
        %v5857 = vpop.permute.xlu0 %5856
        %5858 = vset.pattern.permute.xlu0 0
        %5859 = vperm.xlu0 %5858, %v4184
        %v5860 = vpop.permute.xlu0 %5859
        %5861 = vset.pattern.permute.xlu0 0
        %5862 = vperm.xlu0 %5861, %v4185
        %v5863 = vpop.permute.xlu0 %5862
        %5864 = vset.pattern.permute.xlu0 0
        %5865 = vperm.xlu0 %5864, %v4186
        %v5866 = vpop.permute.xlu0 %5865
        %5867 = vset.pattern.permute.xlu0 0
        %5868 = vperm.xlu0 %5867, %v4187
        %v5869 = vpop.permute.xlu0 %5868
        %5870 = vset.pattern.permute.xlu0 0
        %5871 = vperm.xlu0 %5870, %v4188
        %v5872 = vpop.permute.xlu0 %5871
        %5873 = vset.pattern.permute.xlu0 0
        %5874 = vperm.xlu0 %5873, %v4189
        %v5875 = vpop.permute.xlu0 %5874
        %5876 = vset.pattern.permute.xlu0 0
        %5877 = vperm.xlu0 %5876, %v4190
        %v5878 = vpop.permute.xlu0 %5877
        %5879 = vset.pattern.permute.xlu0 0
        %5880 = vperm.xlu0 %5879, %v4191
        %v5881 = vpop.permute.xlu0 %5880
        %5882 = vset.pattern.permute.xlu0 0
        %5883 = vperm.xlu0 %5882, %v4192
        %v5884 = vpop.permute.xlu0 %5883
        %5885 = vset.pattern.permute.xlu0 0
        %5886 = vperm.xlu0 %5885, %v4193
        %v5887 = vpop.permute.xlu0 %5886
        %5888 = vset.pattern.permute.xlu0 0
        %5889 = vperm.xlu0 %5888, %v4194
        %v5890 = vpop.permute.xlu0 %5889
        %5891 = vset.pattern.permute.xlu0 0
        %5892 = vperm.xlu0 %5891, %v4195
        %v5893 = vpop.permute.xlu0 %5892
        %5894 = vset.pattern.permute.xlu0 0
        %5895 = vperm.xlu0 %5894, %v4196
        %v5896 = vpop.permute.xlu0 %5895
        %5897 = vset.pattern.permute.xlu0 0
        %5898 = vperm.xlu0 %5897, %v4197
        %v5899 = vpop.permute.xlu0 %5898
        %5900 = vset.pattern.permute.xlu0 0
        %5901 = vperm.xlu0 %5900, %v4198
        %v5902 = vpop.permute.xlu0 %5901
        %5903 = vset.pattern.permute.xlu0 0
        %5904 = vperm.xlu0 %5903, %v4199
        %v5905 = vpop.permute.xlu0 %5904
        %5906 = vset.pattern.permute.xlu0 0
        %5907 = vperm.xlu0 %5906, %v4200
        %v5908 = vpop.permute.xlu0 %5907
        %5909 = vset.pattern.permute.xlu0 0
        %5910 = vperm.xlu0 %5909, %v4201
        %v5911 = vpop.permute.xlu0 %5910
        %5912 = vset.pattern.permute.xlu0 0
        %5913 = vperm.xlu0 %5912, %v4202
        %v5914 = vpop.permute.xlu0 %5913
        %5915 = vset.pattern.permute.xlu0 0
        %5916 = vperm.xlu0 %5915, %v4203
        %v5917 = vpop.permute.xlu0 %5916
        %5918 = vset.pattern.permute.xlu0 0
        %5919 = vperm.xlu0 %5918, %v4204
        %v5920 = vpop.permute.xlu0 %5919
        %5921 = vset.pattern.permute.xlu0 0
        %5922 = vperm.xlu0 %5921, %v4205
        %v5923 = vpop.permute.xlu0 %5922
        %5924 = vset.pattern.permute.xlu0 0
        %5925 = vperm.xlu0 %5924, %v4206
        %v5926 = vpop.permute.xlu0 %5925
        %5927 = vset.pattern.permute.xlu0 0
        %5928 = vperm.xlu0 %5927, %v4207
        %v5929 = vpop.permute.xlu0 %5928
        %5930 = vset.pattern.permute.xlu0 0
        %5931 = vperm.xlu0 %5930, %v4208
        %v5932 = vpop.permute.xlu0 %5931
        %5933 = vset.pattern.permute.xlu0 0
        %5934 = vperm.xlu0 %5933, %v4209
        %v5935 = vpop.permute.xlu0 %5934
        %5936 = vset.pattern.permute.xlu0 0
        %5937 = vperm.xlu0 %5936, %v4210
        %v5938 = vpop.permute.xlu0 %5937
        %5939 = vset.pattern.permute.xlu0 0
        %5940 = vperm.xlu0 %5939, %v4211
        %v5941 = vpop.permute.xlu0 %5940
        %5942 = vset.pattern.permute.xlu0 0
        %5943 = vperm.xlu0 %5942, %v4212
        %v5944 = vpop.permute.xlu0 %5943
        %5945 = vset.pattern.permute.xlu0 0
        %5946 = vperm.xlu0 %5945, %v4213
        %v5947 = vpop.permute.xlu0 %5946
        %5948 = vset.pattern.permute.xlu0 0
        %5949 = vperm.xlu0 %5948, %v4214
        %v5950 = vpop.permute.xlu0 %5949
        %5951 = vset.pattern.permute.xlu0 0
        %5952 = vperm.xlu0 %5951, %v4215
        %v5953 = vpop.permute.xlu0 %5952
        %5954 = vset.pattern.permute.xlu0 0
        %5955 = vperm.xlu0 %5954, %v4216
        %v5956 = vpop.permute.xlu0 %5955
        %5957 = vset.pattern.permute.xlu0 0
        %5958 = vperm.xlu0 %5957, %v4217
        %v5959 = vpop.permute.xlu0 %5958
        %5960 = vset.pattern.permute.xlu0 0
        %5961 = vperm.xlu0 %5960, %v4218
        %v5962 = vpop.permute.xlu0 %5961
        %5963 = vset.pattern.permute.xlu0 0
        %5964 = vperm.xlu0 %5963, %v4219
        %v5965 = vpop.permute.xlu0 %5964
        %5966 = vset.pattern.permute.xlu0 0
        %5967 = vperm.xlu0 %5966, %v4220
        %v5968 = vpop.permute.xlu0 %5967
        %5969 = vset.pattern.permute.xlu0 0
        %5970 = vperm.xlu0 %5969, %v4221
        %v5971 = vpop.permute.xlu0 %5970
        %5972 = vset.pattern.permute.xlu0 0
        %5973 = vperm.xlu0 %5972, %v4222
        %v5974 = vpop.permute.xlu0 %5973
        %5975 = vset.pattern.permute.xlu0 0
        %5976 = vperm.xlu0 %5975, %v4223
        %v5977 = vpop.permute.xlu0 %5976
        %5978 = vset.pattern.permute.xlu0 0
        %5979 = vperm.xlu0 %5978, %v4224
        %v5980 = vpop.permute.xlu0 %5979
        %5981 = vset.pattern.permute.xlu0 0
        %5982 = vperm.xlu0 %5981, %v4225
        %v5983 = vpop.permute.xlu0 %5982
        %5984 = vset.pattern.permute.xlu0 0
        %5985 = vperm.xlu0 %5984, %v4226
        %v5986 = vpop.permute.xlu0 %5985
        %5987 = vset.pattern.permute.xlu0 0
        %5988 = vperm.xlu0 %5987, %v4227
        %v5989 = vpop.permute.xlu0 %5988
        %5990 = vset.pattern.permute.xlu0 0
        %5991 = vperm.xlu0 %5990, %v4228
        %v5992 = vpop.permute.xlu0 %5991
        %5993 = vset.pattern.permute.xlu0 0
        %5994 = vperm.xlu0 %5993, %v4229
        %v5995 = vpop.permute.xlu0 %5994
        %5996 = vset.pattern.permute.xlu0 0
        %5997 = vperm.xlu0 %5996, %v4230
        %v5998 = vpop.permute.xlu0 %5997
        %5999 = vset.pattern.permute.xlu0 0
        %6000 = vperm.xlu0 %5999, %v4231
        %v6001 = vpop.permute.xlu0 %6000
        %6002 = vset.pattern.permute.xlu0 0
        %6003 = vperm.xlu0 %6002, %v4232
        %v6004 = vpop.permute.xlu0 %6003
        %6005 = vset.pattern.permute.xlu0 0
        %6006 = vperm.xlu0 %6005, %v4233
        %v6007 = vpop.permute.xlu0 %6006
        %6008 = vset.pattern.permute.xlu0 0
        %6009 = vperm.xlu0 %6008, %v4234
        %v6010 = vpop.permute.xlu0 %6009
        %6011 = vset.pattern.permute.xlu0 0
        %6012 = vperm.xlu0 %6011, %v4235
        %v6013 = vpop.permute.xlu0 %6012
        %6014 = vset.pattern.permute.xlu0 0
        %6015 = vperm.xlu0 %6014, %v4236
        %v6016 = vpop.permute.xlu0 %6015
        %6017 = vset.pattern.permute.xlu0 0
        %6018 = vperm.xlu0 %6017, %v4237
        %v6019 = vpop.permute.xlu0 %6018
        %6020 = vset.pattern.permute.xlu0 0
        %6021 = vperm.xlu0 %6020, %v4238
        %v6022 = vpop.permute.xlu0 %6021
        %6023 = vset.pattern.permute.xlu0 0
        %6024 = vperm.xlu0 %6023, %v4239
        %v6025 = vpop.permute.xlu0 %6024
        %6026 = vset.pattern.permute.xlu0 0
        %6027 = vperm.xlu0 %6026, %v4240
        %v6028 = vpop.permute.xlu0 %6027
        %6029 = vset.pattern.permute.xlu0 0
        %6030 = vperm.xlu0 %6029, %v4241
        %v6031 = vpop.permute.xlu0 %6030
        %6032 = vset.pattern.permute.xlu0 0
        %6033 = vperm.xlu0 %6032, %v4242
        %v6034 = vpop.permute.xlu0 %6033
        %6035 = vset.pattern.permute.xlu0 0
        %6036 = vperm.xlu0 %6035, %v4243
        %v6037 = vpop.permute.xlu0 %6036
        %6038 = vset.pattern.permute.xlu0 0
        %6039 = vperm.xlu0 %6038, %v4244
        %v6040 = vpop.permute.xlu0 %6039
        %6041 = vset.pattern.permute.xlu0 0
        %6042 = vperm.xlu0 %6041, %v4245
        %v6043 = vpop.permute.xlu0 %6042
        %6044 = vset.pattern.permute.xlu0 0
        %6045 = vperm.xlu0 %6044, %v4246
        %v6046 = vpop.permute.xlu0 %6045
        %6047 = vset.pattern.permute.xlu0 0
        %6048 = vperm.xlu0 %6047, %v4247
        %v6049 = vpop.permute.xlu0 %6048
        %6050 = vset.pattern.permute.xlu0 0
        %6051 = vperm.xlu0 %6050, %v4248
        %v6052 = vpop.permute.xlu0 %6051
        %6053 = vset.pattern.permute.xlu0 0
        %6054 = vperm.xlu0 %6053, %v4249
        %v6055 = vpop.permute.xlu0 %6054
        %6056 = vset.pattern.permute.xlu0 0
        %6057 = vperm.xlu0 %6056, %v4250
        %v6058 = vpop.permute.xlu0 %6057
        %6059 = vset.pattern.permute.xlu0 0
        %6060 = vperm.xlu0 %6059, %v4251
        %v6061 = vpop.permute.xlu0 %6060
        %6062 = vset.pattern.permute.xlu0 0
        %6063 = vperm.xlu0 %6062, %v4252
        %v6064 = vpop.permute.xlu0 %6063
        %6065 = vset.pattern.permute.xlu0 0
        %6066 = vperm.xlu0 %6065, %v4253
        %v6067 = vpop.permute.xlu0 %6066
        %6068 = vset.pattern.permute.xlu0 0
        %6069 = vperm.xlu0 %6068, %v4254
        %v6070 = vpop.permute.xlu0 %6069
        %6071 = vset.pattern.permute.xlu0 0
        %6072 = vperm.xlu0 %6071, %v4255
        %v6073 = vpop.permute.xlu0 %6072
        %6074 = vset.pattern.permute.xlu0 0
        %6075 = vperm.xlu0 %6074, %v4256
        %v6076 = vpop.permute.xlu0 %6075
        %6077 = vset.pattern.permute.xlu0 0
        %6078 = vperm.xlu0 %6077, %v4257
        %v6079 = vpop.permute.xlu0 %6078
        %6080 = vset.pattern.permute.xlu0 0
        %6081 = vperm.xlu0 %6080, %v4258
        %v6082 = vpop.permute.xlu0 %6081
        %6083 = vset.pattern.permute.xlu0 0
        %6084 = vperm.xlu0 %6083, %v4259
        %v6085 = vpop.permute.xlu0 %6084
        %6086 = vset.pattern.permute.xlu0 0
        %6087 = vperm.xlu0 %6086, %v4260
        %v6088 = vpop.permute.xlu0 %6087
        %6089 = vset.pattern.permute.xlu0 0
        %6090 = vperm.xlu0 %6089, %v4261
        %v6091 = vpop.permute.xlu0 %6090
        %6092 = vset.pattern.permute.xlu0 0
        %6093 = vperm.xlu0 %6092, %v4262
        %v6094 = vpop.permute.xlu0 %6093
        %6095 = vset.pattern.permute.xlu0 0
        %6096 = vperm.xlu0 %6095, %v4263
        %v6097 = vpop.permute.xlu0 %6096
        %6098 = vset.pattern.permute.xlu0 0
        %6099 = vperm.xlu0 %6098, %v4264
        %v6100 = vpop.permute.xlu0 %6099
        %6101 = vset.pattern.permute.xlu0 0
        %6102 = vperm.xlu0 %6101, %v4265
        %v6103 = vpop.permute.xlu0 %6102
        %6104 = vset.pattern.permute.xlu0 0
        %6105 = vperm.xlu0 %6104, %v4266
        %v6106 = vpop.permute.xlu0 %6105
        %6107 = vset.pattern.permute.xlu0 0
        %6108 = vperm.xlu0 %6107, %v4267
        %v6109 = vpop.permute.xlu0 %6108
        %6110 = vset.pattern.permute.xlu0 0
        %6111 = vperm.xlu0 %6110, %v4268
        %v6112 = vpop.permute.xlu0 %6111
        %6113 = vset.pattern.permute.xlu0 0
        %6114 = vperm.xlu0 %6113, %v4269
        %v6115 = vpop.permute.xlu0 %6114
        %6116 = vset.pattern.permute.xlu0 0
        %6117 = vperm.xlu0 %6116, %v4270
        %v6118 = vpop.permute.xlu0 %6117
        %6119 = vset.pattern.permute.xlu0 0
        %6120 = vperm.xlu0 %6119, %v4271
        %v6121 = vpop.permute.xlu0 %6120
        %6122 = vset.pattern.permute.xlu0 0
        %6123 = vperm.xlu0 %6122, %v4272
        %v6124 = vpop.permute.xlu0 %6123
        %6125 = vset.pattern.permute.xlu0 0
        %6126 = vperm.xlu0 %6125, %v4273
        %v6127 = vpop.permute.xlu0 %6126
        %6128 = vset.pattern.permute.xlu0 0
        %6129 = vperm.xlu0 %6128, %v4274
        %v6130 = vpop.permute.xlu0 %6129
        %6131 = vset.pattern.permute.xlu0 0
        %6132 = vperm.xlu0 %6131, %v4275
        %v6133 = vpop.permute.xlu0 %6132
        %6134 = vset.pattern.permute.xlu0 0
        %6135 = vperm.xlu0 %6134, %v4276
        %v6136 = vpop.permute.xlu0 %6135
        %6137 = vset.pattern.permute.xlu0 0
        %6138 = vperm.xlu0 %6137, %v4277
        %v6139 = vpop.permute.xlu0 %6138
        %6140 = vset.pattern.permute.xlu0 0
        %6141 = vperm.xlu0 %6140, %v4278
        %v6142 = vpop.permute.xlu0 %6141
        %6143 = vset.pattern.permute.xlu0 0
        %6144 = vperm.xlu0 %6143, %v4279
        %v6145 = vpop.permute.xlu0 %6144
        %6146 = vset.pattern.permute.xlu0 0
        %6147 = vperm.xlu0 %6146, %v4280
        %v6148 = vpop.permute.xlu0 %6147
        %6149 = vset.pattern.permute.xlu0 0
        %6150 = vperm.xlu0 %6149, %v4281
        %v6151 = vpop.permute.xlu0 %6150
        %6152 = vset.pattern.permute.xlu0 0
        %6153 = vperm.xlu0 %6152, %v4282
        %v6154 = vpop.permute.xlu0 %6153
        %6155 = vset.pattern.permute.xlu0 0
        %6156 = vperm.xlu0 %6155, %v4283
        %v6157 = vpop.permute.xlu0 %6156
        %6158 = vset.pattern.permute.xlu0 0
        %6159 = vperm.xlu0 %6158, %v4284
        %v6160 = vpop.permute.xlu0 %6159
        %6161 = vset.pattern.permute.xlu0 0
        %6162 = vperm.xlu0 %6161, %v4285
        %v6163 = vpop.permute.xlu0 %6162
        %6164 = vset.pattern.permute.xlu0 0
        %6165 = vperm.xlu0 %6164, %v4286
        %v6166 = vpop.permute.xlu0 %6165
        %6167 = vset.pattern.permute.xlu0 0
        %6168 = vperm.xlu0 %6167, %v4287
        %v6169 = vpop.permute.xlu0 %6168
        %6170 = vset.pattern.permute.xlu0 0
        %6171 = vperm.xlu0 %6170, %v4288
        %v6172 = vpop.permute.xlu0 %6171
        %6173 = vset.pattern.permute.xlu0 0
        %6174 = vperm.xlu0 %6173, %v4289
        %v6175 = vpop.permute.xlu0 %6174
        %6176 = vset.pattern.permute.xlu0 0
        %6177 = vperm.xlu0 %6176, %v4290
        %v6178 = vpop.permute.xlu0 %6177
        %6179 = vset.pattern.permute.xlu0 0
        %6180 = vperm.xlu0 %6179, %v4291
        %v6181 = vpop.permute.xlu0 %6180
        %6182 = vset.pattern.permute.xlu0 0
        %6183 = vperm.xlu0 %6182, %v4292
        %v6184 = vpop.permute.xlu0 %6183
        %6185 = vset.pattern.permute.xlu0 0
        %6186 = vperm.xlu0 %6185, %v4293
        %v6187 = vpop.permute.xlu0 %6186
        %6188 = vset.pattern.permute.xlu0 0
        %6189 = vperm.xlu0 %6188, %v4294
        %v6190 = vpop.permute.xlu0 %6189
        %6191 = vset.pattern.permute.xlu0 0
        %6192 = vperm.xlu0 %6191, %v4295
        %v6193 = vpop.permute.xlu0 %6192
        %6194 = vset.pattern.permute.xlu0 0
        %6195 = vperm.xlu0 %6194, %v4296
        %v6196 = vpop.permute.xlu0 %6195
        %6197 = vset.pattern.permute.xlu0 0
        %6198 = vperm.xlu0 %6197, %v4297
        %v6199 = vpop.permute.xlu0 %6198
        %6200 = vset.pattern.permute.xlu0 0
        %6201 = vperm.xlu0 %6200, %v4298
        %v6202 = vpop.permute.xlu0 %6201
        %6203 = vset.pattern.permute.xlu0 0
        %6204 = vperm.xlu0 %6203, %v4299
        %v6205 = vpop.permute.xlu0 %6204
        %6206 = vset.pattern.permute.xlu0 0
        %6207 = vperm.xlu0 %6206, %v4300
        %v6208 = vpop.permute.xlu0 %6207
        %6209 = vset.pattern.permute.xlu0 0
        %6210 = vperm.xlu0 %6209, %v4301
        %v6211 = vpop.permute.xlu0 %6210
        %6212 = vset.pattern.permute.xlu0 0
        %6213 = vperm.xlu0 %6212, %v4302
        %v6214 = vpop.permute.xlu0 %6213
        %6215 = vset.pattern.permute.xlu0 0
        %6216 = vperm.xlu0 %6215, %v4303
        %v6217 = vpop.permute.xlu0 %6216
        %6218 = vset.pattern.permute.xlu0 0
        %6219 = vperm.xlu0 %6218, %v4304
        %v6220 = vpop.permute.xlu0 %6219
        %6221 = vset.pattern.permute.xlu0 0
        %6222 = vperm.xlu0 %6221, %v4305
        %v6223 = vpop.permute.xlu0 %6222
        %6224 = vset.pattern.permute.xlu0 0
        %6225 = vperm.xlu0 %6224, %v4306
        %v6226 = vpop.permute.xlu0 %6225
        %6227 = vset.pattern.permute.xlu0 0
        %6228 = vperm.xlu0 %6227, %v4307
        %v6229 = vpop.permute.xlu0 %6228
        %6230 = vset.pattern.permute.xlu0 0
        %6231 = vperm.xlu0 %6230, %v4308
        %v6232 = vpop.permute.xlu0 %6231
        %6233 = vset.pattern.permute.xlu0 0
        %6234 = vperm.xlu0 %6233, %v4309
        %v6235 = vpop.permute.xlu0 %6234
        %6236 = vset.pattern.permute.xlu0 0
        %6237 = vperm.xlu0 %6236, %v4310
        %v6238 = vpop.permute.xlu0 %6237
        %6239 = vset.pattern.permute.xlu0 0
        %6240 = vperm.xlu0 %6239, %v4311
        %v6241 = vpop.permute.xlu0 %6240
        %6242 = vset.pattern.permute.xlu0 0
        %6243 = vperm.xlu0 %6242, %v4312
        %v6244 = vpop.permute.xlu0 %6243
        %6245 = vset.pattern.permute.xlu0 0
        %6246 = vperm.xlu0 %6245, %v4313
        %v6247 = vpop.permute.xlu0 %6246
        %6248 = vset.pattern.permute.xlu0 0
        %6249 = vperm.xlu0 %6248, %v4314
        %v6250 = vpop.permute.xlu0 %6249
        %6251 = vset.pattern.permute.xlu0 0
        %6252 = vperm.xlu0 %6251, %v4315
        %v6253 = vpop.permute.xlu0 %6252
        %6254 = vset.pattern.permute.xlu0 0
        %6255 = vperm.xlu0 %6254, %v4316
        %v6256 = vpop.permute.xlu0 %6255
        %6257 = vset.pattern.permute.xlu0 0
        %6258 = vperm.xlu0 %6257, %v4317
        %v6259 = vpop.permute.xlu0 %6258
        %6260 = vset.pattern.permute.xlu0 0
        %6261 = vperm.xlu0 %6260, %v4318
        %v6262 = vpop.permute.xlu0 %6261
        %6263 = vset.pattern.permute.xlu0 0
        %6264 = vperm.xlu0 %6263, %v4319
        %v6265 = vpop.permute.xlu0 %6264
        %6266 = vset.pattern.permute.xlu0 0
        %6267 = vperm.xlu0 %6266, %v4320
        %v6268 = vpop.permute.xlu0 %6267
        %6269 = vset.pattern.permute.xlu0 0
        %6270 = vperm.xlu0 %6269, %v4321
        %v6271 = vpop.permute.xlu0 %6270
        %6272 = vset.pattern.permute.xlu0 0
        %6273 = vperm.xlu0 %6272, %v4322
        %v6274 = vpop.permute.xlu0 %6273
        %6275 = vset.pattern.permute.xlu0 0
        %6276 = vperm.xlu0 %6275, %v4323
        %v6277 = vpop.permute.xlu0 %6276
        %6278 = vset.pattern.permute.xlu0 0
        %6279 = vperm.xlu0 %6278, %v4324
        %v6280 = vpop.permute.xlu0 %6279
        %6281 = vset.pattern.permute.xlu0 0
        %6282 = vperm.xlu0 %6281, %v4325
        %v6283 = vpop.permute.xlu0 %6282
        %6284 = vset.pattern.permute.xlu0 0
        %6285 = vperm.xlu0 %6284, %v4326
        %v6286 = vpop.permute.xlu0 %6285
        %6287 = vset.pattern.permute.xlu0 0
        %6288 = vperm.xlu0 %6287, %v4327
        %v6289 = vpop.permute.xlu0 %6288
        %6290 = vset.pattern.permute.xlu0 0
        %6291 = vperm.xlu0 %6290, %v4328
        %v6292 = vpop.permute.xlu0 %6291
        %6293 = vset.pattern.permute.xlu0 0
        %6294 = vperm.xlu0 %6293, %v4329
        %v6295 = vpop.permute.xlu0 %6294
        %6296 = vset.pattern.permute.xlu0 0
        %6297 = vperm.xlu0 %6296, %v4330
        %v6298 = vpop.permute.xlu0 %6297
        %6299 = vset.pattern.permute.xlu0 0
        %6300 = vperm.xlu0 %6299, %v4331
        %v6301 = vpop.permute.xlu0 %6300
        %6302 = vset.pattern.permute.xlu0 0
        %6303 = vperm.xlu0 %6302, %v4332
        %v6304 = vpop.permute.xlu0 %6303
        %6305 = vset.pattern.permute.xlu0 0
        %6306 = vperm.xlu0 %6305, %v4333
        %v6307 = vpop.permute.xlu0 %6306
        %6308 = vset.pattern.permute.xlu0 0
        %6309 = vperm.xlu0 %6308, %v4334
        %v6310 = vpop.permute.xlu0 %6309
        %6311 = vset.pattern.permute.xlu0 0
        %6312 = vperm.xlu0 %6311, %v4335
        %v6313 = vpop.permute.xlu0 %6312
        %6314 = vset.pattern.permute.xlu0 0
        %6315 = vperm.xlu0 %6314, %v4336
        %v6316 = vpop.permute.xlu0 %6315
        %6317 = vset.pattern.permute.xlu0 0
        %6318 = vperm.xlu0 %6317, %v4337
        %v6319 = vpop.permute.xlu0 %6318
        %6320 = vset.pattern.permute.xlu0 0
        %6321 = vperm.xlu0 %6320, %v4338
        %v6322 = vpop.permute.xlu0 %6321
        %6323 = vset.pattern.permute.xlu0 0
        %6324 = vperm.xlu0 %6323, %v4339
        %v6325 = vpop.permute.xlu0 %6324
        %6326 = vset.pattern.permute.xlu0 0
        %6327 = vperm.xlu0 %6326, %v4340
        %v6328 = vpop.permute.xlu0 %6327
        %6329 = vset.pattern.permute.xlu0 0
        %6330 = vperm.xlu0 %6329, %v4341
        %v6331 = vpop.permute.xlu0 %6330
        %6332 = vset.pattern.permute.xlu0 0
        %6333 = vperm.xlu0 %6332, %v4342
        %v6334 = vpop.permute.xlu0 %6333
        %6335 = vset.pattern.permute.xlu0 0
        %6336 = vperm.xlu0 %6335, %v4343
        %v6337 = vpop.permute.xlu0 %6336
        %6338 = vset.pattern.permute.xlu0 0
        %6339 = vperm.xlu0 %6338, %v4344
        %v6340 = vpop.permute.xlu0 %6339
        %6341 = vset.pattern.permute.xlu0 0
        %6342 = vperm.xlu0 %6341, %v4345
        %v6343 = vpop.permute.xlu0 %6342
        %6344 = vset.pattern.permute.xlu0 0
        %6345 = vperm.xlu0 %6344, %v4346
        %v6346 = vpop.permute.xlu0 %6345
        %6347 = vset.pattern.permute.xlu0 0
        %6348 = vperm.xlu0 %6347, %v4347
        %v6349 = vpop.permute.xlu0 %6348
        %6350 = vset.pattern.permute.xlu0 0
        %6351 = vperm.xlu0 %6350, %v4348
        %v6352 = vpop.permute.xlu0 %6351
        %6353 = vset.pattern.permute.xlu0 0
        %6354 = vperm.xlu0 %6353, %v4349
        %v6355 = vpop.permute.xlu0 %6354
        %6356 = vset.pattern.permute.xlu0 0
        %6357 = vperm.xlu0 %6356, %v4350
        %v6358 = vpop.permute.xlu0 %6357
        %6359 = vset.pattern.permute.xlu0 0
        %6360 = vperm.xlu0 %6359, %v4351
        %v6361 = vpop.permute.xlu0 %6360
        %6362 = vset.pattern.permute.xlu0 0
        %6363 = vperm.xlu0 %6362, %v4352
        %v6364 = vpop.permute.xlu0 %6363
        %6365 = vset.pattern.permute.xlu0 0
        %6366 = vperm.xlu0 %6365, %v4353
        %v6367 = vpop.permute.xlu0 %6366
        %6368 = vset.pattern.permute.xlu0 0
        %6369 = vperm.xlu0 %6368, %v4354
        %v6370 = vpop.permute.xlu0 %6369
        %6371 = vset.pattern.permute.xlu0 0
        %6372 = vperm.xlu0 %6371, %v4355
        %v6373 = vpop.permute.xlu0 %6372
        %6374 = vset.pattern.permute.xlu0 0
        %6375 = vperm.xlu0 %6374, %v4356
        %v6376 = vpop.permute.xlu0 %6375
        %6377 = vset.pattern.permute.xlu0 0
        %6378 = vperm.xlu0 %6377, %v4357
        %v6379 = vpop.permute.xlu0 %6378
        %6380 = vset.pattern.permute.xlu0 0
        %6381 = vperm.xlu0 %6380, %v4358
        %v6382 = vpop.permute.xlu0 %6381
        %6383 = vset.pattern.permute.xlu0 0
        %6384 = vperm.xlu0 %6383, %v4359
        %v6385 = vpop.permute.xlu0 %6384
        %6386 = vset.pattern.permute.xlu0 0
        %6387 = vperm.xlu0 %6386, %v4360
        %v6388 = vpop.permute.xlu0 %6387
        %6389 = vset.pattern.permute.xlu0 0
        %6390 = vperm.xlu0 %6389, %v4361
        %v6391 = vpop.permute.xlu0 %6390
        %6392 = vset.pattern.permute.xlu0 0
        %6393 = vperm.xlu0 %6392, %v4362
        %v6394 = vpop.permute.xlu0 %6393
        %6395 = vset.pattern.permute.xlu0 0
        %6396 = vperm.xlu0 %6395, %v4363
        %v6397 = vpop.permute.xlu0 %6396
        %6398 = vset.pattern.permute.xlu0 0
        %6399 = vperm.xlu0 %6398, %v4364
        %v6400 = vpop.permute.xlu0 %6399
        %6401 = vset.pattern.permute.xlu0 0
        %6402 = vperm.xlu0 %6401, %v4365
        %v6403 = vpop.permute.xlu0 %6402
        %6404 = vset.pattern.permute.xlu0 0
        %6405 = vperm.xlu0 %6404, %v4366
        %v6406 = vpop.permute.xlu0 %6405
        %6407 = vset.pattern.permute.xlu0 0
        %6408 = vperm.xlu0 %6407, %v4367
        %v6409 = vpop.permute.xlu0 %6408
        %6410 = vset.pattern.permute.xlu0 0
        %6411 = vperm.xlu0 %6410, %v4368
        %v6412 = vpop.permute.xlu0 %6411
        %6413 = vset.pattern.permute.xlu0 0
        %6414 = vperm.xlu0 %6413, %v4369
        %v6415 = vpop.permute.xlu0 %6414
        %6416 = vset.pattern.permute.xlu0 0
        %6417 = vperm.xlu0 %6416, %v4370
        %v6418 = vpop.permute.xlu0 %6417
        %v6419 = vlaneseq
        %v6420 = vand.u32 %v6419, 127
        %v6421 = vlaneseq
        %v6422 = vshrl.u32 %v6421, 7
        %v6423 = vsub.s32 %v6420, %v6422
        %v6424 = vrot.slane %v4885, %v6423
        %v6425 = vadd.s32 %v6420, 4294967288
        %v6426 = vlaneseq
        %v6427 = vshrl.u32 %v6426, 7
        %v6428 = vsub.s32 %v6425, %v6427
        %v6429 = vrot.slane %v4888, %v6428
        %vm6430 = vcmask 130112
        %v6431 = vsel %vm6430, %v6429, %v6424
        %v6432 = vadd.s32 %v6420, 4294967280
        %v6433 = vlaneseq
        %v6434 = vshrl.u32 %v6433, 7
        %v6435 = vsub.s32 %v6432, %v6434
        %v6436 = vrot.slane %v4891, %v6435
        %vm6437 = vcmask 195712
        %v6438 = vsel %vm6437, %v6436, %v6431
        %v6439 = vadd.s32 %v6420, 4294967272
        %v6440 = vlaneseq
        %v6441 = vshrl.u32 %v6440, 7
        %v6442 = vsub.s32 %v6439, %v6441
        %v6443 = vrot.slane %v4894, %v6442
        %vm6444 = vcmask 261312
        %v6445 = vsel %vm6444, %v6443, %v6438
        %v6446 = vadd.s32 %v6420, 4294967264
        %v6447 = vlaneseq
        %v6448 = vshrl.u32 %v6447, 7
        %v6449 = vsub.s32 %v6446, %v6448
        %v6450 = vrot.slane %v4897, %v6449
        %vm6451 = vcmask 326912
        %v6452 = vsel %vm6451, %v6450, %v6445
        %v6453 = vadd.s32 %v6420, 4294967256
        %v6454 = vlaneseq
        %v6455 = vshrl.u32 %v6454, 7
        %v6456 = vsub.s32 %v6453, %v6455
        %v6457 = vrot.slane %v4900, %v6456
        %vm6458 = vcmask 392512
        %v6459 = vsel %vm6458, %v6457, %v6452
        %v6460 = vadd.s32 %v6420, 4294967248
        %v6461 = vlaneseq
        %v6462 = vshrl.u32 %v6461, 7
        %v6463 = vsub.s32 %v6460, %v6462
        %v6464 = vrot.slane %v4903, %v6463
        %vm6465 = vcmask 458112
        %v6466 = vsel %vm6465, %v6464, %v6459
        %v6467 = vadd.s32 %v6420, 4294967240
        %v6468 = vlaneseq
        %v6469 = vshrl.u32 %v6468, 7
        %v6470 = vsub.s32 %v6467, %v6469
        %v6471 = vrot.slane %v4906, %v6470
        %vm6472 = vcmask 523712
        %v6473 = vsel %vm6472, %v6471, %v6466
        %v6474 = vadd.s32 %v6420, 4294967232
        %v6475 = vlaneseq
        %v6476 = vshrl.u32 %v6475, 7
        %v6477 = vsub.s32 %v6474, %v6476
        %v6478 = vrot.slane %v4909, %v6477
        %vm6479 = vcmask 589312
        %v6480 = vsel %vm6479, %v6478, %v6473
        %v6481 = vadd.s32 %v6420, 4294967224
        %v6482 = vlaneseq
        %v6483 = vshrl.u32 %v6482, 7
        %v6484 = vsub.s32 %v6481, %v6483
        %v6485 = vrot.slane %v4912, %v6484
        %vm6486 = vcmask 654912
        %v6487 = vsel %vm6486, %v6485, %v6480
        %v6488 = vadd.s32 %v6420, 4294967216
        %v6489 = vlaneseq
        %v6490 = vshrl.u32 %v6489, 7
        %v6491 = vsub.s32 %v6488, %v6490
        %v6492 = vrot.slane %v4915, %v6491
        %vm6493 = vcmask 720512
        %v6494 = vsel %vm6493, %v6492, %v6487
        %v6495 = vadd.s32 %v6420, 4294967208
        %v6496 = vlaneseq
        %v6497 = vshrl.u32 %v6496, 7
        %v6498 = vsub.s32 %v6495, %v6497
        %v6499 = vrot.slane %v4918, %v6498
        %vm6500 = vcmask 786112
        %v6501 = vsel %vm6500, %v6499, %v6494
        %v6502 = vadd.s32 %v6420, 4294967200
        %v6503 = vlaneseq
        %v6504 = vshrl.u32 %v6503, 7
        %v6505 = vsub.s32 %v6502, %v6504
        %v6506 = vrot.slane %v4921, %v6505
        %vm6507 = vcmask 851712
        %v6508 = vsel %vm6507, %v6506, %v6501
        %v6509 = vadd.s32 %v6420, 4294967192
        %v6510 = vlaneseq
        %v6511 = vshrl.u32 %v6510, 7
        %v6512 = vsub.s32 %v6509, %v6511
        %v6513 = vrot.slane %v4924, %v6512
        %vm6514 = vcmask 917312
        %v6515 = vsel %vm6514, %v6513, %v6508
        %v6516 = vadd.s32 %v6420, 4294967184
        %v6517 = vlaneseq
        %v6518 = vshrl.u32 %v6517, 7
        %v6519 = vsub.s32 %v6516, %v6518
        %v6520 = vrot.slane %v4927, %v6519
        %vm6521 = vcmask 982912
        %v6522 = vsel %vm6521, %v6520, %v6515
        %v6523 = vadd.s32 %v6420, 4294967176
        %v6524 = vlaneseq
        %v6525 = vshrl.u32 %v6524, 7
        %v6526 = vsub.s32 %v6523, %v6525
        %v6527 = vrot.slane %v4930, %v6526
        %vm6528 = vcmask 1048512
        %v6529 = vsel %vm6528, %v6527, %v6522
        %v6530 = vlaneseq
        %v6531 = vshrl.u32 %v6530, 7
        %v6532 = vsub.s32 %v6420, %v6531
        %v6533 = vrot.slane %v4933, %v6532
        %v6534 = vlaneseq
        %v6535 = vshrl.u32 %v6534, 7
        %v6536 = vsub.s32 %v6425, %v6535
        %v6537 = vrot.slane %v4936, %v6536
        %v6538 = vsel %vm6430, %v6537, %v6533
        %v6539 = vlaneseq
        %v6540 = vshrl.u32 %v6539, 7
        %v6541 = vsub.s32 %v6432, %v6540
        %v6542 = vrot.slane %v4939, %v6541
        %v6543 = vsel %vm6437, %v6542, %v6538
        %v6544 = vlaneseq
        %v6545 = vshrl.u32 %v6544, 7
        %v6546 = vsub.s32 %v6439, %v6545
        %v6547 = vrot.slane %v4942, %v6546
        %v6548 = vsel %vm6444, %v6547, %v6543
        %v6549 = vlaneseq
        %v6550 = vshrl.u32 %v6549, 7
        %v6551 = vsub.s32 %v6446, %v6550
        %v6552 = vrot.slane %v4945, %v6551
        %v6553 = vsel %vm6451, %v6552, %v6548
        %v6554 = vlaneseq
        %v6555 = vshrl.u32 %v6554, 7
        %v6556 = vsub.s32 %v6453, %v6555
        %v6557 = vrot.slane %v4948, %v6556
        %v6558 = vsel %vm6458, %v6557, %v6553
        %v6559 = vlaneseq
        %v6560 = vshrl.u32 %v6559, 7
        %v6561 = vsub.s32 %v6460, %v6560
        %v6562 = vrot.slane %v4951, %v6561
        %v6563 = vsel %vm6465, %v6562, %v6558
        %v6564 = vlaneseq
        %v6565 = vshrl.u32 %v6564, 7
        %v6566 = vsub.s32 %v6467, %v6565
        %v6567 = vrot.slane %v4954, %v6566
        %v6568 = vsel %vm6472, %v6567, %v6563
        %v6569 = vlaneseq
        %v6570 = vshrl.u32 %v6569, 7
        %v6571 = vsub.s32 %v6474, %v6570
        %v6572 = vrot.slane %v4957, %v6571
        %v6573 = vsel %vm6479, %v6572, %v6568
        %v6574 = vlaneseq
        %v6575 = vshrl.u32 %v6574, 7
        %v6576 = vsub.s32 %v6481, %v6575
        %v6577 = vrot.slane %v4960, %v6576
        %v6578 = vsel %vm6486, %v6577, %v6573
        %v6579 = vlaneseq
        %v6580 = vshrl.u32 %v6579, 7
        %v6581 = vsub.s32 %v6488, %v6580
        %v6582 = vrot.slane %v4963, %v6581
        %v6583 = vsel %vm6493, %v6582, %v6578
        %v6584 = vlaneseq
        %v6585 = vshrl.u32 %v6584, 7
        %v6586 = vsub.s32 %v6495, %v6585
        %v6587 = vrot.slane %v4966, %v6586
        %v6588 = vsel %vm6500, %v6587, %v6583
        %v6589 = vlaneseq
        %v6590 = vshrl.u32 %v6589, 7
        %v6591 = vsub.s32 %v6502, %v6590
        %v6592 = vrot.slane %v4969, %v6591
        %v6593 = vsel %vm6507, %v6592, %v6588
        %v6594 = vlaneseq
        %v6595 = vshrl.u32 %v6594, 7
        %v6596 = vsub.s32 %v6509, %v6595
        %v6597 = vrot.slane %v4972, %v6596
        %v6598 = vsel %vm6514, %v6597, %v6593
        %v6599 = vlaneseq
        %v6600 = vshrl.u32 %v6599, 7
        %v6601 = vsub.s32 %v6516, %v6600
        %v6602 = vrot.slane %v4975, %v6601
        %v6603 = vsel %vm6521, %v6602, %v6598
        %v6604 = vlaneseq
        %v6605 = vshrl.u32 %v6604, 7
        %v6606 = vsub.s32 %v6523, %v6605
        %v6607 = vrot.slane %v4978, %v6606
        %v6608 = vsel %vm6528, %v6607, %v6603
        %v6609 = vlaneseq
        %v6610 = vshrl.u32 %v6609, 7
        %v6611 = vsub.s32 %v6420, %v6610
        %v6612 = vrot.slane %v4981, %v6611
        %v6613 = vlaneseq
        %v6614 = vshrl.u32 %v6613, 7
        %v6615 = vsub.s32 %v6425, %v6614
        %v6616 = vrot.slane %v4984, %v6615
        %v6617 = vsel %vm6430, %v6616, %v6612
        %v6618 = vlaneseq
        %v6619 = vshrl.u32 %v6618, 7
        %v6620 = vsub.s32 %v6432, %v6619
        %v6621 = vrot.slane %v4987, %v6620
        %v6622 = vsel %vm6437, %v6621, %v6617
        %v6623 = vlaneseq
        %v6624 = vshrl.u32 %v6623, 7
        %v6625 = vsub.s32 %v6439, %v6624
        %v6626 = vrot.slane %v4990, %v6625
        %v6627 = vsel %vm6444, %v6626, %v6622
        %v6628 = vlaneseq
        %v6629 = vshrl.u32 %v6628, 7
        %v6630 = vsub.s32 %v6446, %v6629
        %v6631 = vrot.slane %v4993, %v6630
        %v6632 = vsel %vm6451, %v6631, %v6627
        %v6633 = vlaneseq
        %v6634 = vshrl.u32 %v6633, 7
        %v6635 = vsub.s32 %v6453, %v6634
        %v6636 = vrot.slane %v4996, %v6635
        %v6637 = vsel %vm6458, %v6636, %v6632
        %v6638 = vlaneseq
        %v6639 = vshrl.u32 %v6638, 7
        %v6640 = vsub.s32 %v6460, %v6639
        %v6641 = vrot.slane %v4999, %v6640
        %v6642 = vsel %vm6465, %v6641, %v6637
        %v6643 = vlaneseq
        %v6644 = vshrl.u32 %v6643, 7
        %v6645 = vsub.s32 %v6467, %v6644
        %v6646 = vrot.slane %v5002, %v6645
        %v6647 = vsel %vm6472, %v6646, %v6642
        %v6648 = vlaneseq
        %v6649 = vshrl.u32 %v6648, 7
        %v6650 = vsub.s32 %v6474, %v6649
        %v6651 = vrot.slane %v5005, %v6650
        %v6652 = vsel %vm6479, %v6651, %v6647
        %v6653 = vlaneseq
        %v6654 = vshrl.u32 %v6653, 7
        %v6655 = vsub.s32 %v6481, %v6654
        %v6656 = vrot.slane %v5008, %v6655
        %v6657 = vsel %vm6486, %v6656, %v6652
        %v6658 = vlaneseq
        %v6659 = vshrl.u32 %v6658, 7
        %v6660 = vsub.s32 %v6488, %v6659
        %v6661 = vrot.slane %v5011, %v6660
        %v6662 = vsel %vm6493, %v6661, %v6657
        %v6663 = vlaneseq
        %v6664 = vshrl.u32 %v6663, 7
        %v6665 = vsub.s32 %v6495, %v6664
        %v6666 = vrot.slane %v5014, %v6665
        %v6667 = vsel %vm6500, %v6666, %v6662
        %v6668 = vlaneseq
        %v6669 = vshrl.u32 %v6668, 7
        %v6670 = vsub.s32 %v6502, %v6669
        %v6671 = vrot.slane %v5017, %v6670
        %v6672 = vsel %vm6507, %v6671, %v6667
        %v6673 = vlaneseq
        %v6674 = vshrl.u32 %v6673, 7
        %v6675 = vsub.s32 %v6509, %v6674
        %v6676 = vrot.slane %v5020, %v6675
        %v6677 = vsel %vm6514, %v6676, %v6672
        %v6678 = vlaneseq
        %v6679 = vshrl.u32 %v6678, 7
        %v6680 = vsub.s32 %v6516, %v6679
        %v6681 = vrot.slane %v5023, %v6680
        %v6682 = vsel %vm6521, %v6681, %v6677
        %v6683 = vlaneseq
        %v6684 = vshrl.u32 %v6683, 7
        %v6685 = vsub.s32 %v6523, %v6684
        %v6686 = vrot.slane %v5026, %v6685
        %v6687 = vsel %vm6528, %v6686, %v6682
        %v6688 = vlaneseq
        %v6689 = vshrl.u32 %v6688, 7
        %v6690 = vsub.s32 %v6420, %v6689
        %v6691 = vrot.slane %v5029, %v6690
        %v6692 = vlaneseq
        %v6693 = vshrl.u32 %v6692, 7
        %v6694 = vsub.s32 %v6425, %v6693
        %v6695 = vrot.slane %v5032, %v6694
        %v6696 = vsel %vm6430, %v6695, %v6691
        %v6697 = vlaneseq
        %v6698 = vshrl.u32 %v6697, 7
        %v6699 = vsub.s32 %v6432, %v6698
        %v6700 = vrot.slane %v5035, %v6699
        %v6701 = vsel %vm6437, %v6700, %v6696
        %v6702 = vlaneseq
        %v6703 = vshrl.u32 %v6702, 7
        %v6704 = vsub.s32 %v6439, %v6703
        %v6705 = vrot.slane %v5038, %v6704
        %v6706 = vsel %vm6444, %v6705, %v6701
        %v6707 = vlaneseq
        %v6708 = vshrl.u32 %v6707, 7
        %v6709 = vsub.s32 %v6446, %v6708
        %v6710 = vrot.slane %v5041, %v6709
        %v6711 = vsel %vm6451, %v6710, %v6706
        %v6712 = vlaneseq
        %v6713 = vshrl.u32 %v6712, 7
        %v6714 = vsub.s32 %v6453, %v6713
        %v6715 = vrot.slane %v5044, %v6714
        %v6716 = vsel %vm6458, %v6715, %v6711
        %v6717 = vlaneseq
        %v6718 = vshrl.u32 %v6717, 7
        %v6719 = vsub.s32 %v6460, %v6718
        %v6720 = vrot.slane %v5047, %v6719
        %v6721 = vsel %vm6465, %v6720, %v6716
        %v6722 = vlaneseq
        %v6723 = vshrl.u32 %v6722, 7
        %v6724 = vsub.s32 %v6467, %v6723
        %v6725 = vrot.slane %v5050, %v6724
        %v6726 = vsel %vm6472, %v6725, %v6721
        %v6727 = vlaneseq
        %v6728 = vshrl.u32 %v6727, 7
        %v6729 = vsub.s32 %v6474, %v6728
        %v6730 = vrot.slane %v5053, %v6729
        %v6731 = vsel %vm6479, %v6730, %v6726
        %v6732 = vlaneseq
        %v6733 = vshrl.u32 %v6732, 7
        %v6734 = vsub.s32 %v6481, %v6733
        %v6735 = vrot.slane %v5056, %v6734
        %v6736 = vsel %vm6486, %v6735, %v6731
        %v6737 = vlaneseq
        %v6738 = vshrl.u32 %v6737, 7
        %v6739 = vsub.s32 %v6488, %v6738
        %v6740 = vrot.slane %v5059, %v6739
        %v6741 = vsel %vm6493, %v6740, %v6736
        %v6742 = vlaneseq
        %v6743 = vshrl.u32 %v6742, 7
        %v6744 = vsub.s32 %v6495, %v6743
        %v6745 = vrot.slane %v5062, %v6744
        %v6746 = vsel %vm6500, %v6745, %v6741
        %v6747 = vlaneseq
        %v6748 = vshrl.u32 %v6747, 7
        %v6749 = vsub.s32 %v6502, %v6748
        %v6750 = vrot.slane %v5065, %v6749
        %v6751 = vsel %vm6507, %v6750, %v6746
        %v6752 = vlaneseq
        %v6753 = vshrl.u32 %v6752, 7
        %v6754 = vsub.s32 %v6509, %v6753
        %v6755 = vrot.slane %v5068, %v6754
        %v6756 = vsel %vm6514, %v6755, %v6751
        %v6757 = vlaneseq
        %v6758 = vshrl.u32 %v6757, 7
        %v6759 = vsub.s32 %v6516, %v6758
        %v6760 = vrot.slane %v5071, %v6759
        %v6761 = vsel %vm6521, %v6760, %v6756
        %v6762 = vlaneseq
        %v6763 = vshrl.u32 %v6762, 7
        %v6764 = vsub.s32 %v6523, %v6763
        %v6765 = vrot.slane %v5074, %v6764
        %v6766 = vsel %vm6528, %v6765, %v6761
        %v6767 = vlaneseq
        %v6768 = vshrl.u32 %v6767, 7
        %v6769 = vsub.s32 %v6420, %v6768
        %v6770 = vrot.slane %v5077, %v6769
        %v6771 = vlaneseq
        %v6772 = vshrl.u32 %v6771, 7
        %v6773 = vsub.s32 %v6425, %v6772
        %v6774 = vrot.slane %v5080, %v6773
        %v6775 = vsel %vm6430, %v6774, %v6770
        %v6776 = vlaneseq
        %v6777 = vshrl.u32 %v6776, 7
        %v6778 = vsub.s32 %v6432, %v6777
        %v6779 = vrot.slane %v5083, %v6778
        %v6780 = vsel %vm6437, %v6779, %v6775
        %v6781 = vlaneseq
        %v6782 = vshrl.u32 %v6781, 7
        %v6783 = vsub.s32 %v6439, %v6782
        %v6784 = vrot.slane %v5086, %v6783
        %v6785 = vsel %vm6444, %v6784, %v6780
        %v6786 = vlaneseq
        %v6787 = vshrl.u32 %v6786, 7
        %v6788 = vsub.s32 %v6446, %v6787
        %v6789 = vrot.slane %v5089, %v6788
        %v6790 = vsel %vm6451, %v6789, %v6785
        %v6791 = vlaneseq
        %v6792 = vshrl.u32 %v6791, 7
        %v6793 = vsub.s32 %v6453, %v6792
        %v6794 = vrot.slane %v5092, %v6793
        %v6795 = vsel %vm6458, %v6794, %v6790
        %v6796 = vlaneseq
        %v6797 = vshrl.u32 %v6796, 7
        %v6798 = vsub.s32 %v6460, %v6797
        %v6799 = vrot.slane %v5095, %v6798
        %v6800 = vsel %vm6465, %v6799, %v6795
        %v6801 = vlaneseq
        %v6802 = vshrl.u32 %v6801, 7
        %v6803 = vsub.s32 %v6467, %v6802
        %v6804 = vrot.slane %v5098, %v6803
        %v6805 = vsel %vm6472, %v6804, %v6800
        %v6806 = vlaneseq
        %v6807 = vshrl.u32 %v6806, 7
        %v6808 = vsub.s32 %v6474, %v6807
        %v6809 = vrot.slane %v5101, %v6808
        %v6810 = vsel %vm6479, %v6809, %v6805
        %v6811 = vlaneseq
        %v6812 = vshrl.u32 %v6811, 7
        %v6813 = vsub.s32 %v6481, %v6812
        %v6814 = vrot.slane %v5104, %v6813
        %v6815 = vsel %vm6486, %v6814, %v6810
        %v6816 = vlaneseq
        %v6817 = vshrl.u32 %v6816, 7
        %v6818 = vsub.s32 %v6488, %v6817
        %v6819 = vrot.slane %v5107, %v6818
        %v6820 = vsel %vm6493, %v6819, %v6815
        %v6821 = vlaneseq
        %v6822 = vshrl.u32 %v6821, 7
        %v6823 = vsub.s32 %v6495, %v6822
        %v6824 = vrot.slane %v5110, %v6823
        %v6825 = vsel %vm6500, %v6824, %v6820
        %v6826 = vlaneseq
        %v6827 = vshrl.u32 %v6826, 7
        %v6828 = vsub.s32 %v6502, %v6827
        %v6829 = vrot.slane %v5113, %v6828
        %v6830 = vsel %vm6507, %v6829, %v6825
        %v6831 = vlaneseq
        %v6832 = vshrl.u32 %v6831, 7
        %v6833 = vsub.s32 %v6509, %v6832
        %v6834 = vrot.slane %v5116, %v6833
        %v6835 = vsel %vm6514, %v6834, %v6830
        %v6836 = vlaneseq
        %v6837 = vshrl.u32 %v6836, 7
        %v6838 = vsub.s32 %v6516, %v6837
        %v6839 = vrot.slane %v5119, %v6838
        %v6840 = vsel %vm6521, %v6839, %v6835
        %v6841 = vlaneseq
        %v6842 = vshrl.u32 %v6841, 7
        %v6843 = vsub.s32 %v6523, %v6842
        %v6844 = vrot.slane %v5122, %v6843
        %v6845 = vsel %vm6528, %v6844, %v6840
        %v6846 = vlaneseq
        %v6847 = vshrl.u32 %v6846, 7
        %v6848 = vsub.s32 %v6420, %v6847
        %v6849 = vrot.slane %v5125, %v6848
        %v6850 = vlaneseq
        %v6851 = vshrl.u32 %v6850, 7
        %v6852 = vsub.s32 %v6425, %v6851
        %v6853 = vrot.slane %v5128, %v6852
        %v6854 = vsel %vm6430, %v6853, %v6849
        %v6855 = vlaneseq
        %v6856 = vshrl.u32 %v6855, 7
        %v6857 = vsub.s32 %v6432, %v6856
        %v6858 = vrot.slane %v5131, %v6857
        %v6859 = vsel %vm6437, %v6858, %v6854
        %v6860 = vlaneseq
        %v6861 = vshrl.u32 %v6860, 7
        %v6862 = vsub.s32 %v6439, %v6861
        %v6863 = vrot.slane %v5134, %v6862
        %v6864 = vsel %vm6444, %v6863, %v6859
        %v6865 = vlaneseq
        %v6866 = vshrl.u32 %v6865, 7
        %v6867 = vsub.s32 %v6446, %v6866
        %v6868 = vrot.slane %v5137, %v6867
        %v6869 = vsel %vm6451, %v6868, %v6864
        %v6870 = vlaneseq
        %v6871 = vshrl.u32 %v6870, 7
        %v6872 = vsub.s32 %v6453, %v6871
        %v6873 = vrot.slane %v5140, %v6872
        %v6874 = vsel %vm6458, %v6873, %v6869
        %v6875 = vlaneseq
        %v6876 = vshrl.u32 %v6875, 7
        %v6877 = vsub.s32 %v6460, %v6876
        %v6878 = vrot.slane %v5143, %v6877
        %v6879 = vsel %vm6465, %v6878, %v6874
        %v6880 = vlaneseq
        %v6881 = vshrl.u32 %v6880, 7
        %v6882 = vsub.s32 %v6467, %v6881
        %v6883 = vrot.slane %v5146, %v6882
        %v6884 = vsel %vm6472, %v6883, %v6879
        %v6885 = vlaneseq
        %v6886 = vshrl.u32 %v6885, 7
        %v6887 = vsub.s32 %v6474, %v6886
        %v6888 = vrot.slane %v5149, %v6887
        %v6889 = vsel %vm6479, %v6888, %v6884
        %v6890 = vlaneseq
        %v6891 = vshrl.u32 %v6890, 7
        %v6892 = vsub.s32 %v6481, %v6891
        %v6893 = vrot.slane %v5152, %v6892
        %v6894 = vsel %vm6486, %v6893, %v6889
        %v6895 = vlaneseq
        %v6896 = vshrl.u32 %v6895, 7
        %v6897 = vsub.s32 %v6488, %v6896
        %v6898 = vrot.slane %v5155, %v6897
        %v6899 = vsel %vm6493, %v6898, %v6894
        %v6900 = vlaneseq
        %v6901 = vshrl.u32 %v6900, 7
        %v6902 = vsub.s32 %v6495, %v6901
        %v6903 = vrot.slane %v5158, %v6902
        %v6904 = vsel %vm6500, %v6903, %v6899
        %v6905 = vlaneseq
        %v6906 = vshrl.u32 %v6905, 7
        %v6907 = vsub.s32 %v6502, %v6906
        %v6908 = vrot.slane %v5161, %v6907
        %v6909 = vsel %vm6507, %v6908, %v6904
        %v6910 = vlaneseq
        %v6911 = vshrl.u32 %v6910, 7
        %v6912 = vsub.s32 %v6509, %v6911
        %v6913 = vrot.slane %v5164, %v6912
        %v6914 = vsel %vm6514, %v6913, %v6909
        %v6915 = vlaneseq
        %v6916 = vshrl.u32 %v6915, 7
        %v6917 = vsub.s32 %v6516, %v6916
        %v6918 = vrot.slane %v5167, %v6917
        %v6919 = vsel %vm6521, %v6918, %v6914
        %v6920 = vlaneseq
        %v6921 = vshrl.u32 %v6920, 7
        %v6922 = vsub.s32 %v6523, %v6921
        %v6923 = vrot.slane %v5170, %v6922
        %v6924 = vsel %vm6528, %v6923, %v6919
        %v6925 = vlaneseq
        %v6926 = vshrl.u32 %v6925, 7
        %v6927 = vsub.s32 %v6420, %v6926
        %v6928 = vrot.slane %v5173, %v6927
        %v6929 = vlaneseq
        %v6930 = vshrl.u32 %v6929, 7
        %v6931 = vsub.s32 %v6425, %v6930
        %v6932 = vrot.slane %v5176, %v6931
        %v6933 = vsel %vm6430, %v6932, %v6928
        %v6934 = vlaneseq
        %v6935 = vshrl.u32 %v6934, 7
        %v6936 = vsub.s32 %v6432, %v6935
        %v6937 = vrot.slane %v5179, %v6936
        %v6938 = vsel %vm6437, %v6937, %v6933
        %v6939 = vlaneseq
        %v6940 = vshrl.u32 %v6939, 7
        %v6941 = vsub.s32 %v6439, %v6940
        %v6942 = vrot.slane %v5182, %v6941
        %v6943 = vsel %vm6444, %v6942, %v6938
        %v6944 = vlaneseq
        %v6945 = vshrl.u32 %v6944, 7
        %v6946 = vsub.s32 %v6446, %v6945
        %v6947 = vrot.slane %v5185, %v6946
        %v6948 = vsel %vm6451, %v6947, %v6943
        %v6949 = vlaneseq
        %v6950 = vshrl.u32 %v6949, 7
        %v6951 = vsub.s32 %v6453, %v6950
        %v6952 = vrot.slane %v5188, %v6951
        %v6953 = vsel %vm6458, %v6952, %v6948
        %v6954 = vlaneseq
        %v6955 = vshrl.u32 %v6954, 7
        %v6956 = vsub.s32 %v6460, %v6955
        %v6957 = vrot.slane %v5191, %v6956
        %v6958 = vsel %vm6465, %v6957, %v6953
        %v6959 = vlaneseq
        %v6960 = vshrl.u32 %v6959, 7
        %v6961 = vsub.s32 %v6467, %v6960
        %v6962 = vrot.slane %v5194, %v6961
        %v6963 = vsel %vm6472, %v6962, %v6958
        %v6964 = vlaneseq
        %v6965 = vshrl.u32 %v6964, 7
        %v6966 = vsub.s32 %v6474, %v6965
        %v6967 = vrot.slane %v5197, %v6966
        %v6968 = vsel %vm6479, %v6967, %v6963
        %v6969 = vlaneseq
        %v6970 = vshrl.u32 %v6969, 7
        %v6971 = vsub.s32 %v6481, %v6970
        %v6972 = vrot.slane %v5200, %v6971
        %v6973 = vsel %vm6486, %v6972, %v6968
        %v6974 = vlaneseq
        %v6975 = vshrl.u32 %v6974, 7
        %v6976 = vsub.s32 %v6488, %v6975
        %v6977 = vrot.slane %v5203, %v6976
        %v6978 = vsel %vm6493, %v6977, %v6973
        %v6979 = vlaneseq
        %v6980 = vshrl.u32 %v6979, 7
        %v6981 = vsub.s32 %v6495, %v6980
        %v6982 = vrot.slane %v5206, %v6981
        %v6983 = vsel %vm6500, %v6982, %v6978
        %v6984 = vlaneseq
        %v6985 = vshrl.u32 %v6984, 7
        %v6986 = vsub.s32 %v6502, %v6985
        %v6987 = vrot.slane %v5209, %v6986
        %v6988 = vsel %vm6507, %v6987, %v6983
        %v6989 = vlaneseq
        %v6990 = vshrl.u32 %v6989, 7
        %v6991 = vsub.s32 %v6509, %v6990
        %v6992 = vrot.slane %v5212, %v6991
        %v6993 = vsel %vm6514, %v6992, %v6988
        %v6994 = vlaneseq
        %v6995 = vshrl.u32 %v6994, 7
        %v6996 = vsub.s32 %v6516, %v6995
        %v6997 = vrot.slane %v5215, %v6996
        %v6998 = vsel %vm6521, %v6997, %v6993
        %v6999 = vlaneseq
        %v7000 = vshrl.u32 %v6999, 7
        %v7001 = vsub.s32 %v6523, %v7000
        %v7002 = vrot.slane %v5218, %v7001
        %v7003 = vsel %vm6528, %v7002, %v6998
        %v7004 = vlaneseq
        %v7005 = vshrl.u32 %v7004, 7
        %v7006 = vsub.s32 %v6420, %v7005
        %v7007 = vrot.slane %v5221, %v7006
        %v7008 = vlaneseq
        %v7009 = vshrl.u32 %v7008, 7
        %v7010 = vsub.s32 %v6425, %v7009
        %v7011 = vrot.slane %v5224, %v7010
        %v7012 = vsel %vm6430, %v7011, %v7007
        %v7013 = vlaneseq
        %v7014 = vshrl.u32 %v7013, 7
        %v7015 = vsub.s32 %v6432, %v7014
        %v7016 = vrot.slane %v5227, %v7015
        %v7017 = vsel %vm6437, %v7016, %v7012
        %v7018 = vlaneseq
        %v7019 = vshrl.u32 %v7018, 7
        %v7020 = vsub.s32 %v6439, %v7019
        %v7021 = vrot.slane %v5230, %v7020
        %v7022 = vsel %vm6444, %v7021, %v7017
        %v7023 = vlaneseq
        %v7024 = vshrl.u32 %v7023, 7
        %v7025 = vsub.s32 %v6446, %v7024
        %v7026 = vrot.slane %v5233, %v7025
        %v7027 = vsel %vm6451, %v7026, %v7022
        %v7028 = vlaneseq
        %v7029 = vshrl.u32 %v7028, 7
        %v7030 = vsub.s32 %v6453, %v7029
        %v7031 = vrot.slane %v5236, %v7030
        %v7032 = vsel %vm6458, %v7031, %v7027
        %v7033 = vlaneseq
        %v7034 = vshrl.u32 %v7033, 7
        %v7035 = vsub.s32 %v6460, %v7034
        %v7036 = vrot.slane %v5239, %v7035
        %v7037 = vsel %vm6465, %v7036, %v7032
        %v7038 = vlaneseq
        %v7039 = vshrl.u32 %v7038, 7
        %v7040 = vsub.s32 %v6467, %v7039
        %v7041 = vrot.slane %v5242, %v7040
        %v7042 = vsel %vm6472, %v7041, %v7037
        %v7043 = vlaneseq
        %v7044 = vshrl.u32 %v7043, 7
        %v7045 = vsub.s32 %v6474, %v7044
        %v7046 = vrot.slane %v5245, %v7045
        %v7047 = vsel %vm6479, %v7046, %v7042
        %v7048 = vlaneseq
        %v7049 = vshrl.u32 %v7048, 7
        %v7050 = vsub.s32 %v6481, %v7049
        %v7051 = vrot.slane %v5248, %v7050
        %v7052 = vsel %vm6486, %v7051, %v7047
        %v7053 = vlaneseq
        %v7054 = vshrl.u32 %v7053, 7
        %v7055 = vsub.s32 %v6488, %v7054
        %v7056 = vrot.slane %v5251, %v7055
        %v7057 = vsel %vm6493, %v7056, %v7052
        %v7058 = vlaneseq
        %v7059 = vshrl.u32 %v7058, 7
        %v7060 = vsub.s32 %v6495, %v7059
        %v7061 = vrot.slane %v5254, %v7060
        %v7062 = vsel %vm6500, %v7061, %v7057
        %v7063 = vlaneseq
        %v7064 = vshrl.u32 %v7063, 7
        %v7065 = vsub.s32 %v6502, %v7064
        %v7066 = vrot.slane %v5257, %v7065
        %v7067 = vsel %vm6507, %v7066, %v7062
        %v7068 = vlaneseq
        %v7069 = vshrl.u32 %v7068, 7
        %v7070 = vsub.s32 %v6509, %v7069
        %v7071 = vrot.slane %v5260, %v7070
        %v7072 = vsel %vm6514, %v7071, %v7067
        %v7073 = vlaneseq
        %v7074 = vshrl.u32 %v7073, 7
        %v7075 = vsub.s32 %v6516, %v7074
        %v7076 = vrot.slane %v5263, %v7075
        %v7077 = vsel %vm6521, %v7076, %v7072
        %v7078 = vlaneseq
        %v7079 = vshrl.u32 %v7078, 7
        %v7080 = vsub.s32 %v6523, %v7079
        %v7081 = vrot.slane %v5266, %v7080
        %v7082 = vsel %vm6528, %v7081, %v7077
        %v7083 = vlaneseq
        %v7084 = vshrl.u32 %v7083, 7
        %v7085 = vsub.s32 %v6420, %v7084
        %v7086 = vrot.slane %v5269, %v7085
        %v7087 = vlaneseq
        %v7088 = vshrl.u32 %v7087, 7
        %v7089 = vsub.s32 %v6425, %v7088
        %v7090 = vrot.slane %v5272, %v7089
        %v7091 = vsel %vm6430, %v7090, %v7086
        %v7092 = vlaneseq
        %v7093 = vshrl.u32 %v7092, 7
        %v7094 = vsub.s32 %v6432, %v7093
        %v7095 = vrot.slane %v5275, %v7094
        %v7096 = vsel %vm6437, %v7095, %v7091
        %v7097 = vlaneseq
        %v7098 = vshrl.u32 %v7097, 7
        %v7099 = vsub.s32 %v6439, %v7098
        %v7100 = vrot.slane %v5278, %v7099
        %v7101 = vsel %vm6444, %v7100, %v7096
        %v7102 = vlaneseq
        %v7103 = vshrl.u32 %v7102, 7
        %v7104 = vsub.s32 %v6446, %v7103
        %v7105 = vrot.slane %v5281, %v7104
        %v7106 = vsel %vm6451, %v7105, %v7101
        %v7107 = vlaneseq
        %v7108 = vshrl.u32 %v7107, 7
        %v7109 = vsub.s32 %v6453, %v7108
        %v7110 = vrot.slane %v5284, %v7109
        %v7111 = vsel %vm6458, %v7110, %v7106
        %v7112 = vlaneseq
        %v7113 = vshrl.u32 %v7112, 7
        %v7114 = vsub.s32 %v6460, %v7113
        %v7115 = vrot.slane %v5287, %v7114
        %v7116 = vsel %vm6465, %v7115, %v7111
        %v7117 = vlaneseq
        %v7118 = vshrl.u32 %v7117, 7
        %v7119 = vsub.s32 %v6467, %v7118
        %v7120 = vrot.slane %v5290, %v7119
        %v7121 = vsel %vm6472, %v7120, %v7116
        %v7122 = vlaneseq
        %v7123 = vshrl.u32 %v7122, 7
        %v7124 = vsub.s32 %v6474, %v7123
        %v7125 = vrot.slane %v5293, %v7124
        %v7126 = vsel %vm6479, %v7125, %v7121
        %v7127 = vlaneseq
        %v7128 = vshrl.u32 %v7127, 7
        %v7129 = vsub.s32 %v6481, %v7128
        %v7130 = vrot.slane %v5296, %v7129
        %v7131 = vsel %vm6486, %v7130, %v7126
        %v7132 = vlaneseq
        %v7133 = vshrl.u32 %v7132, 7
        %v7134 = vsub.s32 %v6488, %v7133
        %v7135 = vrot.slane %v5299, %v7134
        %v7136 = vsel %vm6493, %v7135, %v7131
        %v7137 = vlaneseq
        %v7138 = vshrl.u32 %v7137, 7
        %v7139 = vsub.s32 %v6495, %v7138
        %v7140 = vrot.slane %v5302, %v7139
        %v7141 = vsel %vm6500, %v7140, %v7136
        %v7142 = vlaneseq
        %v7143 = vshrl.u32 %v7142, 7
        %v7144 = vsub.s32 %v6502, %v7143
        %v7145 = vrot.slane %v5305, %v7144
        %v7146 = vsel %vm6507, %v7145, %v7141
        %v7147 = vlaneseq
        %v7148 = vshrl.u32 %v7147, 7
        %v7149 = vsub.s32 %v6509, %v7148
        %v7150 = vrot.slane %v5308, %v7149
        %v7151 = vsel %vm6514, %v7150, %v7146
        %v7152 = vlaneseq
        %v7153 = vshrl.u32 %v7152, 7
        %v7154 = vsub.s32 %v6516, %v7153
        %v7155 = vrot.slane %v5311, %v7154
        %v7156 = vsel %vm6521, %v7155, %v7151
        %v7157 = vlaneseq
        %v7158 = vshrl.u32 %v7157, 7
        %v7159 = vsub.s32 %v6523, %v7158
        %v7160 = vrot.slane %v5314, %v7159
        %v7161 = vsel %vm6528, %v7160, %v7156
        %v7162 = vlaneseq
        %v7163 = vshrl.u32 %v7162, 7
        %v7164 = vsub.s32 %v6420, %v7163
        %v7165 = vrot.slane %v5317, %v7164
        %v7166 = vlaneseq
        %v7167 = vshrl.u32 %v7166, 7
        %v7168 = vsub.s32 %v6425, %v7167
        %v7169 = vrot.slane %v5320, %v7168
        %v7170 = vsel %vm6430, %v7169, %v7165
        %v7171 = vlaneseq
        %v7172 = vshrl.u32 %v7171, 7
        %v7173 = vsub.s32 %v6432, %v7172
        %v7174 = vrot.slane %v5323, %v7173
        %v7175 = vsel %vm6437, %v7174, %v7170
        %v7176 = vlaneseq
        %v7177 = vshrl.u32 %v7176, 7
        %v7178 = vsub.s32 %v6439, %v7177
        %v7179 = vrot.slane %v5326, %v7178
        %v7180 = vsel %vm6444, %v7179, %v7175
        %v7181 = vlaneseq
        %v7182 = vshrl.u32 %v7181, 7
        %v7183 = vsub.s32 %v6446, %v7182
        %v7184 = vrot.slane %v5329, %v7183
        %v7185 = vsel %vm6451, %v7184, %v7180
        %v7186 = vlaneseq
        %v7187 = vshrl.u32 %v7186, 7
        %v7188 = vsub.s32 %v6453, %v7187
        %v7189 = vrot.slane %v5332, %v7188
        %v7190 = vsel %vm6458, %v7189, %v7185
        %v7191 = vlaneseq
        %v7192 = vshrl.u32 %v7191, 7
        %v7193 = vsub.s32 %v6460, %v7192
        %v7194 = vrot.slane %v5335, %v7193
        %v7195 = vsel %vm6465, %v7194, %v7190
        %v7196 = vlaneseq
        %v7197 = vshrl.u32 %v7196, 7
        %v7198 = vsub.s32 %v6467, %v7197
        %v7199 = vrot.slane %v5338, %v7198
        %v7200 = vsel %vm6472, %v7199, %v7195
        %v7201 = vlaneseq
        %v7202 = vshrl.u32 %v7201, 7
        %v7203 = vsub.s32 %v6474, %v7202
        %v7204 = vrot.slane %v5341, %v7203
        %v7205 = vsel %vm6479, %v7204, %v7200
        %v7206 = vlaneseq
        %v7207 = vshrl.u32 %v7206, 7
        %v7208 = vsub.s32 %v6481, %v7207
        %v7209 = vrot.slane %v5344, %v7208
        %v7210 = vsel %vm6486, %v7209, %v7205
        %v7211 = vlaneseq
        %v7212 = vshrl.u32 %v7211, 7
        %v7213 = vsub.s32 %v6488, %v7212
        %v7214 = vrot.slane %v5347, %v7213
        %v7215 = vsel %vm6493, %v7214, %v7210
        %v7216 = vlaneseq
        %v7217 = vshrl.u32 %v7216, 7
        %v7218 = vsub.s32 %v6495, %v7217
        %v7219 = vrot.slane %v5350, %v7218
        %v7220 = vsel %vm6500, %v7219, %v7215
        %v7221 = vlaneseq
        %v7222 = vshrl.u32 %v7221, 7
        %v7223 = vsub.s32 %v6502, %v7222
        %v7224 = vrot.slane %v5353, %v7223
        %v7225 = vsel %vm6507, %v7224, %v7220
        %v7226 = vlaneseq
        %v7227 = vshrl.u32 %v7226, 7
        %v7228 = vsub.s32 %v6509, %v7227
        %v7229 = vrot.slane %v5356, %v7228
        %v7230 = vsel %vm6514, %v7229, %v7225
        %v7231 = vlaneseq
        %v7232 = vshrl.u32 %v7231, 7
        %v7233 = vsub.s32 %v6516, %v7232
        %v7234 = vrot.slane %v5359, %v7233
        %v7235 = vsel %vm6521, %v7234, %v7230
        %v7236 = vlaneseq
        %v7237 = vshrl.u32 %v7236, 7
        %v7238 = vsub.s32 %v6523, %v7237
        %v7239 = vrot.slane %v5362, %v7238
        %v7240 = vsel %vm6528, %v7239, %v7235
        %v7241 = vlaneseq
        %v7242 = vshrl.u32 %v7241, 7
        %v7243 = vsub.s32 %v6420, %v7242
        %v7244 = vrot.slane %v5365, %v7243
        %v7245 = vlaneseq
        %v7246 = vshrl.u32 %v7245, 7
        %v7247 = vsub.s32 %v6425, %v7246
        %v7248 = vrot.slane %v5368, %v7247
        %v7249 = vsel %vm6430, %v7248, %v7244
        %v7250 = vlaneseq
        %v7251 = vshrl.u32 %v7250, 7
        %v7252 = vsub.s32 %v6432, %v7251
        %v7253 = vrot.slane %v5371, %v7252
        %v7254 = vsel %vm6437, %v7253, %v7249
        %v7255 = vlaneseq
        %v7256 = vshrl.u32 %v7255, 7
        %v7257 = vsub.s32 %v6439, %v7256
        %v7258 = vrot.slane %v5374, %v7257
        %v7259 = vsel %vm6444, %v7258, %v7254
        %v7260 = vlaneseq
        %v7261 = vshrl.u32 %v7260, 7
        %v7262 = vsub.s32 %v6446, %v7261
        %v7263 = vrot.slane %v5377, %v7262
        %v7264 = vsel %vm6451, %v7263, %v7259
        %v7265 = vlaneseq
        %v7266 = vshrl.u32 %v7265, 7
        %v7267 = vsub.s32 %v6453, %v7266
        %v7268 = vrot.slane %v5380, %v7267
        %v7269 = vsel %vm6458, %v7268, %v7264
        %v7270 = vlaneseq
        %v7271 = vshrl.u32 %v7270, 7
        %v7272 = vsub.s32 %v6460, %v7271
        %v7273 = vrot.slane %v5383, %v7272
        %v7274 = vsel %vm6465, %v7273, %v7269
        %v7275 = vlaneseq
        %v7276 = vshrl.u32 %v7275, 7
        %v7277 = vsub.s32 %v6467, %v7276
        %v7278 = vrot.slane %v5386, %v7277
        %v7279 = vsel %vm6472, %v7278, %v7274
        %v7280 = vlaneseq
        %v7281 = vshrl.u32 %v7280, 7
        %v7282 = vsub.s32 %v6474, %v7281
        %v7283 = vrot.slane %v5389, %v7282
        %v7284 = vsel %vm6479, %v7283, %v7279
        %v7285 = vlaneseq
        %v7286 = vshrl.u32 %v7285, 7
        %v7287 = vsub.s32 %v6481, %v7286
        %v7288 = vrot.slane %v5392, %v7287
        %v7289 = vsel %vm6486, %v7288, %v7284
        %v7290 = vlaneseq
        %v7291 = vshrl.u32 %v7290, 7
        %v7292 = vsub.s32 %v6488, %v7291
        %v7293 = vrot.slane %v5395, %v7292
        %v7294 = vsel %vm6493, %v7293, %v7289
        %v7295 = vlaneseq
        %v7296 = vshrl.u32 %v7295, 7
        %v7297 = vsub.s32 %v6495, %v7296
        %v7298 = vrot.slane %v5398, %v7297
        %v7299 = vsel %vm6500, %v7298, %v7294
        %v7300 = vlaneseq
        %v7301 = vshrl.u32 %v7300, 7
        %v7302 = vsub.s32 %v6502, %v7301
        %v7303 = vrot.slane %v5401, %v7302
        %v7304 = vsel %vm6507, %v7303, %v7299
        %v7305 = vlaneseq
        %v7306 = vshrl.u32 %v7305, 7
        %v7307 = vsub.s32 %v6509, %v7306
        %v7308 = vrot.slane %v5404, %v7307
        %v7309 = vsel %vm6514, %v7308, %v7304
        %v7310 = vlaneseq
        %v7311 = vshrl.u32 %v7310, 7
        %v7312 = vsub.s32 %v6516, %v7311
        %v7313 = vrot.slane %v5407, %v7312
        %v7314 = vsel %vm6521, %v7313, %v7309
        %v7315 = vlaneseq
        %v7316 = vshrl.u32 %v7315, 7
        %v7317 = vsub.s32 %v6523, %v7316
        %v7318 = vrot.slane %v5410, %v7317
        %v7319 = vsel %vm6528, %v7318, %v7314
        %v7320 = vlaneseq
        %v7321 = vshrl.u32 %v7320, 7
        %v7322 = vsub.s32 %v6420, %v7321
        %v7323 = vrot.slane %v5413, %v7322
        %v7324 = vlaneseq
        %v7325 = vshrl.u32 %v7324, 7
        %v7326 = vsub.s32 %v6425, %v7325
        %v7327 = vrot.slane %v5416, %v7326
        %v7328 = vsel %vm6430, %v7327, %v7323
        %v7329 = vlaneseq
        %v7330 = vshrl.u32 %v7329, 7
        %v7331 = vsub.s32 %v6432, %v7330
        %v7332 = vrot.slane %v5419, %v7331
        %v7333 = vsel %vm6437, %v7332, %v7328
        %v7334 = vlaneseq
        %v7335 = vshrl.u32 %v7334, 7
        %v7336 = vsub.s32 %v6439, %v7335
        %v7337 = vrot.slane %v5422, %v7336
        %v7338 = vsel %vm6444, %v7337, %v7333
        %v7339 = vlaneseq
        %v7340 = vshrl.u32 %v7339, 7
        %v7341 = vsub.s32 %v6446, %v7340
        %v7342 = vrot.slane %v5425, %v7341
        %v7343 = vsel %vm6451, %v7342, %v7338
        %v7344 = vlaneseq
        %v7345 = vshrl.u32 %v7344, 7
        %v7346 = vsub.s32 %v6453, %v7345
        %v7347 = vrot.slane %v5428, %v7346
        %v7348 = vsel %vm6458, %v7347, %v7343
        %v7349 = vlaneseq
        %v7350 = vshrl.u32 %v7349, 7
        %v7351 = vsub.s32 %v6460, %v7350
        %v7352 = vrot.slane %v5431, %v7351
        %v7353 = vsel %vm6465, %v7352, %v7348
        %v7354 = vlaneseq
        %v7355 = vshrl.u32 %v7354, 7
        %v7356 = vsub.s32 %v6467, %v7355
        %v7357 = vrot.slane %v5434, %v7356
        %v7358 = vsel %vm6472, %v7357, %v7353
        %v7359 = vlaneseq
        %v7360 = vshrl.u32 %v7359, 7
        %v7361 = vsub.s32 %v6474, %v7360
        %v7362 = vrot.slane %v5437, %v7361
        %v7363 = vsel %vm6479, %v7362, %v7358
        %v7364 = vlaneseq
        %v7365 = vshrl.u32 %v7364, 7
        %v7366 = vsub.s32 %v6481, %v7365
        %v7367 = vrot.slane %v5440, %v7366
        %v7368 = vsel %vm6486, %v7367, %v7363
        %v7369 = vlaneseq
        %v7370 = vshrl.u32 %v7369, 7
        %v7371 = vsub.s32 %v6488, %v7370
        %v7372 = vrot.slane %v5443, %v7371
        %v7373 = vsel %vm6493, %v7372, %v7368
        %v7374 = vlaneseq
        %v7375 = vshrl.u32 %v7374, 7
        %v7376 = vsub.s32 %v6495, %v7375
        %v7377 = vrot.slane %v5446, %v7376
        %v7378 = vsel %vm6500, %v7377, %v7373
        %v7379 = vlaneseq
        %v7380 = vshrl.u32 %v7379, 7
        %v7381 = vsub.s32 %v6502, %v7380
        %v7382 = vrot.slane %v5449, %v7381
        %v7383 = vsel %vm6507, %v7382, %v7378
        %v7384 = vlaneseq
        %v7385 = vshrl.u32 %v7384, 7
        %v7386 = vsub.s32 %v6509, %v7385
        %v7387 = vrot.slane %v5452, %v7386
        %v7388 = vsel %vm6514, %v7387, %v7383
        %v7389 = vlaneseq
        %v7390 = vshrl.u32 %v7389, 7
        %v7391 = vsub.s32 %v6516, %v7390
        %v7392 = vrot.slane %v5455, %v7391
        %v7393 = vsel %vm6521, %v7392, %v7388
        %v7394 = vlaneseq
        %v7395 = vshrl.u32 %v7394, 7
        %v7396 = vsub.s32 %v6523, %v7395
        %v7397 = vrot.slane %v5458, %v7396
        %v7398 = vsel %vm6528, %v7397, %v7393
        %v7399 = vlaneseq
        %v7400 = vshrl.u32 %v7399, 7
        %v7401 = vsub.s32 %v6420, %v7400
        %v7402 = vrot.slane %v5461, %v7401
        %v7403 = vlaneseq
        %v7404 = vshrl.u32 %v7403, 7
        %v7405 = vsub.s32 %v6425, %v7404
        %v7406 = vrot.slane %v5464, %v7405
        %v7407 = vsel %vm6430, %v7406, %v7402
        %v7408 = vlaneseq
        %v7409 = vshrl.u32 %v7408, 7
        %v7410 = vsub.s32 %v6432, %v7409
        %v7411 = vrot.slane %v5467, %v7410
        %v7412 = vsel %vm6437, %v7411, %v7407
        %v7413 = vlaneseq
        %v7414 = vshrl.u32 %v7413, 7
        %v7415 = vsub.s32 %v6439, %v7414
        %v7416 = vrot.slane %v5470, %v7415
        %v7417 = vsel %vm6444, %v7416, %v7412
        %v7418 = vlaneseq
        %v7419 = vshrl.u32 %v7418, 7
        %v7420 = vsub.s32 %v6446, %v7419
        %v7421 = vrot.slane %v5473, %v7420
        %v7422 = vsel %vm6451, %v7421, %v7417
        %v7423 = vlaneseq
        %v7424 = vshrl.u32 %v7423, 7
        %v7425 = vsub.s32 %v6453, %v7424
        %v7426 = vrot.slane %v5476, %v7425
        %v7427 = vsel %vm6458, %v7426, %v7422
        %v7428 = vlaneseq
        %v7429 = vshrl.u32 %v7428, 7
        %v7430 = vsub.s32 %v6460, %v7429
        %v7431 = vrot.slane %v5479, %v7430
        %v7432 = vsel %vm6465, %v7431, %v7427
        %v7433 = vlaneseq
        %v7434 = vshrl.u32 %v7433, 7
        %v7435 = vsub.s32 %v6467, %v7434
        %v7436 = vrot.slane %v5482, %v7435
        %v7437 = vsel %vm6472, %v7436, %v7432
        %v7438 = vlaneseq
        %v7439 = vshrl.u32 %v7438, 7
        %v7440 = vsub.s32 %v6474, %v7439
        %v7441 = vrot.slane %v5485, %v7440
        %v7442 = vsel %vm6479, %v7441, %v7437
        %v7443 = vlaneseq
        %v7444 = vshrl.u32 %v7443, 7
        %v7445 = vsub.s32 %v6481, %v7444
        %v7446 = vrot.slane %v5488, %v7445
        %v7447 = vsel %vm6486, %v7446, %v7442
        %v7448 = vlaneseq
        %v7449 = vshrl.u32 %v7448, 7
        %v7450 = vsub.s32 %v6488, %v7449
        %v7451 = vrot.slane %v5491, %v7450
        %v7452 = vsel %vm6493, %v7451, %v7447
        %v7453 = vlaneseq
        %v7454 = vshrl.u32 %v7453, 7
        %v7455 = vsub.s32 %v6495, %v7454
        %v7456 = vrot.slane %v5494, %v7455
        %v7457 = vsel %vm6500, %v7456, %v7452
        %v7458 = vlaneseq
        %v7459 = vshrl.u32 %v7458, 7
        %v7460 = vsub.s32 %v6502, %v7459
        %v7461 = vrot.slane %v5497, %v7460
        %v7462 = vsel %vm6507, %v7461, %v7457
        %v7463 = vlaneseq
        %v7464 = vshrl.u32 %v7463, 7
        %v7465 = vsub.s32 %v6509, %v7464
        %v7466 = vrot.slane %v5500, %v7465
        %v7467 = vsel %vm6514, %v7466, %v7462
        %v7468 = vlaneseq
        %v7469 = vshrl.u32 %v7468, 7
        %v7470 = vsub.s32 %v6516, %v7469
        %v7471 = vrot.slane %v5503, %v7470
        %v7472 = vsel %vm6521, %v7471, %v7467
        %v7473 = vlaneseq
        %v7474 = vshrl.u32 %v7473, 7
        %v7475 = vsub.s32 %v6523, %v7474
        %v7476 = vrot.slane %v5506, %v7475
        %v7477 = vsel %vm6528, %v7476, %v7472
        %v7478 = vlaneseq
        %v7479 = vshrl.u32 %v7478, 7
        %v7480 = vsub.s32 %v6420, %v7479
        %v7481 = vrot.slane %v5509, %v7480
        %v7482 = vlaneseq
        %v7483 = vshrl.u32 %v7482, 7
        %v7484 = vsub.s32 %v6425, %v7483
        %v7485 = vrot.slane %v5512, %v7484
        %v7486 = vsel %vm6430, %v7485, %v7481
        %v7487 = vlaneseq
        %v7488 = vshrl.u32 %v7487, 7
        %v7489 = vsub.s32 %v6432, %v7488
        %v7490 = vrot.slane %v5515, %v7489
        %v7491 = vsel %vm6437, %v7490, %v7486
        %v7492 = vlaneseq
        %v7493 = vshrl.u32 %v7492, 7
        %v7494 = vsub.s32 %v6439, %v7493
        %v7495 = vrot.slane %v5518, %v7494
        %v7496 = vsel %vm6444, %v7495, %v7491
        %v7497 = vlaneseq
        %v7498 = vshrl.u32 %v7497, 7
        %v7499 = vsub.s32 %v6446, %v7498
        %v7500 = vrot.slane %v5521, %v7499
        %v7501 = vsel %vm6451, %v7500, %v7496
        %v7502 = vlaneseq
        %v7503 = vshrl.u32 %v7502, 7
        %v7504 = vsub.s32 %v6453, %v7503
        %v7505 = vrot.slane %v5524, %v7504
        %v7506 = vsel %vm6458, %v7505, %v7501
        %v7507 = vlaneseq
        %v7508 = vshrl.u32 %v7507, 7
        %v7509 = vsub.s32 %v6460, %v7508
        %v7510 = vrot.slane %v5527, %v7509
        %v7511 = vsel %vm6465, %v7510, %v7506
        %v7512 = vlaneseq
        %v7513 = vshrl.u32 %v7512, 7
        %v7514 = vsub.s32 %v6467, %v7513
        %v7515 = vrot.slane %v5530, %v7514
        %v7516 = vsel %vm6472, %v7515, %v7511
        %v7517 = vlaneseq
        %v7518 = vshrl.u32 %v7517, 7
        %v7519 = vsub.s32 %v6474, %v7518
        %v7520 = vrot.slane %v5533, %v7519
        %v7521 = vsel %vm6479, %v7520, %v7516
        %v7522 = vlaneseq
        %v7523 = vshrl.u32 %v7522, 7
        %v7524 = vsub.s32 %v6481, %v7523
        %v7525 = vrot.slane %v5536, %v7524
        %v7526 = vsel %vm6486, %v7525, %v7521
        %v7527 = vlaneseq
        %v7528 = vshrl.u32 %v7527, 7
        %v7529 = vsub.s32 %v6488, %v7528
        %v7530 = vrot.slane %v5539, %v7529
        %v7531 = vsel %vm6493, %v7530, %v7526
        %v7532 = vlaneseq
        %v7533 = vshrl.u32 %v7532, 7
        %v7534 = vsub.s32 %v6495, %v7533
        %v7535 = vrot.slane %v5542, %v7534
        %v7536 = vsel %vm6500, %v7535, %v7531
        %v7537 = vlaneseq
        %v7538 = vshrl.u32 %v7537, 7
        %v7539 = vsub.s32 %v6502, %v7538
        %v7540 = vrot.slane %v5545, %v7539
        %v7541 = vsel %vm6507, %v7540, %v7536
        %v7542 = vlaneseq
        %v7543 = vshrl.u32 %v7542, 7
        %v7544 = vsub.s32 %v6509, %v7543
        %v7545 = vrot.slane %v5548, %v7544
        %v7546 = vsel %vm6514, %v7545, %v7541
        %v7547 = vlaneseq
        %v7548 = vshrl.u32 %v7547, 7
        %v7549 = vsub.s32 %v6516, %v7548
        %v7550 = vrot.slane %v5551, %v7549
        %v7551 = vsel %vm6521, %v7550, %v7546
        %v7552 = vlaneseq
        %v7553 = vshrl.u32 %v7552, 7
        %v7554 = vsub.s32 %v6523, %v7553
        %v7555 = vrot.slane %v5554, %v7554
        %v7556 = vsel %vm6528, %v7555, %v7551
        %v7557 = vlaneseq
        %v7558 = vshrl.u32 %v7557, 7
        %v7559 = vsub.s32 %v6420, %v7558
        %v7560 = vrot.slane %v5557, %v7559
        %v7561 = vlaneseq
        %v7562 = vshrl.u32 %v7561, 7
        %v7563 = vsub.s32 %v6425, %v7562
        %v7564 = vrot.slane %v5560, %v7563
        %v7565 = vsel %vm6430, %v7564, %v7560
        %v7566 = vlaneseq
        %v7567 = vshrl.u32 %v7566, 7
        %v7568 = vsub.s32 %v6432, %v7567
        %v7569 = vrot.slane %v5563, %v7568
        %v7570 = vsel %vm6437, %v7569, %v7565
        %v7571 = vlaneseq
        %v7572 = vshrl.u32 %v7571, 7
        %v7573 = vsub.s32 %v6439, %v7572
        %v7574 = vrot.slane %v5566, %v7573
        %v7575 = vsel %vm6444, %v7574, %v7570
        %v7576 = vlaneseq
        %v7577 = vshrl.u32 %v7576, 7
        %v7578 = vsub.s32 %v6446, %v7577
        %v7579 = vrot.slane %v5569, %v7578
        %v7580 = vsel %vm6451, %v7579, %v7575
        %v7581 = vlaneseq
        %v7582 = vshrl.u32 %v7581, 7
        %v7583 = vsub.s32 %v6453, %v7582
        %v7584 = vrot.slane %v5572, %v7583
        %v7585 = vsel %vm6458, %v7584, %v7580
        %v7586 = vlaneseq
        %v7587 = vshrl.u32 %v7586, 7
        %v7588 = vsub.s32 %v6460, %v7587
        %v7589 = vrot.slane %v5575, %v7588
        %v7590 = vsel %vm6465, %v7589, %v7585
        %v7591 = vlaneseq
        %v7592 = vshrl.u32 %v7591, 7
        %v7593 = vsub.s32 %v6467, %v7592
        %v7594 = vrot.slane %v5578, %v7593
        %v7595 = vsel %vm6472, %v7594, %v7590
        %v7596 = vlaneseq
        %v7597 = vshrl.u32 %v7596, 7
        %v7598 = vsub.s32 %v6474, %v7597
        %v7599 = vrot.slane %v5581, %v7598
        %v7600 = vsel %vm6479, %v7599, %v7595
        %v7601 = vlaneseq
        %v7602 = vshrl.u32 %v7601, 7
        %v7603 = vsub.s32 %v6481, %v7602
        %v7604 = vrot.slane %v5584, %v7603
        %v7605 = vsel %vm6486, %v7604, %v7600
        %v7606 = vlaneseq
        %v7607 = vshrl.u32 %v7606, 7
        %v7608 = vsub.s32 %v6488, %v7607
        %v7609 = vrot.slane %v5587, %v7608
        %v7610 = vsel %vm6493, %v7609, %v7605
        %v7611 = vlaneseq
        %v7612 = vshrl.u32 %v7611, 7
        %v7613 = vsub.s32 %v6495, %v7612
        %v7614 = vrot.slane %v5590, %v7613
        %v7615 = vsel %vm6500, %v7614, %v7610
        %v7616 = vlaneseq
        %v7617 = vshrl.u32 %v7616, 7
        %v7618 = vsub.s32 %v6502, %v7617
        %v7619 = vrot.slane %v5593, %v7618
        %v7620 = vsel %vm6507, %v7619, %v7615
        %v7621 = vlaneseq
        %v7622 = vshrl.u32 %v7621, 7
        %v7623 = vsub.s32 %v6509, %v7622
        %v7624 = vrot.slane %v5596, %v7623
        %v7625 = vsel %vm6514, %v7624, %v7620
        %v7626 = vlaneseq
        %v7627 = vshrl.u32 %v7626, 7
        %v7628 = vsub.s32 %v6516, %v7627
        %v7629 = vrot.slane %v5599, %v7628
        %v7630 = vsel %vm6521, %v7629, %v7625
        %v7631 = vlaneseq
        %v7632 = vshrl.u32 %v7631, 7
        %v7633 = vsub.s32 %v6523, %v7632
        %v7634 = vrot.slane %v5602, %v7633
        %v7635 = vsel %vm6528, %v7634, %v7630
        %v7636 = vlaneseq
        %v7637 = vshrl.u32 %v7636, 7
        %v7638 = vsub.s32 %v6420, %v7637
        %v7639 = vrot.slane %v5605, %v7638
        %v7640 = vlaneseq
        %v7641 = vshrl.u32 %v7640, 7
        %v7642 = vsub.s32 %v6425, %v7641
        %v7643 = vrot.slane %v5608, %v7642
        %v7644 = vsel %vm6430, %v7643, %v7639
        %v7645 = vlaneseq
        %v7646 = vshrl.u32 %v7645, 7
        %v7647 = vsub.s32 %v6432, %v7646
        %v7648 = vrot.slane %v5611, %v7647
        %v7649 = vsel %vm6437, %v7648, %v7644
        %v7650 = vlaneseq
        %v7651 = vshrl.u32 %v7650, 7
        %v7652 = vsub.s32 %v6439, %v7651
        %v7653 = vrot.slane %v5614, %v7652
        %v7654 = vsel %vm6444, %v7653, %v7649
        %v7655 = vlaneseq
        %v7656 = vshrl.u32 %v7655, 7
        %v7657 = vsub.s32 %v6446, %v7656
        %v7658 = vrot.slane %v5617, %v7657
        %v7659 = vsel %vm6451, %v7658, %v7654
        %v7660 = vlaneseq
        %v7661 = vshrl.u32 %v7660, 7
        %v7662 = vsub.s32 %v6453, %v7661
        %v7663 = vrot.slane %v5620, %v7662
        %v7664 = vsel %vm6458, %v7663, %v7659
        %v7665 = vlaneseq
        %v7666 = vshrl.u32 %v7665, 7
        %v7667 = vsub.s32 %v6460, %v7666
        %v7668 = vrot.slane %v5623, %v7667
        %v7669 = vsel %vm6465, %v7668, %v7664
        %v7670 = vlaneseq
        %v7671 = vshrl.u32 %v7670, 7
        %v7672 = vsub.s32 %v6467, %v7671
        %v7673 = vrot.slane %v5626, %v7672
        %v7674 = vsel %vm6472, %v7673, %v7669
        %v7675 = vlaneseq
        %v7676 = vshrl.u32 %v7675, 7
        %v7677 = vsub.s32 %v6474, %v7676
        %v7678 = vrot.slane %v5629, %v7677
        %v7679 = vsel %vm6479, %v7678, %v7674
        %v7680 = vlaneseq
        %v7681 = vshrl.u32 %v7680, 7
        %v7682 = vsub.s32 %v6481, %v7681
        %v7683 = vrot.slane %v5632, %v7682
        %v7684 = vsel %vm6486, %v7683, %v7679
        %v7685 = vlaneseq
        %v7686 = vshrl.u32 %v7685, 7
        %v7687 = vsub.s32 %v6488, %v7686
        %v7688 = vrot.slane %v5635, %v7687
        %v7689 = vsel %vm6493, %v7688, %v7684
        %v7690 = vlaneseq
        %v7691 = vshrl.u32 %v7690, 7
        %v7692 = vsub.s32 %v6495, %v7691
        %v7693 = vrot.slane %v5638, %v7692
        %v7694 = vsel %vm6500, %v7693, %v7689
        %v7695 = vlaneseq
        %v7696 = vshrl.u32 %v7695, 7
        %v7697 = vsub.s32 %v6502, %v7696
        %v7698 = vrot.slane %v5641, %v7697
        %v7699 = vsel %vm6507, %v7698, %v7694
        %v7700 = vlaneseq
        %v7701 = vshrl.u32 %v7700, 7
        %v7702 = vsub.s32 %v6509, %v7701
        %v7703 = vrot.slane %v5644, %v7702
        %v7704 = vsel %vm6514, %v7703, %v7699
        %v7705 = vlaneseq
        %v7706 = vshrl.u32 %v7705, 7
        %v7707 = vsub.s32 %v6516, %v7706
        %v7708 = vrot.slane %v5647, %v7707
        %v7709 = vsel %vm6521, %v7708, %v7704
        %v7710 = vlaneseq
        %v7711 = vshrl.u32 %v7710, 7
        %v7712 = vsub.s32 %v6523, %v7711
        %v7713 = vrot.slane %v5650, %v7712
        %v7714 = vsel %vm6528, %v7713, %v7709
        %v7715 = vlaneseq
        %v7716 = vshrl.u32 %v7715, 7
        %v7717 = vsub.s32 %v6420, %v7716
        %v7718 = vrot.slane %v5653, %v7717
        %v7719 = vlaneseq
        %v7720 = vshrl.u32 %v7719, 7
        %v7721 = vsub.s32 %v6425, %v7720
        %v7722 = vrot.slane %v5656, %v7721
        %v7723 = vsel %vm6430, %v7722, %v7718
        %v7724 = vlaneseq
        %v7725 = vshrl.u32 %v7724, 7
        %v7726 = vsub.s32 %v6432, %v7725
        %v7727 = vrot.slane %v5659, %v7726
        %v7728 = vsel %vm6437, %v7727, %v7723
        %v7729 = vlaneseq
        %v7730 = vshrl.u32 %v7729, 7
        %v7731 = vsub.s32 %v6439, %v7730
        %v7732 = vrot.slane %v5662, %v7731
        %v7733 = vsel %vm6444, %v7732, %v7728
        %v7734 = vlaneseq
        %v7735 = vshrl.u32 %v7734, 7
        %v7736 = vsub.s32 %v6446, %v7735
        %v7737 = vrot.slane %v5665, %v7736
        %v7738 = vsel %vm6451, %v7737, %v7733
        %v7739 = vlaneseq
        %v7740 = vshrl.u32 %v7739, 7
        %v7741 = vsub.s32 %v6453, %v7740
        %v7742 = vrot.slane %v5668, %v7741
        %v7743 = vsel %vm6458, %v7742, %v7738
        %v7744 = vlaneseq
        %v7745 = vshrl.u32 %v7744, 7
        %v7746 = vsub.s32 %v6460, %v7745
        %v7747 = vrot.slane %v5671, %v7746
        %v7748 = vsel %vm6465, %v7747, %v7743
        %v7749 = vlaneseq
        %v7750 = vshrl.u32 %v7749, 7
        %v7751 = vsub.s32 %v6467, %v7750
        %v7752 = vrot.slane %v5674, %v7751
        %v7753 = vsel %vm6472, %v7752, %v7748
        %v7754 = vlaneseq
        %v7755 = vshrl.u32 %v7754, 7
        %v7756 = vsub.s32 %v6474, %v7755
        %v7757 = vrot.slane %v5677, %v7756
        %v7758 = vsel %vm6479, %v7757, %v7753
        %v7759 = vlaneseq
        %v7760 = vshrl.u32 %v7759, 7
        %v7761 = vsub.s32 %v6481, %v7760
        %v7762 = vrot.slane %v5680, %v7761
        %v7763 = vsel %vm6486, %v7762, %v7758
        %v7764 = vlaneseq
        %v7765 = vshrl.u32 %v7764, 7
        %v7766 = vsub.s32 %v6488, %v7765
        %v7767 = vrot.slane %v5683, %v7766
        %v7768 = vsel %vm6493, %v7767, %v7763
        %v7769 = vlaneseq
        %v7770 = vshrl.u32 %v7769, 7
        %v7771 = vsub.s32 %v6495, %v7770
        %v7772 = vrot.slane %v5686, %v7771
        %v7773 = vsel %vm6500, %v7772, %v7768
        %v7774 = vlaneseq
        %v7775 = vshrl.u32 %v7774, 7
        %v7776 = vsub.s32 %v6502, %v7775
        %v7777 = vrot.slane %v5689, %v7776
        %v7778 = vsel %vm6507, %v7777, %v7773
        %v7779 = vlaneseq
        %v7780 = vshrl.u32 %v7779, 7
        %v7781 = vsub.s32 %v6509, %v7780
        %v7782 = vrot.slane %v5692, %v7781
        %v7783 = vsel %vm6514, %v7782, %v7778
        %v7784 = vlaneseq
        %v7785 = vshrl.u32 %v7784, 7
        %v7786 = vsub.s32 %v6516, %v7785
        %v7787 = vrot.slane %v5695, %v7786
        %v7788 = vsel %vm6521, %v7787, %v7783
        %v7789 = vlaneseq
        %v7790 = vshrl.u32 %v7789, 7
        %v7791 = vsub.s32 %v6523, %v7790
        %v7792 = vrot.slane %v5698, %v7791
        %v7793 = vsel %vm6528, %v7792, %v7788
        %v7794 = vlaneseq
        %v7795 = vshrl.u32 %v7794, 7
        %v7796 = vsub.s32 %v6420, %v7795
        %v7797 = vrot.slane %v5701, %v7796
        %v7798 = vlaneseq
        %v7799 = vshrl.u32 %v7798, 7
        %v7800 = vsub.s32 %v6425, %v7799
        %v7801 = vrot.slane %v5704, %v7800
        %v7802 = vsel %vm6430, %v7801, %v7797
        %v7803 = vlaneseq
        %v7804 = vshrl.u32 %v7803, 7
        %v7805 = vsub.s32 %v6432, %v7804
        %v7806 = vrot.slane %v5707, %v7805
        %v7807 = vsel %vm6437, %v7806, %v7802
        %v7808 = vlaneseq
        %v7809 = vshrl.u32 %v7808, 7
        %v7810 = vsub.s32 %v6439, %v7809
        %v7811 = vrot.slane %v5710, %v7810
        %v7812 = vsel %vm6444, %v7811, %v7807
        %v7813 = vlaneseq
        %v7814 = vshrl.u32 %v7813, 7
        %v7815 = vsub.s32 %v6446, %v7814
        %v7816 = vrot.slane %v5713, %v7815
        %v7817 = vsel %vm6451, %v7816, %v7812
        %v7818 = vlaneseq
        %v7819 = vshrl.u32 %v7818, 7
        %v7820 = vsub.s32 %v6453, %v7819
        %v7821 = vrot.slane %v5716, %v7820
        %v7822 = vsel %vm6458, %v7821, %v7817
        %v7823 = vlaneseq
        %v7824 = vshrl.u32 %v7823, 7
        %v7825 = vsub.s32 %v6460, %v7824
        %v7826 = vrot.slane %v5719, %v7825
        %v7827 = vsel %vm6465, %v7826, %v7822
        %v7828 = vlaneseq
        %v7829 = vshrl.u32 %v7828, 7
        %v7830 = vsub.s32 %v6467, %v7829
        %v7831 = vrot.slane %v5722, %v7830
        %v7832 = vsel %vm6472, %v7831, %v7827
        %v7833 = vlaneseq
        %v7834 = vshrl.u32 %v7833, 7
        %v7835 = vsub.s32 %v6474, %v7834
        %v7836 = vrot.slane %v5725, %v7835
        %v7837 = vsel %vm6479, %v7836, %v7832
        %v7838 = vlaneseq
        %v7839 = vshrl.u32 %v7838, 7
        %v7840 = vsub.s32 %v6481, %v7839
        %v7841 = vrot.slane %v5728, %v7840
        %v7842 = vsel %vm6486, %v7841, %v7837
        %v7843 = vlaneseq
        %v7844 = vshrl.u32 %v7843, 7
        %v7845 = vsub.s32 %v6488, %v7844
        %v7846 = vrot.slane %v5731, %v7845
        %v7847 = vsel %vm6493, %v7846, %v7842
        %v7848 = vlaneseq
        %v7849 = vshrl.u32 %v7848, 7
        %v7850 = vsub.s32 %v6495, %v7849
        %v7851 = vrot.slane %v5734, %v7850
        %v7852 = vsel %vm6500, %v7851, %v7847
        %v7853 = vlaneseq
        %v7854 = vshrl.u32 %v7853, 7
        %v7855 = vsub.s32 %v6502, %v7854
        %v7856 = vrot.slane %v5737, %v7855
        %v7857 = vsel %vm6507, %v7856, %v7852
        %v7858 = vlaneseq
        %v7859 = vshrl.u32 %v7858, 7
        %v7860 = vsub.s32 %v6509, %v7859
        %v7861 = vrot.slane %v5740, %v7860
        %v7862 = vsel %vm6514, %v7861, %v7857
        %v7863 = vlaneseq
        %v7864 = vshrl.u32 %v7863, 7
        %v7865 = vsub.s32 %v6516, %v7864
        %v7866 = vrot.slane %v5743, %v7865
        %v7867 = vsel %vm6521, %v7866, %v7862
        %v7868 = vlaneseq
        %v7869 = vshrl.u32 %v7868, 7
        %v7870 = vsub.s32 %v6523, %v7869
        %v7871 = vrot.slane %v5746, %v7870
        %v7872 = vsel %vm6528, %v7871, %v7867
        %v7873 = vlaneseq
        %v7874 = vshrl.u32 %v7873, 7
        %v7875 = vsub.s32 %v6420, %v7874
        %v7876 = vrot.slane %v5749, %v7875
        %v7877 = vlaneseq
        %v7878 = vshrl.u32 %v7877, 7
        %v7879 = vsub.s32 %v6425, %v7878
        %v7880 = vrot.slane %v5752, %v7879
        %v7881 = vsel %vm6430, %v7880, %v7876
        %v7882 = vlaneseq
        %v7883 = vshrl.u32 %v7882, 7
        %v7884 = vsub.s32 %v6432, %v7883
        %v7885 = vrot.slane %v5755, %v7884
        %v7886 = vsel %vm6437, %v7885, %v7881
        %v7887 = vlaneseq
        %v7888 = vshrl.u32 %v7887, 7
        %v7889 = vsub.s32 %v6439, %v7888
        %v7890 = vrot.slane %v5758, %v7889
        %v7891 = vsel %vm6444, %v7890, %v7886
        %v7892 = vlaneseq
        %v7893 = vshrl.u32 %v7892, 7
        %v7894 = vsub.s32 %v6446, %v7893
        %v7895 = vrot.slane %v5761, %v7894
        %v7896 = vsel %vm6451, %v7895, %v7891
        %v7897 = vlaneseq
        %v7898 = vshrl.u32 %v7897, 7
        %v7899 = vsub.s32 %v6453, %v7898
        %v7900 = vrot.slane %v5764, %v7899
        %v7901 = vsel %vm6458, %v7900, %v7896
        %v7902 = vlaneseq
        %v7903 = vshrl.u32 %v7902, 7
        %v7904 = vsub.s32 %v6460, %v7903
        %v7905 = vrot.slane %v5767, %v7904
        %v7906 = vsel %vm6465, %v7905, %v7901
        %v7907 = vlaneseq
        %v7908 = vshrl.u32 %v7907, 7
        %v7909 = vsub.s32 %v6467, %v7908
        %v7910 = vrot.slane %v5770, %v7909
        %v7911 = vsel %vm6472, %v7910, %v7906
        %v7912 = vlaneseq
        %v7913 = vshrl.u32 %v7912, 7
        %v7914 = vsub.s32 %v6474, %v7913
        %v7915 = vrot.slane %v5773, %v7914
        %v7916 = vsel %vm6479, %v7915, %v7911
        %v7917 = vlaneseq
        %v7918 = vshrl.u32 %v7917, 7
        %v7919 = vsub.s32 %v6481, %v7918
        %v7920 = vrot.slane %v5776, %v7919
        %v7921 = vsel %vm6486, %v7920, %v7916
        %v7922 = vlaneseq
        %v7923 = vshrl.u32 %v7922, 7
        %v7924 = vsub.s32 %v6488, %v7923
        %v7925 = vrot.slane %v5779, %v7924
        %v7926 = vsel %vm6493, %v7925, %v7921
        %v7927 = vlaneseq
        %v7928 = vshrl.u32 %v7927, 7
        %v7929 = vsub.s32 %v6495, %v7928
        %v7930 = vrot.slane %v5782, %v7929
        %v7931 = vsel %vm6500, %v7930, %v7926
        %v7932 = vlaneseq
        %v7933 = vshrl.u32 %v7932, 7
        %v7934 = vsub.s32 %v6502, %v7933
        %v7935 = vrot.slane %v5785, %v7934
        %v7936 = vsel %vm6507, %v7935, %v7931
        %v7937 = vlaneseq
        %v7938 = vshrl.u32 %v7937, 7
        %v7939 = vsub.s32 %v6509, %v7938
        %v7940 = vrot.slane %v5788, %v7939
        %v7941 = vsel %vm6514, %v7940, %v7936
        %v7942 = vlaneseq
        %v7943 = vshrl.u32 %v7942, 7
        %v7944 = vsub.s32 %v6516, %v7943
        %v7945 = vrot.slane %v5791, %v7944
        %v7946 = vsel %vm6521, %v7945, %v7941
        %v7947 = vlaneseq
        %v7948 = vshrl.u32 %v7947, 7
        %v7949 = vsub.s32 %v6523, %v7948
        %v7950 = vrot.slane %v5794, %v7949
        %v7951 = vsel %vm6528, %v7950, %v7946
        %v7952 = vlaneseq
        %v7953 = vshrl.u32 %v7952, 7
        %v7954 = vsub.s32 %v6420, %v7953
        %v7955 = vrot.slane %v5797, %v7954
        %v7956 = vlaneseq
        %v7957 = vshrl.u32 %v7956, 7
        %v7958 = vsub.s32 %v6425, %v7957
        %v7959 = vrot.slane %v5800, %v7958
        %v7960 = vsel %vm6430, %v7959, %v7955
        %v7961 = vlaneseq
        %v7962 = vshrl.u32 %v7961, 7
        %v7963 = vsub.s32 %v6432, %v7962
        %v7964 = vrot.slane %v5803, %v7963
        %v7965 = vsel %vm6437, %v7964, %v7960
        %v7966 = vlaneseq
        %v7967 = vshrl.u32 %v7966, 7
        %v7968 = vsub.s32 %v6439, %v7967
        %v7969 = vrot.slane %v5806, %v7968
        %v7970 = vsel %vm6444, %v7969, %v7965
        %v7971 = vlaneseq
        %v7972 = vshrl.u32 %v7971, 7
        %v7973 = vsub.s32 %v6446, %v7972
        %v7974 = vrot.slane %v5809, %v7973
        %v7975 = vsel %vm6451, %v7974, %v7970
        %v7976 = vlaneseq
        %v7977 = vshrl.u32 %v7976, 7
        %v7978 = vsub.s32 %v6453, %v7977
        %v7979 = vrot.slane %v5812, %v7978
        %v7980 = vsel %vm6458, %v7979, %v7975
        %v7981 = vlaneseq
        %v7982 = vshrl.u32 %v7981, 7
        %v7983 = vsub.s32 %v6460, %v7982
        %v7984 = vrot.slane %v5815, %v7983
        %v7985 = vsel %vm6465, %v7984, %v7980
        %v7986 = vlaneseq
        %v7987 = vshrl.u32 %v7986, 7
        %v7988 = vsub.s32 %v6467, %v7987
        %v7989 = vrot.slane %v5818, %v7988
        %v7990 = vsel %vm6472, %v7989, %v7985
        %v7991 = vlaneseq
        %v7992 = vshrl.u32 %v7991, 7
        %v7993 = vsub.s32 %v6474, %v7992
        %v7994 = vrot.slane %v5821, %v7993
        %v7995 = vsel %vm6479, %v7994, %v7990
        %v7996 = vlaneseq
        %v7997 = vshrl.u32 %v7996, 7
        %v7998 = vsub.s32 %v6481, %v7997
        %v7999 = vrot.slane %v5824, %v7998
        %v8000 = vsel %vm6486, %v7999, %v7995
        %v8001 = vlaneseq
        %v8002 = vshrl.u32 %v8001, 7
        %v8003 = vsub.s32 %v6488, %v8002
        %v8004 = vrot.slane %v5827, %v8003
        %v8005 = vsel %vm6493, %v8004, %v8000
        %v8006 = vlaneseq
        %v8007 = vshrl.u32 %v8006, 7
        %v8008 = vsub.s32 %v6495, %v8007
        %v8009 = vrot.slane %v5830, %v8008
        %v8010 = vsel %vm6500, %v8009, %v8005
        %v8011 = vlaneseq
        %v8012 = vshrl.u32 %v8011, 7
        %v8013 = vsub.s32 %v6502, %v8012
        %v8014 = vrot.slane %v5833, %v8013
        %v8015 = vsel %vm6507, %v8014, %v8010
        %v8016 = vlaneseq
        %v8017 = vshrl.u32 %v8016, 7
        %v8018 = vsub.s32 %v6509, %v8017
        %v8019 = vrot.slane %v5836, %v8018
        %v8020 = vsel %vm6514, %v8019, %v8015
        %v8021 = vlaneseq
        %v8022 = vshrl.u32 %v8021, 7
        %v8023 = vsub.s32 %v6516, %v8022
        %v8024 = vrot.slane %v5839, %v8023
        %v8025 = vsel %vm6521, %v8024, %v8020
        %v8026 = vlaneseq
        %v8027 = vshrl.u32 %v8026, 7
        %v8028 = vsub.s32 %v6523, %v8027
        %v8029 = vrot.slane %v5842, %v8028
        %v8030 = vsel %vm6528, %v8029, %v8025
        %v8031 = vlaneseq
        %v8032 = vshrl.u32 %v8031, 7
        %v8033 = vsub.s32 %v6420, %v8032
        %v8034 = vrot.slane %v5845, %v8033
        %v8035 = vlaneseq
        %v8036 = vshrl.u32 %v8035, 7
        %v8037 = vsub.s32 %v6425, %v8036
        %v8038 = vrot.slane %v5848, %v8037
        %v8039 = vsel %vm6430, %v8038, %v8034
        %v8040 = vlaneseq
        %v8041 = vshrl.u32 %v8040, 7
        %v8042 = vsub.s32 %v6432, %v8041
        %v8043 = vrot.slane %v5851, %v8042
        %v8044 = vsel %vm6437, %v8043, %v8039
        %v8045 = vlaneseq
        %v8046 = vshrl.u32 %v8045, 7
        %v8047 = vsub.s32 %v6439, %v8046
        %v8048 = vrot.slane %v5854, %v8047
        %v8049 = vsel %vm6444, %v8048, %v8044
        %v8050 = vlaneseq
        %v8051 = vshrl.u32 %v8050, 7
        %v8052 = vsub.s32 %v6446, %v8051
        %v8053 = vrot.slane %v5857, %v8052
        %v8054 = vsel %vm6451, %v8053, %v8049
        %v8055 = vlaneseq
        %v8056 = vshrl.u32 %v8055, 7
        %v8057 = vsub.s32 %v6453, %v8056
        %v8058 = vrot.slane %v5860, %v8057
        %v8059 = vsel %vm6458, %v8058, %v8054
        %v8060 = vlaneseq
        %v8061 = vshrl.u32 %v8060, 7
        %v8062 = vsub.s32 %v6460, %v8061
        %v8063 = vrot.slane %v5863, %v8062
        %v8064 = vsel %vm6465, %v8063, %v8059
        %v8065 = vlaneseq
        %v8066 = vshrl.u32 %v8065, 7
        %v8067 = vsub.s32 %v6467, %v8066
        %v8068 = vrot.slane %v5866, %v8067
        %v8069 = vsel %vm6472, %v8068, %v8064
        %v8070 = vlaneseq
        %v8071 = vshrl.u32 %v8070, 7
        %v8072 = vsub.s32 %v6474, %v8071
        %v8073 = vrot.slane %v5869, %v8072
        %v8074 = vsel %vm6479, %v8073, %v8069
        %v8075 = vlaneseq
        %v8076 = vshrl.u32 %v8075, 7
        %v8077 = vsub.s32 %v6481, %v8076
        %v8078 = vrot.slane %v5872, %v8077
        %v8079 = vsel %vm6486, %v8078, %v8074
        %v8080 = vlaneseq
        %v8081 = vshrl.u32 %v8080, 7
        %v8082 = vsub.s32 %v6488, %v8081
        %v8083 = vrot.slane %v5875, %v8082
        %v8084 = vsel %vm6493, %v8083, %v8079
        %v8085 = vlaneseq
        %v8086 = vshrl.u32 %v8085, 7
        %v8087 = vsub.s32 %v6495, %v8086
        %v8088 = vrot.slane %v5878, %v8087
        %v8089 = vsel %vm6500, %v8088, %v8084
        %v8090 = vlaneseq
        %v8091 = vshrl.u32 %v8090, 7
        %v8092 = vsub.s32 %v6502, %v8091
        %v8093 = vrot.slane %v5881, %v8092
        %v8094 = vsel %vm6507, %v8093, %v8089
        %v8095 = vlaneseq
        %v8096 = vshrl.u32 %v8095, 7
        %v8097 = vsub.s32 %v6509, %v8096
        %v8098 = vrot.slane %v5884, %v8097
        %v8099 = vsel %vm6514, %v8098, %v8094
        %v8100 = vlaneseq
        %v8101 = vshrl.u32 %v8100, 7
        %v8102 = vsub.s32 %v6516, %v8101
        %v8103 = vrot.slane %v5887, %v8102
        %v8104 = vsel %vm6521, %v8103, %v8099
        %v8105 = vlaneseq
        %v8106 = vshrl.u32 %v8105, 7
        %v8107 = vsub.s32 %v6523, %v8106
        %v8108 = vrot.slane %v5890, %v8107
        %v8109 = vsel %vm6528, %v8108, %v8104
        %v8110 = vlaneseq
        %v8111 = vshrl.u32 %v8110, 7
        %v8112 = vsub.s32 %v6420, %v8111
        %v8113 = vrot.slane %v5893, %v8112
        %v8114 = vlaneseq
        %v8115 = vshrl.u32 %v8114, 7
        %v8116 = vsub.s32 %v6425, %v8115
        %v8117 = vrot.slane %v5896, %v8116
        %v8118 = vsel %vm6430, %v8117, %v8113
        %v8119 = vlaneseq
        %v8120 = vshrl.u32 %v8119, 7
        %v8121 = vsub.s32 %v6432, %v8120
        %v8122 = vrot.slane %v5899, %v8121
        %v8123 = vsel %vm6437, %v8122, %v8118
        %v8124 = vlaneseq
        %v8125 = vshrl.u32 %v8124, 7
        %v8126 = vsub.s32 %v6439, %v8125
        %v8127 = vrot.slane %v5902, %v8126
        %v8128 = vsel %vm6444, %v8127, %v8123
        %v8129 = vlaneseq
        %v8130 = vshrl.u32 %v8129, 7
        %v8131 = vsub.s32 %v6446, %v8130
        %v8132 = vrot.slane %v5905, %v8131
        %v8133 = vsel %vm6451, %v8132, %v8128
        %v8134 = vlaneseq
        %v8135 = vshrl.u32 %v8134, 7
        %v8136 = vsub.s32 %v6453, %v8135
        %v8137 = vrot.slane %v5908, %v8136
        %v8138 = vsel %vm6458, %v8137, %v8133
        %v8139 = vlaneseq
        %v8140 = vshrl.u32 %v8139, 7
        %v8141 = vsub.s32 %v6460, %v8140
        %v8142 = vrot.slane %v5911, %v8141
        %v8143 = vsel %vm6465, %v8142, %v8138
        %v8144 = vlaneseq
        %v8145 = vshrl.u32 %v8144, 7
        %v8146 = vsub.s32 %v6467, %v8145
        %v8147 = vrot.slane %v5914, %v8146
        %v8148 = vsel %vm6472, %v8147, %v8143
        %v8149 = vlaneseq
        %v8150 = vshrl.u32 %v8149, 7
        %v8151 = vsub.s32 %v6474, %v8150
        %v8152 = vrot.slane %v5917, %v8151
        %v8153 = vsel %vm6479, %v8152, %v8148
        %v8154 = vlaneseq
        %v8155 = vshrl.u32 %v8154, 7
        %v8156 = vsub.s32 %v6481, %v8155
        %v8157 = vrot.slane %v5920, %v8156
        %v8158 = vsel %vm6486, %v8157, %v8153
        %v8159 = vlaneseq
        %v8160 = vshrl.u32 %v8159, 7
        %v8161 = vsub.s32 %v6488, %v8160
        %v8162 = vrot.slane %v5923, %v8161
        %v8163 = vsel %vm6493, %v8162, %v8158
        %v8164 = vlaneseq
        %v8165 = vshrl.u32 %v8164, 7
        %v8166 = vsub.s32 %v6495, %v8165
        %v8167 = vrot.slane %v5926, %v8166
        %v8168 = vsel %vm6500, %v8167, %v8163
        %v8169 = vlaneseq
        %v8170 = vshrl.u32 %v8169, 7
        %v8171 = vsub.s32 %v6502, %v8170
        %v8172 = vrot.slane %v5929, %v8171
        %v8173 = vsel %vm6507, %v8172, %v8168
        %v8174 = vlaneseq
        %v8175 = vshrl.u32 %v8174, 7
        %v8176 = vsub.s32 %v6509, %v8175
        %v8177 = vrot.slane %v5932, %v8176
        %v8178 = vsel %vm6514, %v8177, %v8173
        %v8179 = vlaneseq
        %v8180 = vshrl.u32 %v8179, 7
        %v8181 = vsub.s32 %v6516, %v8180
        %v8182 = vrot.slane %v5935, %v8181
        %v8183 = vsel %vm6521, %v8182, %v8178
        %v8184 = vlaneseq
        %v8185 = vshrl.u32 %v8184, 7
        %v8186 = vsub.s32 %v6523, %v8185
        %v8187 = vrot.slane %v5938, %v8186
        %v8188 = vsel %vm6528, %v8187, %v8183
        %v8189 = vlaneseq
        %v8190 = vshrl.u32 %v8189, 7
        %v8191 = vsub.s32 %v6420, %v8190
        %v8192 = vrot.slane %v5941, %v8191
        %v8193 = vlaneseq
        %v8194 = vshrl.u32 %v8193, 7
        %v8195 = vsub.s32 %v6425, %v8194
        %v8196 = vrot.slane %v5944, %v8195
        %v8197 = vsel %vm6430, %v8196, %v8192
        %v8198 = vlaneseq
        %v8199 = vshrl.u32 %v8198, 7
        %v8200 = vsub.s32 %v6432, %v8199
        %v8201 = vrot.slane %v5947, %v8200
        %v8202 = vsel %vm6437, %v8201, %v8197
        %v8203 = vlaneseq
        %v8204 = vshrl.u32 %v8203, 7
        %v8205 = vsub.s32 %v6439, %v8204
        %v8206 = vrot.slane %v5950, %v8205
        %v8207 = vsel %vm6444, %v8206, %v8202
        %v8208 = vlaneseq
        %v8209 = vshrl.u32 %v8208, 7
        %v8210 = vsub.s32 %v6446, %v8209
        %v8211 = vrot.slane %v5953, %v8210
        %v8212 = vsel %vm6451, %v8211, %v8207
        %v8213 = vlaneseq
        %v8214 = vshrl.u32 %v8213, 7
        %v8215 = vsub.s32 %v6453, %v8214
        %v8216 = vrot.slane %v5956, %v8215
        %v8217 = vsel %vm6458, %v8216, %v8212
        %v8218 = vlaneseq
        %v8219 = vshrl.u32 %v8218, 7
        %v8220 = vsub.s32 %v6460, %v8219
        %v8221 = vrot.slane %v5959, %v8220
        %v8222 = vsel %vm6465, %v8221, %v8217
        %v8223 = vlaneseq
        %v8224 = vshrl.u32 %v8223, 7
        %v8225 = vsub.s32 %v6467, %v8224
        %v8226 = vrot.slane %v5962, %v8225
        %v8227 = vsel %vm6472, %v8226, %v8222
        %v8228 = vlaneseq
        %v8229 = vshrl.u32 %v8228, 7
        %v8230 = vsub.s32 %v6474, %v8229
        %v8231 = vrot.slane %v5965, %v8230
        %v8232 = vsel %vm6479, %v8231, %v8227
        %v8233 = vlaneseq
        %v8234 = vshrl.u32 %v8233, 7
        %v8235 = vsub.s32 %v6481, %v8234
        %v8236 = vrot.slane %v5968, %v8235
        %v8237 = vsel %vm6486, %v8236, %v8232
        %v8238 = vlaneseq
        %v8239 = vshrl.u32 %v8238, 7
        %v8240 = vsub.s32 %v6488, %v8239
        %v8241 = vrot.slane %v5971, %v8240
        %v8242 = vsel %vm6493, %v8241, %v8237
        %v8243 = vlaneseq
        %v8244 = vshrl.u32 %v8243, 7
        %v8245 = vsub.s32 %v6495, %v8244
        %v8246 = vrot.slane %v5974, %v8245
        %v8247 = vsel %vm6500, %v8246, %v8242
        %v8248 = vlaneseq
        %v8249 = vshrl.u32 %v8248, 7
        %v8250 = vsub.s32 %v6502, %v8249
        %v8251 = vrot.slane %v5977, %v8250
        %v8252 = vsel %vm6507, %v8251, %v8247
        %v8253 = vlaneseq
        %v8254 = vshrl.u32 %v8253, 7
        %v8255 = vsub.s32 %v6509, %v8254
        %v8256 = vrot.slane %v5980, %v8255
        %v8257 = vsel %vm6514, %v8256, %v8252
        %v8258 = vlaneseq
        %v8259 = vshrl.u32 %v8258, 7
        %v8260 = vsub.s32 %v6516, %v8259
        %v8261 = vrot.slane %v5983, %v8260
        %v8262 = vsel %vm6521, %v8261, %v8257
        %v8263 = vlaneseq
        %v8264 = vshrl.u32 %v8263, 7
        %v8265 = vsub.s32 %v6523, %v8264
        %v8266 = vrot.slane %v5986, %v8265
        %v8267 = vsel %vm6528, %v8266, %v8262
        %v8268 = vlaneseq
        %v8269 = vshrl.u32 %v8268, 7
        %v8270 = vsub.s32 %v6420, %v8269
        %v8271 = vrot.slane %v5989, %v8270
        %v8272 = vlaneseq
        %v8273 = vshrl.u32 %v8272, 7
        %v8274 = vsub.s32 %v6425, %v8273
        %v8275 = vrot.slane %v5992, %v8274
        %v8276 = vsel %vm6430, %v8275, %v8271
        %v8277 = vlaneseq
        %v8278 = vshrl.u32 %v8277, 7
        %v8279 = vsub.s32 %v6432, %v8278
        %v8280 = vrot.slane %v5995, %v8279
        %v8281 = vsel %vm6437, %v8280, %v8276
        %v8282 = vlaneseq
        %v8283 = vshrl.u32 %v8282, 7
        %v8284 = vsub.s32 %v6439, %v8283
        %v8285 = vrot.slane %v5998, %v8284
        %v8286 = vsel %vm6444, %v8285, %v8281
        %v8287 = vlaneseq
        %v8288 = vshrl.u32 %v8287, 7
        %v8289 = vsub.s32 %v6446, %v8288
        %v8290 = vrot.slane %v6001, %v8289
        %v8291 = vsel %vm6451, %v8290, %v8286
        %v8292 = vlaneseq
        %v8293 = vshrl.u32 %v8292, 7
        %v8294 = vsub.s32 %v6453, %v8293
        %v8295 = vrot.slane %v6004, %v8294
        %v8296 = vsel %vm6458, %v8295, %v8291
        %v8297 = vlaneseq
        %v8298 = vshrl.u32 %v8297, 7
        %v8299 = vsub.s32 %v6460, %v8298
        %v8300 = vrot.slane %v6007, %v8299
        %v8301 = vsel %vm6465, %v8300, %v8296
        %v8302 = vlaneseq
        %v8303 = vshrl.u32 %v8302, 7
        %v8304 = vsub.s32 %v6467, %v8303
        %v8305 = vrot.slane %v6010, %v8304
        %v8306 = vsel %vm6472, %v8305, %v8301
        %v8307 = vlaneseq
        %v8308 = vshrl.u32 %v8307, 7
        %v8309 = vsub.s32 %v6474, %v8308
        %v8310 = vrot.slane %v6013, %v8309
        %v8311 = vsel %vm6479, %v8310, %v8306
        %v8312 = vlaneseq
        %v8313 = vshrl.u32 %v8312, 7
        %v8314 = vsub.s32 %v6481, %v8313
        %v8315 = vrot.slane %v6016, %v8314
        %v8316 = vsel %vm6486, %v8315, %v8311
        %v8317 = vlaneseq
        %v8318 = vshrl.u32 %v8317, 7
        %v8319 = vsub.s32 %v6488, %v8318
        %v8320 = vrot.slane %v6019, %v8319
        %v8321 = vsel %vm6493, %v8320, %v8316
        %v8322 = vlaneseq
        %v8323 = vshrl.u32 %v8322, 7
        %v8324 = vsub.s32 %v6495, %v8323
        %v8325 = vrot.slane %v6022, %v8324
        %v8326 = vsel %vm6500, %v8325, %v8321
        %v8327 = vlaneseq
        %v8328 = vshrl.u32 %v8327, 7
        %v8329 = vsub.s32 %v6502, %v8328
        %v8330 = vrot.slane %v6025, %v8329
        %v8331 = vsel %vm6507, %v8330, %v8326
        %v8332 = vlaneseq
        %v8333 = vshrl.u32 %v8332, 7
        %v8334 = vsub.s32 %v6509, %v8333
        %v8335 = vrot.slane %v6028, %v8334
        %v8336 = vsel %vm6514, %v8335, %v8331
        %v8337 = vlaneseq
        %v8338 = vshrl.u32 %v8337, 7
        %v8339 = vsub.s32 %v6516, %v8338
        %v8340 = vrot.slane %v6031, %v8339
        %v8341 = vsel %vm6521, %v8340, %v8336
        %v8342 = vlaneseq
        %v8343 = vshrl.u32 %v8342, 7
        %v8344 = vsub.s32 %v6523, %v8343
        %v8345 = vrot.slane %v6034, %v8344
        %v8346 = vsel %vm6528, %v8345, %v8341
        %v8347 = vlaneseq
        %v8348 = vshrl.u32 %v8347, 7
        %v8349 = vsub.s32 %v6420, %v8348
        %v8350 = vrot.slane %v6037, %v8349
        %v8351 = vlaneseq
        %v8352 = vshrl.u32 %v8351, 7
        %v8353 = vsub.s32 %v6425, %v8352
        %v8354 = vrot.slane %v6040, %v8353
        %v8355 = vsel %vm6430, %v8354, %v8350
        %v8356 = vlaneseq
        %v8357 = vshrl.u32 %v8356, 7
        %v8358 = vsub.s32 %v6432, %v8357
        %v8359 = vrot.slane %v6043, %v8358
        %v8360 = vsel %vm6437, %v8359, %v8355
        %v8361 = vlaneseq
        %v8362 = vshrl.u32 %v8361, 7
        %v8363 = vsub.s32 %v6439, %v8362
        %v8364 = vrot.slane %v6046, %v8363
        %v8365 = vsel %vm6444, %v8364, %v8360
        %v8366 = vlaneseq
        %v8367 = vshrl.u32 %v8366, 7
        %v8368 = vsub.s32 %v6446, %v8367
        %v8369 = vrot.slane %v6049, %v8368
        %v8370 = vsel %vm6451, %v8369, %v8365
        %v8371 = vlaneseq
        %v8372 = vshrl.u32 %v8371, 7
        %v8373 = vsub.s32 %v6453, %v8372
        %v8374 = vrot.slane %v6052, %v8373
        %v8375 = vsel %vm6458, %v8374, %v8370
        %v8376 = vlaneseq
        %v8377 = vshrl.u32 %v8376, 7
        %v8378 = vsub.s32 %v6460, %v8377
        %v8379 = vrot.slane %v6055, %v8378
        %v8380 = vsel %vm6465, %v8379, %v8375
        %v8381 = vlaneseq
        %v8382 = vshrl.u32 %v8381, 7
        %v8383 = vsub.s32 %v6467, %v8382
        %v8384 = vrot.slane %v6058, %v8383
        %v8385 = vsel %vm6472, %v8384, %v8380
        %v8386 = vlaneseq
        %v8387 = vshrl.u32 %v8386, 7
        %v8388 = vsub.s32 %v6474, %v8387
        %v8389 = vrot.slane %v6061, %v8388
        %v8390 = vsel %vm6479, %v8389, %v8385
        %v8391 = vlaneseq
        %v8392 = vshrl.u32 %v8391, 7
        %v8393 = vsub.s32 %v6481, %v8392
        %v8394 = vrot.slane %v6064, %v8393
        %v8395 = vsel %vm6486, %v8394, %v8390
        %v8396 = vlaneseq
        %v8397 = vshrl.u32 %v8396, 7
        %v8398 = vsub.s32 %v6488, %v8397
        %v8399 = vrot.slane %v6067, %v8398
        %v8400 = vsel %vm6493, %v8399, %v8395
        %v8401 = vlaneseq
        %v8402 = vshrl.u32 %v8401, 7
        %v8403 = vsub.s32 %v6495, %v8402
        %v8404 = vrot.slane %v6070, %v8403
        %v8405 = vsel %vm6500, %v8404, %v8400
        %v8406 = vlaneseq
        %v8407 = vshrl.u32 %v8406, 7
        %v8408 = vsub.s32 %v6502, %v8407
        %v8409 = vrot.slane %v6073, %v8408
        %v8410 = vsel %vm6507, %v8409, %v8405
        %v8411 = vlaneseq
        %v8412 = vshrl.u32 %v8411, 7
        %v8413 = vsub.s32 %v6509, %v8412
        %v8414 = vrot.slane %v6076, %v8413
        %v8415 = vsel %vm6514, %v8414, %v8410
        %v8416 = vlaneseq
        %v8417 = vshrl.u32 %v8416, 7
        %v8418 = vsub.s32 %v6516, %v8417
        %v8419 = vrot.slane %v6079, %v8418
        %v8420 = vsel %vm6521, %v8419, %v8415
        %v8421 = vlaneseq
        %v8422 = vshrl.u32 %v8421, 7
        %v8423 = vsub.s32 %v6523, %v8422
        %v8424 = vrot.slane %v6082, %v8423
        %v8425 = vsel %vm6528, %v8424, %v8420
        %v8426 = vlaneseq
        %v8427 = vshrl.u32 %v8426, 7
        %v8428 = vsub.s32 %v6420, %v8427
        %v8429 = vrot.slane %v6085, %v8428
        %v8430 = vlaneseq
        %v8431 = vshrl.u32 %v8430, 7
        %v8432 = vsub.s32 %v6425, %v8431
        %v8433 = vrot.slane %v6088, %v8432
        %v8434 = vsel %vm6430, %v8433, %v8429
        %v8435 = vlaneseq
        %v8436 = vshrl.u32 %v8435, 7
        %v8437 = vsub.s32 %v6432, %v8436
        %v8438 = vrot.slane %v6091, %v8437
        %v8439 = vsel %vm6437, %v8438, %v8434
        %v8440 = vlaneseq
        %v8441 = vshrl.u32 %v8440, 7
        %v8442 = vsub.s32 %v6439, %v8441
        %v8443 = vrot.slane %v6094, %v8442
        %v8444 = vsel %vm6444, %v8443, %v8439
        %v8445 = vlaneseq
        %v8446 = vshrl.u32 %v8445, 7
        %v8447 = vsub.s32 %v6446, %v8446
        %v8448 = vrot.slane %v6097, %v8447
        %v8449 = vsel %vm6451, %v8448, %v8444
        %v8450 = vlaneseq
        %v8451 = vshrl.u32 %v8450, 7
        %v8452 = vsub.s32 %v6453, %v8451
        %v8453 = vrot.slane %v6100, %v8452
        %v8454 = vsel %vm6458, %v8453, %v8449
        %v8455 = vlaneseq
        %v8456 = vshrl.u32 %v8455, 7
        %v8457 = vsub.s32 %v6460, %v8456
        %v8458 = vrot.slane %v6103, %v8457
        %v8459 = vsel %vm6465, %v8458, %v8454
        %v8460 = vlaneseq
        %v8461 = vshrl.u32 %v8460, 7
        %v8462 = vsub.s32 %v6467, %v8461
        %v8463 = vrot.slane %v6106, %v8462
        %v8464 = vsel %vm6472, %v8463, %v8459
        %v8465 = vlaneseq
        %v8466 = vshrl.u32 %v8465, 7
        %v8467 = vsub.s32 %v6474, %v8466
        %v8468 = vrot.slane %v6109, %v8467
        %v8469 = vsel %vm6479, %v8468, %v8464
        %v8470 = vlaneseq
        %v8471 = vshrl.u32 %v8470, 7
        %v8472 = vsub.s32 %v6481, %v8471
        %v8473 = vrot.slane %v6112, %v8472
        %v8474 = vsel %vm6486, %v8473, %v8469
        %v8475 = vlaneseq
        %v8476 = vshrl.u32 %v8475, 7
        %v8477 = vsub.s32 %v6488, %v8476
        %v8478 = vrot.slane %v6115, %v8477
        %v8479 = vsel %vm6493, %v8478, %v8474
        %v8480 = vlaneseq
        %v8481 = vshrl.u32 %v8480, 7
        %v8482 = vsub.s32 %v6495, %v8481
        %v8483 = vrot.slane %v6118, %v8482
        %v8484 = vsel %vm6500, %v8483, %v8479
        %v8485 = vlaneseq
        %v8486 = vshrl.u32 %v8485, 7
        %v8487 = vsub.s32 %v6502, %v8486
        %v8488 = vrot.slane %v6121, %v8487
        %v8489 = vsel %vm6507, %v8488, %v8484
        %v8490 = vlaneseq
        %v8491 = vshrl.u32 %v8490, 7
        %v8492 = vsub.s32 %v6509, %v8491
        %v8493 = vrot.slane %v6124, %v8492
        %v8494 = vsel %vm6514, %v8493, %v8489
        %v8495 = vlaneseq
        %v8496 = vshrl.u32 %v8495, 7
        %v8497 = vsub.s32 %v6516, %v8496
        %v8498 = vrot.slane %v6127, %v8497
        %v8499 = vsel %vm6521, %v8498, %v8494
        %v8500 = vlaneseq
        %v8501 = vshrl.u32 %v8500, 7
        %v8502 = vsub.s32 %v6523, %v8501
        %v8503 = vrot.slane %v6130, %v8502
        %v8504 = vsel %vm6528, %v8503, %v8499
        %v8505 = vlaneseq
        %v8506 = vshrl.u32 %v8505, 7
        %v8507 = vsub.s32 %v6420, %v8506
        %v8508 = vrot.slane %v6133, %v8507
        %v8509 = vlaneseq
        %v8510 = vshrl.u32 %v8509, 7
        %v8511 = vsub.s32 %v6425, %v8510
        %v8512 = vrot.slane %v6136, %v8511
        %v8513 = vsel %vm6430, %v8512, %v8508
        %v8514 = vlaneseq
        %v8515 = vshrl.u32 %v8514, 7
        %v8516 = vsub.s32 %v6432, %v8515
        %v8517 = vrot.slane %v6139, %v8516
        %v8518 = vsel %vm6437, %v8517, %v8513
        %v8519 = vlaneseq
        %v8520 = vshrl.u32 %v8519, 7
        %v8521 = vsub.s32 %v6439, %v8520
        %v8522 = vrot.slane %v6142, %v8521
        %v8523 = vsel %vm6444, %v8522, %v8518
        %v8524 = vlaneseq
        %v8525 = vshrl.u32 %v8524, 7
        %v8526 = vsub.s32 %v6446, %v8525
        %v8527 = vrot.slane %v6145, %v8526
        %v8528 = vsel %vm6451, %v8527, %v8523
        %v8529 = vlaneseq
        %v8530 = vshrl.u32 %v8529, 7
        %v8531 = vsub.s32 %v6453, %v8530
        %v8532 = vrot.slane %v6148, %v8531
        %v8533 = vsel %vm6458, %v8532, %v8528
        %v8534 = vlaneseq
        %v8535 = vshrl.u32 %v8534, 7
        %v8536 = vsub.s32 %v6460, %v8535
        %v8537 = vrot.slane %v6151, %v8536
        %v8538 = vsel %vm6465, %v8537, %v8533
        %v8539 = vlaneseq
        %v8540 = vshrl.u32 %v8539, 7
        %v8541 = vsub.s32 %v6467, %v8540
        %v8542 = vrot.slane %v6154, %v8541
        %v8543 = vsel %vm6472, %v8542, %v8538
        %v8544 = vlaneseq
        %v8545 = vshrl.u32 %v8544, 7
        %v8546 = vsub.s32 %v6474, %v8545
        %v8547 = vrot.slane %v6157, %v8546
        %v8548 = vsel %vm6479, %v8547, %v8543
        %v8549 = vlaneseq
        %v8550 = vshrl.u32 %v8549, 7
        %v8551 = vsub.s32 %v6481, %v8550
        %v8552 = vrot.slane %v6160, %v8551
        %v8553 = vsel %vm6486, %v8552, %v8548
        %v8554 = vlaneseq
        %v8555 = vshrl.u32 %v8554, 7
        %v8556 = vsub.s32 %v6488, %v8555
        %v8557 = vrot.slane %v6163, %v8556
        %v8558 = vsel %vm6493, %v8557, %v8553
        %v8559 = vlaneseq
        %v8560 = vshrl.u32 %v8559, 7
        %v8561 = vsub.s32 %v6495, %v8560
        %v8562 = vrot.slane %v6166, %v8561
        %v8563 = vsel %vm6500, %v8562, %v8558
        %v8564 = vlaneseq
        %v8565 = vshrl.u32 %v8564, 7
        %v8566 = vsub.s32 %v6502, %v8565
        %v8567 = vrot.slane %v6169, %v8566
        %v8568 = vsel %vm6507, %v8567, %v8563
        %v8569 = vlaneseq
        %v8570 = vshrl.u32 %v8569, 7
        %v8571 = vsub.s32 %v6509, %v8570
        %v8572 = vrot.slane %v6172, %v8571
        %v8573 = vsel %vm6514, %v8572, %v8568
        %v8574 = vlaneseq
        %v8575 = vshrl.u32 %v8574, 7
        %v8576 = vsub.s32 %v6516, %v8575
        %v8577 = vrot.slane %v6175, %v8576
        %v8578 = vsel %vm6521, %v8577, %v8573
        %v8579 = vlaneseq
        %v8580 = vshrl.u32 %v8579, 7
        %v8581 = vsub.s32 %v6523, %v8580
        %v8582 = vrot.slane %v6178, %v8581
        %v8583 = vsel %vm6528, %v8582, %v8578
        %v8584 = vlaneseq
        %v8585 = vshrl.u32 %v8584, 7
        %v8586 = vsub.s32 %v6420, %v8585
        %v8587 = vrot.slane %v6181, %v8586
        %v8588 = vlaneseq
        %v8589 = vshrl.u32 %v8588, 7
        %v8590 = vsub.s32 %v6425, %v8589
        %v8591 = vrot.slane %v6184, %v8590
        %v8592 = vsel %vm6430, %v8591, %v8587
        %v8593 = vlaneseq
        %v8594 = vshrl.u32 %v8593, 7
        %v8595 = vsub.s32 %v6432, %v8594
        %v8596 = vrot.slane %v6187, %v8595
        %v8597 = vsel %vm6437, %v8596, %v8592
        %v8598 = vlaneseq
        %v8599 = vshrl.u32 %v8598, 7
        %v8600 = vsub.s32 %v6439, %v8599
        %v8601 = vrot.slane %v6190, %v8600
        %v8602 = vsel %vm6444, %v8601, %v8597
        %v8603 = vlaneseq
        %v8604 = vshrl.u32 %v8603, 7
        %v8605 = vsub.s32 %v6446, %v8604
        %v8606 = vrot.slane %v6193, %v8605
        %v8607 = vsel %vm6451, %v8606, %v8602
        %v8608 = vlaneseq
        %v8609 = vshrl.u32 %v8608, 7
        %v8610 = vsub.s32 %v6453, %v8609
        %v8611 = vrot.slane %v6196, %v8610
        %v8612 = vsel %vm6458, %v8611, %v8607
        %v8613 = vlaneseq
        %v8614 = vshrl.u32 %v8613, 7
        %v8615 = vsub.s32 %v6460, %v8614
        %v8616 = vrot.slane %v6199, %v8615
        %v8617 = vsel %vm6465, %v8616, %v8612
        %v8618 = vlaneseq
        %v8619 = vshrl.u32 %v8618, 7
        %v8620 = vsub.s32 %v6467, %v8619
        %v8621 = vrot.slane %v6202, %v8620
        %v8622 = vsel %vm6472, %v8621, %v8617
        %v8623 = vlaneseq
        %v8624 = vshrl.u32 %v8623, 7
        %v8625 = vsub.s32 %v6474, %v8624
        %v8626 = vrot.slane %v6205, %v8625
        %v8627 = vsel %vm6479, %v8626, %v8622
        %v8628 = vlaneseq
        %v8629 = vshrl.u32 %v8628, 7
        %v8630 = vsub.s32 %v6481, %v8629
        %v8631 = vrot.slane %v6208, %v8630
        %v8632 = vsel %vm6486, %v8631, %v8627
        %v8633 = vlaneseq
        %v8634 = vshrl.u32 %v8633, 7
        %v8635 = vsub.s32 %v6488, %v8634
        %v8636 = vrot.slane %v6211, %v8635
        %v8637 = vsel %vm6493, %v8636, %v8632
        %v8638 = vlaneseq
        %v8639 = vshrl.u32 %v8638, 7
        %v8640 = vsub.s32 %v6495, %v8639
        %v8641 = vrot.slane %v6214, %v8640
        %v8642 = vsel %vm6500, %v8641, %v8637
        %v8643 = vlaneseq
        %v8644 = vshrl.u32 %v8643, 7
        %v8645 = vsub.s32 %v6502, %v8644
        %v8646 = vrot.slane %v6217, %v8645
        %v8647 = vsel %vm6507, %v8646, %v8642
        %v8648 = vlaneseq
        %v8649 = vshrl.u32 %v8648, 7
        %v8650 = vsub.s32 %v6509, %v8649
        %v8651 = vrot.slane %v6220, %v8650
        %v8652 = vsel %vm6514, %v8651, %v8647
        %v8653 = vlaneseq
        %v8654 = vshrl.u32 %v8653, 7
        %v8655 = vsub.s32 %v6516, %v8654
        %v8656 = vrot.slane %v6223, %v8655
        %v8657 = vsel %vm6521, %v8656, %v8652
        %v8658 = vlaneseq
        %v8659 = vshrl.u32 %v8658, 7
        %v8660 = vsub.s32 %v6523, %v8659
        %v8661 = vrot.slane %v6226, %v8660
        %v8662 = vsel %vm6528, %v8661, %v8657
        %v8663 = vlaneseq
        %v8664 = vshrl.u32 %v8663, 7
        %v8665 = vsub.s32 %v6420, %v8664
        %v8666 = vrot.slane %v6229, %v8665
        %v8667 = vlaneseq
        %v8668 = vshrl.u32 %v8667, 7
        %v8669 = vsub.s32 %v6425, %v8668
        %v8670 = vrot.slane %v6232, %v8669
        %v8671 = vsel %vm6430, %v8670, %v8666
        %v8672 = vlaneseq
        %v8673 = vshrl.u32 %v8672, 7
        %v8674 = vsub.s32 %v6432, %v8673
        %v8675 = vrot.slane %v6235, %v8674
        %v8676 = vsel %vm6437, %v8675, %v8671
        %v8677 = vlaneseq
        %v8678 = vshrl.u32 %v8677, 7
        %v8679 = vsub.s32 %v6439, %v8678
        %v8680 = vrot.slane %v6238, %v8679
        %v8681 = vsel %vm6444, %v8680, %v8676
        %v8682 = vlaneseq
        %v8683 = vshrl.u32 %v8682, 7
        %v8684 = vsub.s32 %v6446, %v8683
        %v8685 = vrot.slane %v6241, %v8684
        %v8686 = vsel %vm6451, %v8685, %v8681
        %v8687 = vlaneseq
        %v8688 = vshrl.u32 %v8687, 7
        %v8689 = vsub.s32 %v6453, %v8688
        %v8690 = vrot.slane %v6244, %v8689
        %v8691 = vsel %vm6458, %v8690, %v8686
        %v8692 = vlaneseq
        %v8693 = vshrl.u32 %v8692, 7
        %v8694 = vsub.s32 %v6460, %v8693
        %v8695 = vrot.slane %v6247, %v8694
        %v8696 = vsel %vm6465, %v8695, %v8691
        %v8697 = vlaneseq
        %v8698 = vshrl.u32 %v8697, 7
        %v8699 = vsub.s32 %v6467, %v8698
        %v8700 = vrot.slane %v6250, %v8699
        %v8701 = vsel %vm6472, %v8700, %v8696
        %v8702 = vlaneseq
        %v8703 = vshrl.u32 %v8702, 7
        %v8704 = vsub.s32 %v6474, %v8703
        %v8705 = vrot.slane %v6253, %v8704
        %v8706 = vsel %vm6479, %v8705, %v8701
        %v8707 = vlaneseq
        %v8708 = vshrl.u32 %v8707, 7
        %v8709 = vsub.s32 %v6481, %v8708
        %v8710 = vrot.slane %v6256, %v8709
        %v8711 = vsel %vm6486, %v8710, %v8706
        %v8712 = vlaneseq
        %v8713 = vshrl.u32 %v8712, 7
        %v8714 = vsub.s32 %v6488, %v8713
        %v8715 = vrot.slane %v6259, %v8714
        %v8716 = vsel %vm6493, %v8715, %v8711
        %v8717 = vlaneseq
        %v8718 = vshrl.u32 %v8717, 7
        %v8719 = vsub.s32 %v6495, %v8718
        %v8720 = vrot.slane %v6262, %v8719
        %v8721 = vsel %vm6500, %v8720, %v8716
        %v8722 = vlaneseq
        %v8723 = vshrl.u32 %v8722, 7
        %v8724 = vsub.s32 %v6502, %v8723
        %v8725 = vrot.slane %v6265, %v8724
        %v8726 = vsel %vm6507, %v8725, %v8721
        %v8727 = vlaneseq
        %v8728 = vshrl.u32 %v8727, 7
        %v8729 = vsub.s32 %v6509, %v8728
        %v8730 = vrot.slane %v6268, %v8729
        %v8731 = vsel %vm6514, %v8730, %v8726
        %v8732 = vlaneseq
        %v8733 = vshrl.u32 %v8732, 7
        %v8734 = vsub.s32 %v6516, %v8733
        %v8735 = vrot.slane %v6271, %v8734
        %v8736 = vsel %vm6521, %v8735, %v8731
        %v8737 = vlaneseq
        %v8738 = vshrl.u32 %v8737, 7
        %v8739 = vsub.s32 %v6523, %v8738
        %v8740 = vrot.slane %v6274, %v8739
        %v8741 = vsel %vm6528, %v8740, %v8736
        %v8742 = vlaneseq
        %v8743 = vshrl.u32 %v8742, 7
        %v8744 = vsub.s32 %v6420, %v8743
        %v8745 = vrot.slane %v6277, %v8744
        %v8746 = vlaneseq
        %v8747 = vshrl.u32 %v8746, 7
        %v8748 = vsub.s32 %v6425, %v8747
        %v8749 = vrot.slane %v6280, %v8748
        %v8750 = vsel %vm6430, %v8749, %v8745
        %v8751 = vlaneseq
        %v8752 = vshrl.u32 %v8751, 7
        %v8753 = vsub.s32 %v6432, %v8752
        %v8754 = vrot.slane %v6283, %v8753
        %v8755 = vsel %vm6437, %v8754, %v8750
        %v8756 = vlaneseq
        %v8757 = vshrl.u32 %v8756, 7
        %v8758 = vsub.s32 %v6439, %v8757
        %v8759 = vrot.slane %v6286, %v8758
        %v8760 = vsel %vm6444, %v8759, %v8755
        %v8761 = vlaneseq
        %v8762 = vshrl.u32 %v8761, 7
        %v8763 = vsub.s32 %v6446, %v8762
        %v8764 = vrot.slane %v6289, %v8763
        %v8765 = vsel %vm6451, %v8764, %v8760
        %v8766 = vlaneseq
        %v8767 = vshrl.u32 %v8766, 7
        %v8768 = vsub.s32 %v6453, %v8767
        %v8769 = vrot.slane %v6292, %v8768
        %v8770 = vsel %vm6458, %v8769, %v8765
        %v8771 = vlaneseq
        %v8772 = vshrl.u32 %v8771, 7
        %v8773 = vsub.s32 %v6460, %v8772
        %v8774 = vrot.slane %v6295, %v8773
        %v8775 = vsel %vm6465, %v8774, %v8770
        %v8776 = vlaneseq
        %v8777 = vshrl.u32 %v8776, 7
        %v8778 = vsub.s32 %v6467, %v8777
        %v8779 = vrot.slane %v6298, %v8778
        %v8780 = vsel %vm6472, %v8779, %v8775
        %v8781 = vlaneseq
        %v8782 = vshrl.u32 %v8781, 7
        %v8783 = vsub.s32 %v6474, %v8782
        %v8784 = vrot.slane %v6301, %v8783
        %v8785 = vsel %vm6479, %v8784, %v8780
        %v8786 = vlaneseq
        %v8787 = vshrl.u32 %v8786, 7
        %v8788 = vsub.s32 %v6481, %v8787
        %v8789 = vrot.slane %v6304, %v8788
        %v8790 = vsel %vm6486, %v8789, %v8785
        %v8791 = vlaneseq
        %v8792 = vshrl.u32 %v8791, 7
        %v8793 = vsub.s32 %v6488, %v8792
        %v8794 = vrot.slane %v6307, %v8793
        %v8795 = vsel %vm6493, %v8794, %v8790
        %v8796 = vlaneseq
        %v8797 = vshrl.u32 %v8796, 7
        %v8798 = vsub.s32 %v6495, %v8797
        %v8799 = vrot.slane %v6310, %v8798
        %v8800 = vsel %vm6500, %v8799, %v8795
        %v8801 = vlaneseq
        %v8802 = vshrl.u32 %v8801, 7
        %v8803 = vsub.s32 %v6502, %v8802
        %v8804 = vrot.slane %v6313, %v8803
        %v8805 = vsel %vm6507, %v8804, %v8800
        %v8806 = vlaneseq
        %v8807 = vshrl.u32 %v8806, 7
        %v8808 = vsub.s32 %v6509, %v8807
        %v8809 = vrot.slane %v6316, %v8808
        %v8810 = vsel %vm6514, %v8809, %v8805
        %v8811 = vlaneseq
        %v8812 = vshrl.u32 %v8811, 7
        %v8813 = vsub.s32 %v6516, %v8812
        %v8814 = vrot.slane %v6319, %v8813
        %v8815 = vsel %vm6521, %v8814, %v8810
        %v8816 = vlaneseq
        %v8817 = vshrl.u32 %v8816, 7
        %v8818 = vsub.s32 %v6523, %v8817
        %v8819 = vrot.slane %v6322, %v8818
        %v8820 = vsel %vm6528, %v8819, %v8815
        %v8821 = vlaneseq
        %v8822 = vshrl.u32 %v8821, 7
        %v8823 = vsub.s32 %v6420, %v8822
        %v8824 = vrot.slane %v6325, %v8823
        %v8825 = vlaneseq
        %v8826 = vshrl.u32 %v8825, 7
        %v8827 = vsub.s32 %v6425, %v8826
        %v8828 = vrot.slane %v6328, %v8827
        %v8829 = vsel %vm6430, %v8828, %v8824
        %v8830 = vlaneseq
        %v8831 = vshrl.u32 %v8830, 7
        %v8832 = vsub.s32 %v6432, %v8831
        %v8833 = vrot.slane %v6331, %v8832
        %v8834 = vsel %vm6437, %v8833, %v8829
        %v8835 = vlaneseq
        %v8836 = vshrl.u32 %v8835, 7
        %v8837 = vsub.s32 %v6439, %v8836
        %v8838 = vrot.slane %v6334, %v8837
        %v8839 = vsel %vm6444, %v8838, %v8834
        %v8840 = vlaneseq
        %v8841 = vshrl.u32 %v8840, 7
        %v8842 = vsub.s32 %v6446, %v8841
        %v8843 = vrot.slane %v6337, %v8842
        %v8844 = vsel %vm6451, %v8843, %v8839
        %v8845 = vlaneseq
        %v8846 = vshrl.u32 %v8845, 7
        %v8847 = vsub.s32 %v6453, %v8846
        %v8848 = vrot.slane %v6340, %v8847
        %v8849 = vsel %vm6458, %v8848, %v8844
        %v8850 = vlaneseq
        %v8851 = vshrl.u32 %v8850, 7
        %v8852 = vsub.s32 %v6460, %v8851
        %v8853 = vrot.slane %v6343, %v8852
        %v8854 = vsel %vm6465, %v8853, %v8849
        %v8855 = vlaneseq
        %v8856 = vshrl.u32 %v8855, 7
        %v8857 = vsub.s32 %v6467, %v8856
        %v8858 = vrot.slane %v6346, %v8857
        %v8859 = vsel %vm6472, %v8858, %v8854
        %v8860 = vlaneseq
        %v8861 = vshrl.u32 %v8860, 7
        %v8862 = vsub.s32 %v6474, %v8861
        %v8863 = vrot.slane %v6349, %v8862
        %v8864 = vsel %vm6479, %v8863, %v8859
        %v8865 = vlaneseq
        %v8866 = vshrl.u32 %v8865, 7
        %v8867 = vsub.s32 %v6481, %v8866
        %v8868 = vrot.slane %v6352, %v8867
        %v8869 = vsel %vm6486, %v8868, %v8864
        %v8870 = vlaneseq
        %v8871 = vshrl.u32 %v8870, 7
        %v8872 = vsub.s32 %v6488, %v8871
        %v8873 = vrot.slane %v6355, %v8872
        %v8874 = vsel %vm6493, %v8873, %v8869
        %v8875 = vlaneseq
        %v8876 = vshrl.u32 %v8875, 7
        %v8877 = vsub.s32 %v6495, %v8876
        %v8878 = vrot.slane %v6358, %v8877
        %v8879 = vsel %vm6500, %v8878, %v8874
        %v8880 = vlaneseq
        %v8881 = vshrl.u32 %v8880, 7
        %v8882 = vsub.s32 %v6502, %v8881
        %v8883 = vrot.slane %v6361, %v8882
        %v8884 = vsel %vm6507, %v8883, %v8879
        %v8885 = vlaneseq
        %v8886 = vshrl.u32 %v8885, 7
        %v8887 = vsub.s32 %v6509, %v8886
        %v8888 = vrot.slane %v6364, %v8887
        %v8889 = vsel %vm6514, %v8888, %v8884
        %v8890 = vlaneseq
        %v8891 = vshrl.u32 %v8890, 7
        %v8892 = vsub.s32 %v6516, %v8891
        %v8893 = vrot.slane %v6367, %v8892
        %v8894 = vsel %vm6521, %v8893, %v8889
        %v8895 = vlaneseq
        %v8896 = vshrl.u32 %v8895, 7
        %v8897 = vsub.s32 %v6523, %v8896
        %v8898 = vrot.slane %v6370, %v8897
        %v8899 = vsel %vm6528, %v8898, %v8894
        %v8900 = vlaneseq
        %v8901 = vshrl.u32 %v8900, 7
        %v8902 = vsub.s32 %v6420, %v8901
        %v8903 = vrot.slane %v6373, %v8902
        %v8904 = vlaneseq
        %v8905 = vshrl.u32 %v8904, 7
        %v8906 = vsub.s32 %v6425, %v8905
        %v8907 = vrot.slane %v6376, %v8906
        %v8908 = vsel %vm6430, %v8907, %v8903
        %v8909 = vlaneseq
        %v8910 = vshrl.u32 %v8909, 7
        %v8911 = vsub.s32 %v6432, %v8910
        %v8912 = vrot.slane %v6379, %v8911
        %v8913 = vsel %vm6437, %v8912, %v8908
        %v8914 = vlaneseq
        %v8915 = vshrl.u32 %v8914, 7
        %v8916 = vsub.s32 %v6439, %v8915
        %v8917 = vrot.slane %v6382, %v8916
        %v8918 = vsel %vm6444, %v8917, %v8913
        %v8919 = vlaneseq
        %v8920 = vshrl.u32 %v8919, 7
        %v8921 = vsub.s32 %v6446, %v8920
        %v8922 = vrot.slane %v6385, %v8921
        %v8923 = vsel %vm6451, %v8922, %v8918
        %v8924 = vlaneseq
        %v8925 = vshrl.u32 %v8924, 7
        %v8926 = vsub.s32 %v6453, %v8925
        %v8927 = vrot.slane %v6388, %v8926
        %v8928 = vsel %vm6458, %v8927, %v8923
        %v8929 = vlaneseq
        %v8930 = vshrl.u32 %v8929, 7
        %v8931 = vsub.s32 %v6460, %v8930
        %v8932 = vrot.slane %v6391, %v8931
        %v8933 = vsel %vm6465, %v8932, %v8928
        %v8934 = vlaneseq
        %v8935 = vshrl.u32 %v8934, 7
        %v8936 = vsub.s32 %v6467, %v8935
        %v8937 = vrot.slane %v6394, %v8936
        %v8938 = vsel %vm6472, %v8937, %v8933
        %v8939 = vlaneseq
        %v8940 = vshrl.u32 %v8939, 7
        %v8941 = vsub.s32 %v6474, %v8940
        %v8942 = vrot.slane %v6397, %v8941
        %v8943 = vsel %vm6479, %v8942, %v8938
        %v8944 = vlaneseq
        %v8945 = vshrl.u32 %v8944, 7
        %v8946 = vsub.s32 %v6481, %v8945
        %v8947 = vrot.slane %v6400, %v8946
        %v8948 = vsel %vm6486, %v8947, %v8943
        %v8949 = vlaneseq
        %v8950 = vshrl.u32 %v8949, 7
        %v8951 = vsub.s32 %v6488, %v8950
        %v8952 = vrot.slane %v6403, %v8951
        %v8953 = vsel %vm6493, %v8952, %v8948
        %v8954 = vlaneseq
        %v8955 = vshrl.u32 %v8954, 7
        %v8956 = vsub.s32 %v6495, %v8955
        %v8957 = vrot.slane %v6406, %v8956
        %v8958 = vsel %vm6500, %v8957, %v8953
        %v8959 = vlaneseq
        %v8960 = vshrl.u32 %v8959, 7
        %v8961 = vsub.s32 %v6502, %v8960
        %v8962 = vrot.slane %v6409, %v8961
        %v8963 = vsel %vm6507, %v8962, %v8958
        %v8964 = vlaneseq
        %v8965 = vshrl.u32 %v8964, 7
        %v8966 = vsub.s32 %v6509, %v8965
        %v8967 = vrot.slane %v6412, %v8966
        %v8968 = vsel %vm6514, %v8967, %v8963
        %v8969 = vlaneseq
        %v8970 = vshrl.u32 %v8969, 7
        %v8971 = vsub.s32 %v6516, %v8970
        %v8972 = vrot.slane %v6415, %v8971
        %v8973 = vsel %vm6521, %v8972, %v8968
        %v8974 = vlaneseq
        %v8975 = vshrl.u32 %v8974, 7
        %v8976 = vsub.s32 %v6523, %v8975
        %v8977 = vrot.slane %v6418, %v8976
        %v8978 = vsel %vm6528, %v8977, %v8973
        %vm8979 = vcmask 1041409
        %v8980 = vsel %vm8979, %v6608, %v6529
        %vm8981 = vcmask 1042434
        %v8982 = vsel %vm8981, %v6687, %v8980
        %vm8983 = vcmask 1043459
        %v8984 = vsel %vm8983, %v6766, %v8982
        %vm8985 = vcmask 1044484
        %v8986 = vsel %vm8985, %v6845, %v8984
        %vm8987 = vcmask 1045509
        %v8988 = vsel %vm8987, %v6924, %v8986
        %vm8989 = vcmask 1046534
        %v8990 = vsel %vm8989, %v7003, %v8988
        %vm8991 = vcmask 1047559
        %v8992 = vsel %vm8991, %v7082, %v8990
        %v8993 = vsel %vm8979, %v7240, %v7161
        %v8994 = vsel %vm8981, %v7319, %v8993
        %v8995 = vsel %vm8983, %v7398, %v8994
        %v8996 = vsel %vm8985, %v7477, %v8995
        %v8997 = vsel %vm8987, %v7556, %v8996
        %v8998 = vsel %vm8989, %v7635, %v8997
        %v8999 = vsel %vm8991, %v7714, %v8998
        %v9000 = vsel %vm8979, %v7872, %v7793
        %v9001 = vsel %vm8981, %v7951, %v9000
        %v9002 = vsel %vm8983, %v8030, %v9001
        %v9003 = vsel %vm8985, %v8109, %v9002
        %v9004 = vsel %vm8987, %v8188, %v9003
        %v9005 = vsel %vm8989, %v8267, %v9004
        %v9006 = vsel %vm8991, %v8346, %v9005
        %v9007 = vsel %vm8979, %v8504, %v8425
        %v9008 = vsel %vm8981, %v8583, %v9007
        %v9009 = vsel %vm8983, %v8662, %v9008
        %v9010 = vsel %vm8985, %v8741, %v9009
        %v9011 = vsel %vm8987, %v8820, %v9010
        %v9012 = vsel %vm8989, %v8899, %v9011
        %v9013 = vsel %vm8991, %v8978, %v9012
        %v9018 = vadd.f32 %v999, %v8992
        %v9019 = vadd.f32 %v1000, %v8999
        %v9020 = vadd.f32 %v1001, %v9006
        %v9021 = vadd.f32 %v1002, %v9013
        %v9022 = vand.u32 2147483647, %v9018
        %vm9023 = vcmp.le.f32.partialorder %v9022, 0.7853982
        %vm9024 = vcmp.lt.s32.totalorder %v9018, 0
        %v9025 = vand.u32 %v9018, 2139095040
        %v9026 = vshrl.u32 %v9025, 23
        %v9027 = vsub.s32 %v9026, 127
        %v9028 = vand.u32 2147483647, %v9018
        %v9029 = vand.u32 %v9028, 8388607
        %v9030 = vor.u32 %v9029, 8388608
        %v9031 = vsub.s32 0, %v9030
        %v9032 = vadd.s32 %v9027, 1
        %vm9033 = vcmp.gt.s32.totalorder %v9032, 0
        %v9034 = vsel %vm9033, %v9032, 0
        %v9035 = vshrl.u32 %v9034, 5
        %v9036 = vand.u32 %v9034, 31
        %v9037 = vsub.s32 32, %v9036
        %v9038 = vshrl.u32 683565275, %v9037
        %v9039 = vshll.u32 683565275, %v9036
        %v9040 = vshrl.u32 2475754826, %v9037
        %v9041 = vor.u32 %v9039, %v9040
        %v9042 = vshll.u32 2475754826, %v9036
        %v9043 = vshrl.u32 2131351028, %v9037
        %v9044 = vor.u32 %v9042, %v9043
        %v9045 = vshll.u32 2131351028, %v9036
        %v9046 = vshrl.u32 2102212464, %v9037
        %v9047 = vor.u32 %v9045, %v9046
        %v9048 = vshll.u32 2102212464, %v9036
        %v9049 = vshrl.u32 920167782, %v9037
        %v9050 = vor.u32 %v9048, %v9049
        %v9051 = vshll.u32 920167782, %v9036
        %v9052 = vshrl.u32 1326507024, %v9037
        %v9053 = vor.u32 %v9051, %v9052
        %vm9054 = vcmp.lt.s32.totalorder %v9035, 1
        %vm9055 = vcmp.lt.s32.totalorder %v9035, 2
        %vm9056 = vcmp.lt.s32.totalorder %v9035, 3
        %vm9057 = vcmp.lt.s32.totalorder %v9035, 4
        %v9058 = vsel %vm9054, %v9038, %v9041
        %v9059 = vsel %vm9057, %v9047, 2102212464
        %v9060 = vsel %vm9056, %v9044, %v9059
        %v9061 = vsel %vm9055, %v9058, %v9060
        %v9062 = vsel %vm9054, %v9041, %v9044
        %v9063 = vsel %vm9057, %v9050, 920167782
        %v9064 = vsel %vm9056, %v9047, %v9063
        %v9065 = vsel %vm9055, %v9062, %v9064
        %v9066 = vsel %vm9054, %v9044, %v9047
        %v9067 = vsel %vm9057, %v9053, 1326507024
        %v9068 = vsel %vm9056, %v9050, %v9067
        %v9069 = vsel %vm9055, %v9066, %v9068
        %v9070 = vshll.u32 %v9030, 8
        %v9071 = vmul.u32.u64.compose %v9070, %v9069
        %v9072 = vextract.low.u32 %v9071
        %v9073 = vextract.high.u32 %v9071
        %v9074 = vmul.u32.u64.compose %v9070, %v9065
        %v9075 = vextract.low.u32 %v9074
        %v9076 = vextract.high.u32 %v9074
        %v9077 = vmul.u32 %v9070, %v9061
        %v9078 = vadd.s32 %v9073, %v9075
        %vm9079 = vc.u32 %v9073, %v9075
        %v9080 = vadd.s32 %v9076, 1
        %v9081 = vsel %vm9079, %v9080, %v9076
        %v9082 = vadd.s32 %v9077, %v9081
        %v9083 = vadd.s32 %v9082, 536870912
        %v9084 = vshrl.u32 %v9083, 30
        %v9085 = vshll.u32 %v9084, 30
        %v9086 = vsub.s32 %v9082, %v9085
        %vm9087 = vcmp.lt.s32.totalorder %v9086, 0
        %v9088 = vsub.s32 0, %v9086
        %v9089 = vsel %vm9087, %v9088, %v9086
        %v9090 = vclz %v9089
        %v9091 = vsub.s32 %v9090, 2
        %vm9092 = vcmp.gt.s32.totalorder 0, %v9091
        %v9093 = vsel %vm9092, 0, %v9091
        %v9094 = vsub.s32 32, %v9093
        %v9095 = vshll.u32 %v9086, %v9093
        %v9096 = vshrl.u32 %v9078, %v9094
        %v9097 = vor.u32 %v9095, %v9096
        %v9098 = vsub.s32 4294967266, %v9093
        %v9099 = vadd.s32 %v9098, 127
        %v9100 = vshll.u32 %v9099, 23
        %v9101 = vor.u32 4788187, %v9100
        %v9102 = vand.u32 2147483647, %v9101
        %v9104 = vcvt.s32.f32 %v9097
        %v9105 = vmul.f32 %v9104, %v9102
        %v9106 = vxor.u32 %v9105, 2147483648
        %v9107 = vsel %vm9024, %v9106, %v9105
        %v9108 = vsub.s32 4, %v9084
        %v9109 = vsel %vm9024, %v9108, %v9084
        %v9110 = vsel %vm9023, %v9018, %v9107
        %v9111 = vsel %vm9023, 0, %v9109
        %v9112 = vcosq.f32.pop %v9110
        %v9113 = vsinq.f32.pop %v9110
        %vm9114 = vweird.f32 %v9018
        %v9115 = vand.u32 %v9111, 3
        %vm9116 = vcmp.lt.s32.totalorder %v9115, 2
        %vm9117 = vcmp.eq.s32.totalorder %v9115, 0
        %v9118 = vxor.u32 %v9113, 2147483648
        %v9119 = vsel %vm9117, %v9112, %v9118
        %vm9120 = vcmp.eq.s32.totalorder %v9115, 2
        %v9121 = vxor.u32 %v9112, 2147483648
        %v9122 = vsel %vm9120, %v9121, %v9113
        %v9123 = vsel %vm9116, %v9119, %v9122
        %v9124 = vsel %vm9114, nan, %v9123
        %v9125 = vand.u32 2147483647, %v9019
        %vm9126 = vcmp.le.f32.partialorder %v9125, 0.7853982
        %vm9127 = vcmp.lt.s32.totalorder %v9019, 0
        %v9128 = vand.u32 %v9019, 2139095040
        %v9129 = vshrl.u32 %v9128, 23
        %v9130 = vsub.s32 %v9129, 127
        %v9131 = vand.u32 2147483647, %v9019
        %v9132 = vand.u32 %v9131, 8388607
        %v9133 = vor.u32 %v9132, 8388608
        %v9134 = vsub.s32 0, %v9133
        %v9135 = vadd.s32 %v9130, 1
        %vm9136 = vcmp.gt.s32.totalorder %v9135, 0
        %v9137 = vsel %vm9136, %v9135, 0
        %v9138 = vshrl.u32 %v9137, 5
        %v9139 = vand.u32 %v9137, 31
        %v9140 = vsub.s32 32, %v9139
        %v9141 = vshrl.u32 683565275, %v9140
        %v9142 = vshll.u32 683565275, %v9139
        %v9143 = vshrl.u32 2475754826, %v9140
        %v9144 = vor.u32 %v9142, %v9143
        %v9145 = vshll.u32 2475754826, %v9139
        %v9146 = vshrl.u32 2131351028, %v9140
        %v9147 = vor.u32 %v9145, %v9146
        %v9148 = vshll.u32 2131351028, %v9139
        %v9149 = vshrl.u32 2102212464, %v9140
        %v9150 = vor.u32 %v9148, %v9149
        %v9151 = vshll.u32 2102212464, %v9139
        %v9152 = vshrl.u32 920167782, %v9140
        %v9153 = vor.u32 %v9151, %v9152
        %v9154 = vshll.u32 920167782, %v9139
        %v9155 = vshrl.u32 1326507024, %v9140
        %v9156 = vor.u32 %v9154, %v9155
        %vm9157 = vcmp.lt.s32.totalorder %v9138, 1
        %vm9158 = vcmp.lt.s32.totalorder %v9138, 2
        %vm9159 = vcmp.lt.s32.totalorder %v9138, 3
        %vm9160 = vcmp.lt.s32.totalorder %v9138, 4
        %v9161 = vsel %vm9157, %v9141, %v9144
        %v9162 = vsel %vm9160, %v9150, 2102212464
        %v9163 = vsel %vm9159, %v9147, %v9162
        %v9164 = vsel %vm9158, %v9161, %v9163
        %v9165 = vsel %vm9157, %v9144, %v9147
        %v9166 = vsel %vm9160, %v9153, 920167782
        %v9167 = vsel %vm9159, %v9150, %v9166
        %v9168 = vsel %vm9158, %v9165, %v9167
        %v9169 = vsel %vm9157, %v9147, %v9150
        %v9170 = vsel %vm9160, %v9156, 1326507024
        %v9171 = vsel %vm9159, %v9153, %v9170
        %v9172 = vsel %vm9158, %v9169, %v9171
        %v9173 = vshll.u32 %v9133, 8
        %v9174 = vmul.u32.u64.compose %v9173, %v9172
        %v9175 = vextract.low.u32 %v9174
        %v9176 = vextract.high.u32 %v9174
        %v9177 = vmul.u32.u64.compose %v9173, %v9168
        %v9178 = vextract.low.u32 %v9177
        %v9179 = vextract.high.u32 %v9177
        %v9180 = vmul.u32 %v9173, %v9164
        %v9181 = vadd.s32 %v9176, %v9178
        %vm9182 = vc.u32 %v9176, %v9178
        %v9183 = vadd.s32 %v9179, 1
        %v9184 = vsel %vm9182, %v9183, %v9179
        %v9185 = vadd.s32 %v9180, %v9184
        %v9186 = vadd.s32 %v9185, 536870912
        %v9187 = vshrl.u32 %v9186, 30
        %v9188 = vshll.u32 %v9187, 30
        %v9189 = vsub.s32 %v9185, %v9188
        %vm9190 = vcmp.lt.s32.totalorder %v9189, 0
        %v9191 = vsub.s32 0, %v9189
        %v9192 = vsel %vm9190, %v9191, %v9189
        %v9193 = vclz %v9192
        %v9194 = vsub.s32 %v9193, 2
        %vm9195 = vcmp.gt.s32.totalorder 0, %v9194
        %v9196 = vsel %vm9195, 0, %v9194
        %v9197 = vsub.s32 32, %v9196
        %v9198 = vshll.u32 %v9189, %v9196
        %v9199 = vshrl.u32 %v9181, %v9197
        %v9200 = vor.u32 %v9198, %v9199
        %v9201 = vsub.s32 4294967266, %v9196
        %v9202 = vadd.s32 %v9201, 127
        %v9203 = vshll.u32 %v9202, 23
        %v9204 = vor.u32 4788187, %v9203
        %v9205 = vand.u32 2147483647, %v9204
        %v9207 = vcvt.s32.f32 %v9200
        %v9208 = vmul.f32 %v9207, %v9205
        %v9209 = vxor.u32 %v9208, 2147483648
        %v9210 = vsel %vm9127, %v9209, %v9208
        %v9211 = vsub.s32 4, %v9187
        %v9212 = vsel %vm9127, %v9211, %v9187
        %v9213 = vsel %vm9126, %v9019, %v9210
        %v9214 = vsel %vm9126, 0, %v9212
        %v9215 = vcosq.f32.pop %v9213
        %v9216 = vsinq.f32.pop %v9213
        %vm9217 = vweird.f32 %v9019
        %v9218 = vand.u32 %v9214, 3
        %vm9219 = vcmp.lt.s32.totalorder %v9218, 2
        %vm9220 = vcmp.eq.s32.totalorder %v9218, 0
        %v9221 = vxor.u32 %v9216, 2147483648
        %v9222 = vsel %vm9220, %v9215, %v9221
        %vm9223 = vcmp.eq.s32.totalorder %v9218, 2
        %v9224 = vxor.u32 %v9215, 2147483648
        %v9225 = vsel %vm9223, %v9224, %v9216
        %v9226 = vsel %vm9219, %v9222, %v9225
        %v9227 = vsel %vm9217, nan, %v9226
        %v9228 = vand.u32 2147483647, %v9020
        %vm9229 = vcmp.le.f32.partialorder %v9228, 0.7853982
        %vm9230 = vcmp.lt.s32.totalorder %v9020, 0
        %v9231 = vand.u32 %v9020, 2139095040
        %v9232 = vshrl.u32 %v9231, 23
        %v9233 = vsub.s32 %v9232, 127
        %v9234 = vand.u32 2147483647, %v9020
        %v9235 = vand.u32 %v9234, 8388607
        %v9236 = vor.u32 %v9235, 8388608
        %v9237 = vsub.s32 0, %v9236
        %v9238 = vadd.s32 %v9233, 1
        %vm9239 = vcmp.gt.s32.totalorder %v9238, 0
        %v9240 = vsel %vm9239, %v9238, 0
        %v9241 = vshrl.u32 %v9240, 5
        %v9242 = vand.u32 %v9240, 31
        %v9243 = vsub.s32 32, %v9242
        %v9244 = vshrl.u32 683565275, %v9243
        %v9245 = vshll.u32 683565275, %v9242
        %v9246 = vshrl.u32 2475754826, %v9243
        %v9247 = vor.u32 %v9245, %v9246
        %v9248 = vshll.u32 2475754826, %v9242
        %v9249 = vshrl.u32 2131351028, %v9243
        %v9250 = vor.u32 %v9248, %v9249
        %v9251 = vshll.u32 2131351028, %v9242
        %v9252 = vshrl.u32 2102212464, %v9243
        %v9253 = vor.u32 %v9251, %v9252
        %v9254 = vshll.u32 2102212464, %v9242
        %v9255 = vshrl.u32 920167782, %v9243
        %v9256 = vor.u32 %v9254, %v9255
        %v9257 = vshll.u32 920167782, %v9242
        %v9258 = vshrl.u32 1326507024, %v9243
        %v9259 = vor.u32 %v9257, %v9258
        %vm9260 = vcmp.lt.s32.totalorder %v9241, 1
        %vm9261 = vcmp.lt.s32.totalorder %v9241, 2
        %vm9262 = vcmp.lt.s32.totalorder %v9241, 3
        %vm9263 = vcmp.lt.s32.totalorder %v9241, 4
        %v9264 = vsel %vm9260, %v9244, %v9247
        %v9265 = vsel %vm9263, %v9253, 2102212464
        %v9266 = vsel %vm9262, %v9250, %v9265
        %v9267 = vsel %vm9261, %v9264, %v9266
        %v9268 = vsel %vm9260, %v9247, %v9250
        %v9269 = vsel %vm9263, %v9256, 920167782
        %v9270 = vsel %vm9262, %v9253, %v9269
        %v9271 = vsel %vm9261, %v9268, %v9270
        %v9272 = vsel %vm9260, %v9250, %v9253
        %v9273 = vsel %vm9263, %v9259, 1326507024
        %v9274 = vsel %vm9262, %v9256, %v9273
        %v9275 = vsel %vm9261, %v9272, %v9274
        %v9276 = vshll.u32 %v9236, 8
        %v9277 = vmul.u32.u64.compose %v9276, %v9275
        %v9278 = vextract.low.u32 %v9277
        %v9279 = vextract.high.u32 %v9277
        %v9280 = vmul.u32.u64.compose %v9276, %v9271
        %v9281 = vextract.low.u32 %v9280
        %v9282 = vextract.high.u32 %v9280
        %v9283 = vmul.u32 %v9276, %v9267
        %v9284 = vadd.s32 %v9279, %v9281
        %vm9285 = vc.u32 %v9279, %v9281
        %v9286 = vadd.s32 %v9282, 1
        %v9287 = vsel %vm9285, %v9286, %v9282
        %v9288 = vadd.s32 %v9283, %v9287
        %v9289 = vadd.s32 %v9288, 536870912
        %v9290 = vshrl.u32 %v9289, 30
        %v9291 = vshll.u32 %v9290, 30
        %v9292 = vsub.s32 %v9288, %v9291
        %vm9293 = vcmp.lt.s32.totalorder %v9292, 0
        %v9294 = vsub.s32 0, %v9292
        %v9295 = vsel %vm9293, %v9294, %v9292
        %v9296 = vclz %v9295
        %v9297 = vsub.s32 %v9296, 2
        %vm9298 = vcmp.gt.s32.totalorder 0, %v9297
        %v9299 = vsel %vm9298, 0, %v9297
        %v9300 = vsub.s32 32, %v9299
        %v9301 = vshll.u32 %v9292, %v9299
        %v9302 = vshrl.u32 %v9284, %v9300
        %v9303 = vor.u32 %v9301, %v9302
        %v9304 = vsub.s32 4294967266, %v9299
        %v9305 = vadd.s32 %v9304, 127
        %v9306 = vshll.u32 %v9305, 23
        %v9307 = vor.u32 4788187, %v9306
        %v9308 = vand.u32 2147483647, %v9307
        %v9310 = vcvt.s32.f32 %v9303
        %v9311 = vmul.f32 %v9310, %v9308
        %v9312 = vxor.u32 %v9311, 2147483648
        %v9313 = vsel %vm9230, %v9312, %v9311
        %v9314 = vsub.s32 4, %v9290
        %v9315 = vsel %vm9230, %v9314, %v9290
        %v9316 = vsel %vm9229, %v9020, %v9313
        %v9317 = vsel %vm9229, 0, %v9315
        %v9318 = vcosq.f32.pop %v9316
        %v9319 = vsinq.f32.pop %v9316
        %vm9320 = vweird.f32 %v9020
        %v9321 = vand.u32 %v9317, 3
        %vm9322 = vcmp.lt.s32.totalorder %v9321, 2
        %vm9323 = vcmp.eq.s32.totalorder %v9321, 0
        %v9324 = vxor.u32 %v9319, 2147483648
        %v9325 = vsel %vm9323, %v9318, %v9324
        %vm9326 = vcmp.eq.s32.totalorder %v9321, 2
        %v9327 = vxor.u32 %v9318, 2147483648
        %v9328 = vsel %vm9326, %v9327, %v9319
        %v9329 = vsel %vm9322, %v9325, %v9328
        %v9330 = vsel %vm9320, nan, %v9329
        %v9331 = vand.u32 2147483647, %v9021
        %vm9332 = vcmp.le.f32.partialorder %v9331, 0.7853982
        %vm9333 = vcmp.lt.s32.totalorder %v9021, 0
        %v9334 = vand.u32 %v9021, 2139095040
        %v9335 = vshrl.u32 %v9334, 23
        %v9336 = vsub.s32 %v9335, 127
        %v9337 = vand.u32 2147483647, %v9021
        %v9338 = vand.u32 %v9337, 8388607
        %v9339 = vor.u32 %v9338, 8388608
        %v9340 = vsub.s32 0, %v9339
        %v9341 = vadd.s32 %v9336, 1
        %vm9342 = vcmp.gt.s32.totalorder %v9341, 0
        %v9343 = vsel %vm9342, %v9341, 0
        %v9344 = vshrl.u32 %v9343, 5
        %v9345 = vand.u32 %v9343, 31
        %v9346 = vsub.s32 32, %v9345
        %v9347 = vshrl.u32 683565275, %v9346
        %v9348 = vshll.u32 683565275, %v9345
        %v9349 = vshrl.u32 2475754826, %v9346
        %v9350 = vor.u32 %v9348, %v9349
        %v9351 = vshll.u32 2475754826, %v9345
        %v9352 = vshrl.u32 2131351028, %v9346
        %v9353 = vor.u32 %v9351, %v9352
        %v9354 = vshll.u32 2131351028, %v9345
        %v9355 = vshrl.u32 2102212464, %v9346
        %v9356 = vor.u32 %v9354, %v9355
        %v9357 = vshll.u32 2102212464, %v9345
        %v9358 = vshrl.u32 920167782, %v9346
        %v9359 = vor.u32 %v9357, %v9358
        %v9360 = vshll.u32 920167782, %v9345
        %v9361 = vshrl.u32 1326507024, %v9346
        %v9362 = vor.u32 %v9360, %v9361
        %vm9363 = vcmp.lt.s32.totalorder %v9344, 1
        %vm9364 = vcmp.lt.s32.totalorder %v9344, 2
        %vm9365 = vcmp.lt.s32.totalorder %v9344, 3
        %vm9366 = vcmp.lt.s32.totalorder %v9344, 4
        %v9367 = vsel %vm9363, %v9347, %v9350
        %v9368 = vsel %vm9366, %v9356, 2102212464
        %v9369 = vsel %vm9365, %v9353, %v9368
        %v9370 = vsel %vm9364, %v9367, %v9369
        %v9371 = vsel %vm9363, %v9350, %v9353
        %v9372 = vsel %vm9366, %v9359, 920167782
        %v9373 = vsel %vm9365, %v9356, %v9372
        %v9374 = vsel %vm9364, %v9371, %v9373
        %v9375 = vsel %vm9363, %v9353, %v9356
        %v9376 = vsel %vm9366, %v9362, 1326507024
        %v9377 = vsel %vm9365, %v9359, %v9376
        %v9378 = vsel %vm9364, %v9375, %v9377
        %v9379 = vshll.u32 %v9339, 8
        %v9380 = vmul.u32.u64.compose %v9379, %v9378
        %v9381 = vextract.low.u32 %v9380
        %v9382 = vextract.high.u32 %v9380
        %v9383 = vmul.u32.u64.compose %v9379, %v9374
        %v9384 = vextract.low.u32 %v9383
        %v9385 = vextract.high.u32 %v9383
        %v9386 = vmul.u32 %v9379, %v9370
        %v9387 = vadd.s32 %v9382, %v9384
        %vm9388 = vc.u32 %v9382, %v9384
        %v9389 = vadd.s32 %v9385, 1
        %v9390 = vsel %vm9388, %v9389, %v9385
        %v9391 = vadd.s32 %v9386, %v9390
        %v9392 = vadd.s32 %v9391, 536870912
        %v9393 = vshrl.u32 %v9392, 30
        %v9394 = vshll.u32 %v9393, 30
        %v9395 = vsub.s32 %v9391, %v9394
        %vm9396 = vcmp.lt.s32.totalorder %v9395, 0
        %v9397 = vsub.s32 0, %v9395
        %v9398 = vsel %vm9396, %v9397, %v9395
        %v9399 = vclz %v9398
        %v9400 = vsub.s32 %v9399, 2
        %vm9401 = vcmp.gt.s32.totalorder 0, %v9400
        %v9402 = vsel %vm9401, 0, %v9400
        %v9403 = vsub.s32 32, %v9402
        %v9404 = vshll.u32 %v9395, %v9402
        %v9405 = vshrl.u32 %v9387, %v9403
        %v9406 = vor.u32 %v9404, %v9405
        %v9407 = vsub.s32 4294967266, %v9402
        %v9408 = vadd.s32 %v9407, 127
        %v9409 = vshll.u32 %v9408, 23
        %v9410 = vor.u32 4788187, %v9409
        %v9411 = vand.u32 2147483647, %v9410
        %v9413 = vcvt.s32.f32 %v9406
        %v9414 = vmul.f32 %v9413, %v9411
        %v9415 = vxor.u32 %v9414, 2147483648
        %v9416 = vsel %vm9333, %v9415, %v9414
        %v9417 = vsub.s32 4, %v9393
        %v9418 = vsel %vm9333, %v9417, %v9393
        %v9419 = vsel %vm9332, %v9021, %v9416
        %v9420 = vsel %vm9332, 0, %v9418
        %v9421 = vcosq.f32.pop %v9419
        %v9422 = vsinq.f32.pop %v9419
        %vm9423 = vweird.f32 %v9021
        %v9424 = vand.u32 %v9420, 3
        %vm9425 = vcmp.lt.s32.totalorder %v9424, 2
        %vm9426 = vcmp.eq.s32.totalorder %v9424, 0
        %v9427 = vxor.u32 %v9422, 2147483648
        %v9428 = vsel %vm9426, %v9421, %v9427
        %vm9429 = vcmp.eq.s32.totalorder %v9424, 2
        %v9430 = vxor.u32 %v9421, 2147483648
        %v9431 = vsel %vm9429, %v9430, %v9422
        %v9432 = vsel %vm9425, %v9428, %v9431
        %v9433 = vsel %vm9423, nan, %v9432
        %v9434 = vld [vmem:[%s354] sm:$0xff]
        %v9435 = vld [vmem:[%s354 + $0x8] sm:$0xff]
        %v9436 = vld [vmem:[%s354 + $0x10] sm:$0xff]
        %v9437 = vld [vmem:[%s354 + $0x18] sm:$0xff]
        %vm9438 = vcmp.eq.s32.totalorder %v9434, 4294967295
        %vm9439 = vcmp.eq.s32.totalorder %v9435, 4294967295
        %vm9440 = vcmp.eq.s32.totalorder %v9436, 4294967295
        %vm9441 = vcmp.eq.s32.totalorder %v9437, 4294967295
        %v9442 = vld [vmem:[%s359] sm:$0x1]
        %v9443 = vld [vmem:[%s359 + $0x1] sm:$0x1]
        %vm9444 = vcmp.eq.s32.totalorder %v9442, 4294967295
        %vm9445 = vcmp.eq.s32.totalorder %v9443, 4294967295
        %v9446 = vsel %vm9438, 1, 0
        %v9447 = vsel %vm9439, 1, 0
        %v9448 = vsel %vm9440, 1, 0
        %v9449 = vsel %vm9441, 1, 0
        %9450 = vset.pattern.permute.xlu0 0
        %9451 = vperm.xlu0 %9450, %v9446
        %v9452 = vpop.permute.xlu0 %9451
        %9453 = vset.pattern.permute.xlu0 0
        %9454 = vperm.xlu0 %9453, %v9447
        %v9455 = vpop.permute.xlu0 %9454
        %9456 = vset.pattern.permute.xlu0 0
        %9457 = vperm.xlu0 %9456, %v9448
        %v9458 = vpop.permute.xlu0 %9457
        %9459 = vset.pattern.permute.xlu0 0
        %9460 = vperm.xlu0 %9459, %v9449
        %v9461 = vpop.permute.xlu0 %9460
        %vm9462 = vcmp.eq.s32.totalorder %v9452, 1
        %vm9463 = vcmp.eq.s32.totalorder %v9455, 1
        %vm9464 = vcmp.eq.s32.totalorder %v9458, 1
        %vm9465 = vcmp.eq.s32.totalorder %v9461, 1
        %v9466 = vsel %vm9444, 1, 0
        %v9467 = vsel %vm9445, 1, 0
        %v9468 = vlaneseq
        %v9469 = vshrl.u32 %v9468, 7
        %v9470 = vsub.s32 0, %v9469
        %v9471 = vrot.slane %v9466, %v9470
        %v9472 = vlaneseq
        %v9473 = vshrl.u32 %v9472, 7
        %v9474 = vsub.s32 0, %v9473
        %v9475 = vrot.slane %v9467, %v9474
        %vm9476 = vcmp.eq.s32.totalorder %v9471, 1
        %vm9477 = vcmp.eq.s32.totalorder %v9475, 1
        %vm9478 = vmor %vm9462, %vm9476
        %vm9479 = vmor %vm9463, %vm9476
        %vm9480 = vmor %vm9464, %vm9477
        %vm9481 = vmor %vm9465, %vm9477
        %v9482 = vsel %vm9478, 0.0, %v9124
        %v9483 = vsel %vm9479, 0.0, %v9227
        %v9484 = vsel %vm9480, 0.0, %v9330
        %v9485 = vsel %vm9481, 0.0, %v9433
        %9486 = vst [vmem:[%s336] sm:$0xff] %v9482
        %9487 = vst [vmem:[%s336 + $0x8] sm:$0xff] %v9483
        %9488 = vst [vmem:[%s336 + $0x10] sm:$0xff] %v9484
        %9489 = vst [vmem:[%s336 + $0x18] sm:$0xff] %v9485
        %s9490 = sand.u32 %s174, 1
        %s9491 = scalar_lea.sflag [#allocation5], %s9490
        %s9492 = sand.u32 %s174, 1
        %s9493 = smul.addr %s9492, 32
        %s9494 = scalar_lea.vmem [#allocation8], %s9493
        // Predicated region
        $region49: #{tpu_custom_call.1} parent=39 // pred_check
          %p9495 = pneg %p184
        $region50: #{tpu_custom_call.1} parent=39 // pred_check_branch
          %9497 = sbr.rel (%p9495) target = $region52
        $region51: #{tpu_custom_call.1} parent=39 // pred_region
          #allocation10 [shape = 'u32[6]{0}', space=smem, size = 0x18, scoped, tag = 'DMA stride descriptor']
          %s9498 = smul.u32 2, %s28
          %s9500 = ssub.s32 512, 512
          %9501 = vsyncadd %s9491, %s9500
          %s9502 = smul.addr %s27, 2
          %s9503 = smul.addr %s9498, 4
          %s9504 = sadd.s32 %s9502, %s9503
          %s9505 = smul.addr %s9504, 128
          %s9506 = scalar_lea.hbm %s5, %s9505
          %s9508 = sshll.u32 1, 14
          %s9509 = sxor.u32 4294967295, %s9508
          %s9512 = sshll.u32 7, 18
          %s9513 = sxor.u32 4294967295, %s9512
          %s9514 = sand.u32 0, %s9513
          %s9516 = sor.u32 %s9514, 0
          %s9517 = sshll.u32 %s9494, 4
          %s9518 = int_to_ptr.vmem [resolvable:$true] %s9517
          %9524 = sst [smem:[#allocation10]] 256
          %s9525 = scalar_lea.smem [#allocation10], 1
          %9526 = sst [smem:[%s9525]] 512
          %s9527 = scalar_lea.smem [#allocation10], 2
          %9528 = sst [smem:[%s9527]] 2
          %s9529 = scalar_lea.smem [#allocation10], 3
          %9530 = sst [smem:[%s9529]] 128
          %s9531 = scalar_lea.smem [#allocation10], 4
          %9532 = sst [smem:[%s9531]] 128
          %s9533 = scalar_lea.smem [#allocation10], 5
          %9534 = sst [smem:[%s9533]] 8
          %9536 = dma.general %s9518, 512, %s9506, %s9491, 131072, [#allocation10], %s9516, 0
        $region52: #{tpu_custom_call.1} parent=39 // pred_fallthru
          _
      $region40: #{tpu_custom_call.1} parent=5 // pred_fallthru
        _
      %p9537 = scmp.le.s32.totalorder 2, %s18
      // Predicated region
      $region53: #{tpu_custom_call.1} parent=5 // pred_check
        %p9538 = pneg %p9537
      $region54: #{tpu_custom_call.1} parent=5 // pred_check_branch
        %9540 = sbr.rel (%p9538) target = $region56
      $region55: #{tpu_custom_call.1} parent=5 // pred_region
        %s9541 = ssub.s32 %s18, 2
        // Predicated region
        $region57: #{tpu_custom_call.1} parent=55 // pred_check
          %p9542 = pneg %p190
        $region58: #{tpu_custom_call.1} parent=55 // pred_check_branch
          %9544 = sbr.rel (%p9542) target = $region60
        $region59: #{tpu_custom_call.1} parent=55 // pred_region
          %s9545 = sand.u32 %s175, 1
          %s9546 = scalar_lea.sflag [#allocation5], %s9545
          %s9547 = sand.u32 %s175, 1
          %s9548 = smul.addr %s9547, 32
          %s9549 = scalar_lea.vmem [#allocation8], %s9548
          %9550 = dma.done %s9546, 512
        $region60: #{tpu_custom_call.1} parent=55 // pred_fallthru
          _
      $region56: #{tpu_custom_call.1} parent=5 // pred_fallthru
        _
    $region6: #{tpu_custom_call.1} parent=1 // loop_footer
      %s22 = sadd.s32 1, %s18
    $region7: #{tpu_custom_call.1} parent=1 // loop_footer_branch
      %17 = sbr.rel target = $region3
    $region8: #{tpu_custom_call.1} parent=1 // loop_exit
      _
    %9551 = vsyncpa [#allocation4], 1
    %s9552 = scalar_lea.sflag [#allocation4], 1
    %9553 = vsyncpa %s9552, 1
    %9554 = vsyncpa [#allocation7], 1
    %9555 = vsyncpa [#allocation5], 1
    %s9556 = scalar_lea.sflag [#allocation5], 1
    %9557 = vsyncpa %s9556, 1

</llo_original>
